<compile_context>
chip_gen: v7x
topology: tpu7x:2x2x1
jax: 0.10.0
libtpu: 0.0.40
codegen_flags: <defaults>
</compile_context>

<pallas_src>
import functools

import numpy as np
import jax
import jax.numpy as jnp
from jax.experimental import pallas as pl
from jax.experimental.pallas import tpu as pltpu

LANES = 128       # lane width everything is padded to
NCLS = 10         # real number of classes


# ------------------------------- fused kernel -------------------------------


def net_kernel(x_ref, band1_ref, bias1_ref, band2_ref, bias2_ref,
               fw1_ref, fb1_ref, fw2_ref, fb2_ref, out_ref, p1p_scr):
    """Forward pass for one block of BM images (one grid step).

    x_ref     : [2, 14, BM, 128]  x_ref[p, r, m, k] = image[m, 2r+p, k]  (k < 28 real)
    band1_ref : [2, 5, 128, 128]  band1[b, di][k, v*10+c] = conv1_w[c, 0, di, k-(2v+b)]
    bias1_ref : [1, 128]          bias1[0, v*10+c] = conv1_b[c]          (120 real lanes)
    band2_ref : [2, 5, 128, 128]  band2[b2, di][v*10+ci, v2*20+co] = conv2_w[co, ci, di, v-(2v2+b2)]
    bias2_ref : [1, 128]          bias2[0, v2*20+co] = conv2_b[co]        (80 real lanes)
    fw1_ref   : [4, 128, 128]     fw1[u2, v2*20+co, n] = fc1_w[n, co*16 + u2*4 + v2]
    fb1_ref   : [1, 128]
    fw2_ref   : [128, 128]        fw2[k, n] = fc2_w[n, k]
    fb2_ref   : [1, 128]
    out_ref   : [BM, 128]         log_softmax (first 10 lanes valid)
    p1p_scr   : VMEM [2, 6*BM, 128]  pool1 output split by row parity:
                                  p1p[p, u'*BM + m, v*10+c] = relu(pool1)[m, c, 2u'+p, v]
    """
    f32 = jnp.float32
    bm = x_ref.shape[2]

    # ---- conv1 (5x5, 1->10) + bias + 2x2 maxpool + ReLU: 20 banded MXU matmuls ----
    # Row slabs of the input, one per vertical tap offset s = a + di (s = 0..5):
    #   xs[s][(u, m), k] = image[m, 2u + s, k]
    xs = [x_ref[s % 2, s // 2:s // 2 + 12, :, :].reshape(12 * bm, LANES) for s in range(6)]

    pooled1 = None
    for a in range(2):            # pool-candidate row offset
        for b in range(2):        # pool-candidate column offset (baked into the band matrix)
            y = None
            for di in range(5):
                t = jnp.dot(xs[a + di], band1_ref[b, di], preferred_element_type=f32)
                y = t if y is None else y + t                 # [12*BM, 128], lanes = v*10+c
            pooled1 = y if pooled1 is None else jnp.maximum(pooled1, y)
    p1 = jnp.maximum(pooled1 + bias1_ref[...], 0.0)           # [12*BM, 128]

    # Split the 12 pooled rows by parity so conv2's stride-2 pool rows become static slices.
    for u in range(12):
        p1p_scr[u % 2, (u // 2) * bm:(u // 2 + 1) * bm, :] = p1[u * bm:(u + 1) * bm, :]

    # ---- conv2 (5x5, 10->20) + bias + 2x2 maxpool + ReLU: 20 banded MXU matmuls ----
    # TODO(synk): Dropout2d before pool2 is identity in eval mode (training masks not done).
    pooled2 = None
    for a2 in range(2):
        for b2 in range(2):
            z = None
            for di in range(5):
                s = a2 + di
                lhs = p1p_scr[s % 2, (s // 2) * bm:(s // 2 + 4) * bm, :]   # [4*BM, 128]
                t = jnp.dot(lhs, band2_ref[b2, di], preferred_element_type=f32)
                z = t if z is None else z + t                 # [4*BM, 128], lanes = v2*20+co
            pooled2 = z if pooled2 is None else jnp.maximum(pooled2, z)
    p2 = jnp.maximum(pooled2 + bias2_ref[...], 0.0)           # [4*BM, 128], rows = (u2, m)

    # ---- fc1 + ReLU: accumulate the K=320 contraction over the 4 spatial row blocks ----
    z1 = None
    for u2 in range(4):
        t = jnp.dot(p2[u2 * bm:(u2 + 1) * bm, :], fw1_ref[u2],
                    preferred_element_type=f32)               # [BM, 128]
        z1 = t if z1 is None else z1 + t
    z1 = jnp.maximum(z1 + fb1_ref[...], 0.0)                  # [BM, 128]  (50 real lanes)
    # TODO(synk): F.dropout between fc1 and fc2 is identity in eval mode.

    # ---- fc2 + masked log_softmax over the 10 real classes ----
    logits = jnp.dot(z1, fw2_ref[...], preferred_element_type=f32) + fb2_ref[...]
    lane = jax.lax.broadcasted_iota(jnp.int32, logits.shape, 1)
    valid = lane < NCLS
    zm = jnp.where(valid, logits, -1e30)
    mx = jnp.max(zm, axis=-1, keepdims=True)
    e = jnp.where(valid, jnp.exp(zm - mx), 0.0)
    logsm = zm - mx - jnp.log(jnp.sum(e, axis=-1, keepdims=True))
    out_ref[...] = jnp.where(valid, logsm, 0.0)


# ------------------------------ params & packing ------------------------------


def init_params(key):
    ks = jax.random.split(key, 8)
    p = {}
    p["conv1_w"] = jax.random.normal(ks[0], (10, 1, 5, 5), jnp.float32) * 0.10
    p["conv1_b"] = jax.random.normal(ks[1], (10,), jnp.float32) * 0.10
    p["conv2_w"] = jax.random.normal(ks[2], (20, 10, 5, 5), jnp.float32) * 0.05
    p["conv2_b"] = jax.random.normal(ks[3], (20,), jnp.float32) * 0.05
    p["fc1_w"]   = jax.random.normal(ks[4], (50, 320), jnp.float32) * 0.05   # PyTorch [out, in]
    p["fc1_b"]   = jax.random.normal(ks[5], (50,), jnp.float32) * 0.05
    p["fc2_w"]   = jax.random.normal(ks[6], (10, 50), jnp.float32) * 0.10
    p["fc2_b"]   = jax.random.normal(ks[7], (10,), jnp.float32) * 0.10
    return p


def pack_params(p):
    """One-time repack of PyTorch-layout weights into banded / lane-dense layouts."""
    f32 = np.float32
    w1 = np.asarray(p["conv1_w"], f32)      # [10, 1, 5, 5]
    b1 = np.asarray(p["conv1_b"], f32)      # [10]
    w2 = np.asarray(p["conv2_w"], f32)      # [20, 10, 5, 5]
    b2 = np.asarray(p["conv2_b"], f32)      # [20]
    f1w = np.asarray(p["fc1_w"], f32)       # [50, 320]
    f1b = np.asarray(p["fc1_b"], f32)       # [50]
    f2w = np.asarray(p["fc2_w"], f32)       # [10, 50]
    f2b = np.asarray(p["fc2_b"], f32)       # [10]

    # conv1 bands: band1[b, di, k, v*10+c] = w1[c, 0, di, dj] with k = 2v + b + dj.
    band1 = np.zeros((2, 5, LANES, LANES), f32)
    for b in range(2):
        for di in range(5):
            for v in range(12):
                for dj in range(5):
                    band1[b, di, 2 * v + b + dj, v * 10:(v + 1) * 10] = w1[:, 0, di, dj]
    bias1 = np.zeros((1, LANES), f32)
    bias1[0, :120] = np.tile(b1, 12)

    # conv2 bands: band2[b2, di, v*10+ci, v2*20+co] = w2[co, ci, di, dj] with v = 2v2 + b2 + dj.
    band2 = np.zeros((2, 5, LANES, LANES), f32)
    for b2_ in range(2):
        for di in range(5):
            for v2 in range(4):
                for dj in range(5):
                    v = 2 * v2 + b2_ + dj
                    band2[b2_, di, v * 10:(v + 1) * 10, v2 * 20:(v2 + 1) * 20] = \
                        w2[:, :, di, dj].T
    bias2 = np.zeros((1, LANES), f32)
    bias2[0, :80] = np.tile(b2, 4)

    # fc1: PyTorch flatten order is (co, h, w) -> feature f = co*16 + u2*4 + v2.
    fw1 = np.zeros((4, LANES, LANES), f32)
    for u2 in range(4):
        for v2 in range(4):
            for co in range(20):
                fw1[u2, v2 * 20 + co, :50] = f1w[:, co * 16 + u2 * 4 + v2]
    fb1 = np.zeros((1, LANES), f32)
    fb1[0, :50] = f1b

    fw2 = np.zeros((LANES, LANES), f32)
    fw2[:50, :NCLS] = f2w.T
    fb2 = np.zeros((1, LANES), f32)
    fb2[0, :NCLS] = f2b

    arrays = dict(band1=band1, bias1=bias1, band2=band2, bias2=bias2,
                  fw1=fw1, fb1=fb1, fw2=fw2, fb2=fb2)
    return {k: jnp.asarray(v) for k, v in arrays.items()}


# --------------------------------- forward ----------------------------------


@functools.partial(jax.jit, static_argnames=("bm",))
def net_forward(packed, x_nchw, bm=8):
    """x_nchw: [B, 1, 28, 28].  Returns [B, 10] log-probabilities.

    bm = images per grid step (multiple of 8).  Raise it (64..128) for throughput on real
    batches; the grid is sharded across TensorCores via dimension_semantics=("parallel",).
    """
    assert bm % 8 == 0 and bm > 0
    B = x_nchw.shape[0]
    n_blocks = -(-B // bm)
    bpad = n_blocks * bm

    # Pure relayout: split image rows by parity, batch in sublanes, 28 columns zero-padded
    # to 128 lanes.  xph[p, r, m, k] = image[m, 2r + p, k].
    x = x_nchw[:, 0].astype(jnp.float32)
    x = jnp.pad(x, ((0, bpad - B), (0, 0), (0, LANES - 28)))
    xph = jnp.transpose(jnp.stack([x[:, 0::2, :], x[:, 1::2, :]], axis=0), (0, 2, 1, 3))

    const4 = lambda g: (0, 0, 0, 0)
    const3 = lambda g: (0, 0, 0)
    const2 = lambda g: (0, 0)

    out = pl.pallas_call(
        net_kernel,
        out_shape=jax.ShapeDtypeStruct((bpad, LANES), jnp.float32),
        grid_spec=pltpu.PrefetchScalarGridSpec(
            num_scalar_prefetch=0,
            grid=(n_blocks,),
            in_specs=[
                pl.BlockSpec((2, 14, bm, LANES), lambda g: (0, 0, g, 0)),   # x (batch block)
                pl.BlockSpec((2, 5, LANES, LANES), const4),                 # band1
                pl.BlockSpec((1, LANES), const2),                           # bias1
                pl.BlockSpec((2, 5, LANES, LANES), const4),                 # band2
                pl.BlockSpec((1, LANES), const2),                           # bias2
                pl.BlockSpec((4, LANES, LANES), const3),                    # fw1
                pl.BlockSpec((1, LANES), const2),                           # fb1
                pl.BlockSpec((LANES, LANES), const2),                       # fw2
                pl.BlockSpec((1, LANES), const2),                           # fb2
            ],
            out_specs=pl.BlockSpec((bm, LANES), lambda g: (g, 0)),
            scratch_shapes=[pltpu.VMEM((2, 6 * bm, LANES), jnp.float32)],
        ),
        compiler_params=pltpu.CompilerParams(
            dimension_semantics=("parallel",),
            vmem_limit_bytes=32 * 1024 * 1024),
    )(xph, packed["band1"], packed["bias1"], packed["band2"], packed["bias2"],
      packed["fw1"], packed["fb1"], packed["fw2"], packed["fb2"])
    return out[:B, :NCLS]


# ------------------------------ plain-JAX reference ------------------------------


def reference_forward(p, x_nchw):
    x = x_nchw.astype(jnp.float32)
    dn = ("NCHW", "OIHW", "NCHW")

    def pool2(y):
        y = jnp.maximum(jnp.maximum(y[:, :, 0::2, 0::2], y[:, :, 0::2, 1::2]),
                        jnp.maximum(y[:, :, 1::2, 0::2], y[:, :, 1::2, 1::2]))
        return jnp.maximum(y, 0.0)

    y = jax.lax.conv_general_dilated(x, p["conv1_w"], (1, 1), "VALID",
                                     dimension_numbers=dn)
    y = pool2(y + p["conv1_b"][None, :, None, None])
    y = jax.lax.conv_general_dilated(y, p["conv2_w"], (1, 1), "VALID",
                                     dimension_numbers=dn)
    y = pool2(y + p["conv2_b"][None, :, None, None])
    y = y.reshape(y.shape[0], 320)
    y = jnp.maximum(y @ p["fc1_w"].T + p["fc1_b"], 0.0)
    y = y @ p["fc2_w"].T + p["fc2_b"]
    return jax.nn.log_softmax(y, axis=-1)


if __name__ == "__main__":
    key = jax.random.PRNGKey(0)
    pkey, xkey = jax.random.split(key)
    params = init_params(pkey)
    packed = pack_params(params)          # one-time weight repack (off the forward path)

    # MNIST-shaped input (28x28 required by the 320-wide flatten); B=18 deliberately not a
    # multiple of bm=8 to exercise batch padding and a multi-step grid.
    B = 18
    x = jax.random.normal(xkey, (B, 1, 28, 28), dtype=jnp.float32)

    out = jax.block_until_ready(net_forward(packed, x))
    assert out.shape == (B, NCLS)

    ref = jax.block_until_ready(reference_forward(params, x))
    err = float(jnp.max(jnp.abs(out - ref)))
    assert err < 5e-3, f"mismatch vs plain-JAX reference: {err}"

    print("KERNEL_OK")
</pallas_src>

<mosaic_0001>
module attributes {stable_mosaic.version = 11 : i64} {
  func.func @net_kernel(%arg0: i32, %arg1: memref<2x14x8x128xf32, #tpu.memory_space<vmem>>, %arg2: memref<2x5x128x128xf32, #tpu.memory_space<vmem>>, %arg3: memref<1x128xf32, #tpu.memory_space<vmem>>, %arg4: memref<2x5x128x128xf32, #tpu.memory_space<vmem>>, %arg5: memref<1x128xf32, #tpu.memory_space<vmem>>, %arg6: memref<4x128x128xf32, #tpu.memory_space<vmem>>, %arg7: memref<1x128xf32, #tpu.memory_space<vmem>>, %arg8: memref<128x128xf32, #tpu.memory_space<vmem>>, %arg9: memref<1x128xf32, #tpu.memory_space<vmem>>, %arg10: memref<8x128xf32, #tpu.memory_space<vmem>>, %arg11: memref<2x48x128xf32, #tpu.memory_space<vmem>>) attributes {dimension_semantics = [#tpu.dimension_semantics<parallel>], iteration_bounds = array<i64: 3>, scalar_prefetch = 0 : i64, scratch_operands = 1 : i64, tpu.core_type = #tpu.core_type<tc>, window_params = [{transform_indices = @transform_0, window_bounds = array<i64: 2, 14, 8, 128>}, {pipeline_mode = #tpu.pipeline_mode<synchronous>, transform_indices = @transform_1, window_bounds = array<i64: 2, 5, 128, 128>}, {pipeline_mode = #tpu.pipeline_mode<synchronous>, transform_indices = @transform_2, window_bounds = array<i64: 1, 128>}, {pipeline_mode = #tpu.pipeline_mode<synchronous>, transform_indices = @transform_3, window_bounds = array<i64: 2, 5, 128, 128>}, {pipeline_mode = #tpu.pipeline_mode<synchronous>, transform_indices = @transform_4, window_bounds = array<i64: 1, 128>}, {pipeline_mode = #tpu.pipeline_mode<synchronous>, transform_indices = @transform_5, window_bounds = array<i64: 4, 128, 128>}, {pipeline_mode = #tpu.pipeline_mode<synchronous>, transform_indices = @transform_6, window_bounds = array<i64: 1, 128>}, {pipeline_mode = #tpu.pipeline_mode<synchronous>, transform_indices = @transform_7, window_bounds = array<i64: 128, 128>}, {pipeline_mode = #tpu.pipeline_mode<synchronous>, transform_indices = @transform_8, window_bounds = array<i64: 1, 128>}, {transform_indices = @transform_9, window_bounds = array<i64: 8, 128>}]} {
    %c0 = arith.constant 0 : index
    %c0_0 = arith.constant 0 : index
    %c0_1 = arith.constant 0 : index
    %c0_2 = arith.constant 0 : index
    %0 = vector.load %arg1[%c0, %c0_0, %c0_1, %c0_2] : memref<2x14x8x128xf32, #tpu.memory_space<vmem>>, vector<1x12x8x128xf32>
    %1 = vector.shape_cast %0 : vector<1x12x8x128xf32> to vector<12x8x128xf32>
    %2 = vector.shape_cast %1 : vector<12x8x128xf32> to vector<96x128xf32>
    %c1 = arith.constant 1 : index
    %c0_3 = arith.constant 0 : index
    %c0_4 = arith.constant 0 : index
    %c0_5 = arith.constant 0 : index
    %3 = vector.load %arg1[%c1, %c0_3, %c0_4, %c0_5] : memref<2x14x8x128xf32, #tpu.memory_space<vmem>>, vector<1x12x8x128xf32>
    %4 = vector.shape_cast %3 : vector<1x12x8x128xf32> to vector<12x8x128xf32>
    %5 = vector.shape_cast %4 : vector<12x8x128xf32> to vector<96x128xf32>
    %c0_6 = arith.constant 0 : index
    %c1_7 = arith.constant 1 : index
    %c0_8 = arith.constant 0 : index
    %c0_9 = arith.constant 0 : index
    %6 = vector.load %arg1[%c0_6, %c1_7, %c0_8, %c0_9] : memref<2x14x8x128xf32, #tpu.memory_space<vmem>>, vector<1x12x8x128xf32>
    %7 = vector.shape_cast %6 : vector<1x12x8x128xf32> to vector<12x8x128xf32>
    %8 = vector.shape_cast %7 : vector<12x8x128xf32> to vector<96x128xf32>
    %c1_10 = arith.constant 1 : index
    %c1_11 = arith.constant 1 : index
    %c0_12 = arith.constant 0 : index
    %c0_13 = arith.constant 0 : index
    %9 = vector.load %arg1[%c1_10, %c1_11, %c0_12, %c0_13] : memref<2x14x8x128xf32, #tpu.memory_space<vmem>>, vector<1x12x8x128xf32>
    %10 = vector.shape_cast %9 : vector<1x12x8x128xf32> to vector<12x8x128xf32>
    %11 = vector.shape_cast %10 : vector<12x8x128xf32> to vector<96x128xf32>
    %c0_14 = arith.constant 0 : index
    %c2 = arith.constant 2 : index
    %c0_15 = arith.constant 0 : index
    %c0_16 = arith.constant 0 : index
    %12 = vector.load %arg1[%c0_14, %c2, %c0_15, %c0_16] : memref<2x14x8x128xf32, #tpu.memory_space<vmem>>, vector<1x12x8x128xf32>
    %13 = vector.shape_cast %12 : vector<1x12x8x128xf32> to vector<12x8x128xf32>
    %14 = vector.shape_cast %13 : vector<12x8x128xf32> to vector<96x128xf32>
    %c1_17 = arith.constant 1 : index
    %c2_18 = arith.constant 2 : index
    %c0_19 = arith.constant 0 : index
    %c0_20 = arith.constant 0 : index
    %15 = vector.load %arg1[%c1_17, %c2_18, %c0_19, %c0_20] : memref<2x14x8x128xf32, #tpu.memory_space<vmem>>, vector<1x12x8x128xf32>
    %16 = vector.shape_cast %15 : vector<1x12x8x128xf32> to vector<12x8x128xf32>
    %17 = vector.shape_cast %16 : vector<12x8x128xf32> to vector<96x128xf32>
    %c0_21 = arith.constant 0 : index
    %c0_22 = arith.constant 0 : index
    %c0_23 = arith.constant 0 : index
    %c0_24 = arith.constant 0 : index
    %18 = vector.load %arg2[%c0_21, %c0_22, %c0_23, %c0_24] : memref<2x5x128x128xf32, #tpu.memory_space<vmem>>, vector<1x1x128x128xf32>
    %19 = vector.shape_cast %18 : vector<1x1x128x128xf32> to vector<128x128xf32>
    %cst = arith.constant dense<0.000000e+00> : vector<96x128xf32>
    %20 = tpu.matmul %2, %19, %cst {dimension_numbers = #tpu.dot_dimension_numbers<[1], [0], [0], [1], [0, 0, 1, 1], [], []>} : vector<96x128xf32>, vector<128x128xf32>, vector<96x128xf32> -> vector<96x128xf32>
    %c0_25 = arith.constant 0 : index
    %c1_26 = arith.constant 1 : index
    %c0_27 = arith.constant 0 : index
    %c0_28 = arith.constant 0 : index
    %21 = vector.load %arg2[%c0_25, %c1_26, %c0_27, %c0_28] : memref<2x5x128x128xf32, #tpu.memory_space<vmem>>, vector<1x1x128x128xf32>
    %22 = vector.shape_cast %21 : vector<1x1x128x128xf32> to vector<128x128xf32>
    %cst_29 = arith.constant dense<0.000000e+00> : vector<96x128xf32>
    %23 = tpu.matmul %5, %22, %cst_29 {dimension_numbers = #tpu.dot_dimension_numbers<[1], [0], [0], [1], [0, 0, 1, 1], [], []>} : vector<96x128xf32>, vector<128x128xf32>, vector<96x128xf32> -> vector<96x128xf32>
    %24 = arith.addf %20, %23 : vector<96x128xf32>
    %c0_30 = arith.constant 0 : index
    %c2_31 = arith.constant 2 : index
    %c0_32 = arith.constant 0 : index
    %c0_33 = arith.constant 0 : index
    %25 = vector.load %arg2[%c0_30, %c2_31, %c0_32, %c0_33] : memref<2x5x128x128xf32, #tpu.memory_space<vmem>>, vector<1x1x128x128xf32>
    %26 = vector.shape_cast %25 : vector<1x1x128x128xf32> to vector<128x128xf32>
    %cst_34 = arith.constant dense<0.000000e+00> : vector<96x128xf32>
    %27 = tpu.matmul %8, %26, %cst_34 {dimension_numbers = #tpu.dot_dimension_numbers<[1], [0], [0], [1], [0, 0, 1, 1], [], []>} : vector<96x128xf32>, vector<128x128xf32>, vector<96x128xf32> -> vector<96x128xf32>
    %28 = arith.addf %24, %27 : vector<96x128xf32>
    %c0_35 = arith.constant 0 : index
    %c3 = arith.constant 3 : index
    %c0_36 = arith.constant 0 : index
    %c0_37 = arith.constant 0 : index
    %29 = vector.load %arg2[%c0_35, %c3, %c0_36, %c0_37] : memref<2x5x128x128xf32, #tpu.memory_space<vmem>>, vector<1x1x128x128xf32>
    %30 = vector.shape_cast %29 : vector<1x1x128x128xf32> to vector<128x128xf32>
    %cst_38 = arith.constant dense<0.000000e+00> : vector<96x128xf32>
    %31 = tpu.matmul %11, %30, %cst_38 {dimension_numbers = #tpu.dot_dimension_numbers<[1], [0], [0], [1], [0, 0, 1, 1], [], []>} : vector<96x128xf32>, vector<128x128xf32>, vector<96x128xf32> -> vector<96x128xf32>
    %32 = arith.addf %28, %31 : vector<96x128xf32>
    %c0_39 = arith.constant 0 : index
    %c4 = arith.constant 4 : index
    %c0_40 = arith.constant 0 : index
    %c0_41 = arith.constant 0 : index
    %33 = vector.load %arg2[%c0_39, %c4, %c0_40, %c0_41] : memref<2x5x128x128xf32, #tpu.memory_space<vmem>>, vector<1x1x128x128xf32>
    %34 = vector.shape_cast %33 : vector<1x1x128x128xf32> to vector<128x128xf32>
    %cst_42 = arith.constant dense<0.000000e+00> : vector<96x128xf32>
    %35 = tpu.matmul %14, %34, %cst_42 {dimension_numbers = #tpu.dot_dimension_numbers<[1], [0], [0], [1], [0, 0, 1, 1], [], []>} : vector<96x128xf32>, vector<128x128xf32>, vector<96x128xf32> -> vector<96x128xf32>
    %36 = arith.addf %32, %35 : vector<96x128xf32>
    %c1_43 = arith.constant 1 : index
    %c0_44 = arith.constant 0 : index
    %c0_45 = arith.constant 0 : index
    %c0_46 = arith.constant 0 : index
    %37 = vector.load %arg2[%c1_43, %c0_44, %c0_45, %c0_46] : memref<2x5x128x128xf32, #tpu.memory_space<vmem>>, vector<1x1x128x128xf32>
    %38 = vector.shape_cast %37 : vector<1x1x128x128xf32> to vector<128x128xf32>
    %cst_47 = arith.constant dense<0.000000e+00> : vector<96x128xf32>
    %39 = tpu.matmul %2, %38, %cst_47 {dimension_numbers = #tpu.dot_dimension_numbers<[1], [0], [0], [1], [0, 0, 1, 1], [], []>} : vector<96x128xf32>, vector<128x128xf32>, vector<96x128xf32> -> vector<96x128xf32>
    %c1_48 = arith.constant 1 : index
    %c1_49 = arith.constant 1 : index
    %c0_50 = arith.constant 0 : index
    %c0_51 = arith.constant 0 : index
    %40 = vector.load %arg2[%c1_48, %c1_49, %c0_50, %c0_51] : memref<2x5x128x128xf32, #tpu.memory_space<vmem>>, vector<1x1x128x128xf32>
    %41 = vector.shape_cast %40 : vector<1x1x128x128xf32> to vector<128x128xf32>
    %cst_52 = arith.constant dense<0.000000e+00> : vector<96x128xf32>
    %42 = tpu.matmul %5, %41, %cst_52 {dimension_numbers = #tpu.dot_dimension_numbers<[1], [0], [0], [1], [0, 0, 1, 1], [], []>} : vector<96x128xf32>, vector<128x128xf32>, vector<96x128xf32> -> vector<96x128xf32>
    %43 = arith.addf %39, %42 : vector<96x128xf32>
    %c1_53 = arith.constant 1 : index
    %c2_54 = arith.constant 2 : index
    %c0_55 = arith.constant 0 : index
    %c0_56 = arith.constant 0 : index
    %44 = vector.load %arg2[%c1_53, %c2_54, %c0_55, %c0_56] : memref<2x5x128x128xf32, #tpu.memory_space<vmem>>, vector<1x1x128x128xf32>
    %45 = vector.shape_cast %44 : vector<1x1x128x128xf32> to vector<128x128xf32>
    %cst_57 = arith.constant dense<0.000000e+00> : vector<96x128xf32>
    %46 = tpu.matmul %8, %45, %cst_57 {dimension_numbers = #tpu.dot_dimension_numbers<[1], [0], [0], [1], [0, 0, 1, 1], [], []>} : vector<96x128xf32>, vector<128x128xf32>, vector<96x128xf32> -> vector<96x128xf32>
    %47 = arith.addf %43, %46 : vector<96x128xf32>
    %c1_58 = arith.constant 1 : index
    %c3_59 = arith.constant 3 : index
    %c0_60 = arith.constant 0 : index
    %c0_61 = arith.constant 0 : index
    %48 = vector.load %arg2[%c1_58, %c3_59, %c0_60, %c0_61] : memref<2x5x128x128xf32, #tpu.memory_space<vmem>>, vector<1x1x128x128xf32>
    %49 = vector.shape_cast %48 : vector<1x1x128x128xf32> to vector<128x128xf32>
    %cst_62 = arith.constant dense<0.000000e+00> : vector<96x128xf32>
    %50 = tpu.matmul %11, %49, %cst_62 {dimension_numbers = #tpu.dot_dimension_numbers<[1], [0], [0], [1], [0, 0, 1, 1], [], []>} : vector<96x128xf32>, vector<128x128xf32>, vector<96x128xf32> -> vector<96x128xf32>
    %51 = arith.addf %47, %50 : vector<96x128xf32>
    %c1_63 = arith.constant 1 : index
    %c4_64 = arith.constant 4 : index
    %c0_65 = arith.constant 0 : index
    %c0_66 = arith.constant 0 : index
    %52 = vector.load %arg2[%c1_63, %c4_64, %c0_65, %c0_66] : memref<2x5x128x128xf32, #tpu.memory_space<vmem>>, vector<1x1x128x128xf32>
    %53 = vector.shape_cast %52 : vector<1x1x128x128xf32> to vector<128x128xf32>
    %cst_67 = arith.constant dense<0.000000e+00> : vector<96x128xf32>
    %54 = tpu.matmul %14, %53, %cst_67 {dimension_numbers = #tpu.dot_dimension_numbers<[1], [0], [0], [1], [0, 0, 1, 1], [], []>} : vector<96x128xf32>, vector<128x128xf32>, vector<96x128xf32> -> vector<96x128xf32>
    %55 = arith.addf %51, %54 : vector<96x128xf32>
    %56 = arith.maximumf %36, %55 : vector<96x128xf32>
    %c0_68 = arith.constant 0 : index
    %c0_69 = arith.constant 0 : index
    %c0_70 = arith.constant 0 : index
    %c0_71 = arith.constant 0 : index
    %57 = vector.load %arg2[%c0_68, %c0_69, %c0_70, %c0_71] : memref<2x5x128x128xf32, #tpu.memory_space<vmem>>, vector<1x1x128x128xf32>
    %58 = vector.shape_cast %57 : vector<1x1x128x128xf32> to vector<128x128xf32>
    %cst_72 = arith.constant dense<0.000000e+00> : vector<96x128xf32>
    %59 = tpu.matmul %5, %58, %cst_72 {dimension_numbers = #tpu.dot_dimension_numbers<[1], [0], [0], [1], [0, 0, 1, 1], [], []>} : vector<96x128xf32>, vector<128x128xf32>, vector<96x128xf32> -> vector<96x128xf32>
    %c0_73 = arith.constant 0 : index
    %c1_74 = arith.constant 1 : index
    %c0_75 = arith.constant 0 : index
    %c0_76 = arith.constant 0 : index
    %60 = vector.load %arg2[%c0_73, %c1_74, %c0_75, %c0_76] : memref<2x5x128x128xf32, #tpu.memory_space<vmem>>, vector<1x1x128x128xf32>
    %61 = vector.shape_cast %60 : vector<1x1x128x128xf32> to vector<128x128xf32>
    %cst_77 = arith.constant dense<0.000000e+00> : vector<96x128xf32>
    %62 = tpu.matmul %8, %61, %cst_77 {dimension_numbers = #tpu.dot_dimension_numbers<[1], [0], [0], [1], [0, 0, 1, 1], [], []>} : vector<96x128xf32>, vector<128x128xf32>, vector<96x128xf32> -> vector<96x128xf32>
    %63 = arith.addf %59, %62 : vector<96x128xf32>
    %c0_78 = arith.constant 0 : index
    %c2_79 = arith.constant 2 : index
    %c0_80 = arith.constant 0 : index
    %c0_81 = arith.constant 0 : index
    %64 = vector.load %arg2[%c0_78, %c2_79, %c0_80, %c0_81] : memref<2x5x128x128xf32, #tpu.memory_space<vmem>>, vector<1x1x128x128xf32>
    %65 = vector.shape_cast %64 : vector<1x1x128x128xf32> to vector<128x128xf32>
    %cst_82 = arith.constant dense<0.000000e+00> : vector<96x128xf32>
    %66 = tpu.matmul %11, %65, %cst_82 {dimension_numbers = #tpu.dot_dimension_numbers<[1], [0], [0], [1], [0, 0, 1, 1], [], []>} : vector<96x128xf32>, vector<128x128xf32>, vector<96x128xf32> -> vector<96x128xf32>
    %67 = arith.addf %63, %66 : vector<96x128xf32>
    %c0_83 = arith.constant 0 : index
    %c3_84 = arith.constant 3 : index
    %c0_85 = arith.constant 0 : index
    %c0_86 = arith.constant 0 : index
    %68 = vector.load %arg2[%c0_83, %c3_84, %c0_85, %c0_86] : memref<2x5x128x128xf32, #tpu.memory_space<vmem>>, vector<1x1x128x128xf32>
    %69 = vector.shape_cast %68 : vector<1x1x128x128xf32> to vector<128x128xf32>
    %cst_87 = arith.constant dense<0.000000e+00> : vector<96x128xf32>
    %70 = tpu.matmul %14, %69, %cst_87 {dimension_numbers = #tpu.dot_dimension_numbers<[1], [0], [0], [1], [0, 0, 1, 1], [], []>} : vector<96x128xf32>, vector<128x128xf32>, vector<96x128xf32> -> vector<96x128xf32>
    %71 = arith.addf %67, %70 : vector<96x128xf32>
    %c0_88 = arith.constant 0 : index
    %c4_89 = arith.constant 4 : index
    %c0_90 = arith.constant 0 : index
    %c0_91 = arith.constant 0 : index
    %72 = vector.load %arg2[%c0_88, %c4_89, %c0_90, %c0_91] : memref<2x5x128x128xf32, #tpu.memory_space<vmem>>, vector<1x1x128x128xf32>
    %73 = vector.shape_cast %72 : vector<1x1x128x128xf32> to vector<128x128xf32>
    %cst_92 = arith.constant dense<0.000000e+00> : vector<96x128xf32>
    %74 = tpu.matmul %17, %73, %cst_92 {dimension_numbers = #tpu.dot_dimension_numbers<[1], [0], [0], [1], [0, 0, 1, 1], [], []>} : vector<96x128xf32>, vector<128x128xf32>, vector<96x128xf32> -> vector<96x128xf32>
    %75 = arith.addf %71, %74 : vector<96x128xf32>
    %76 = arith.maximumf %56, %75 : vector<96x128xf32>
    %c1_93 = arith.constant 1 : index
    %c0_94 = arith.constant 0 : index
    %c0_95 = arith.constant 0 : index
    %c0_96 = arith.constant 0 : index
    %77 = vector.load %arg2[%c1_93, %c0_94, %c0_95, %c0_96] : memref<2x5x128x128xf32, #tpu.memory_space<vmem>>, vector<1x1x128x128xf32>
    %78 = vector.shape_cast %77 : vector<1x1x128x128xf32> to vector<128x128xf32>
    %cst_97 = arith.constant dense<0.000000e+00> : vector<96x128xf32>
    %79 = tpu.matmul %5, %78, %cst_97 {dimension_numbers = #tpu.dot_dimension_numbers<[1], [0], [0], [1], [0, 0, 1, 1], [], []>} : vector<96x128xf32>, vector<128x128xf32>, vector<96x128xf32> -> vector<96x128xf32>
    %c1_98 = arith.constant 1 : index
    %c1_99 = arith.constant 1 : index
    %c0_100 = arith.constant 0 : index
    %c0_101 = arith.constant 0 : index
    %80 = vector.load %arg2[%c1_98, %c1_99, %c0_100, %c0_101] : memref<2x5x128x128xf32, #tpu.memory_space<vmem>>, vector<1x1x128x128xf32>
    %81 = vector.shape_cast %80 : vector<1x1x128x128xf32> to vector<128x128xf32>
    %cst_102 = arith.constant dense<0.000000e+00> : vector<96x128xf32>
    %82 = tpu.matmul %8, %81, %cst_102 {dimension_numbers = #tpu.dot_dimension_numbers<[1], [0], [0], [1], [0, 0, 1, 1], [], []>} : vector<96x128xf32>, vector<128x128xf32>, vector<96x128xf32> -> vector<96x128xf32>
    %83 = arith.addf %79, %82 : vector<96x128xf32>
    %c1_103 = arith.constant 1 : index
    %c2_104 = arith.constant 2 : index
    %c0_105 = arith.constant 0 : index
    %c0_106 = arith.constant 0 : index
    %84 = vector.load %arg2[%c1_103, %c2_104, %c0_105, %c0_106] : memref<2x5x128x128xf32, #tpu.memory_space<vmem>>, vector<1x1x128x128xf32>
    %85 = vector.shape_cast %84 : vector<1x1x128x128xf32> to vector<128x128xf32>
    %cst_107 = arith.constant dense<0.000000e+00> : vector<96x128xf32>
    %86 = tpu.matmul %11, %85, %cst_107 {dimension_numbers = #tpu.dot_dimension_numbers<[1], [0], [0], [1], [0, 0, 1, 1], [], []>} : vector<96x128xf32>, vector<128x128xf32>, vector<96x128xf32> -> vector<96x128xf32>
    %87 = arith.addf %83, %86 : vector<96x128xf32>
    %c1_108 = arith.constant 1 : index
    %c3_109 = arith.constant 3 : index
    %c0_110 = arith.constant 0 : index
    %c0_111 = arith.constant 0 : index
    %88 = vector.load %arg2[%c1_108, %c3_109, %c0_110, %c0_111] : memref<2x5x128x128xf32, #tpu.memory_space<vmem>>, vector<1x1x128x128xf32>
    %89 = vector.shape_cast %88 : vector<1x1x128x128xf32> to vector<128x128xf32>
    %cst_112 = arith.constant dense<0.000000e+00> : vector<96x128xf32>
    %90 = tpu.matmul %14, %89, %cst_112 {dimension_numbers = #tpu.dot_dimension_numbers<[1], [0], [0], [1], [0, 0, 1, 1], [], []>} : vector<96x128xf32>, vector<128x128xf32>, vector<96x128xf32> -> vector<96x128xf32>
    %91 = arith.addf %87, %90 : vector<96x128xf32>
    %c1_113 = arith.constant 1 : index
    %c4_114 = arith.constant 4 : index
    %c0_115 = arith.constant 0 : index
    %c0_116 = arith.constant 0 : index
    %92 = vector.load %arg2[%c1_113, %c4_114, %c0_115, %c0_116] : memref<2x5x128x128xf32, #tpu.memory_space<vmem>>, vector<1x1x128x128xf32>
    %93 = vector.shape_cast %92 : vector<1x1x128x128xf32> to vector<128x128xf32>
    %cst_117 = arith.constant dense<0.000000e+00> : vector<96x128xf32>
    %94 = tpu.matmul %17, %93, %cst_117 {dimension_numbers = #tpu.dot_dimension_numbers<[1], [0], [0], [1], [0, 0, 1, 1], [], []>} : vector<96x128xf32>, vector<128x128xf32>, vector<96x128xf32> -> vector<96x128xf32>
    %95 = arith.addf %91, %94 : vector<96x128xf32>
    %96 = arith.maximumf %76, %95 : vector<96x128xf32>
    %c0_118 = arith.constant 0 : index
    %c0_119 = arith.constant 0 : index
    %97 = vector.load %arg3[%c0_118, %c0_119] : memref<1x128xf32, #tpu.memory_space<vmem>>, vector<1x128xf32>
    %98 = vector.broadcast %97 : vector<1x128xf32> to vector<96x128xf32>
    %99 = arith.addf %96, %98 : vector<96x128xf32>
    %cst_120 = arith.constant 0.000000e+00 : f32
    %100 = vector.broadcast %cst_120 : f32 to vector<96x128xf32>
    %101 = arith.maximumf %99, %100 : vector<96x128xf32>
    %102 = vector.extract_strided_slice %101 {offsets = [0, 0], sizes = [8, 128], strides = [1, 1]} : vector<96x128xf32> to vector<8x128xf32>
    %c0_121 = arith.constant 0 : index
    %c0_122 = arith.constant 0 : index
    %c0_123 = arith.constant 0 : index
    %103 = vector.load %arg11[%c0_121, %c0_122, %c0_123] : memref<2x48x128xf32, #tpu.memory_space<vmem>>, vector<1x8x128xf32>
    %104 = vector.shape_cast %103 : vector<1x8x128xf32> to vector<8x128xf32>
    %105 = vector.shape_cast %102 : vector<8x128xf32> to vector<1x8x128xf32>
    tpu.vector_store %arg11[%c0_121, %c0_122, %c0_123], %105 {strides = array<i32>} : memref<2x48x128xf32, #tpu.memory_space<vmem>>, vector<1x8x128xf32>,
    %106 = vector.extract_strided_slice %101 {offsets = [8, 0], sizes = [8, 128], strides = [1, 1]} : vector<96x128xf32> to vector<8x128xf32>
    %c1_124 = arith.constant 1 : index
    %c0_125 = arith.constant 0 : index
    %c0_126 = arith.constant 0 : index
    %107 = vector.load %arg11[%c1_124, %c0_125, %c0_126] : memref<2x48x128xf32, #tpu.memory_space<vmem>>, vector<1x8x128xf32>
    %108 = vector.shape_cast %107 : vector<1x8x128xf32> to vector<8x128xf32>
    %109 = vector.shape_cast %106 : vector<8x128xf32> to vector<1x8x128xf32>
    tpu.vector_store %arg11[%c1_124, %c0_125, %c0_126], %109 {strides = array<i32>} : memref<2x48x128xf32, #tpu.memory_space<vmem>>, vector<1x8x128xf32>,
    %110 = vector.extract_strided_slice %101 {offsets = [16, 0], sizes = [8, 128], strides = [1, 1]} : vector<96x128xf32> to vector<8x128xf32>
    %c0_127 = arith.constant 0 : index
    %c8 = arith.constant 8 : index
    %c0_128 = arith.constant 0 : index
    %111 = vector.load %arg11[%c0_127, %c8, %c0_128] : memref<2x48x128xf32, #tpu.memory_space<vmem>>, vector<1x8x128xf32>
    %112 = vector.shape_cast %111 : vector<1x8x128xf32> to vector<8x128xf32>
    %113 = vector.shape_cast %110 : vector<8x128xf32> to vector<1x8x128xf32>
    tpu.vector_store %arg11[%c0_127, %c8, %c0_128], %113 {strides = array<i32>} : memref<2x48x128xf32, #tpu.memory_space<vmem>>, vector<1x8x128xf32>,
    %114 = vector.extract_strided_slice %101 {offsets = [24, 0], sizes = [8, 128], strides = [1, 1]} : vector<96x128xf32> to vector<8x128xf32>
    %c1_129 = arith.constant 1 : index
    %c8_130 = arith.constant 8 : index
    %c0_131 = arith.constant 0 : index
    %115 = vector.load %arg11[%c1_129, %c8_130, %c0_131] : memref<2x48x128xf32, #tpu.memory_space<vmem>>, vector<1x8x128xf32>
    %116 = vector.shape_cast %115 : vector<1x8x128xf32> to vector<8x128xf32>
    %117 = vector.shape_cast %114 : vector<8x128xf32> to vector<1x8x128xf32>
    tpu.vector_store %arg11[%c1_129, %c8_130, %c0_131], %117 {strides = array<i32>} : memref<2x48x128xf32, #tpu.memory_space<vmem>>, vector<1x8x128xf32>,
    %118 = vector.extract_strided_slice %101 {offsets = [32, 0], sizes = [8, 128], strides = [1, 1]} : vector<96x128xf32> to vector<8x128xf32>
    %c0_132 = arith.constant 0 : index
    %c16 = arith.constant 16 : index
    %c0_133 = arith.constant 0 : index
    %119 = vector.load %arg11[%c0_132, %c16, %c0_133] : memref<2x48x128xf32, #tpu.memory_space<vmem>>, vector<1x8x128xf32>
    %120 = vector.shape_cast %119 : vector<1x8x128xf32> to vector<8x128xf32>
    %121 = vector.shape_cast %118 : vector<8x128xf32> to vector<1x8x128xf32>
    tpu.vector_store %arg11[%c0_132, %c16, %c0_133], %121 {strides = array<i32>} : memref<2x48x128xf32, #tpu.memory_space<vmem>>, vector<1x8x128xf32>,
    %122 = vector.extract_strided_slice %101 {offsets = [40, 0], sizes = [8, 128], strides = [1, 1]} : vector<96x128xf32> to vector<8x128xf32>
    %c1_134 = arith.constant 1 : index
    %c16_135 = arith.constant 16 : index
    %c0_136 = arith.constant 0 : index
    %123 = vector.load %arg11[%c1_134, %c16_135, %c0_136] : memref<2x48x128xf32, #tpu.memory_space<vmem>>, vector<1x8x128xf32>
    %124 = vector.shape_cast %123 : vector<1x8x128xf32> to vector<8x128xf32>
    %125 = vector.shape_cast %122 : vector<8x128xf32> to vector<1x8x128xf32>
    tpu.vector_store %arg11[%c1_134, %c16_135, %c0_136], %125 {strides = array<i32>} : memref<2x48x128xf32, #tpu.memory_space<vmem>>, vector<1x8x128xf32>,
    %126 = vector.extract_strided_slice %101 {offsets = [48, 0], sizes = [8, 128], strides = [1, 1]} : vector<96x128xf32> to vector<8x128xf32>
    %c0_137 = arith.constant 0 : index
    %c24 = arith.constant 24 : index
    %c0_138 = arith.constant 0 : index
    %127 = vector.load %arg11[%c0_137, %c24, %c0_138] : memref<2x48x128xf32, #tpu.memory_space<vmem>>, vector<1x8x128xf32>
    %128 = vector.shape_cast %127 : vector<1x8x128xf32> to vector<8x128xf32>
    %129 = vector.shape_cast %126 : vector<8x128xf32> to vector<1x8x128xf32>
    tpu.vector_store %arg11[%c0_137, %c24, %c0_138], %129 {strides = array<i32>} : memref<2x48x128xf32, #tpu.memory_space<vmem>>, vector<1x8x128xf32>,
    %130 = vector.extract_strided_slice %101 {offsets = [56, 0], sizes = [8, 128], strides = [1, 1]} : vector<96x128xf32> to vector<8x128xf32>
    %c1_139 = arith.constant 1 : index
    %c24_140 = arith.constant 24 : index
    %c0_141 = arith.constant 0 : index
    %131 = vector.load %arg11[%c1_139, %c24_140, %c0_141] : memref<2x48x128xf32, #tpu.memory_space<vmem>>, vector<1x8x128xf32>
    %132 = vector.shape_cast %131 : vector<1x8x128xf32> to vector<8x128xf32>
    %133 = vector.shape_cast %130 : vector<8x128xf32> to vector<1x8x128xf32>
    tpu.vector_store %arg11[%c1_139, %c24_140, %c0_141], %133 {strides = array<i32>} : memref<2x48x128xf32, #tpu.memory_space<vmem>>, vector<1x8x128xf32>,
    %134 = vector.extract_strided_slice %101 {offsets = [64, 0], sizes = [8, 128], strides = [1, 1]} : vector<96x128xf32> to vector<8x128xf32>
    %c0_142 = arith.constant 0 : index
    %c32 = arith.constant 32 : index
    %c0_143 = arith.constant 0 : index
    %135 = vector.load %arg11[%c0_142, %c32, %c0_143] : memref<2x48x128xf32, #tpu.memory_space<vmem>>, vector<1x8x128xf32>
    %136 = vector.shape_cast %135 : vector<1x8x128xf32> to vector<8x128xf32>
    %137 = vector.shape_cast %134 : vector<8x128xf32> to vector<1x8x128xf32>
    tpu.vector_store %arg11[%c0_142, %c32, %c0_143], %137 {strides = array<i32>} : memref<2x48x128xf32, #tpu.memory_space<vmem>>, vector<1x8x128xf32>,
    %138 = vector.extract_strided_slice %101 {offsets = [72, 0], sizes = [8, 128], strides = [1, 1]} : vector<96x128xf32> to vector<8x128xf32>
    %c1_144 = arith.constant 1 : index
    %c32_145 = arith.constant 32 : index
    %c0_146 = arith.constant 0 : index
    %139 = vector.load %arg11[%c1_144, %c32_145, %c0_146] : memref<2x48x128xf32, #tpu.memory_space<vmem>>, vector<1x8x128xf32>
    %140 = vector.shape_cast %139 : vector<1x8x128xf32> to vector<8x128xf32>
    %141 = vector.shape_cast %138 : vector<8x128xf32> to vector<1x8x128xf32>
    tpu.vector_store %arg11[%c1_144, %c32_145, %c0_146], %141 {strides = array<i32>} : memref<2x48x128xf32, #tpu.memory_space<vmem>>, vector<1x8x128xf32>,
    %142 = vector.extract_strided_slice %101 {offsets = [80, 0], sizes = [8, 128], strides = [1, 1]} : vector<96x128xf32> to vector<8x128xf32>
    %c0_147 = arith.constant 0 : index
    %c40 = arith.constant 40 : index
    %c0_148 = arith.constant 0 : index
    %143 = vector.load %arg11[%c0_147, %c40, %c0_148] : memref<2x48x128xf32, #tpu.memory_space<vmem>>, vector<1x8x128xf32>
    %144 = vector.shape_cast %143 : vector<1x8x128xf32> to vector<8x128xf32>
    %145 = vector.shape_cast %142 : vector<8x128xf32> to vector<1x8x128xf32>
    tpu.vector_store %arg11[%c0_147, %c40, %c0_148], %145 {strides = array<i32>} : memref<2x48x128xf32, #tpu.memory_space<vmem>>, vector<1x8x128xf32>,
    %146 = vector.extract_strided_slice %101 {offsets = [88, 0], sizes = [8, 128], strides = [1, 1]} : vector<96x128xf32> to vector<8x128xf32>
    %c1_149 = arith.constant 1 : index
    %c40_150 = arith.constant 40 : index
    %c0_151 = arith.constant 0 : index
    %147 = vector.load %arg11[%c1_149, %c40_150, %c0_151] : memref<2x48x128xf32, #tpu.memory_space<vmem>>, vector<1x8x128xf32>
    %148 = vector.shape_cast %147 : vector<1x8x128xf32> to vector<8x128xf32>
    %149 = vector.shape_cast %146 : vector<8x128xf32> to vector<1x8x128xf32>
    tpu.vector_store %arg11[%c1_149, %c40_150, %c0_151], %149 {strides = array<i32>} : memref<2x48x128xf32, #tpu.memory_space<vmem>>, vector<1x8x128xf32>,
    %c0_152 = arith.constant 0 : index
    %c0_153 = arith.constant 0 : index
    %c0_154 = arith.constant 0 : index
    %150 = vector.load %arg11[%c0_152, %c0_153, %c0_154] : memref<2x48x128xf32, #tpu.memory_space<vmem>>, vector<1x32x128xf32>
    %151 = vector.shape_cast %150 : vector<1x32x128xf32> to vector<32x128xf32>
    %c0_155 = arith.constant 0 : index
    %c0_156 = arith.constant 0 : index
    %c0_157 = arith.constant 0 : index
    %c0_158 = arith.constant 0 : index
    %152 = vector.load %arg4[%c0_155, %c0_156, %c0_157, %c0_158] : memref<2x5x128x128xf32, #tpu.memory_space<vmem>>, vector<1x1x128x128xf32>
    %153 = vector.shape_cast %152 : vector<1x1x128x128xf32> to vector<128x128xf32>
    %cst_159 = arith.constant dense<0.000000e+00> : vector<32x128xf32>
    %154 = tpu.matmul %151, %153, %cst_159 {dimension_numbers = #tpu.dot_dimension_numbers<[1], [0], [0], [1], [0, 0, 1, 1], [], []>} : vector<32x128xf32>, vector<128x128xf32>, vector<32x128xf32> -> vector<32x128xf32>
    %c1_160 = arith.constant 1 : index
    %c0_161 = arith.constant 0 : index
    %c0_162 = arith.constant 0 : index
    %155 = vector.load %arg11[%c1_160, %c0_161, %c0_162] : memref<2x48x128xf32, #tpu.memory_space<vmem>>, vector<1x32x128xf32>
    %156 = vector.shape_cast %155 : vector<1x32x128xf32> to vector<32x128xf32>
    %c0_163 = arith.constant 0 : index
    %c1_164 = arith.constant 1 : index
    %c0_165 = arith.constant 0 : index
    %c0_166 = arith.constant 0 : index
    %157 = vector.load %arg4[%c0_163, %c1_164, %c0_165, %c0_166] : memref<2x5x128x128xf32, #tpu.memory_space<vmem>>, vector<1x1x128x128xf32>
    %158 = vector.shape_cast %157 : vector<1x1x128x128xf32> to vector<128x128xf32>
    %cst_167 = arith.constant dense<0.000000e+00> : vector<32x128xf32>
    %159 = tpu.matmul %156, %158, %cst_167 {dimension_numbers = #tpu.dot_dimension_numbers<[1], [0], [0], [1], [0, 0, 1, 1], [], []>} : vector<32x128xf32>, vector<128x128xf32>, vector<32x128xf32> -> vector<32x128xf32>
    %160 = arith.addf %154, %159 : vector<32x128xf32>
    %c0_168 = arith.constant 0 : index
    %c8_169 = arith.constant 8 : index
    %c0_170 = arith.constant 0 : index
    %161 = vector.load %arg11[%c0_168, %c8_169, %c0_170] : memref<2x48x128xf32, #tpu.memory_space<vmem>>, vector<1x32x128xf32>
    %162 = vector.shape_cast %161 : vector<1x32x128xf32> to vector<32x128xf32>
    %c0_171 = arith.constant 0 : index
    %c2_172 = arith.constant 2 : index
    %c0_173 = arith.constant 0 : index
    %c0_174 = arith.constant 0 : index
    %163 = vector.load %arg4[%c0_171, %c2_172, %c0_173, %c0_174] : memref<2x5x128x128xf32, #tpu.memory_space<vmem>>, vector<1x1x128x128xf32>
    %164 = vector.shape_cast %163 : vector<1x1x128x128xf32> to vector<128x128xf32>
    %cst_175 = arith.constant dense<0.000000e+00> : vector<32x128xf32>
    %165 = tpu.matmul %162, %164, %cst_175 {dimension_numbers = #tpu.dot_dimension_numbers<[1], [0], [0], [1], [0, 0, 1, 1], [], []>} : vector<32x128xf32>, vector<128x128xf32>, vector<32x128xf32> -> vector<32x128xf32>
    %166 = arith.addf %160, %165 : vector<32x128xf32>
    %c1_176 = arith.constant 1 : index
    %c8_177 = arith.constant 8 : index
    %c0_178 = arith.constant 0 : index
    %167 = vector.load %arg11[%c1_176, %c8_177, %c0_178] : memref<2x48x128xf32, #tpu.memory_space<vmem>>, vector<1x32x128xf32>
    %168 = vector.shape_cast %167 : vector<1x32x128xf32> to vector<32x128xf32>
    %c0_179 = arith.constant 0 : index
    %c3_180 = arith.constant 3 : index
    %c0_181 = arith.constant 0 : index
    %c0_182 = arith.constant 0 : index
    %169 = vector.load %arg4[%c0_179, %c3_180, %c0_181, %c0_182] : memref<2x5x128x128xf32, #tpu.memory_space<vmem>>, vector<1x1x128x128xf32>
    %170 = vector.shape_cast %169 : vector<1x1x128x128xf32> to vector<128x128xf32>
    %cst_183 = arith.constant dense<0.000000e+00> : vector<32x128xf32>
    %171 = tpu.matmul %168, %170, %cst_183 {dimension_numbers = #tpu.dot_dimension_numbers<[1], [0], [0], [1], [0, 0, 1, 1], [], []>} : vector<32x128xf32>, vector<128x128xf32>, vector<32x128xf32> -> vector<32x128xf32>
    %172 = arith.addf %166, %171 : vector<32x128xf32>
    %c0_184 = arith.constant 0 : index
    %c16_185 = arith.constant 16 : index
    %c0_186 = arith.constant 0 : index
    %173 = vector.load %arg11[%c0_184, %c16_185, %c0_186] : memref<2x48x128xf32, #tpu.memory_space<vmem>>, vector<1x32x128xf32>
    %174 = vector.shape_cast %173 : vector<1x32x128xf32> to vector<32x128xf32>
    %c0_187 = arith.constant 0 : index
    %c4_188 = arith.constant 4 : index
    %c0_189 = arith.constant 0 : index
    %c0_190 = arith.constant 0 : index
    %175 = vector.load %arg4[%c0_187, %c4_188, %c0_189, %c0_190] : memref<2x5x128x128xf32, #tpu.memory_space<vmem>>, vector<1x1x128x128xf32>
    %176 = vector.shape_cast %175 : vector<1x1x128x128xf32> to vector<128x128xf32>
    %cst_191 = arith.constant dense<0.000000e+00> : vector<32x128xf32>
    %177 = tpu.matmul %174, %176, %cst_191 {dimension_numbers = #tpu.dot_dimension_numbers<[1], [0], [0], [1], [0, 0, 1, 1], [], []>} : vector<32x128xf32>, vector<128x128xf32>, vector<32x128xf32> -> vector<32x128xf32>
    %178 = arith.addf %172, %177 : vector<32x128xf32>
    %c0_192 = arith.constant 0 : index
    %c0_193 = arith.constant 0 : index
    %c0_194 = arith.constant 0 : index
    %179 = vector.load %arg11[%c0_192, %c0_193, %c0_194] : memref<2x48x128xf32, #tpu.memory_space<vmem>>, vector<1x32x128xf32>
    %180 = vector.shape_cast %179 : vector<1x32x128xf32> to vector<32x128xf32>
    %c1_195 = arith.constant 1 : index
    %c0_196 = arith.constant 0 : index
    %c0_197 = arith.constant 0 : index
    %c0_198 = arith.constant 0 : index
    %181 = vector.load %arg4[%c1_195, %c0_196, %c0_197, %c0_198] : memref<2x5x128x128xf32, #tpu.memory_space<vmem>>, vector<1x1x128x128xf32>
    %182 = vector.shape_cast %181 : vector<1x1x128x128xf32> to vector<128x128xf32>
    %cst_199 = arith.constant dense<0.000000e+00> : vector<32x128xf32>
    %183 = tpu.matmul %180, %182, %cst_199 {dimension_numbers = #tpu.dot_dimension_numbers<[1], [0], [0], [1], [0, 0, 1, 1], [], []>} : vector<32x128xf32>, vector<128x128xf32>, vector<32x128xf32> -> vector<32x128xf32>
    %c1_200 = arith.constant 1 : index
    %c0_201 = arith.constant 0 : index
    %c0_202 = arith.constant 0 : index
    %184 = vector.load %arg11[%c1_200, %c0_201, %c0_202] : memref<2x48x128xf32, #tpu.memory_space<vmem>>, vector<1x32x128xf32>
    %185 = vector.shape_cast %184 : vector<1x32x128xf32> to vector<32x128xf32>
    %c1_203 = arith.constant 1 : index
    %c1_204 = arith.constant 1 : index
    %c0_205 = arith.constant 0 : index
    %c0_206 = arith.constant 0 : index
    %186 = vector.load %arg4[%c1_203, %c1_204, %c0_205, %c0_206] : memref<2x5x128x128xf32, #tpu.memory_space<vmem>>, vector<1x1x128x128xf32>
    %187 = vector.shape_cast %186 : vector<1x1x128x128xf32> to vector<128x128xf32>
    %cst_207 = arith.constant dense<0.000000e+00> : vector<32x128xf32>
    %188 = tpu.matmul %185, %187, %cst_207 {dimension_numbers = #tpu.dot_dimension_numbers<[1], [0], [0], [1], [0, 0, 1, 1], [], []>} : vector<32x128xf32>, vector<128x128xf32>, vector<32x128xf32> -> vector<32x128xf32>
    %189 = arith.addf %183, %188 : vector<32x128xf32>
    %c0_208 = arith.constant 0 : index
    %c8_209 = arith.constant 8 : index
    %c0_210 = arith.constant 0 : index
    %190 = vector.load %arg11[%c0_208, %c8_209, %c0_210] : memref<2x48x128xf32, #tpu.memory_space<vmem>>, vector<1x32x128xf32>
    %191 = vector.shape_cast %190 : vector<1x32x128xf32> to vector<32x128xf32>
    %c1_211 = arith.constant 1 : index
    %c2_212 = arith.constant 2 : index
    %c0_213 = arith.constant 0 : index
    %c0_214 = arith.constant 0 : index
    %192 = vector.load %arg4[%c1_211, %c2_212, %c0_213, %c0_214] : memref<2x5x128x128xf32, #tpu.memory_space<vmem>>, vector<1x1x128x128xf32>
    %193 = vector.shape_cast %192 : vector<1x1x128x128xf32> to vector<128x128xf32>
    %cst_215 = arith.constant dense<0.000000e+00> : vector<32x128xf32>
    %194 = tpu.matmul %191, %193, %cst_215 {dimension_numbers = #tpu.dot_dimension_numbers<[1], [0], [0], [1], [0, 0, 1, 1], [], []>} : vector<32x128xf32>, vector<128x128xf32>, vector<32x128xf32> -> vector<32x128xf32>
    %195 = arith.addf %189, %194 : vector<32x128xf32>
    %c1_216 = arith.constant 1 : index
    %c8_217 = arith.constant 8 : index
    %c0_218 = arith.constant 0 : index
    %196 = vector.load %arg11[%c1_216, %c8_217, %c0_218] : memref<2x48x128xf32, #tpu.memory_space<vmem>>, vector<1x32x128xf32>
    %197 = vector.shape_cast %196 : vector<1x32x128xf32> to vector<32x128xf32>
    %c1_219 = arith.constant 1 : index
    %c3_220 = arith.constant 3 : index
    %c0_221 = arith.constant 0 : index
    %c0_222 = arith.constant 0 : index
    %198 = vector.load %arg4[%c1_219, %c3_220, %c0_221, %c0_222] : memref<2x5x128x128xf32, #tpu.memory_space<vmem>>, vector<1x1x128x128xf32>
    %199 = vector.shape_cast %198 : vector<1x1x128x128xf32> to vector<128x128xf32>
    %cst_223 = arith.constant dense<0.000000e+00> : vector<32x128xf32>
    %200 = tpu.matmul %197, %199, %cst_223 {dimension_numbers = #tpu.dot_dimension_numbers<[1], [0], [0], [1], [0, 0, 1, 1], [], []>} : vector<32x128xf32>, vector<128x128xf32>, vector<32x128xf32> -> vector<32x128xf32>
    %201 = arith.addf %195, %200 : vector<32x128xf32>
    %c0_224 = arith.constant 0 : index
    %c16_225 = arith.constant 16 : index
    %c0_226 = arith.constant 0 : index
    %202 = vector.load %arg11[%c0_224, %c16_225, %c0_226] : memref<2x48x128xf32, #tpu.memory_space<vmem>>, vector<1x32x128xf32>
    %203 = vector.shape_cast %202 : vector<1x32x128xf32> to vector<32x128xf32>
    %c1_227 = arith.constant 1 : index
    %c4_228 = arith.constant 4 : index
    %c0_229 = arith.constant 0 : index
    %c0_230 = arith.constant 0 : index
    %204 = vector.load %arg4[%c1_227, %c4_228, %c0_229, %c0_230] : memref<2x5x128x128xf32, #tpu.memory_space<vmem>>, vector<1x1x128x128xf32>
    %205 = vector.shape_cast %204 : vector<1x1x128x128xf32> to vector<128x128xf32>
    %cst_231 = arith.constant dense<0.000000e+00> : vector<32x128xf32>
    %206 = tpu.matmul %203, %205, %cst_231 {dimension_numbers = #tpu.dot_dimension_numbers<[1], [0], [0], [1], [0, 0, 1, 1], [], []>} : vector<32x128xf32>, vector<128x128xf32>, vector<32x128xf32> -> vector<32x128xf32>
    %207 = arith.addf %201, %206 : vector<32x128xf32>
    %208 = arith.maximumf %178, %207 : vector<32x128xf32>
    %c1_232 = arith.constant 1 : index
    %c0_233 = arith.constant 0 : index
    %c0_234 = arith.constant 0 : index
    %209 = vector.load %arg11[%c1_232, %c0_233, %c0_234] : memref<2x48x128xf32, #tpu.memory_space<vmem>>, vector<1x32x128xf32>
    %210 = vector.shape_cast %209 : vector<1x32x128xf32> to vector<32x128xf32>
    %c0_235 = arith.constant 0 : index
    %c0_236 = arith.constant 0 : index
    %c0_237 = arith.constant 0 : index
    %c0_238 = arith.constant 0 : index
    %211 = vector.load %arg4[%c0_235, %c0_236, %c0_237, %c0_238] : memref<2x5x128x128xf32, #tpu.memory_space<vmem>>, vector<1x1x128x128xf32>
    %212 = vector.shape_cast %211 : vector<1x1x128x128xf32> to vector<128x128xf32>
    %cst_239 = arith.constant dense<0.000000e+00> : vector<32x128xf32>
    %213 = tpu.matmul %210, %212, %cst_239 {dimension_numbers = #tpu.dot_dimension_numbers<[1], [0], [0], [1], [0, 0, 1, 1], [], []>} : vector<32x128xf32>, vector<128x128xf32>, vector<32x128xf32> -> vector<32x128xf32>
    %c0_240 = arith.constant 0 : index
    %c8_241 = arith.constant 8 : index
    %c0_242 = arith.constant 0 : index
    %214 = vector.load %arg11[%c0_240, %c8_241, %c0_242] : memref<2x48x128xf32, #tpu.memory_space<vmem>>, vector<1x32x128xf32>
    %215 = vector.shape_cast %214 : vector<1x32x128xf32> to vector<32x128xf32>
    %c0_243 = arith.constant 0 : index
    %c1_244 = arith.constant 1 : index
    %c0_245 = arith.constant 0 : index
    %c0_246 = arith.constant 0 : index
    %216 = vector.load %arg4[%c0_243, %c1_244, %c0_245, %c0_246] : memref<2x5x128x128xf32, #tpu.memory_space<vmem>>, vector<1x1x128x128xf32>
    %217 = vector.shape_cast %216 : vector<1x1x128x128xf32> to vector<128x128xf32>
    %cst_247 = arith.constant dense<0.000000e+00> : vector<32x128xf32>
    %218 = tpu.matmul %215, %217, %cst_247 {dimension_numbers = #tpu.dot_dimension_numbers<[1], [0], [0], [1], [0, 0, 1, 1], [], []>} : vector<32x128xf32>, vector<128x128xf32>, vector<32x128xf32> -> vector<32x128xf32>
    %219 = arith.addf %213, %218 : vector<32x128xf32>
    %c1_248 = arith.constant 1 : index
    %c8_249 = arith.constant 8 : index
    %c0_250 = arith.constant 0 : index
    %220 = vector.load %arg11[%c1_248, %c8_249, %c0_250] : memref<2x48x128xf32, #tpu.memory_space<vmem>>, vector<1x32x128xf32>
    %221 = vector.shape_cast %220 : vector<1x32x128xf32> to vector<32x128xf32>
    %c0_251 = arith.constant 0 : index
    %c2_252 = arith.constant 2 : index
    %c0_253 = arith.constant 0 : index
    %c0_254 = arith.constant 0 : index
    %222 = vector.load %arg4[%c0_251, %c2_252, %c0_253, %c0_254] : memref<2x5x128x128xf32, #tpu.memory_space<vmem>>, vector<1x1x128x128xf32>
    %223 = vector.shape_cast %222 : vector<1x1x128x128xf32> to vector<128x128xf32>
    %cst_255 = arith.constant dense<0.000000e+00> : vector<32x128xf32>
    %224 = tpu.matmul %221, %223, %cst_255 {dimension_numbers = #tpu.dot_dimension_numbers<[1], [0], [0], [1], [0, 0, 1, 1], [], []>} : vector<32x128xf32>, vector<128x128xf32>, vector<32x128xf32> -> vector<32x128xf32>
    %225 = arith.addf %219, %224 : vector<32x128xf32>
    %c0_256 = arith.constant 0 : index
    %c16_257 = arith.constant 16 : index
    %c0_258 = arith.constant 0 : index
    %226 = vector.load %arg11[%c0_256, %c16_257, %c0_258] : memref<2x48x128xf32, #tpu.memory_space<vmem>>, vector<1x32x128xf32>
    %227 = vector.shape_cast %226 : vector<1x32x128xf32> to vector<32x128xf32>
    %c0_259 = arith.constant 0 : index
    %c3_260 = arith.constant 3 : index
    %c0_261 = arith.constant 0 : index
    %c0_262 = arith.constant 0 : index
    %228 = vector.load %arg4[%c0_259, %c3_260, %c0_261, %c0_262] : memref<2x5x128x128xf32, #tpu.memory_space<vmem>>, vector<1x1x128x128xf32>
    %229 = vector.shape_cast %228 : vector<1x1x128x128xf32> to vector<128x128xf32>
    %cst_263 = arith.constant dense<0.000000e+00> : vector<32x128xf32>
    %230 = tpu.matmul %227, %229, %cst_263 {dimension_numbers = #tpu.dot_dimension_numbers<[1], [0], [0], [1], [0, 0, 1, 1], [], []>} : vector<32x128xf32>, vector<128x128xf32>, vector<32x128xf32> -> vector<32x128xf32>
    %231 = arith.addf %225, %230 : vector<32x128xf32>
    %c1_264 = arith.constant 1 : index
    %c16_265 = arith.constant 16 : index
    %c0_266 = arith.constant 0 : index
    %232 = vector.load %arg11[%c1_264, %c16_265, %c0_266] : memref<2x48x128xf32, #tpu.memory_space<vmem>>, vector<1x32x128xf32>
    %233 = vector.shape_cast %232 : vector<1x32x128xf32> to vector<32x128xf32>
    %c0_267 = arith.constant 0 : index
    %c4_268 = arith.constant 4 : index
    %c0_269 = arith.constant 0 : index
    %c0_270 = arith.constant 0 : index
    %234 = vector.load %arg4[%c0_267, %c4_268, %c0_269, %c0_270] : memref<2x5x128x128xf32, #tpu.memory_space<vmem>>, vector<1x1x128x128xf32>
    %235 = vector.shape_cast %234 : vector<1x1x128x128xf32> to vector<128x128xf32>
    %cst_271 = arith.constant dense<0.000000e+00> : vector<32x128xf32>
    %236 = tpu.matmul %233, %235, %cst_271 {dimension_numbers = #tpu.dot_dimension_numbers<[1], [0], [0], [1], [0, 0, 1, 1], [], []>} : vector<32x128xf32>, vector<128x128xf32>, vector<32x128xf32> -> vector<32x128xf32>
    %237 = arith.addf %231, %236 : vector<32x128xf32>
    %238 = arith.maximumf %208, %237 : vector<32x128xf32>
    %c1_272 = arith.constant 1 : index
    %c0_273 = arith.constant 0 : index
    %c0_274 = arith.constant 0 : index
    %239 = vector.load %arg11[%c1_272, %c0_273, %c0_274] : memref<2x48x128xf32, #tpu.memory_space<vmem>>, vector<1x32x128xf32>
    %240 = vector.shape_cast %239 : vector<1x32x128xf32> to vector<32x128xf32>
    %c1_275 = arith.constant 1 : index
    %c0_276 = arith.constant 0 : index
    %c0_277 = arith.constant 0 : index
    %c0_278 = arith.constant 0 : index
    %241 = vector.load %arg4[%c1_275, %c0_276, %c0_277, %c0_278] : memref<2x5x128x128xf32, #tpu.memory_space<vmem>>, vector<1x1x128x128xf32>
    %242 = vector.shape_cast %241 : vector<1x1x128x128xf32> to vector<128x128xf32>
    %cst_279 = arith.constant dense<0.000000e+00> : vector<32x128xf32>
    %243 = tpu.matmul %240, %242, %cst_279 {dimension_numbers = #tpu.dot_dimension_numbers<[1], [0], [0], [1], [0, 0, 1, 1], [], []>} : vector<32x128xf32>, vector<128x128xf32>, vector<32x128xf32> -> vector<32x128xf32>
    %c0_280 = arith.constant 0 : index
    %c8_281 = arith.constant 8 : index
    %c0_282 = arith.constant 0 : index
    %244 = vector.load %arg11[%c0_280, %c8_281, %c0_282] : memref<2x48x128xf32, #tpu.memory_space<vmem>>, vector<1x32x128xf32>
    %245 = vector.shape_cast %244 : vector<1x32x128xf32> to vector<32x128xf32>
    %c1_283 = arith.constant 1 : index
    %c1_284 = arith.constant 1 : index
    %c0_285 = arith.constant 0 : index
    %c0_286 = arith.constant 0 : index
    %246 = vector.load %arg4[%c1_283, %c1_284, %c0_285, %c0_286] : memref<2x5x128x128xf32, #tpu.memory_space<vmem>>, vector<1x1x128x128xf32>
    %247 = vector.shape_cast %246 : vector<1x1x128x128xf32> to vector<128x128xf32>
    %cst_287 = arith.constant dense<0.000000e+00> : vector<32x128xf32>
    %248 = tpu.matmul %245, %247, %cst_287 {dimension_numbers = #tpu.dot_dimension_numbers<[1], [0], [0], [1], [0, 0, 1, 1], [], []>} : vector<32x128xf32>, vector<128x128xf32>, vector<32x128xf32> -> vector<32x128xf32>
    %249 = arith.addf %243, %248 : vector<32x128xf32>
    %c1_288 = arith.constant 1 : index
    %c8_289 = arith.constant 8 : index
    %c0_290 = arith.constant 0 : index
    %250 = vector.load %arg11[%c1_288, %c8_289, %c0_290] : memref<2x48x128xf32, #tpu.memory_space<vmem>>, vector<1x32x128xf32>
    %251 = vector.shape_cast %250 : vector<1x32x128xf32> to vector<32x128xf32>
    %c1_291 = arith.constant 1 : index
    %c2_292 = arith.constant 2 : index
    %c0_293 = arith.constant 0 : index
    %c0_294 = arith.constant 0 : index
    %252 = vector.load %arg4[%c1_291, %c2_292, %c0_293, %c0_294] : memref<2x5x128x128xf32, #tpu.memory_space<vmem>>, vector<1x1x128x128xf32>
    %253 = vector.shape_cast %252 : vector<1x1x128x128xf32> to vector<128x128xf32>
    %cst_295 = arith.constant dense<0.000000e+00> : vector<32x128xf32>
    %254 = tpu.matmul %251, %253, %cst_295 {dimension_numbers = #tpu.dot_dimension_numbers<[1], [0], [0], [1], [0, 0, 1, 1], [], []>} : vector<32x128xf32>, vector<128x128xf32>, vector<32x128xf32> -> vector<32x128xf32>
    %255 = arith.addf %249, %254 : vector<32x128xf32>
    %c0_296 = arith.constant 0 : index
    %c16_297 = arith.constant 16 : index
    %c0_298 = arith.constant 0 : index
    %256 = vector.load %arg11[%c0_296, %c16_297, %c0_298] : memref<2x48x128xf32, #tpu.memory_space<vmem>>, vector<1x32x128xf32>
    %257 = vector.shape_cast %256 : vector<1x32x128xf32> to vector<32x128xf32>
    %c1_299 = arith.constant 1 : index
    %c3_300 = arith.constant 3 : index
    %c0_301 = arith.constant 0 : index
    %c0_302 = arith.constant 0 : index
    %258 = vector.load %arg4[%c1_299, %c3_300, %c0_301, %c0_302] : memref<2x5x128x128xf32, #tpu.memory_space<vmem>>, vector<1x1x128x128xf32>
    %259 = vector.shape_cast %258 : vector<1x1x128x128xf32> to vector<128x128xf32>
    %cst_303 = arith.constant dense<0.000000e+00> : vector<32x128xf32>
    %260 = tpu.matmul %257, %259, %cst_303 {dimension_numbers = #tpu.dot_dimension_numbers<[1], [0], [0], [1], [0, 0, 1, 1], [], []>} : vector<32x128xf32>, vector<128x128xf32>, vector<32x128xf32> -> vector<32x128xf32>
    %261 = arith.addf %255, %260 : vector<32x128xf32>
    %c1_304 = arith.constant 1 : index
    %c16_305 = arith.constant 16 : index
    %c0_306 = arith.constant 0 : index
    %262 = vector.load %arg11[%c1_304, %c16_305, %c0_306] : memref<2x48x128xf32, #tpu.memory_space<vmem>>, vector<1x32x128xf32>
    %263 = vector.shape_cast %262 : vector<1x32x128xf32> to vector<32x128xf32>
    %c1_307 = arith.constant 1 : index
    %c4_308 = arith.constant 4 : index
    %c0_309 = arith.constant 0 : index
    %c0_310 = arith.constant 0 : index
    %264 = vector.load %arg4[%c1_307, %c4_308, %c0_309, %c0_310] : memref<2x5x128x128xf32, #tpu.memory_space<vmem>>, vector<1x1x128x128xf32>
    %265 = vector.shape_cast %264 : vector<1x1x128x128xf32> to vector<128x128xf32>
    %cst_311 = arith.constant dense<0.000000e+00> : vector<32x128xf32>
    %266 = tpu.matmul %263, %265, %cst_311 {dimension_numbers = #tpu.dot_dimension_numbers<[1], [0], [0], [1], [0, 0, 1, 1], [], []>} : vector<32x128xf32>, vector<128x128xf32>, vector<32x128xf32> -> vector<32x128xf32>
    %267 = arith.addf %261, %266 : vector<32x128xf32>
    %268 = arith.maximumf %238, %267 : vector<32x128xf32>
    %c0_312 = arith.constant 0 : index
    %c0_313 = arith.constant 0 : index
    %269 = vector.load %arg5[%c0_312, %c0_313] : memref<1x128xf32, #tpu.memory_space<vmem>>, vector<1x128xf32>
    %270 = vector.broadcast %269 : vector<1x128xf32> to vector<32x128xf32>
    %271 = arith.addf %268, %270 : vector<32x128xf32>
    %cst_314 = arith.constant 0.000000e+00 : f32
    %272 = vector.broadcast %cst_314 : f32 to vector<32x128xf32>
    %273 = arith.maximumf %271, %272 : vector<32x128xf32>
    %274 = vector.extract_strided_slice %273 {offsets = [0, 0], sizes = [8, 128], strides = [1, 1]} : vector<32x128xf32> to vector<8x128xf32>
    %c0_315 = arith.constant 0 : index
    %c0_316 = arith.constant 0 : index
    %c0_317 = arith.constant 0 : index
    %275 = vector.load %arg6[%c0_315, %c0_316, %c0_317] : memref<4x128x128xf32, #tpu.memory_space<vmem>>, vector<1x128x128xf32>
    %276 = vector.shape_cast %275 : vector<1x128x128xf32> to vector<128x128xf32>
    %cst_318 = arith.constant dense<0.000000e+00> : vector<8x128xf32>
    %277 = tpu.matmul %274, %276, %cst_318 {dimension_numbers = #tpu.dot_dimension_numbers<[1], [0], [0], [1], [0, 0, 1, 1], [], []>} : vector<8x128xf32>, vector<128x128xf32>, vector<8x128xf32> -> vector<8x128xf32>
    %278 = vector.extract_strided_slice %273 {offsets = [8, 0], sizes = [8, 128], strides = [1, 1]} : vector<32x128xf32> to vector<8x128xf32>
    %c1_319 = arith.constant 1 : index
    %c0_320 = arith.constant 0 : index
    %c0_321 = arith.constant 0 : index
    %279 = vector.load %arg6[%c1_319, %c0_320, %c0_321] : memref<4x128x128xf32, #tpu.memory_space<vmem>>, vector<1x128x128xf32>
    %280 = vector.shape_cast %279 : vector<1x128x128xf32> to vector<128x128xf32>
    %cst_322 = arith.constant dense<0.000000e+00> : vector<8x128xf32>
    %281 = tpu.matmul %278, %280, %cst_322 {dimension_numbers = #tpu.dot_dimension_numbers<[1], [0], [0], [1], [0, 0, 1, 1], [], []>} : vector<8x128xf32>, vector<128x128xf32>, vector<8x128xf32> -> vector<8x128xf32>
    %282 = arith.addf %277, %281 : vector<8x128xf32>
    %283 = vector.extract_strided_slice %273 {offsets = [16, 0], sizes = [8, 128], strides = [1, 1]} : vector<32x128xf32> to vector<8x128xf32>
    %c2_323 = arith.constant 2 : index
    %c0_324 = arith.constant 0 : index
    %c0_325 = arith.constant 0 : index
    %284 = vector.load %arg6[%c2_323, %c0_324, %c0_325] : memref<4x128x128xf32, #tpu.memory_space<vmem>>, vector<1x128x128xf32>
    %285 = vector.shape_cast %284 : vector<1x128x128xf32> to vector<128x128xf32>
    %cst_326 = arith.constant dense<0.000000e+00> : vector<8x128xf32>
    %286 = tpu.matmul %283, %285, %cst_326 {dimension_numbers = #tpu.dot_dimension_numbers<[1], [0], [0], [1], [0, 0, 1, 1], [], []>} : vector<8x128xf32>, vector<128x128xf32>, vector<8x128xf32> -> vector<8x128xf32>
    %287 = arith.addf %282, %286 : vector<8x128xf32>
    %288 = vector.extract_strided_slice %273 {offsets = [24, 0], sizes = [8, 128], strides = [1, 1]} : vector<32x128xf32> to vector<8x128xf32>
    %c3_327 = arith.constant 3 : index
    %c0_328 = arith.constant 0 : index
    %c0_329 = arith.constant 0 : index
    %289 = vector.load %arg6[%c3_327, %c0_328, %c0_329] : memref<4x128x128xf32, #tpu.memory_space<vmem>>, vector<1x128x128xf32>
    %290 = vector.shape_cast %289 : vector<1x128x128xf32> to vector<128x128xf32>
    %cst_330 = arith.constant dense<0.000000e+00> : vector<8x128xf32>
    %291 = tpu.matmul %288, %290, %cst_330 {dimension_numbers = #tpu.dot_dimension_numbers<[1], [0], [0], [1], [0, 0, 1, 1], [], []>} : vector<8x128xf32>, vector<128x128xf32>, vector<8x128xf32> -> vector<8x128xf32>
    %292 = arith.addf %287, %291 : vector<8x128xf32>
    %c0_331 = arith.constant 0 : index
    %c0_332 = arith.constant 0 : index
    %293 = vector.load %arg7[%c0_331, %c0_332] : memref<1x128xf32, #tpu.memory_space<vmem>>, vector<1x128xf32>
    %294 = vector.broadcast %293 : vector<1x128xf32> to vector<8x128xf32>
    %295 = arith.addf %292, %294 : vector<8x128xf32>
    %cst_333 = arith.constant 0.000000e+00 : f32
    %296 = vector.broadcast %cst_333 : f32 to vector<8x128xf32>
    %297 = arith.maximumf %295, %296 : vector<8x128xf32>
    %c0_334 = arith.constant 0 : index
    %c0_335 = arith.constant 0 : index
    %298 = vector.load %arg8[%c0_334, %c0_335] : memref<128x128xf32, #tpu.memory_space<vmem>>, vector<128x128xf32>
    %cst_336 = arith.constant dense<0.000000e+00> : vector<8x128xf32>
    %299 = tpu.matmul %297, %298, %cst_336 {dimension_numbers = #tpu.dot_dimension_numbers<[1], [0], [0], [1], [0, 0, 1, 1], [], []>} : vector<8x128xf32>, vector<128x128xf32>, vector<8x128xf32> -> vector<8x128xf32>
    %c0_337 = arith.constant 0 : index
    %c0_338 = arith.constant 0 : index
    %300 = vector.load %arg9[%c0_337, %c0_338] : memref<1x128xf32, #tpu.memory_space<vmem>>, vector<1x128xf32>
    %301 = vector.broadcast %300 : vector<1x128xf32> to vector<8x128xf32>
    %302 = arith.addf %299, %301 : vector<8x128xf32>
    %303 = tpu.iota {dimensions = array<i32: 1>} : vector<8x128xi32>
    %c10_i32 = arith.constant 10 : i32
    %304 = vector.broadcast %c10_i32 : i32 to vector<8x128xi32>
    %305 = arith.cmpi slt, %303, %304 : vector<8x128xi32>
    %cst_339 = arith.constant -1.000000e+30 : f32
    %306 = vector.broadcast %cst_339 : f32 to vector<8x128xf32>
    %307 = arith.select %305, %302, %306 : vector<8x128xi1>, vector<8x128xf32>
    %cst_340 = arith.constant dense<0xFF800000> : vector<8xf32>
    %308 = vector.multi_reduction <maximumf>, %307, %cst_340 [1] : vector<8x128xf32> to vector<8xf32>
    %309 = vector.shape_cast %308 : vector<8xf32> to vector<8x1xf32>
    %310 = vector.broadcast %309 : vector<8x1xf32> to vector<8x128xf32>
    %311 = arith.subf %307, %310 : vector<8x128xf32>
    %312 = math.exp %311 : vector<8x128xf32>
    %cst_341 = arith.constant 0.000000e+00 : f32
    %313 = vector.broadcast %cst_341 : f32 to vector<8x128xf32>
    %314 = arith.select %305, %312, %313 : vector<8x128xi1>, vector<8x128xf32>
    %315 = vector.broadcast %309 : vector<8x1xf32> to vector<8x128xf32>
    %316 = arith.subf %307, %315 : vector<8x128xf32>
    %cst_342 = arith.constant dense<0.000000e+00> : vector<8xf32>
    %317 = vector.multi_reduction <add>, %314, %cst_342 [1] : vector<8x128xf32> to vector<8xf32>
    %318 = vector.shape_cast %317 : vector<8xf32> to vector<8x1xf32>
    %319 = math.log %318 : vector<8x1xf32>
    %320 = vector.broadcast %319 : vector<8x1xf32> to vector<8x128xf32>
    %321 = arith.subf %316, %320 : vector<8x128xf32>
    %cst_343 = arith.constant 0.000000e+00 : f32
    %322 = vector.broadcast %cst_343 : f32 to vector<8x128xf32>
    %323 = arith.select %305, %321, %322 : vector<8x128xi1>, vector<8x128xf32>
    %c0_344 = arith.constant 0 : index
    %c0_345 = arith.constant 0 : index
    %324 = vector.load %arg10[%c0_344, %c0_345] : memref<8x128xf32, #tpu.memory_space<vmem>>, vector<8x128xf32>
    tpu.vector_store %arg10[%c0_344, %c0_345], %323 {strides = array<i32>} : memref<8x128xf32, #tpu.memory_space<vmem>>, vector<8x128xf32>,
    return
  }
  func.func @transform_0(%arg0: i32) -> (i32, i32, i32, i32) {
    %c0_i32 = arith.constant 0 : i32
    %c0_i32_0 = arith.constant 0 : i32
    %c0_i32_1 = arith.constant 0 : i32
    %c0_i32_2 = arith.constant 0 : i32
    return %c0_i32, %c0_i32_0, %arg0, %c0_i32_1 : i32, i32, i32, i32
  }
  func.func @transform_1(%arg0: i32) -> (i32, i32, i32, i32) {
    %c0_i32 = arith.constant 0 : i32
    %c0_i32_0 = arith.constant 0 : i32
    %c0_i32_1 = arith.constant 0 : i32
    %c0_i32_2 = arith.constant 0 : i32
    %c0_i32_3 = arith.constant 0 : i32
    return %c0_i32, %c0_i32_0, %c0_i32_1, %c0_i32_2 : i32, i32, i32, i32
  }
  func.func @transform_2(%arg0: i32) -> (i32, i32) {
    %c0_i32 = arith.constant 0 : i32
    %c0_i32_0 = arith.constant 0 : i32
    %c0_i32_1 = arith.constant 0 : i32
    return %c0_i32, %c0_i32_0 : i32, i32
  }
  func.func @transform_3(%arg0: i32) -> (i32, i32, i32, i32) {
    %c0_i32 = arith.constant 0 : i32
    %c0_i32_0 = arith.constant 0 : i32
    %c0_i32_1 = arith.constant 0 : i32
    %c0_i32_2 = arith.constant 0 : i32
    %c0_i32_3 = arith.constant 0 : i32
    return %c0_i32, %c0_i32_0, %c0_i32_1, %c0_i32_2 : i32, i32, i32, i32
  }
  func.func @transform_4(%arg0: i32) -> (i32, i32) {
    %c0_i32 = arith.constant 0 : i32
    %c0_i32_0 = arith.constant 0 : i32
    %c0_i32_1 = arith.constant 0 : i32
    return %c0_i32, %c0_i32_0 : i32, i32
  }
  func.func @transform_5(%arg0: i32) -> (i32, i32, i32) {
    %c0_i32 = arith.constant 0 : i32
    %c0_i32_0 = arith.constant 0 : i32
    %c0_i32_1 = arith.constant 0 : i32
    %c0_i32_2 = arith.constant 0 : i32
    return %c0_i32, %c0_i32_0, %c0_i32_1 : i32, i32, i32
  }
  func.func @transform_6(%arg0: i32) -> (i32, i32) {
    %c0_i32 = arith.constant 0 : i32
    %c0_i32_0 = arith.constant 0 : i32
    %c0_i32_1 = arith.constant 0 : i32
    return %c0_i32, %c0_i32_0 : i32, i32
  }
  func.func @transform_7(%arg0: i32) -> (i32, i32) {
    %c0_i32 = arith.constant 0 : i32
    %c0_i32_0 = arith.constant 0 : i32
    %c0_i32_1 = arith.constant 0 : i32
    return %c0_i32, %c0_i32_0 : i32, i32
  }
  func.func @transform_8(%arg0: i32) -> (i32, i32) {
    %c0_i32 = arith.constant 0 : i32
    %c0_i32_0 = arith.constant 0 : i32
    %c0_i32_1 = arith.constant 0 : i32
    return %c0_i32, %c0_i32_0 : i32, i32
  }
  func.func @transform_9(%arg0: i32) -> (i32, i32) {
    %c0_i32 = arith.constant 0 : i32
    %c0_i32_0 = arith.constant 0 : i32
    return %arg0, %c0_i32 : i32, i32
  }
}

</mosaic_0001>

<llo_original>
// kernel: net_forward.1
$region0: #{net_forward.1}
  #allocation0 [shape = 'u32[]', space=smem, size = 0x4, offset = 0x4, fixed_abs, tag = 'smem constant byte address 0x4 - core index']
  #allocation1 [shape = 'u32[144,128]{1,0:T(1,128)}', space=vmem, size = 0x12000, scoped, tag = 'internal scratch']
  #allocation2 [shape = 'f32[2,48,128]{2,1,0:T(8,128)}', space=vmem, size = 0xc000, scoped, tag = 'scratch operand']
  %s0 = inlined_call_operand.vmem [shape: f32[2,14,24,128], index: 0, kind: input, shape index: {}]
  %s1 = inlined_call_operand.vmem [shape: f32[2,5,128,128], index: 1, kind: input, shape index: {}]
  %s2 = inlined_call_operand.vmem [shape: f32[1,128], index: 2, kind: input, shape index: {}]
  %s3 = inlined_call_operand.vmem [shape: f32[2,5,128,128], index: 3, kind: input, shape index: {}]
  %s4 = inlined_call_operand.vmem [shape: f32[1,128], index: 4, kind: input, shape index: {}]
  %s5 = inlined_call_operand.vmem [shape: f32[4,128,128], index: 5, kind: input, shape index: {}]
  %s6 = inlined_call_operand.vmem [shape: f32[1,128], index: 6, kind: input, shape index: {}]
  %s7 = inlined_call_operand.vmem [shape: f32[128,128], index: 7, kind: input, shape index: {}]
  %s8 = inlined_call_operand.vmem [shape: f32[1,128], index: 8, kind: input, shape index: {}]
  %s9 = inlined_call_operand.vmem [shape: f32[24,128], index: 9, kind: output, shape index: {}]
  %s10 = sld [smem:[#allocation0]]
  $region107: #{net_forward.1} parent=0
    _
  %s12 = ssub.s32 1, %s10
  %s13 = scalar_select 0, %s12, %s10
  $region1: #{net_forward.1} parent=0
    #allocation3 [shape = 'u8[229376]{0}', space=vmem, size = 0x38000, scoped, tag = 'input window, operand 0']
    loop: start=0, step=1, limit=5
    $region2: #{net_forward.1} parent=1 // loop_pre_header
      _
    $region3: #{net_forward.1} parent=1 // loop_header
      %s15 = sphi 0, %s19
      %p16 = scmp.ge.s32.totalorder %s15, 5
      %s25 = sphi 0, %s27
      %s28 = sphi 0, %s25
      %s29 = sphi 0, %s28
      %s45 = sphi 0, %s29
      %s49 = sphi 0, %s49
      %s51 = sphi 0, %s49
      %s52 = sphi 0, %s51
      %s66 = sphi 0, %s52
      %s70 = sphi 0, %s70
      %s72 = sphi 0, %s70
      %s73 = sphi 0, %s72
      %s87 = sphi 0, %s73
      %s91 = sphi 0, %s91
      %s93 = sphi 0, %s91
      %s94 = sphi 0, %s93
      %s108 = sphi 0, %s94
      %s112 = sphi 0, %s112
      %s114 = sphi 0, %s112
      %s115 = sphi 0, %s114
      %s129 = sphi 0, %s115
      %s133 = sphi 0, %s133
      %s135 = sphi 0, %s133
      %s136 = sphi 0, %s135
      %s150 = sphi 0, %s136
      %s154 = sphi 0, %s154
      %s156 = sphi 0, %s154
      %s157 = sphi 0, %s156
      %s171 = sphi 0, %s157
      %s175 = sphi 0, %s175
      %s177 = sphi 0, %s175
      %s178 = sphi 0, %s177
      %s192 = sphi 0, %s178
      %s196 = sphi 0, %s196
      %s198 = sphi 0, %s196
      %s199 = sphi 0, %s198
      %s213 = sphi 0, %s199
      %s219 = sphi 0, %s221
      %s222 = sphi 0, %s219
      %s223 = sphi 0, %s222
      %s239 = sphi 0, %s223
    $region4: #{net_forward.1} parent=1 // loop_header_branch
      %18 = sbr.rel (%p16) target = $region8
    $region5: #{net_forward.1} parent=1 // loop_body
      %s20 = ssub.s32 %s15, 1
      %s21 = ssub.s32 %s15, 2
      %s22 = sadd.s32 %s15, 1
      %s23 = ssub.s32 %s15, %s22
      %p24 = scmp.eq.s32.totalorder %s23, 0
      %s26 = sadd.s32 %s25, 1
      %s27 = scalar_select %p24, %s25, %s26
      %p30 = pneg %p24
      %p31 = scmp.eq.s32.totalorder %s15, 2
      %p32 = por %p30, %p31
      %p33 = scmp.ne.s32.totalorder %s25, %s28
      %p34 = scmp.eq.s32.totalorder %s15, 0
      %p35 = por %p33, %p34
      %p36 = scmp.ne.s32.totalorder %s25, %s28
      %p37 = scmp.eq.s32.totalorder %s20, 2
      %p38 = por %p36, %p37
      %p39 = scmp.ne.s32.totalorder %s28, %s29
      %p40 = scmp.eq.s32.totalorder %s20, 0
      %p41 = por %p39, %p40
      %p42 = scmp.ne.s32.totalorder %s28, %s29
      %p43 = scmp.eq.s32.totalorder %s21, 2
      %p44 = por %p42, %p43
      %p46 = scmp.ne.s32.totalorder %s29, %s45
      %p47 = scmp.eq.s32.totalorder %s21, 0
      %p48 = por %p46, %p47
      %s50 = sadd.s32 %s49, 1
      %p53 = scmp.eq.s32.totalorder %s15, 2
      %p54 = scmp.ne.s32.totalorder %s49, %s51
      %p55 = scmp.eq.s32.totalorder %s15, 0
      %p56 = por %p54, %p55
      %p57 = scmp.ne.s32.totalorder %s49, %s51
      %p58 = scmp.eq.s32.totalorder %s20, 2
      %p59 = por %p57, %p58
      %p60 = scmp.ne.s32.totalorder %s51, %s52
      %p61 = scmp.eq.s32.totalorder %s20, 0
      %p62 = por %p60, %p61
      %p63 = scmp.ne.s32.totalorder %s51, %s52
      %p64 = scmp.eq.s32.totalorder %s21, 2
      %p65 = por %p63, %p64
      %p67 = scmp.ne.s32.totalorder %s52, %s66
      %p68 = scmp.eq.s32.totalorder %s21, 0
      %p69 = por %p67, %p68
      %s71 = sadd.s32 %s70, 1
      %p74 = scmp.eq.s32.totalorder %s15, 2
      %p75 = scmp.ne.s32.totalorder %s70, %s72
      %p76 = scmp.eq.s32.totalorder %s15, 0
      %p77 = por %p75, %p76
      %p78 = scmp.ne.s32.totalorder %s70, %s72
      %p79 = scmp.eq.s32.totalorder %s20, 2
      %p80 = por %p78, %p79
      %p81 = scmp.ne.s32.totalorder %s72, %s73
      %p82 = scmp.eq.s32.totalorder %s20, 0
      %p83 = por %p81, %p82
      %p84 = scmp.ne.s32.totalorder %s72, %s73
      %p85 = scmp.eq.s32.totalorder %s21, 2
      %p86 = por %p84, %p85
      %p88 = scmp.ne.s32.totalorder %s73, %s87
      %p89 = scmp.eq.s32.totalorder %s21, 0
      %p90 = por %p88, %p89
      %s92 = sadd.s32 %s91, 1
      %p95 = scmp.eq.s32.totalorder %s15, 2
      %p96 = scmp.ne.s32.totalorder %s91, %s93
      %p97 = scmp.eq.s32.totalorder %s15, 0
      %p98 = por %p96, %p97
      %p99 = scmp.ne.s32.totalorder %s91, %s93
      %p100 = scmp.eq.s32.totalorder %s20, 2
      %p101 = por %p99, %p100
      %p102 = scmp.ne.s32.totalorder %s93, %s94
      %p103 = scmp.eq.s32.totalorder %s20, 0
      %p104 = por %p102, %p103
      %p105 = scmp.ne.s32.totalorder %s93, %s94
      %p106 = scmp.eq.s32.totalorder %s21, 2
      %p107 = por %p105, %p106
      %p109 = scmp.ne.s32.totalorder %s94, %s108
      %p110 = scmp.eq.s32.totalorder %s21, 0
      %p111 = por %p109, %p110
      %s113 = sadd.s32 %s112, 1
      %p116 = scmp.eq.s32.totalorder %s15, 2
      %p117 = scmp.ne.s32.totalorder %s112, %s114
      %p118 = scmp.eq.s32.totalorder %s15, 0
      %p119 = por %p117, %p118
      %p120 = scmp.ne.s32.totalorder %s112, %s114
      %p121 = scmp.eq.s32.totalorder %s20, 2
      %p122 = por %p120, %p121
      %p123 = scmp.ne.s32.totalorder %s114, %s115
      %p124 = scmp.eq.s32.totalorder %s20, 0
      %p125 = por %p123, %p124
      %p126 = scmp.ne.s32.totalorder %s114, %s115
      %p127 = scmp.eq.s32.totalorder %s21, 2
      %p128 = por %p126, %p127
      %p130 = scmp.ne.s32.totalorder %s115, %s129
      %p131 = scmp.eq.s32.totalorder %s21, 0
      %p132 = por %p130, %p131
      %s134 = sadd.s32 %s133, 1
      %p137 = scmp.eq.s32.totalorder %s15, 2
      %p138 = scmp.ne.s32.totalorder %s133, %s135
      %p139 = scmp.eq.s32.totalorder %s15, 0
      %p140 = por %p138, %p139
      %p141 = scmp.ne.s32.totalorder %s133, %s135
      %p142 = scmp.eq.s32.totalorder %s20, 2
      %p143 = por %p141, %p142
      %p144 = scmp.ne.s32.totalorder %s135, %s136
      %p145 = scmp.eq.s32.totalorder %s20, 0
      %p146 = por %p144, %p145
      %p147 = scmp.ne.s32.totalorder %s135, %s136
      %p148 = scmp.eq.s32.totalorder %s21, 2
      %p149 = por %p147, %p148
      %p151 = scmp.ne.s32.totalorder %s136, %s150
      %p152 = scmp.eq.s32.totalorder %s21, 0
      %p153 = por %p151, %p152
      %s155 = sadd.s32 %s154, 1
      %p158 = scmp.eq.s32.totalorder %s15, 2
      %p159 = scmp.ne.s32.totalorder %s154, %s156
      %p160 = scmp.eq.s32.totalorder %s15, 0
      %p161 = por %p159, %p160
      %p162 = scmp.ne.s32.totalorder %s154, %s156
      %p163 = scmp.eq.s32.totalorder %s20, 2
      %p164 = por %p162, %p163
      %p165 = scmp.ne.s32.totalorder %s156, %s157
      %p166 = scmp.eq.s32.totalorder %s20, 0
      %p167 = por %p165, %p166
      %p168 = scmp.ne.s32.totalorder %s156, %s157
      %p169 = scmp.eq.s32.totalorder %s21, 2
      %p170 = por %p168, %p169
      %p172 = scmp.ne.s32.totalorder %s157, %s171
      %p173 = scmp.eq.s32.totalorder %s21, 0
      %p174 = por %p172, %p173
      %s176 = sadd.s32 %s175, 1
      %p179 = scmp.eq.s32.totalorder %s15, 2
      %p180 = scmp.ne.s32.totalorder %s175, %s177
      %p181 = scmp.eq.s32.totalorder %s15, 0
      %p182 = por %p180, %p181
      %p183 = scmp.ne.s32.totalorder %s175, %s177
      %p184 = scmp.eq.s32.totalorder %s20, 2
      %p185 = por %p183, %p184
      %p186 = scmp.ne.s32.totalorder %s177, %s178
      %p187 = scmp.eq.s32.totalorder %s20, 0
      %p188 = por %p186, %p187
      %p189 = scmp.ne.s32.totalorder %s177, %s178
      %p190 = scmp.eq.s32.totalorder %s21, 2
      %p191 = por %p189, %p190
      %p193 = scmp.ne.s32.totalorder %s178, %s192
      %p194 = scmp.eq.s32.totalorder %s21, 0
      %p195 = por %p193, %p194
      %s197 = sadd.s32 %s196, 1
      %p200 = scmp.eq.s32.totalorder %s15, 2
      %p201 = scmp.ne.s32.totalorder %s196, %s198
      %p202 = scmp.eq.s32.totalorder %s15, 0
      %p203 = por %p201, %p202
      %p204 = scmp.ne.s32.totalorder %s196, %s198
      %p205 = scmp.eq.s32.totalorder %s20, 2
      %p206 = por %p204, %p205
      %p207 = scmp.ne.s32.totalorder %s198, %s199
      %p208 = scmp.eq.s32.totalorder %s20, 0
      %p209 = por %p207, %p208
      %p210 = scmp.ne.s32.totalorder %s198, %s199
      %p211 = scmp.eq.s32.totalorder %s21, 2
      %p212 = por %p210, %p211
      %p214 = scmp.ne.s32.totalorder %s199, %s213
      %p215 = scmp.eq.s32.totalorder %s21, 0
      %p216 = por %p214, %p215
      %s217 = ssub.s32 %s15, %s22
      %p218 = scmp.eq.s32.totalorder %s217, 0
      %s220 = sadd.s32 %s219, 1
      %s221 = scalar_select %p218, %s219, %s220
      %p224 = pneg %p218
      %p225 = scmp.eq.s32.totalorder %s15, 2
      %p226 = por %p224, %p225
      %p227 = scmp.ne.s32.totalorder %s219, %s222
      %p228 = scmp.eq.s32.totalorder %s15, 0
      %p229 = por %p227, %p228
      %p230 = scmp.ne.s32.totalorder %s219, %s222
      %p231 = scmp.eq.s32.totalorder %s20, 2
      %p232 = por %p230, %p231
      %p233 = scmp.ne.s32.totalorder %s222, %s223
      %p234 = scmp.eq.s32.totalorder %s20, 0
      %p235 = por %p233, %p234
      %p236 = scmp.ne.s32.totalorder %s222, %s223
      %p237 = scmp.eq.s32.totalorder %s21, 2
      %p238 = por %p236, %p237
      %p240 = scmp.ne.s32.totalorder %s223, %s239
      %p241 = scmp.eq.s32.totalorder %s21, 0
      %p242 = por %p240, %p241
      %p243 = scmp.le.s32.totalorder 1, %s15
      %p244 = scmp.lt.s32.totalorder %s15, 4
      %p245 = pnand %p243, %p244
      %p246 = pneg %p245
      // Predicated region
      $region9: #{net_forward.1} parent=5 // pred_check
        _
      $region10: #{net_forward.1} parent=5 // pred_check_branch
        %248 = sbr.rel (%p245) target = $region12
      $region11: #{net_forward.1} parent=5 // pred_region
        %s249 = ssub.s32 %s15, 1
        // Predicated region
        $region13: #{net_forward.1} parent=11 // pred_check
          %p250 = pneg %p62
        $region14: #{net_forward.1} parent=11 // pred_check_branch
          %252 = sbr.rel (%p250) target = $region16
        $region15: #{net_forward.1} parent=11 // pred_region
          _
        $region16: #{net_forward.1} parent=11 // pred_fallthru
          _
        // Predicated region
        $region17: #{net_forward.1} parent=11 // pred_check
          %p253 = pneg %p83
        $region18: #{net_forward.1} parent=11 // pred_check_branch
          %255 = sbr.rel (%p253) target = $region20
        $region19: #{net_forward.1} parent=11 // pred_region
          _
        $region20: #{net_forward.1} parent=11 // pred_fallthru
          _
        // Predicated region
        $region21: #{net_forward.1} parent=11 // pred_check
          %p256 = pneg %p104
        $region22: #{net_forward.1} parent=11 // pred_check_branch
          %258 = sbr.rel (%p256) target = $region24
        $region23: #{net_forward.1} parent=11 // pred_region
          _
        $region24: #{net_forward.1} parent=11 // pred_fallthru
          _
        // Predicated region
        $region25: #{net_forward.1} parent=11 // pred_check
          %p259 = pneg %p125
        $region26: #{net_forward.1} parent=11 // pred_check_branch
          %261 = sbr.rel (%p259) target = $region28
        $region27: #{net_forward.1} parent=11 // pred_region
          _
        $region28: #{net_forward.1} parent=11 // pred_fallthru
          _
        // Predicated region
        $region29: #{net_forward.1} parent=11 // pred_check
          %p262 = pneg %p146
        $region30: #{net_forward.1} parent=11 // pred_check_branch
          %264 = sbr.rel (%p262) target = $region32
        $region31: #{net_forward.1} parent=11 // pred_region
          _
        $region32: #{net_forward.1} parent=11 // pred_fallthru
          _
        // Predicated region
        $region33: #{net_forward.1} parent=11 // pred_check
          %p265 = pneg %p167
        $region34: #{net_forward.1} parent=11 // pred_check_branch
          %267 = sbr.rel (%p265) target = $region36
        $region35: #{net_forward.1} parent=11 // pred_region
          _
        $region36: #{net_forward.1} parent=11 // pred_fallthru
          _
        // Predicated region
        $region37: #{net_forward.1} parent=11 // pred_check
          %p268 = pneg %p188
        $region38: #{net_forward.1} parent=11 // pred_check_branch
          %270 = sbr.rel (%p268) target = $region40
        $region39: #{net_forward.1} parent=11 // pred_region
          _
        $region40: #{net_forward.1} parent=11 // pred_fallthru
          _
        // Predicated region
        $region41: #{net_forward.1} parent=11 // pred_check
          %p271 = pneg %p209
        $region42: #{net_forward.1} parent=11 // pred_check_branch
          %273 = sbr.rel (%p271) target = $region44
        $region43: #{net_forward.1} parent=11 // pred_region
          _
        $region44: #{net_forward.1} parent=11 // pred_fallthru
          _
      $region12: #{net_forward.1} parent=5 // pred_fallthru
        _
      %p274 = scmp.lt.s32.totalorder %s15, 3
      // Predicated region
      $region45: #{net_forward.1} parent=5 // pred_check
        %p275 = pneg %p274
      $region46: #{net_forward.1} parent=5 // pred_check_branch
        %277 = sbr.rel (%p275) target = $region48
      $region47: #{net_forward.1} parent=5 // pred_region
        // Predicated region
        $region49: #{net_forward.1} parent=47 // pred_check
          %p278 = pneg %p35
        $region50: #{net_forward.1} parent=47 // pred_check_branch
          %280 = sbr.rel (%p278) target = $region52
        $region51: #{net_forward.1} parent=47 // pred_region
          %s281 = sand.u32 %s25, 1
          %s282 = sand.u32 %s25, 1
          %s283 = smul.addr %s282, 224
          %s284 = scalar_lea.vmem [#allocation3], %s283
          %s285 = smul.addr %s15, 8
          %s286 = scalar_lea.vmem %s0, %s285
          // Predicated region
          $region53: #{net_forward.1} parent=51 // pred_check
            _
          $region54: #{net_forward.1} parent=51 // pred_check_branch
            %288 = sbr.rel (0) target = $region56
          $region55: #{net_forward.1} parent=51 // pred_region
            // Predicated region
            $region57: #{net_forward.1} parent=55 // pred_check
              _
            $region58: #{net_forward.1} parent=55 // pred_check_branch
              %290 = sbr.rel (0) target = $region60
            $region59: #{net_forward.1} parent=55 // pred_region
              // Predicated region
              $region72: #{net_forward.1} parent=59 // pred_check
                _
              $region73: #{net_forward.1} parent=59 // pred_check_branch
                %359 = sbr.rel (0) target = $region75
              $region74: #{net_forward.1} parent=59 // pred_region
                loop: start=0, step=1, limit=1
                $region76: #{net_forward.1} parent=74 // loop_pre_header
                  _
                $region77: #{net_forward.1} parent=74 // loop_header
                  %s361 = sphi 0, %s365
                  %p362 = scmp.ge.s32.totalorder %s361, 1
                  %s366 = sphi %s286, %s286
                  %s367 = sphi %s284, %s284
                $region78: #{net_forward.1} parent=74 // loop_header_branch
                  %364 = sbr.rel (%p362) target = $region82
                $region79: #{net_forward.1} parent=74 // loop_body
                  %v368 = vld [vmem:[%s366] sm:$0xff]
                  %369 = vst [vmem:[%s367] sm:$0xff] %v368
                  %v370 = vld [vmem:[%s366 + $0x18] sm:$0xff]
                  %371 = vst [vmem:[%s367 + $0x8] sm:$0xff] %v370
                  %v372 = vld [vmem:[%s366 + $0x30] sm:$0xff]
                  %373 = vst [vmem:[%s367 + $0x10] sm:$0xff] %v372
                  %v374 = vld [vmem:[%s366 + $0x48] sm:$0xff]
                  %375 = vst [vmem:[%s367 + $0x18] sm:$0xff] %v374
                  %v376 = vld [vmem:[%s366 + $0x60] sm:$0xff]
                  %377 = vst [vmem:[%s367 + $0x20] sm:$0xff] %v376
                  %v378 = vld [vmem:[%s366 + $0x78] sm:$0xff]
                  %379 = vst [vmem:[%s367 + $0x28] sm:$0xff] %v378
                  %v380 = vld [vmem:[%s366 + $0x90] sm:$0xff]
                  %381 = vst [vmem:[%s367 + $0x30] sm:$0xff] %v380
                  %v382 = vld [vmem:[%s366 + $0xa8] sm:$0xff]
                  %383 = vst [vmem:[%s367 + $0x38] sm:$0xff] %v382
                  %v384 = vld [vmem:[%s366 + $0xc0] sm:$0xff]
                  %385 = vst [vmem:[%s367 + $0x40] sm:$0xff] %v384
                  %v386 = vld [vmem:[%s366 + $0xd8] sm:$0xff]
                  %387 = vst [vmem:[%s367 + $0x48] sm:$0xff] %v386
                  %v388 = vld [vmem:[%s366 + $0xf0] sm:$0xff]
                  %389 = vst [vmem:[%s367 + $0x50] sm:$0xff] %v388
                  %v390 = vld [vmem:[%s366 + $0x108] sm:$0xff]
                  %391 = vst [vmem:[%s367 + $0x58] sm:$0xff] %v390
                  %v392 = vld [vmem:[%s366 + $0x120] sm:$0xff]
                  %393 = vst [vmem:[%s367 + $0x60] sm:$0xff] %v392
                  %v394 = vld [vmem:[%s366 + $0x138] sm:$0xff]
                  %395 = vst [vmem:[%s367 + $0x68] sm:$0xff] %v394
                  %v396 = vld [vmem:[%s366 + $0x150] sm:$0xff]
                  %397 = vst [vmem:[%s367 + $0x70] sm:$0xff] %v396
                  %v398 = vld [vmem:[%s366 + $0x168] sm:$0xff]
                  %399 = vst [vmem:[%s367 + $0x78] sm:$0xff] %v398
                  %v400 = vld [vmem:[%s366 + $0x180] sm:$0xff]
                  %401 = vst [vmem:[%s367 + $0x80] sm:$0xff] %v400
                  %v402 = vld [vmem:[%s366 + $0x198] sm:$0xff]
                  %403 = vst [vmem:[%s367 + $0x88] sm:$0xff] %v402
                  %v404 = vld [vmem:[%s366 + $0x1b0] sm:$0xff]
                  %405 = vst [vmem:[%s367 + $0x90] sm:$0xff] %v404
                  %v406 = vld [vmem:[%s366 + $0x1c8] sm:$0xff]
                  %407 = vst [vmem:[%s367 + $0x98] sm:$0xff] %v406
                  %v408 = vld [vmem:[%s366 + $0x1e0] sm:$0xff]
                  %409 = vst [vmem:[%s367 + $0xa0] sm:$0xff] %v408
                  %v410 = vld [vmem:[%s366 + $0x1f8] sm:$0xff]
                  %411 = vst [vmem:[%s367 + $0xa8] sm:$0xff] %v410
                  %v412 = vld [vmem:[%s366 + $0x210] sm:$0xff]
                  %413 = vst [vmem:[%s367 + $0xb0] sm:$0xff] %v412
                  %v414 = vld [vmem:[%s366 + $0x228] sm:$0xff]
                  %415 = vst [vmem:[%s367 + $0xb8] sm:$0xff] %v414
                  %v416 = vld [vmem:[%s366 + $0x240] sm:$0xff]
                  %417 = vst [vmem:[%s367 + $0xc0] sm:$0xff] %v416
                  %v418 = vld [vmem:[%s366 + $0x258] sm:$0xff]
                  %419 = vst [vmem:[%s367 + $0xc8] sm:$0xff] %v418
                  %v420 = vld [vmem:[%s366 + $0x270] sm:$0xff]
                  %421 = vst [vmem:[%s367 + $0xd0] sm:$0xff] %v420
                  %v422 = vld [vmem:[%s366 + $0x288] sm:$0xff]
                  %423 = vst [vmem:[%s367 + $0xd8] sm:$0xff] %v422
                $region80: #{net_forward.1} parent=74 // loop_footer
                  %s365 = sadd.s32 1, %s361
                $region81: #{net_forward.1} parent=74 // loop_footer_branch
                  %360 = sbr.rel target = $region77
                $region82: #{net_forward.1} parent=74 // loop_exit
                  _
              $region75: #{net_forward.1} parent=59 // pred_fallthru
                _
              // Predicated region
              $region83: #{net_forward.1} parent=59 // pred_check
                _
              $region84: #{net_forward.1} parent=59 // pred_check_branch
                %425 = sbr.rel target = $region86
              $region85: #{net_forward.1} parent=59 // pred_region
                _
              $region86: #{net_forward.1} parent=59 // pred_fallthru
                _
            $region60: #{net_forward.1} parent=55 // pred_fallthru
              _
            // Predicated region
            $region61: #{net_forward.1} parent=55 // pred_check
              _
            $region62: #{net_forward.1} parent=55 // pred_check_branch
              %292 = sbr.rel target = $region64
            $region63: #{net_forward.1} parent=55 // pred_region
              loop: start=0, step=1, limit=1
              $region65: #{net_forward.1} parent=63 // loop_pre_header
                _
              $region66: #{net_forward.1} parent=63 // loop_header
                %s295 = sphi 0, %s299
                %p296 = scmp.ge.s32.totalorder %s295, 1
                %s300 = sphi %s286, %s286
                %s301 = sphi %s284, %s284
              $region67: #{net_forward.1} parent=63 // loop_header_branch
                %298 = sbr.rel (%p296) target = $region71
              $region68: #{net_forward.1} parent=63 // loop_body
                %v302 = vld [vmem:[%s300] sm:$0xff]
                %303 = vst [vmem:[%s301] sm:$0xff] %v302
                %v304 = vld [vmem:[%s300 + $0x18] sm:$0xff]
                %305 = vst [vmem:[%s301 + $0x8] sm:$0xff] %v304
                %v306 = vld [vmem:[%s300 + $0x30] sm:$0xff]
                %307 = vst [vmem:[%s301 + $0x10] sm:$0xff] %v306
                %v308 = vld [vmem:[%s300 + $0x48] sm:$0xff]
                %309 = vst [vmem:[%s301 + $0x18] sm:$0xff] %v308
                %v310 = vld [vmem:[%s300 + $0x60] sm:$0xff]
                %311 = vst [vmem:[%s301 + $0x20] sm:$0xff] %v310
                %v312 = vld [vmem:[%s300 + $0x78] sm:$0xff]
                %313 = vst [vmem:[%s301 + $0x28] sm:$0xff] %v312
                %v314 = vld [vmem:[%s300 + $0x90] sm:$0xff]
                %315 = vst [vmem:[%s301 + $0x30] sm:$0xff] %v314
                %v316 = vld [vmem:[%s300 + $0xa8] sm:$0xff]
                %317 = vst [vmem:[%s301 + $0x38] sm:$0xff] %v316
                %v318 = vld [vmem:[%s300 + $0xc0] sm:$0xff]
                %319 = vst [vmem:[%s301 + $0x40] sm:$0xff] %v318
                %v320 = vld [vmem:[%s300 + $0xd8] sm:$0xff]
                %321 = vst [vmem:[%s301 + $0x48] sm:$0xff] %v320
                %v322 = vld [vmem:[%s300 + $0xf0] sm:$0xff]
                %323 = vst [vmem:[%s301 + $0x50] sm:$0xff] %v322
                %v324 = vld [vmem:[%s300 + $0x108] sm:$0xff]
                %325 = vst [vmem:[%s301 + $0x58] sm:$0xff] %v324
                %v326 = vld [vmem:[%s300 + $0x120] sm:$0xff]
                %327 = vst [vmem:[%s301 + $0x60] sm:$0xff] %v326
                %v328 = vld [vmem:[%s300 + $0x138] sm:$0xff]
                %329 = vst [vmem:[%s301 + $0x68] sm:$0xff] %v328
                %v330 = vld [vmem:[%s300 + $0x150] sm:$0xff]
                %331 = vst [vmem:[%s301 + $0x70] sm:$0xff] %v330
                %v332 = vld [vmem:[%s300 + $0x168] sm:$0xff]
                %333 = vst [vmem:[%s301 + $0x78] sm:$0xff] %v332
                %v334 = vld [vmem:[%s300 + $0x180] sm:$0xff]
                %335 = vst [vmem:[%s301 + $0x80] sm:$0xff] %v334
                %v336 = vld [vmem:[%s300 + $0x198] sm:$0xff]
                %337 = vst [vmem:[%s301 + $0x88] sm:$0xff] %v336
                %v338 = vld [vmem:[%s300 + $0x1b0] sm:$0xff]
                %339 = vst [vmem:[%s301 + $0x90] sm:$0xff] %v338
                %v340 = vld [vmem:[%s300 + $0x1c8] sm:$0xff]
                %341 = vst [vmem:[%s301 + $0x98] sm:$0xff] %v340
                %v342 = vld [vmem:[%s300 + $0x1e0] sm:$0xff]
                %343 = vst [vmem:[%s301 + $0xa0] sm:$0xff] %v342
                %v344 = vld [vmem:[%s300 + $0x1f8] sm:$0xff]
                %345 = vst [vmem:[%s301 + $0xa8] sm:$0xff] %v344
                %v346 = vld [vmem:[%s300 + $0x210] sm:$0xff]
                %347 = vst [vmem:[%s301 + $0xb0] sm:$0xff] %v346
                %v348 = vld [vmem:[%s300 + $0x228] sm:$0xff]
                %349 = vst [vmem:[%s301 + $0xb8] sm:$0xff] %v348
                %v350 = vld [vmem:[%s300 + $0x240] sm:$0xff]
                %351 = vst [vmem:[%s301 + $0xc0] sm:$0xff] %v350
                %v352 = vld [vmem:[%s300 + $0x258] sm:$0xff]
                %353 = vst [vmem:[%s301 + $0xc8] sm:$0xff] %v352
                %v354 = vld [vmem:[%s300 + $0x270] sm:$0xff]
                %355 = vst [vmem:[%s301 + $0xd0] sm:$0xff] %v354
                %v356 = vld [vmem:[%s300 + $0x288] sm:$0xff]
                %357 = vst [vmem:[%s301 + $0xd8] sm:$0xff] %v356
              $region69: #{net_forward.1} parent=63 // loop_footer
                %s299 = sadd.s32 1, %s295
              $region70: #{net_forward.1} parent=63 // loop_footer_branch
                %294 = sbr.rel target = $region66
              $region71: #{net_forward.1} parent=63 // loop_exit
                _
            $region64: #{net_forward.1} parent=55 // pred_fallthru
              _
          $region56: #{net_forward.1} parent=51 // pred_fallthru
            _
          %426 = vnop
        $region52: #{net_forward.1} parent=47 // pred_fallthru
          _
      $region48: #{net_forward.1} parent=5 // pred_fallthru
        _
      %p427 = scmp.le.s32.totalorder 1, %s15
      %p428 = scmp.lt.s32.totalorder %s15, 4
      %p429 = pnand %p427, %p428
      %p430 = pneg %p429
      // Predicated region
      $region87: #{net_forward.1} parent=5 // pred_check
        _
      $region88: #{net_forward.1} parent=5 // pred_check_branch
        %432 = sbr.rel (%p429) target = $region90
      $region89: #{net_forward.1} parent=5 // pred_region
        %s433 = ssub.s32 %s15, 1
        %s434 = sand.u32 %s28, 1
        %s435 = sand.u32 %s28, 1
        %s436 = smul.addr %s435, 224
        %s437 = scalar_lea.vmem [#allocation3], %s436
        // Predicated region
        $region91: #{net_forward.1} parent=89 // pred_check
          %p438 = pneg %p41
        $region92: #{net_forward.1} parent=89 // pred_check_branch
          %440 = sbr.rel (%p438) target = $region94
        $region93: #{net_forward.1} parent=89 // pred_region
          _
        $region94: #{net_forward.1} parent=89 // pred_fallthru
          _
        %s441 = sand.u32 %s28, 1
        %s442 = sand.u32 %s28, 1
        %s443 = smul.addr %s442, 224
        %s444 = scalar_lea.vmem [#allocation3], %s443
        %p445 = pneg %p41
        %p446 = pneg %p38
        %p447 = pneg %p62
        %p448 = pneg %p59
        %p449 = pneg %p83
        %p450 = pneg %p80
        %p451 = pneg %p104
        %p452 = pneg %p101
        %p453 = pneg %p125
        %p454 = pneg %p122
        %p455 = pneg %p146
        %p456 = pneg %p143
        %p457 = pneg %p167
        %p458 = pneg %p164
        %p459 = pneg %p188
        %p460 = pneg %p185
        %p461 = pneg %p209
        %p462 = pneg %p206
        %p463 = pneg %p235
        %p464 = pneg %p232
        %p465 = scmp.lt.s32.totalorder %s20, 2
        %s466 = scalar_select %p465, %s20, 2
        %s467 = smul.addr %s466, 8
        %s468 = scalar_lea.vmem %s9, %s467
        %p469 = scmp.lt.s32.totalorder %s20, 2
        %s470 = scalar_select %p469, %s20, 2
        %s471 = smul.addr %s470, 8
        %s472 = scalar_lea.vmem %s9, %s471
        %v473 = vld [vmem:[%s437] sm:$0xff]
        %v474 = vld [vmem:[%s437 + $0x8] sm:$0xff]
        %v475 = vld [vmem:[%s437 + $0x10] sm:$0xff]
        %v476 = vld [vmem:[%s437 + $0x18] sm:$0xff]
        %v477 = vld [vmem:[%s437 + $0x20] sm:$0xff]
        %v478 = vld [vmem:[%s437 + $0x28] sm:$0xff]
        %v479 = vld [vmem:[%s437 + $0x30] sm:$0xff]
        %v480 = vld [vmem:[%s437 + $0x38] sm:$0xff]
        %v481 = vld [vmem:[%s437 + $0x40] sm:$0xff]
        %v482 = vld [vmem:[%s437 + $0x48] sm:$0xff]
        %v483 = vld [vmem:[%s437 + $0x50] sm:$0xff]
        %v484 = vld [vmem:[%s437 + $0x58] sm:$0xff]
        %s485 = scalar_lea.vmem %s437, 112 [#allocation3]
        %v486 = vld [vmem:[%s485] sm:$0xff]
        %v487 = vld [vmem:[%s485 + $0x8] sm:$0xff]
        %v488 = vld [vmem:[%s485 + $0x10] sm:$0xff]
        %v489 = vld [vmem:[%s485 + $0x18] sm:$0xff]
        %v490 = vld [vmem:[%s485 + $0x20] sm:$0xff]
        %v491 = vld [vmem:[%s485 + $0x28] sm:$0xff]
        %v492 = vld [vmem:[%s485 + $0x30] sm:$0xff]
        %v493 = vld [vmem:[%s485 + $0x38] sm:$0xff]
        %v494 = vld [vmem:[%s485 + $0x40] sm:$0xff]
        %v495 = vld [vmem:[%s485 + $0x48] sm:$0xff]
        %v496 = vld [vmem:[%s485 + $0x50] sm:$0xff]
        %v497 = vld [vmem:[%s485 + $0x58] sm:$0xff]
        %s498 = scalar_lea.vmem %s437, 8 [#allocation3]
        %v499 = vld [vmem:[%s498] sm:$0xff]
        %v500 = vld [vmem:[%s498 + $0x8] sm:$0xff]
        %v501 = vld [vmem:[%s498 + $0x10] sm:$0xff]
        %v502 = vld [vmem:[%s498 + $0x18] sm:$0xff]
        %v503 = vld [vmem:[%s498 + $0x20] sm:$0xff]
        %v504 = vld [vmem:[%s498 + $0x28] sm:$0xff]
        %v505 = vld [vmem:[%s498 + $0x30] sm:$0xff]
        %v506 = vld [vmem:[%s498 + $0x38] sm:$0xff]
        %v507 = vld [vmem:[%s498 + $0x40] sm:$0xff]
        %v508 = vld [vmem:[%s498 + $0x48] sm:$0xff]
        %v509 = vld [vmem:[%s498 + $0x50] sm:$0xff]
        %v510 = vld [vmem:[%s498 + $0x58] sm:$0xff]
        %s511 = scalar_lea.vmem %s437, 120 [#allocation3]
        %v512 = vld [vmem:[%s511] sm:$0xff]
        %v513 = vld [vmem:[%s511 + $0x8] sm:$0xff]
        %v514 = vld [vmem:[%s511 + $0x10] sm:$0xff]
        %v515 = vld [vmem:[%s511 + $0x18] sm:$0xff]
        %v516 = vld [vmem:[%s511 + $0x20] sm:$0xff]
        %v517 = vld [vmem:[%s511 + $0x28] sm:$0xff]
        %v518 = vld [vmem:[%s511 + $0x30] sm:$0xff]
        %v519 = vld [vmem:[%s511 + $0x38] sm:$0xff]
        %v520 = vld [vmem:[%s511 + $0x40] sm:$0xff]
        %v521 = vld [vmem:[%s511 + $0x48] sm:$0xff]
        %v522 = vld [vmem:[%s511 + $0x50] sm:$0xff]
        %v523 = vld [vmem:[%s511 + $0x58] sm:$0xff]
        %s524 = scalar_lea.vmem %s437, 16 [#allocation3]
        %v525 = vld [vmem:[%s524] sm:$0xff]
        %v526 = vld [vmem:[%s524 + $0x8] sm:$0xff]
        %v527 = vld [vmem:[%s524 + $0x10] sm:$0xff]
        %v528 = vld [vmem:[%s524 + $0x18] sm:$0xff]
        %v529 = vld [vmem:[%s524 + $0x20] sm:$0xff]
        %v530 = vld [vmem:[%s524 + $0x28] sm:$0xff]
        %v531 = vld [vmem:[%s524 + $0x30] sm:$0xff]
        %v532 = vld [vmem:[%s524 + $0x38] sm:$0xff]
        %v533 = vld [vmem:[%s524 + $0x40] sm:$0xff]
        %v534 = vld [vmem:[%s524 + $0x48] sm:$0xff]
        %v535 = vld [vmem:[%s524 + $0x50] sm:$0xff]
        %v536 = vld [vmem:[%s524 + $0x58] sm:$0xff]
        %s537 = scalar_lea.vmem %s437, 128 [#allocation3]
        %v538 = vld [vmem:[%s537] sm:$0xff]
        %v539 = vld [vmem:[%s537 + $0x8] sm:$0xff]
        %v540 = vld [vmem:[%s537 + $0x10] sm:$0xff]
        %v541 = vld [vmem:[%s537 + $0x18] sm:$0xff]
        %v542 = vld [vmem:[%s537 + $0x20] sm:$0xff]
        %v543 = vld [vmem:[%s537 + $0x28] sm:$0xff]
        %v544 = vld [vmem:[%s537 + $0x30] sm:$0xff]
        %v545 = vld [vmem:[%s537 + $0x38] sm:$0xff]
        %v546 = vld [vmem:[%s537 + $0x40] sm:$0xff]
        %v547 = vld [vmem:[%s537 + $0x48] sm:$0xff]
        %v548 = vld [vmem:[%s537 + $0x50] sm:$0xff]
        %v549 = vld [vmem:[%s537 + $0x58] sm:$0xff]
        %v550 = vld [vmem:[%s1] sm:$0xff]
        %v551 = vld [vmem:[%s1 + $0x8] sm:$0xff]
        %v552 = vld [vmem:[%s1 + $0x10] sm:$0xff]
        %v553 = vld [vmem:[%s1 + $0x18] sm:$0xff]
        %v554 = vld [vmem:[%s1 + $0x20] sm:$0xff]
        %v555 = vld [vmem:[%s1 + $0x28] sm:$0xff]
        %v556 = vld [vmem:[%s1 + $0x30] sm:$0xff]
        %v557 = vld [vmem:[%s1 + $0x38] sm:$0xff]
        %v558 = vld [vmem:[%s1 + $0x40] sm:$0xff]
        %v559 = vld [vmem:[%s1 + $0x48] sm:$0xff]
        %v560 = vld [vmem:[%s1 + $0x50] sm:$0xff]
        %v561 = vld [vmem:[%s1 + $0x58] sm:$0xff]
        %v562 = vld [vmem:[%s1 + $0x60] sm:$0xff]
        %v563 = vld [vmem:[%s1 + $0x68] sm:$0xff]
        %v564 = vld [vmem:[%s1 + $0x70] sm:$0xff]
        %v565 = vld [vmem:[%s1 + $0x78] sm:$0xff]
        %s566 = scalar_lea.vmem %s1, 128
        %v567 = vld [vmem:[%s566] sm:$0xff]
        %v568 = vld [vmem:[%s566 + $0x8] sm:$0xff]
        %v569 = vld [vmem:[%s566 + $0x10] sm:$0xff]
        %v570 = vld [vmem:[%s566 + $0x18] sm:$0xff]
        %v571 = vld [vmem:[%s566 + $0x20] sm:$0xff]
        %v572 = vld [vmem:[%s566 + $0x28] sm:$0xff]
        %v573 = vld [vmem:[%s566 + $0x30] sm:$0xff]
        %v574 = vld [vmem:[%s566 + $0x38] sm:$0xff]
        %v575 = vld [vmem:[%s566 + $0x40] sm:$0xff]
        %v576 = vld [vmem:[%s566 + $0x48] sm:$0xff]
        %v577 = vld [vmem:[%s566 + $0x50] sm:$0xff]
        %v578 = vld [vmem:[%s566 + $0x58] sm:$0xff]
        %v579 = vld [vmem:[%s566 + $0x60] sm:$0xff]
        %v580 = vld [vmem:[%s566 + $0x68] sm:$0xff]
        %v581 = vld [vmem:[%s566 + $0x70] sm:$0xff]
        %v582 = vld [vmem:[%s566 + $0x78] sm:$0xff]
        %583 = vmatprep.subr.mxu0 0.0
        %584 = vmatpush1.msra.mxu0 %v567
        %585 = vmatprep.subr.mxu0 0.0
        %586 = vmatpush1.msra.mxu0 %v568
        %587 = vmatprep.subr.mxu0 0.0
        %588 = vmatpush1.msra.mxu0 %v569
        %589 = vmatprep.subr.mxu0 0.0
        %590 = vmatpush1.msra.mxu0 %v570
        %591 = vmatprep.subr.mxu0 0.0
        %592 = vmatpush1.msra.mxu0 %v571
        %593 = vmatprep.subr.mxu0 0.0
        %594 = vmatpush1.msra.mxu0 %v572
        %595 = vmatprep.subr.mxu0 0.0
        %596 = vmatpush1.msra.mxu0 %v573
        %597 = vmatprep.subr.mxu0 0.0
        %598 = vmatpush1.msra.mxu0 %v574
        %599 = vmatprep.subr.mxu0 0.0
        %600 = vmatpush1.msra.mxu0 %v575
        %601 = vmatprep.subr.mxu0 0.0
        %602 = vmatpush1.msra.mxu0 %v576
        %603 = vmatprep.subr.mxu0 0.0
        %604 = vmatpush1.msra.mxu0 %v577
        %605 = vmatprep.subr.mxu0 0.0
        %606 = vmatpush1.msra.mxu0 %v578
        %607 = vmatprep.subr.mxu0 0.0
        %608 = vmatpush1.msra.mxu0 %v579
        %609 = vmatprep.subr.mxu0 0.0
        %610 = vmatpush1.msra.mxu0 %v580
        %611 = vmatprep.subr.mxu0 0.0
        %612 = vmatpush1.msra.mxu0 %v581
        %613 = vmatprep.subr.mxu0 0.0
        %614 = vmatpush1.msra.mxu0 %v582
        %615 = vmatprep.subr.mxu0 0.0
        %616 = vmatpush1.msra.mxu0 0.0
        %617 = vmatprep.subr.mxu0 0.0
        %618 = vmatpush1.msra.mxu0 0.0
        %619 = vmatprep.subr.mxu0 0.0
        %620 = vmatpush1.msra.mxu0 0.0
        %621 = vmatprep.subr.mxu0 0.0
        %622 = vmatpush1.msra.mxu0 0.0
        %623 = vmatprep.subr.mxu0 0.0
        %624 = vmatpush1.msra.mxu0 0.0
        %625 = vmatprep.subr.mxu0 0.0
        %626 = vmatpush1.msra.mxu0 0.0
        %627 = vmatprep.subr.mxu0 0.0
        %628 = vmatpush1.msra.mxu0 0.0
        %629 = vmatprep.subr.mxu0 0.0
        %630 = vmatpush1.msra.mxu0 0.0
        %631 = vmatprep.subr.mxu0 0.0
        %632 = vmatpush1.msra.mxu0 0.0
        %633 = vmatprep.subr.mxu0 0.0
        %634 = vmatpush1.msra.mxu0 0.0
        %635 = vmatprep.subr.mxu0 0.0
        %636 = vmatpush1.msra.mxu0 0.0
        %637 = vmatprep.subr.mxu0 0.0
        %638 = vmatpush1.msra.mxu0 0.0
        %639 = vmatprep.subr.mxu0 0.0
        %640 = vmatpush1.msra.mxu0 0.0
        %641 = vmatprep.subr.mxu0 0.0
        %642 = vmatpush1.msra.mxu0 0.0
        %643 = vmatprep.subr.mxu0 0.0
        %644 = vmatpush1.msra.mxu0 0.0
        %645 = vmatprep.subr.mxu0 0.0
        %646 = vmatpush1.msra.mxu0 0.0
        %647 = vmatprep.mubr.f32.mxu0 0.0
        %648 = vmatmul.mubr.f32.gmra.mrb[0].mxu0 %v486
        %v649 = vpop.f32.mrb[0].mxu0
        %v650 = vadd.f32 0.0, %v649
        %v651 = vpop.f32.mrb[0].mxu0
        %652 = vmatprep.mubr.f32.mxu0 0.0
        %653 = vmatmul.mubr.f32.gmra.mrb[0].mxu0 %v487
        %v654 = vpop.f32.mrb[0].mxu0
        %v655 = vadd.f32 0.0, %v654
        %v656 = vpop.f32.mrb[0].mxu0
        %657 = vmatprep.mubr.f32.mxu0 0.0
        %658 = vmatmul.mubr.f32.gmra.mrb[0].mxu0 %v488
        %v659 = vpop.f32.mrb[0].mxu0
        %v660 = vadd.f32 0.0, %v659
        %v661 = vpop.f32.mrb[0].mxu0
        %662 = vmatprep.mubr.f32.mxu0 0.0
        %663 = vmatmul.mubr.f32.gmra.mrb[0].mxu0 %v489
        %v664 = vpop.f32.mrb[0].mxu0
        %v665 = vadd.f32 0.0, %v664
        %v666 = vpop.f32.mrb[0].mxu0
        %667 = vmatprep.mubr.f32.mxu0 0.0
        %668 = vmatmul.mubr.f32.gmra.mrb[0].mxu0 %v490
        %v669 = vpop.f32.mrb[0].mxu0
        %v670 = vadd.f32 0.0, %v669
        %v671 = vpop.f32.mrb[0].mxu0
        %672 = vmatprep.mubr.f32.mxu0 0.0
        %673 = vmatmul.mubr.f32.gmra.mrb[0].mxu0 %v491
        %v674 = vpop.f32.mrb[0].mxu0
        %v675 = vadd.f32 0.0, %v674
        %v676 = vpop.f32.mrb[0].mxu0
        %677 = vmatprep.mubr.f32.mxu0 0.0
        %678 = vmatmul.mubr.f32.gmra.mrb[0].mxu0 %v492
        %v679 = vpop.f32.mrb[0].mxu0
        %v680 = vadd.f32 0.0, %v679
        %v681 = vpop.f32.mrb[0].mxu0
        %682 = vmatprep.mubr.f32.mxu0 0.0
        %683 = vmatmul.mubr.f32.gmra.mrb[0].mxu0 %v493
        %v684 = vpop.f32.mrb[0].mxu0
        %v685 = vadd.f32 0.0, %v684
        %v686 = vpop.f32.mrb[0].mxu0
        %687 = vmatprep.mubr.f32.mxu0 0.0
        %688 = vmatmul.mubr.f32.gmra.mrb[0].mxu0 %v494
        %v689 = vpop.f32.mrb[0].mxu0
        %v690 = vadd.f32 0.0, %v689
        %v691 = vpop.f32.mrb[0].mxu0
        %692 = vmatprep.mubr.f32.mxu0 0.0
        %693 = vmatmul.mubr.f32.gmra.mrb[0].mxu0 %v495
        %v694 = vpop.f32.mrb[0].mxu0
        %v695 = vadd.f32 0.0, %v694
        %v696 = vpop.f32.mrb[0].mxu0
        %697 = vmatprep.mubr.f32.mxu0 0.0
        %698 = vmatmul.mubr.f32.gmra.mrb[0].mxu0 %v496
        %v699 = vpop.f32.mrb[0].mxu0
        %v700 = vadd.f32 0.0, %v699
        %v701 = vpop.f32.mrb[0].mxu0
        %702 = vmatprep.mubr.f32.mxu0 0.0
        %703 = vmatmul.mubr.f32.gmra.mrb[0].mxu0 %v497
        %v704 = vpop.f32.mrb[0].mxu0
        %v705 = vadd.f32 0.0, %v704
        %v706 = vpop.f32.mrb[0].mxu0
        %707 = vdwg.mxu0
        %708 = vmatprep.subr.mxu0 0.0
        %709 = vmatpush1.msra.mxu0 %v550
        %710 = vmatprep.subr.mxu0 0.0
        %711 = vmatpush1.msra.mxu0 %v551
        %712 = vmatprep.subr.mxu0 0.0
        %713 = vmatpush1.msra.mxu0 %v552
        %714 = vmatprep.subr.mxu0 0.0
        %715 = vmatpush1.msra.mxu0 %v553
        %716 = vmatprep.subr.mxu0 0.0
        %717 = vmatpush1.msra.mxu0 %v554
        %718 = vmatprep.subr.mxu0 0.0
        %719 = vmatpush1.msra.mxu0 %v555
        %720 = vmatprep.subr.mxu0 0.0
        %721 = vmatpush1.msra.mxu0 %v556
        %722 = vmatprep.subr.mxu0 0.0
        %723 = vmatpush1.msra.mxu0 %v557
        %724 = vmatprep.subr.mxu0 0.0
        %725 = vmatpush1.msra.mxu0 %v558
        %726 = vmatprep.subr.mxu0 0.0
        %727 = vmatpush1.msra.mxu0 %v559
        %728 = vmatprep.subr.mxu0 0.0
        %729 = vmatpush1.msra.mxu0 %v560
        %730 = vmatprep.subr.mxu0 0.0
        %731 = vmatpush1.msra.mxu0 %v561
        %732 = vmatprep.subr.mxu0 0.0
        %733 = vmatpush1.msra.mxu0 %v562
        %734 = vmatprep.subr.mxu0 0.0
        %735 = vmatpush1.msra.mxu0 %v563
        %736 = vmatprep.subr.mxu0 0.0
        %737 = vmatpush1.msra.mxu0 %v564
        %738 = vmatprep.subr.mxu0 0.0
        %739 = vmatpush1.msra.mxu0 %v565
        %740 = vmatprep.subr.mxu0 0.0
        %741 = vmatpush1.msra.mxu0 0.0
        %742 = vmatprep.subr.mxu0 0.0
        %743 = vmatpush1.msra.mxu0 0.0
        %744 = vmatprep.subr.mxu0 0.0
        %745 = vmatpush1.msra.mxu0 0.0
        %746 = vmatprep.subr.mxu0 0.0
        %747 = vmatpush1.msra.mxu0 0.0
        %748 = vmatprep.subr.mxu0 0.0
        %749 = vmatpush1.msra.mxu0 0.0
        %750 = vmatprep.subr.mxu0 0.0
        %751 = vmatpush1.msra.mxu0 0.0
        %752 = vmatprep.subr.mxu0 0.0
        %753 = vmatpush1.msra.mxu0 0.0
        %754 = vmatprep.subr.mxu0 0.0
        %755 = vmatpush1.msra.mxu0 0.0
        %756 = vmatprep.subr.mxu0 0.0
        %757 = vmatpush1.msra.mxu0 0.0
        %758 = vmatprep.subr.mxu0 0.0
        %759 = vmatpush1.msra.mxu0 0.0
        %760 = vmatprep.subr.mxu0 0.0
        %761 = vmatpush1.msra.mxu0 0.0
        %762 = vmatprep.subr.mxu0 0.0
        %763 = vmatpush1.msra.mxu0 0.0
        %764 = vmatprep.subr.mxu0 0.0
        %765 = vmatpush1.msra.mxu0 0.0
        %766 = vmatprep.subr.mxu0 0.0
        %767 = vmatpush1.msra.mxu0 0.0
        %768 = vmatprep.subr.mxu0 0.0
        %769 = vmatpush1.msra.mxu0 0.0
        %770 = vmatprep.subr.mxu0 0.0
        %771 = vmatpush1.msra.mxu0 0.0
        %772 = vmatprep.mubr.f32.mxu0 0.0
        %773 = vmatmul.mubr.f32.gmra.mrb[0].mxu0 %v473
        %v774 = vpop.f32.mrb[0].mxu0
        %v775 = vadd.f32 %v650, %v774
        %v776 = vpop.f32.mrb[0].mxu0
        %777 = vmatprep.mubr.f32.mxu0 0.0
        %778 = vmatmul.mubr.f32.gmra.mrb[0].mxu0 %v474
        %v779 = vpop.f32.mrb[0].mxu0
        %v780 = vadd.f32 %v655, %v779
        %v781 = vpop.f32.mrb[0].mxu0
        %782 = vmatprep.mubr.f32.mxu0 0.0
        %783 = vmatmul.mubr.f32.gmra.mrb[0].mxu0 %v475
        %v784 = vpop.f32.mrb[0].mxu0
        %v785 = vadd.f32 %v660, %v784
        %v786 = vpop.f32.mrb[0].mxu0
        %787 = vmatprep.mubr.f32.mxu0 0.0
        %788 = vmatmul.mubr.f32.gmra.mrb[0].mxu0 %v476
        %v789 = vpop.f32.mrb[0].mxu0
        %v790 = vadd.f32 %v665, %v789
        %v791 = vpop.f32.mrb[0].mxu0
        %792 = vmatprep.mubr.f32.mxu0 0.0
        %793 = vmatmul.mubr.f32.gmra.mrb[0].mxu0 %v477
        %v794 = vpop.f32.mrb[0].mxu0
        %v795 = vadd.f32 %v670, %v794
        %v796 = vpop.f32.mrb[0].mxu0
        %797 = vmatprep.mubr.f32.mxu0 0.0
        %798 = vmatmul.mubr.f32.gmra.mrb[0].mxu0 %v478
        %v799 = vpop.f32.mrb[0].mxu0
        %v800 = vadd.f32 %v675, %v799
        %v801 = vpop.f32.mrb[0].mxu0
        %802 = vmatprep.mubr.f32.mxu0 0.0
        %803 = vmatmul.mubr.f32.gmra.mrb[0].mxu0 %v479
        %v804 = vpop.f32.mrb[0].mxu0
        %v805 = vadd.f32 %v680, %v804
        %v806 = vpop.f32.mrb[0].mxu0
        %807 = vmatprep.mubr.f32.mxu0 0.0
        %808 = vmatmul.mubr.f32.gmra.mrb[0].mxu0 %v480
        %v809 = vpop.f32.mrb[0].mxu0
        %v810 = vadd.f32 %v685, %v809
        %v811 = vpop.f32.mrb[0].mxu0
        %812 = vmatprep.mubr.f32.mxu0 0.0
        %813 = vmatmul.mubr.f32.gmra.mrb[0].mxu0 %v481
        %v814 = vpop.f32.mrb[0].mxu0
        %v815 = vadd.f32 %v690, %v814
        %v816 = vpop.f32.mrb[0].mxu0
        %817 = vmatprep.mubr.f32.mxu0 0.0
        %818 = vmatmul.mubr.f32.gmra.mrb[0].mxu0 %v482
        %v819 = vpop.f32.mrb[0].mxu0
        %v820 = vadd.f32 %v695, %v819
        %v821 = vpop.f32.mrb[0].mxu0
        %822 = vmatprep.mubr.f32.mxu0 0.0
        %823 = vmatmul.mubr.f32.gmra.mrb[0].mxu0 %v483
        %v824 = vpop.f32.mrb[0].mxu0
        %v825 = vadd.f32 %v700, %v824
        %v826 = vpop.f32.mrb[0].mxu0
        %827 = vmatprep.mubr.f32.mxu0 0.0
        %828 = vmatmul.mubr.f32.gmra.mrb[0].mxu0 %v484
        %v829 = vpop.f32.mrb[0].mxu0
        %v830 = vadd.f32 %v705, %v829
        %v831 = vpop.f32.mrb[0].mxu0
        %832 = vdwg.mxu0
        %s833 = scalar_lea.vmem %s1, 256
        %v834 = vld [vmem:[%s833] sm:$0xff]
        %v835 = vld [vmem:[%s833 + $0x8] sm:$0xff]
        %v836 = vld [vmem:[%s833 + $0x10] sm:$0xff]
        %v837 = vld [vmem:[%s833 + $0x18] sm:$0xff]
        %v838 = vld [vmem:[%s833 + $0x20] sm:$0xff]
        %v839 = vld [vmem:[%s833 + $0x28] sm:$0xff]
        %v840 = vld [vmem:[%s833 + $0x30] sm:$0xff]
        %v841 = vld [vmem:[%s833 + $0x38] sm:$0xff]
        %v842 = vld [vmem:[%s833 + $0x40] sm:$0xff]
        %v843 = vld [vmem:[%s833 + $0x48] sm:$0xff]
        %v844 = vld [vmem:[%s833 + $0x50] sm:$0xff]
        %v845 = vld [vmem:[%s833 + $0x58] sm:$0xff]
        %v846 = vld [vmem:[%s833 + $0x60] sm:$0xff]
        %v847 = vld [vmem:[%s833 + $0x68] sm:$0xff]
        %v848 = vld [vmem:[%s833 + $0x70] sm:$0xff]
        %v849 = vld [vmem:[%s833 + $0x78] sm:$0xff]
        %850 = vmatprep.subr.mxu0 0.0
        %851 = vmatpush1.msra.mxu0 %v834
        %852 = vmatprep.subr.mxu0 0.0
        %853 = vmatpush1.msra.mxu0 %v835
        %854 = vmatprep.subr.mxu0 0.0
        %855 = vmatpush1.msra.mxu0 %v836
        %856 = vmatprep.subr.mxu0 0.0
        %857 = vmatpush1.msra.mxu0 %v837
        %858 = vmatprep.subr.mxu0 0.0
        %859 = vmatpush1.msra.mxu0 %v838
        %860 = vmatprep.subr.mxu0 0.0
        %861 = vmatpush1.msra.mxu0 %v839
        %862 = vmatprep.subr.mxu0 0.0
        %863 = vmatpush1.msra.mxu0 %v840
        %864 = vmatprep.subr.mxu0 0.0
        %865 = vmatpush1.msra.mxu0 %v841
        %866 = vmatprep.subr.mxu0 0.0
        %867 = vmatpush1.msra.mxu0 %v842
        %868 = vmatprep.subr.mxu0 0.0
        %869 = vmatpush1.msra.mxu0 %v843
        %870 = vmatprep.subr.mxu0 0.0
        %871 = vmatpush1.msra.mxu0 %v844
        %872 = vmatprep.subr.mxu0 0.0
        %873 = vmatpush1.msra.mxu0 %v845
        %874 = vmatprep.subr.mxu0 0.0
        %875 = vmatpush1.msra.mxu0 %v846
        %876 = vmatprep.subr.mxu0 0.0
        %877 = vmatpush1.msra.mxu0 %v847
        %878 = vmatprep.subr.mxu0 0.0
        %879 = vmatpush1.msra.mxu0 %v848
        %880 = vmatprep.subr.mxu0 0.0
        %881 = vmatpush1.msra.mxu0 %v849
        %882 = vmatprep.subr.mxu0 0.0
        %883 = vmatpush1.msra.mxu0 0.0
        %884 = vmatprep.subr.mxu0 0.0
        %885 = vmatpush1.msra.mxu0 0.0
        %886 = vmatprep.subr.mxu0 0.0
        %887 = vmatpush1.msra.mxu0 0.0
        %888 = vmatprep.subr.mxu0 0.0
        %889 = vmatpush1.msra.mxu0 0.0
        %890 = vmatprep.subr.mxu0 0.0
        %891 = vmatpush1.msra.mxu0 0.0
        %892 = vmatprep.subr.mxu0 0.0
        %893 = vmatpush1.msra.mxu0 0.0
        %894 = vmatprep.subr.mxu0 0.0
        %895 = vmatpush1.msra.mxu0 0.0
        %896 = vmatprep.subr.mxu0 0.0
        %897 = vmatpush1.msra.mxu0 0.0
        %898 = vmatprep.subr.mxu0 0.0
        %899 = vmatpush1.msra.mxu0 0.0
        %900 = vmatprep.subr.mxu0 0.0
        %901 = vmatpush1.msra.mxu0 0.0
        %902 = vmatprep.subr.mxu0 0.0
        %903 = vmatpush1.msra.mxu0 0.0
        %904 = vmatprep.subr.mxu0 0.0
        %905 = vmatpush1.msra.mxu0 0.0
        %906 = vmatprep.subr.mxu0 0.0
        %907 = vmatpush1.msra.mxu0 0.0
        %908 = vmatprep.subr.mxu0 0.0
        %909 = vmatpush1.msra.mxu0 0.0
        %910 = vmatprep.subr.mxu0 0.0
        %911 = vmatpush1.msra.mxu0 0.0
        %912 = vmatprep.subr.mxu0 0.0
        %913 = vmatpush1.msra.mxu0 0.0
        %914 = vmatprep.mubr.f32.mxu0 0.0
        %915 = vmatmul.mubr.f32.gmra.mrb[0].mxu0 %v499
        %v916 = vpop.f32.mrb[0].mxu0
        %v917 = vadd.f32 0.0, %v916
        %v918 = vpop.f32.mrb[0].mxu0
        %919 = vmatprep.mubr.f32.mxu0 0.0
        %920 = vmatmul.mubr.f32.gmra.mrb[0].mxu0 %v500
        %v921 = vpop.f32.mrb[0].mxu0
        %v922 = vadd.f32 0.0, %v921
        %v923 = vpop.f32.mrb[0].mxu0
        %924 = vmatprep.mubr.f32.mxu0 0.0
        %925 = vmatmul.mubr.f32.gmra.mrb[0].mxu0 %v501
        %v926 = vpop.f32.mrb[0].mxu0
        %v927 = vadd.f32 0.0, %v926
        %v928 = vpop.f32.mrb[0].mxu0
        %929 = vmatprep.mubr.f32.mxu0 0.0
        %930 = vmatmul.mubr.f32.gmra.mrb[0].mxu0 %v502
        %v931 = vpop.f32.mrb[0].mxu0
        %v932 = vadd.f32 0.0, %v931
        %v933 = vpop.f32.mrb[0].mxu0
        %934 = vmatprep.mubr.f32.mxu0 0.0
        %935 = vmatmul.mubr.f32.gmra.mrb[0].mxu0 %v503
        %v936 = vpop.f32.mrb[0].mxu0
        %v937 = vadd.f32 0.0, %v936
        %v938 = vpop.f32.mrb[0].mxu0
        %939 = vmatprep.mubr.f32.mxu0 0.0
        %940 = vmatmul.mubr.f32.gmra.mrb[0].mxu0 %v504
        %v941 = vpop.f32.mrb[0].mxu0
        %v942 = vadd.f32 0.0, %v941
        %v943 = vpop.f32.mrb[0].mxu0
        %944 = vmatprep.mubr.f32.mxu0 0.0
        %945 = vmatmul.mubr.f32.gmra.mrb[0].mxu0 %v505
        %v946 = vpop.f32.mrb[0].mxu0
        %v947 = vadd.f32 0.0, %v946
        %v948 = vpop.f32.mrb[0].mxu0
        %949 = vmatprep.mubr.f32.mxu0 0.0
        %950 = vmatmul.mubr.f32.gmra.mrb[0].mxu0 %v506
        %v951 = vpop.f32.mrb[0].mxu0
        %v952 = vadd.f32 0.0, %v951
        %v953 = vpop.f32.mrb[0].mxu0
        %954 = vmatprep.mubr.f32.mxu0 0.0
        %955 = vmatmul.mubr.f32.gmra.mrb[0].mxu0 %v507
        %v956 = vpop.f32.mrb[0].mxu0
        %v957 = vadd.f32 0.0, %v956
        %v958 = vpop.f32.mrb[0].mxu0
        %959 = vmatprep.mubr.f32.mxu0 0.0
        %960 = vmatmul.mubr.f32.gmra.mrb[0].mxu0 %v508
        %v961 = vpop.f32.mrb[0].mxu0
        %v962 = vadd.f32 0.0, %v961
        %v963 = vpop.f32.mrb[0].mxu0
        %964 = vmatprep.mubr.f32.mxu0 0.0
        %965 = vmatmul.mubr.f32.gmra.mrb[0].mxu0 %v509
        %v966 = vpop.f32.mrb[0].mxu0
        %v967 = vadd.f32 0.0, %v966
        %v968 = vpop.f32.mrb[0].mxu0
        %969 = vmatprep.mubr.f32.mxu0 0.0
        %970 = vmatmul.mubr.f32.gmra.mrb[0].mxu0 %v510
        %v971 = vpop.f32.mrb[0].mxu0
        %v972 = vadd.f32 0.0, %v971
        %v973 = vpop.f32.mrb[0].mxu0
        %974 = vdwg.mxu0
        %v975 = vadd.f32 %v775, %v917
        %v976 = vadd.f32 %v780, %v922
        %v977 = vadd.f32 %v785, %v927
        %v978 = vadd.f32 %v790, %v932
        %v979 = vadd.f32 %v795, %v937
        %v980 = vadd.f32 %v800, %v942
        %v981 = vadd.f32 %v805, %v947
        %v982 = vadd.f32 %v810, %v952
        %v983 = vadd.f32 %v815, %v957
        %v984 = vadd.f32 %v820, %v962
        %v985 = vadd.f32 %v825, %v967
        %v986 = vadd.f32 %v830, %v972
        %s987 = scalar_lea.vmem %s1, 384
        %v988 = vld [vmem:[%s987] sm:$0xff]
        %v989 = vld [vmem:[%s987 + $0x8] sm:$0xff]
        %v990 = vld [vmem:[%s987 + $0x10] sm:$0xff]
        %v991 = vld [vmem:[%s987 + $0x18] sm:$0xff]
        %v992 = vld [vmem:[%s987 + $0x20] sm:$0xff]
        %v993 = vld [vmem:[%s987 + $0x28] sm:$0xff]
        %v994 = vld [vmem:[%s987 + $0x30] sm:$0xff]
        %v995 = vld [vmem:[%s987 + $0x38] sm:$0xff]
        %v996 = vld [vmem:[%s987 + $0x40] sm:$0xff]
        %v997 = vld [vmem:[%s987 + $0x48] sm:$0xff]
        %v998 = vld [vmem:[%s987 + $0x50] sm:$0xff]
        %v999 = vld [vmem:[%s987 + $0x58] sm:$0xff]
        %v1000 = vld [vmem:[%s987 + $0x60] sm:$0xff]
        %v1001 = vld [vmem:[%s987 + $0x68] sm:$0xff]
        %v1002 = vld [vmem:[%s987 + $0x70] sm:$0xff]
        %v1003 = vld [vmem:[%s987 + $0x78] sm:$0xff]
        %1004 = vmatprep.subr.mxu0 0.0
        %1005 = vmatpush1.msra.mxu0 %v988
        %1006 = vmatprep.subr.mxu0 0.0
        %1007 = vmatpush1.msra.mxu0 %v989
        %1008 = vmatprep.subr.mxu0 0.0
        %1009 = vmatpush1.msra.mxu0 %v990
        %1010 = vmatprep.subr.mxu0 0.0
        %1011 = vmatpush1.msra.mxu0 %v991
        %1012 = vmatprep.subr.mxu0 0.0
        %1013 = vmatpush1.msra.mxu0 %v992
        %1014 = vmatprep.subr.mxu0 0.0
        %1015 = vmatpush1.msra.mxu0 %v993
        %1016 = vmatprep.subr.mxu0 0.0
        %1017 = vmatpush1.msra.mxu0 %v994
        %1018 = vmatprep.subr.mxu0 0.0
        %1019 = vmatpush1.msra.mxu0 %v995
        %1020 = vmatprep.subr.mxu0 0.0
        %1021 = vmatpush1.msra.mxu0 %v996
        %1022 = vmatprep.subr.mxu0 0.0
        %1023 = vmatpush1.msra.mxu0 %v997
        %1024 = vmatprep.subr.mxu0 0.0
        %1025 = vmatpush1.msra.mxu0 %v998
        %1026 = vmatprep.subr.mxu0 0.0
        %1027 = vmatpush1.msra.mxu0 %v999
        %1028 = vmatprep.subr.mxu0 0.0
        %1029 = vmatpush1.msra.mxu0 %v1000
        %1030 = vmatprep.subr.mxu0 0.0
        %1031 = vmatpush1.msra.mxu0 %v1001
        %1032 = vmatprep.subr.mxu0 0.0
        %1033 = vmatpush1.msra.mxu0 %v1002
        %1034 = vmatprep.subr.mxu0 0.0
        %1035 = vmatpush1.msra.mxu0 %v1003
        %1036 = vmatprep.subr.mxu0 0.0
        %1037 = vmatpush1.msra.mxu0 0.0
        %1038 = vmatprep.subr.mxu0 0.0
        %1039 = vmatpush1.msra.mxu0 0.0
        %1040 = vmatprep.subr.mxu0 0.0
        %1041 = vmatpush1.msra.mxu0 0.0
        %1042 = vmatprep.subr.mxu0 0.0
        %1043 = vmatpush1.msra.mxu0 0.0
        %1044 = vmatprep.subr.mxu0 0.0
        %1045 = vmatpush1.msra.mxu0 0.0
        %1046 = vmatprep.subr.mxu0 0.0
        %1047 = vmatpush1.msra.mxu0 0.0
        %1048 = vmatprep.subr.mxu0 0.0
        %1049 = vmatpush1.msra.mxu0 0.0
        %1050 = vmatprep.subr.mxu0 0.0
        %1051 = vmatpush1.msra.mxu0 0.0
        %1052 = vmatprep.subr.mxu0 0.0
        %1053 = vmatpush1.msra.mxu0 0.0
        %1054 = vmatprep.subr.mxu0 0.0
        %1055 = vmatpush1.msra.mxu0 0.0
        %1056 = vmatprep.subr.mxu0 0.0
        %1057 = vmatpush1.msra.mxu0 0.0
        %1058 = vmatprep.subr.mxu0 0.0
        %1059 = vmatpush1.msra.mxu0 0.0
        %1060 = vmatprep.subr.mxu0 0.0
        %1061 = vmatpush1.msra.mxu0 0.0
        %1062 = vmatprep.subr.mxu0 0.0
        %1063 = vmatpush1.msra.mxu0 0.0
        %1064 = vmatprep.subr.mxu0 0.0
        %1065 = vmatpush1.msra.mxu0 0.0
        %1066 = vmatprep.subr.mxu0 0.0
        %1067 = vmatpush1.msra.mxu0 0.0
        %1068 = vmatprep.mubr.f32.mxu0 0.0
        %1069 = vmatmul.mubr.f32.gmra.mrb[0].mxu0 %v512
        %v1070 = vpop.f32.mrb[0].mxu0
        %v1071 = vadd.f32 0.0, %v1070
        %v1072 = vpop.f32.mrb[0].mxu0
        %1073 = vmatprep.mubr.f32.mxu0 0.0
        %1074 = vmatmul.mubr.f32.gmra.mrb[0].mxu0 %v513
        %v1075 = vpop.f32.mrb[0].mxu0
        %v1076 = vadd.f32 0.0, %v1075
        %v1077 = vpop.f32.mrb[0].mxu0
        %1078 = vmatprep.mubr.f32.mxu0 0.0
        %1079 = vmatmul.mubr.f32.gmra.mrb[0].mxu0 %v514
        %v1080 = vpop.f32.mrb[0].mxu0
        %v1081 = vadd.f32 0.0, %v1080
        %v1082 = vpop.f32.mrb[0].mxu0
        %1083 = vmatprep.mubr.f32.mxu0 0.0
        %1084 = vmatmul.mubr.f32.gmra.mrb[0].mxu0 %v515
        %v1085 = vpop.f32.mrb[0].mxu0
        %v1086 = vadd.f32 0.0, %v1085
        %v1087 = vpop.f32.mrb[0].mxu0
        %1088 = vmatprep.mubr.f32.mxu0 0.0
        %1089 = vmatmul.mubr.f32.gmra.mrb[0].mxu0 %v516
        %v1090 = vpop.f32.mrb[0].mxu0
        %v1091 = vadd.f32 0.0, %v1090
        %v1092 = vpop.f32.mrb[0].mxu0
        %1093 = vmatprep.mubr.f32.mxu0 0.0
        %1094 = vmatmul.mubr.f32.gmra.mrb[0].mxu0 %v517
        %v1095 = vpop.f32.mrb[0].mxu0
        %v1096 = vadd.f32 0.0, %v1095
        %v1097 = vpop.f32.mrb[0].mxu0
        %1098 = vmatprep.mubr.f32.mxu0 0.0
        %1099 = vmatmul.mubr.f32.gmra.mrb[0].mxu0 %v518
        %v1100 = vpop.f32.mrb[0].mxu0
        %v1101 = vadd.f32 0.0, %v1100
        %v1102 = vpop.f32.mrb[0].mxu0
        %1103 = vmatprep.mubr.f32.mxu0 0.0
        %1104 = vmatmul.mubr.f32.gmra.mrb[0].mxu0 %v519
        %v1105 = vpop.f32.mrb[0].mxu0
        %v1106 = vadd.f32 0.0, %v1105
        %v1107 = vpop.f32.mrb[0].mxu0
        %1108 = vmatprep.mubr.f32.mxu0 0.0
        %1109 = vmatmul.mubr.f32.gmra.mrb[0].mxu0 %v520
        %v1110 = vpop.f32.mrb[0].mxu0
        %v1111 = vadd.f32 0.0, %v1110
        %v1112 = vpop.f32.mrb[0].mxu0
        %1113 = vmatprep.mubr.f32.mxu0 0.0
        %1114 = vmatmul.mubr.f32.gmra.mrb[0].mxu0 %v521
        %v1115 = vpop.f32.mrb[0].mxu0
        %v1116 = vadd.f32 0.0, %v1115
        %v1117 = vpop.f32.mrb[0].mxu0
        %1118 = vmatprep.mubr.f32.mxu0 0.0
        %1119 = vmatmul.mubr.f32.gmra.mrb[0].mxu0 %v522
        %v1120 = vpop.f32.mrb[0].mxu0
        %v1121 = vadd.f32 0.0, %v1120
        %v1122 = vpop.f32.mrb[0].mxu0
        %1123 = vmatprep.mubr.f32.mxu0 0.0
        %1124 = vmatmul.mubr.f32.gmra.mrb[0].mxu0 %v523
        %v1125 = vpop.f32.mrb[0].mxu0
        %v1126 = vadd.f32 0.0, %v1125
        %v1127 = vpop.f32.mrb[0].mxu0
        %1128 = vdwg.mxu0
        %v1129 = vadd.f32 %v975, %v1071
        %v1130 = vadd.f32 %v976, %v1076
        %v1131 = vadd.f32 %v977, %v1081
        %v1132 = vadd.f32 %v978, %v1086
        %v1133 = vadd.f32 %v979, %v1091
        %v1134 = vadd.f32 %v980, %v1096
        %v1135 = vadd.f32 %v981, %v1101
        %v1136 = vadd.f32 %v982, %v1106
        %v1137 = vadd.f32 %v983, %v1111
        %v1138 = vadd.f32 %v984, %v1116
        %v1139 = vadd.f32 %v985, %v1121
        %v1140 = vadd.f32 %v986, %v1126
        %s1141 = scalar_lea.vmem %s1, 512
        %v1142 = vld [vmem:[%s1141] sm:$0xff]
        %v1143 = vld [vmem:[%s1141 + $0x8] sm:$0xff]
        %v1144 = vld [vmem:[%s1141 + $0x10] sm:$0xff]
        %v1145 = vld [vmem:[%s1141 + $0x18] sm:$0xff]
        %v1146 = vld [vmem:[%s1141 + $0x20] sm:$0xff]
        %v1147 = vld [vmem:[%s1141 + $0x28] sm:$0xff]
        %v1148 = vld [vmem:[%s1141 + $0x30] sm:$0xff]
        %v1149 = vld [vmem:[%s1141 + $0x38] sm:$0xff]
        %v1150 = vld [vmem:[%s1141 + $0x40] sm:$0xff]
        %v1151 = vld [vmem:[%s1141 + $0x48] sm:$0xff]
        %v1152 = vld [vmem:[%s1141 + $0x50] sm:$0xff]
        %v1153 = vld [vmem:[%s1141 + $0x58] sm:$0xff]
        %v1154 = vld [vmem:[%s1141 + $0x60] sm:$0xff]
        %v1155 = vld [vmem:[%s1141 + $0x68] sm:$0xff]
        %v1156 = vld [vmem:[%s1141 + $0x70] sm:$0xff]
        %v1157 = vld [vmem:[%s1141 + $0x78] sm:$0xff]
        %1158 = vmatprep.subr.mxu0 0.0
        %1159 = vmatpush1.msra.mxu0 %v1142
        %1160 = vmatprep.subr.mxu0 0.0
        %1161 = vmatpush1.msra.mxu0 %v1143
        %1162 = vmatprep.subr.mxu0 0.0
        %1163 = vmatpush1.msra.mxu0 %v1144
        %1164 = vmatprep.subr.mxu0 0.0
        %1165 = vmatpush1.msra.mxu0 %v1145
        %1166 = vmatprep.subr.mxu0 0.0
        %1167 = vmatpush1.msra.mxu0 %v1146
        %1168 = vmatprep.subr.mxu0 0.0
        %1169 = vmatpush1.msra.mxu0 %v1147
        %1170 = vmatprep.subr.mxu0 0.0
        %1171 = vmatpush1.msra.mxu0 %v1148
        %1172 = vmatprep.subr.mxu0 0.0
        %1173 = vmatpush1.msra.mxu0 %v1149
        %1174 = vmatprep.subr.mxu0 0.0
        %1175 = vmatpush1.msra.mxu0 %v1150
        %1176 = vmatprep.subr.mxu0 0.0
        %1177 = vmatpush1.msra.mxu0 %v1151
        %1178 = vmatprep.subr.mxu0 0.0
        %1179 = vmatpush1.msra.mxu0 %v1152
        %1180 = vmatprep.subr.mxu0 0.0
        %1181 = vmatpush1.msra.mxu0 %v1153
        %1182 = vmatprep.subr.mxu0 0.0
        %1183 = vmatpush1.msra.mxu0 %v1154
        %1184 = vmatprep.subr.mxu0 0.0
        %1185 = vmatpush1.msra.mxu0 %v1155
        %1186 = vmatprep.subr.mxu0 0.0
        %1187 = vmatpush1.msra.mxu0 %v1156
        %1188 = vmatprep.subr.mxu0 0.0
        %1189 = vmatpush1.msra.mxu0 %v1157
        %1190 = vmatprep.subr.mxu0 0.0
        %1191 = vmatpush1.msra.mxu0 0.0
        %1192 = vmatprep.subr.mxu0 0.0
        %1193 = vmatpush1.msra.mxu0 0.0
        %1194 = vmatprep.subr.mxu0 0.0
        %1195 = vmatpush1.msra.mxu0 0.0
        %1196 = vmatprep.subr.mxu0 0.0
        %1197 = vmatpush1.msra.mxu0 0.0
        %1198 = vmatprep.subr.mxu0 0.0
        %1199 = vmatpush1.msra.mxu0 0.0
        %1200 = vmatprep.subr.mxu0 0.0
        %1201 = vmatpush1.msra.mxu0 0.0
        %1202 = vmatprep.subr.mxu0 0.0
        %1203 = vmatpush1.msra.mxu0 0.0
        %1204 = vmatprep.subr.mxu0 0.0
        %1205 = vmatpush1.msra.mxu0 0.0
        %1206 = vmatprep.subr.mxu0 0.0
        %1207 = vmatpush1.msra.mxu0 0.0
        %1208 = vmatprep.subr.mxu0 0.0
        %1209 = vmatpush1.msra.mxu0 0.0
        %1210 = vmatprep.subr.mxu0 0.0
        %1211 = vmatpush1.msra.mxu0 0.0
        %1212 = vmatprep.subr.mxu0 0.0
        %1213 = vmatpush1.msra.mxu0 0.0
        %1214 = vmatprep.subr.mxu0 0.0
        %1215 = vmatpush1.msra.mxu0 0.0
        %1216 = vmatprep.subr.mxu0 0.0
        %1217 = vmatpush1.msra.mxu0 0.0
        %1218 = vmatprep.subr.mxu0 0.0
        %1219 = vmatpush1.msra.mxu0 0.0
        %1220 = vmatprep.subr.mxu0 0.0
        %1221 = vmatpush1.msra.mxu0 0.0
        %1222 = vmatprep.mubr.f32.mxu0 0.0
        %1223 = vmatmul.mubr.f32.gmra.mrb[0].mxu0 %v525
        %v1224 = vpop.f32.mrb[0].mxu0
        %v1225 = vadd.f32 0.0, %v1224
        %v1226 = vpop.f32.mrb[0].mxu0
        %1227 = vmatprep.mubr.f32.mxu0 0.0
        %1228 = vmatmul.mubr.f32.gmra.mrb[0].mxu0 %v526
        %v1229 = vpop.f32.mrb[0].mxu0
        %v1230 = vadd.f32 0.0, %v1229
        %v1231 = vpop.f32.mrb[0].mxu0
        %1232 = vmatprep.mubr.f32.mxu0 0.0
        %1233 = vmatmul.mubr.f32.gmra.mrb[0].mxu0 %v527
        %v1234 = vpop.f32.mrb[0].mxu0
        %v1235 = vadd.f32 0.0, %v1234
        %v1236 = vpop.f32.mrb[0].mxu0
        %1237 = vmatprep.mubr.f32.mxu0 0.0
        %1238 = vmatmul.mubr.f32.gmra.mrb[0].mxu0 %v528
        %v1239 = vpop.f32.mrb[0].mxu0
        %v1240 = vadd.f32 0.0, %v1239
        %v1241 = vpop.f32.mrb[0].mxu0
        %1242 = vmatprep.mubr.f32.mxu0 0.0
        %1243 = vmatmul.mubr.f32.gmra.mrb[0].mxu0 %v529
        %v1244 = vpop.f32.mrb[0].mxu0
        %v1245 = vadd.f32 0.0, %v1244
        %v1246 = vpop.f32.mrb[0].mxu0
        %1247 = vmatprep.mubr.f32.mxu0 0.0
        %1248 = vmatmul.mubr.f32.gmra.mrb[0].mxu0 %v530
        %v1249 = vpop.f32.mrb[0].mxu0
        %v1250 = vadd.f32 0.0, %v1249
        %v1251 = vpop.f32.mrb[0].mxu0
        %1252 = vmatprep.mubr.f32.mxu0 0.0
        %1253 = vmatmul.mubr.f32.gmra.mrb[0].mxu0 %v531
        %v1254 = vpop.f32.mrb[0].mxu0
        %v1255 = vadd.f32 0.0, %v1254
        %v1256 = vpop.f32.mrb[0].mxu0
        %1257 = vmatprep.mubr.f32.mxu0 0.0
        %1258 = vmatmul.mubr.f32.gmra.mrb[0].mxu0 %v532
        %v1259 = vpop.f32.mrb[0].mxu0
        %v1260 = vadd.f32 0.0, %v1259
        %v1261 = vpop.f32.mrb[0].mxu0
        %1262 = vmatprep.mubr.f32.mxu0 0.0
        %1263 = vmatmul.mubr.f32.gmra.mrb[0].mxu0 %v533
        %v1264 = vpop.f32.mrb[0].mxu0
        %v1265 = vadd.f32 0.0, %v1264
        %v1266 = vpop.f32.mrb[0].mxu0
        %1267 = vmatprep.mubr.f32.mxu0 0.0
        %1268 = vmatmul.mubr.f32.gmra.mrb[0].mxu0 %v534
        %v1269 = vpop.f32.mrb[0].mxu0
        %v1270 = vadd.f32 0.0, %v1269
        %v1271 = vpop.f32.mrb[0].mxu0
        %1272 = vmatprep.mubr.f32.mxu0 0.0
        %1273 = vmatmul.mubr.f32.gmra.mrb[0].mxu0 %v535
        %v1274 = vpop.f32.mrb[0].mxu0
        %v1275 = vadd.f32 0.0, %v1274
        %v1276 = vpop.f32.mrb[0].mxu0
        %1277 = vmatprep.mubr.f32.mxu0 0.0
        %1278 = vmatmul.mubr.f32.gmra.mrb[0].mxu0 %v536
        %v1279 = vpop.f32.mrb[0].mxu0
        %v1280 = vadd.f32 0.0, %v1279
        %v1281 = vpop.f32.mrb[0].mxu0
        %1282 = vdwg.mxu0
        %v1283 = vadd.f32 %v1129, %v1225
        %v1284 = vadd.f32 %v1130, %v1230
        %v1285 = vadd.f32 %v1131, %v1235
        %v1286 = vadd.f32 %v1132, %v1240
        %v1287 = vadd.f32 %v1133, %v1245
        %v1288 = vadd.f32 %v1134, %v1250
        %v1289 = vadd.f32 %v1135, %v1255
        %v1290 = vadd.f32 %v1136, %v1260
        %v1291 = vadd.f32 %v1137, %v1265
        %v1292 = vadd.f32 %v1138, %v1270
        %v1293 = vadd.f32 %v1139, %v1275
        %v1294 = vadd.f32 %v1140, %v1280
        %s1295 = scalar_lea.vmem %s1, 640
        %v1296 = vld [vmem:[%s1295] sm:$0xff]
        %v1297 = vld [vmem:[%s1295 + $0x8] sm:$0xff]
        %v1298 = vld [vmem:[%s1295 + $0x10] sm:$0xff]
        %v1299 = vld [vmem:[%s1295 + $0x18] sm:$0xff]
        %v1300 = vld [vmem:[%s1295 + $0x20] sm:$0xff]
        %v1301 = vld [vmem:[%s1295 + $0x28] sm:$0xff]
        %v1302 = vld [vmem:[%s1295 + $0x30] sm:$0xff]
        %v1303 = vld [vmem:[%s1295 + $0x38] sm:$0xff]
        %v1304 = vld [vmem:[%s1295 + $0x40] sm:$0xff]
        %v1305 = vld [vmem:[%s1295 + $0x48] sm:$0xff]
        %v1306 = vld [vmem:[%s1295 + $0x50] sm:$0xff]
        %v1307 = vld [vmem:[%s1295 + $0x58] sm:$0xff]
        %v1308 = vld [vmem:[%s1295 + $0x60] sm:$0xff]
        %v1309 = vld [vmem:[%s1295 + $0x68] sm:$0xff]
        %v1310 = vld [vmem:[%s1295 + $0x70] sm:$0xff]
        %v1311 = vld [vmem:[%s1295 + $0x78] sm:$0xff]
        %s1312 = scalar_lea.vmem %s1, 768
        %v1313 = vld [vmem:[%s1312] sm:$0xff]
        %v1314 = vld [vmem:[%s1312 + $0x8] sm:$0xff]
        %v1315 = vld [vmem:[%s1312 + $0x10] sm:$0xff]
        %v1316 = vld [vmem:[%s1312 + $0x18] sm:$0xff]
        %v1317 = vld [vmem:[%s1312 + $0x20] sm:$0xff]
        %v1318 = vld [vmem:[%s1312 + $0x28] sm:$0xff]
        %v1319 = vld [vmem:[%s1312 + $0x30] sm:$0xff]
        %v1320 = vld [vmem:[%s1312 + $0x38] sm:$0xff]
        %v1321 = vld [vmem:[%s1312 + $0x40] sm:$0xff]
        %v1322 = vld [vmem:[%s1312 + $0x48] sm:$0xff]
        %v1323 = vld [vmem:[%s1312 + $0x50] sm:$0xff]
        %v1324 = vld [vmem:[%s1312 + $0x58] sm:$0xff]
        %v1325 = vld [vmem:[%s1312 + $0x60] sm:$0xff]
        %v1326 = vld [vmem:[%s1312 + $0x68] sm:$0xff]
        %v1327 = vld [vmem:[%s1312 + $0x70] sm:$0xff]
        %v1328 = vld [vmem:[%s1312 + $0x78] sm:$0xff]
        %1329 = vmatprep.subr.mxu0 0.0
        %1330 = vmatpush1.msra.mxu0 %v1313
        %1331 = vmatprep.subr.mxu0 0.0
        %1332 = vmatpush1.msra.mxu0 %v1314
        %1333 = vmatprep.subr.mxu0 0.0
        %1334 = vmatpush1.msra.mxu0 %v1315
        %1335 = vmatprep.subr.mxu0 0.0
        %1336 = vmatpush1.msra.mxu0 %v1316
        %1337 = vmatprep.subr.mxu0 0.0
        %1338 = vmatpush1.msra.mxu0 %v1317
        %1339 = vmatprep.subr.mxu0 0.0
        %1340 = vmatpush1.msra.mxu0 %v1318
        %1341 = vmatprep.subr.mxu0 0.0
        %1342 = vmatpush1.msra.mxu0 %v1319
        %1343 = vmatprep.subr.mxu0 0.0
        %1344 = vmatpush1.msra.mxu0 %v1320
        %1345 = vmatprep.subr.mxu0 0.0
        %1346 = vmatpush1.msra.mxu0 %v1321
        %1347 = vmatprep.subr.mxu0 0.0
        %1348 = vmatpush1.msra.mxu0 %v1322
        %1349 = vmatprep.subr.mxu0 0.0
        %1350 = vmatpush1.msra.mxu0 %v1323
        %1351 = vmatprep.subr.mxu0 0.0
        %1352 = vmatpush1.msra.mxu0 %v1324
        %1353 = vmatprep.subr.mxu0 0.0
        %1354 = vmatpush1.msra.mxu0 %v1325
        %1355 = vmatprep.subr.mxu0 0.0
        %1356 = vmatpush1.msra.mxu0 %v1326
        %1357 = vmatprep.subr.mxu0 0.0
        %1358 = vmatpush1.msra.mxu0 %v1327
        %1359 = vmatprep.subr.mxu0 0.0
        %1360 = vmatpush1.msra.mxu0 %v1328
        %1361 = vmatprep.subr.mxu0 0.0
        %1362 = vmatpush1.msra.mxu0 0.0
        %1363 = vmatprep.subr.mxu0 0.0
        %1364 = vmatpush1.msra.mxu0 0.0
        %1365 = vmatprep.subr.mxu0 0.0
        %1366 = vmatpush1.msra.mxu0 0.0
        %1367 = vmatprep.subr.mxu0 0.0
        %1368 = vmatpush1.msra.mxu0 0.0
        %1369 = vmatprep.subr.mxu0 0.0
        %1370 = vmatpush1.msra.mxu0 0.0
        %1371 = vmatprep.subr.mxu0 0.0
        %1372 = vmatpush1.msra.mxu0 0.0
        %1373 = vmatprep.subr.mxu0 0.0
        %1374 = vmatpush1.msra.mxu0 0.0
        %1375 = vmatprep.subr.mxu0 0.0
        %1376 = vmatpush1.msra.mxu0 0.0
        %1377 = vmatprep.subr.mxu0 0.0
        %1378 = vmatpush1.msra.mxu0 0.0
        %1379 = vmatprep.subr.mxu0 0.0
        %1380 = vmatpush1.msra.mxu0 0.0
        %1381 = vmatprep.subr.mxu0 0.0
        %1382 = vmatpush1.msra.mxu0 0.0
        %1383 = vmatprep.subr.mxu0 0.0
        %1384 = vmatpush1.msra.mxu0 0.0
        %1385 = vmatprep.subr.mxu0 0.0
        %1386 = vmatpush1.msra.mxu0 0.0
        %1387 = vmatprep.subr.mxu0 0.0
        %1388 = vmatpush1.msra.mxu0 0.0
        %1389 = vmatprep.subr.mxu0 0.0
        %1390 = vmatpush1.msra.mxu0 0.0
        %1391 = vmatprep.subr.mxu0 0.0
        %1392 = vmatpush1.msra.mxu0 0.0
        %1393 = vmatprep.mubr.f32.mxu0 0.0
        %1394 = vmatmul.mubr.f32.gmra.mrb[0].mxu0 %v486
        %v1395 = vpop.f32.mrb[0].mxu0
        %v1396 = vadd.f32 0.0, %v1395
        %v1397 = vpop.f32.mrb[0].mxu0
        %1398 = vmatprep.mubr.f32.mxu0 0.0
        %1399 = vmatmul.mubr.f32.gmra.mrb[0].mxu0 %v487
        %v1400 = vpop.f32.mrb[0].mxu0
        %v1401 = vadd.f32 0.0, %v1400
        %v1402 = vpop.f32.mrb[0].mxu0
        %1403 = vmatprep.mubr.f32.mxu0 0.0
        %1404 = vmatmul.mubr.f32.gmra.mrb[0].mxu0 %v488
        %v1405 = vpop.f32.mrb[0].mxu0
        %v1406 = vadd.f32 0.0, %v1405
        %v1407 = vpop.f32.mrb[0].mxu0
        %1408 = vmatprep.mubr.f32.mxu0 0.0
        %1409 = vmatmul.mubr.f32.gmra.mrb[0].mxu0 %v489
        %v1410 = vpop.f32.mrb[0].mxu0
        %v1411 = vadd.f32 0.0, %v1410
        %v1412 = vpop.f32.mrb[0].mxu0
        %1413 = vmatprep.mubr.f32.mxu0 0.0
        %1414 = vmatmul.mubr.f32.gmra.mrb[0].mxu0 %v490
        %v1415 = vpop.f32.mrb[0].mxu0
        %v1416 = vadd.f32 0.0, %v1415
        %v1417 = vpop.f32.mrb[0].mxu0
        %1418 = vmatprep.mubr.f32.mxu0 0.0
        %1419 = vmatmul.mubr.f32.gmra.mrb[0].mxu0 %v491
        %v1420 = vpop.f32.mrb[0].mxu0
        %v1421 = vadd.f32 0.0, %v1420
        %v1422 = vpop.f32.mrb[0].mxu0
        %1423 = vmatprep.mubr.f32.mxu0 0.0
        %1424 = vmatmul.mubr.f32.gmra.mrb[0].mxu0 %v492
        %v1425 = vpop.f32.mrb[0].mxu0
        %v1426 = vadd.f32 0.0, %v1425
        %v1427 = vpop.f32.mrb[0].mxu0
        %1428 = vmatprep.mubr.f32.mxu0 0.0
        %1429 = vmatmul.mubr.f32.gmra.mrb[0].mxu0 %v493
        %v1430 = vpop.f32.mrb[0].mxu0
        %v1431 = vadd.f32 0.0, %v1430
        %v1432 = vpop.f32.mrb[0].mxu0
        %1433 = vmatprep.mubr.f32.mxu0 0.0
        %1434 = vmatmul.mubr.f32.gmra.mrb[0].mxu0 %v494
        %v1435 = vpop.f32.mrb[0].mxu0
        %v1436 = vadd.f32 0.0, %v1435
        %v1437 = vpop.f32.mrb[0].mxu0
        %1438 = vmatprep.mubr.f32.mxu0 0.0
        %1439 = vmatmul.mubr.f32.gmra.mrb[0].mxu0 %v495
        %v1440 = vpop.f32.mrb[0].mxu0
        %v1441 = vadd.f32 0.0, %v1440
        %v1442 = vpop.f32.mrb[0].mxu0
        %1443 = vmatprep.mubr.f32.mxu0 0.0
        %1444 = vmatmul.mubr.f32.gmra.mrb[0].mxu0 %v496
        %v1445 = vpop.f32.mrb[0].mxu0
        %v1446 = vadd.f32 0.0, %v1445
        %v1447 = vpop.f32.mrb[0].mxu0
        %1448 = vmatprep.mubr.f32.mxu0 0.0
        %1449 = vmatmul.mubr.f32.gmra.mrb[0].mxu0 %v497
        %v1450 = vpop.f32.mrb[0].mxu0
        %v1451 = vadd.f32 0.0, %v1450
        %v1452 = vpop.f32.mrb[0].mxu0
        %1453 = vdwg.mxu0
        %1454 = vmatprep.subr.mxu0 0.0
        %1455 = vmatpush1.msra.mxu0 %v1296
        %1456 = vmatprep.subr.mxu0 0.0
        %1457 = vmatpush1.msra.mxu0 %v1297
        %1458 = vmatprep.subr.mxu0 0.0
        %1459 = vmatpush1.msra.mxu0 %v1298
        %1460 = vmatprep.subr.mxu0 0.0
        %1461 = vmatpush1.msra.mxu0 %v1299
        %1462 = vmatprep.subr.mxu0 0.0
        %1463 = vmatpush1.msra.mxu0 %v1300
        %1464 = vmatprep.subr.mxu0 0.0
        %1465 = vmatpush1.msra.mxu0 %v1301
        %1466 = vmatprep.subr.mxu0 0.0
        %1467 = vmatpush1.msra.mxu0 %v1302
        %1468 = vmatprep.subr.mxu0 0.0
        %1469 = vmatpush1.msra.mxu0 %v1303
        %1470 = vmatprep.subr.mxu0 0.0
        %1471 = vmatpush1.msra.mxu0 %v1304
        %1472 = vmatprep.subr.mxu0 0.0
        %1473 = vmatpush1.msra.mxu0 %v1305
        %1474 = vmatprep.subr.mxu0 0.0
        %1475 = vmatpush1.msra.mxu0 %v1306
        %1476 = vmatprep.subr.mxu0 0.0
        %1477 = vmatpush1.msra.mxu0 %v1307
        %1478 = vmatprep.subr.mxu0 0.0
        %1479 = vmatpush1.msra.mxu0 %v1308
        %1480 = vmatprep.subr.mxu0 0.0
        %1481 = vmatpush1.msra.mxu0 %v1309
        %1482 = vmatprep.subr.mxu0 0.0
        %1483 = vmatpush1.msra.mxu0 %v1310
        %1484 = vmatprep.subr.mxu0 0.0
        %1485 = vmatpush1.msra.mxu0 %v1311
        %1486 = vmatprep.subr.mxu0 0.0
        %1487 = vmatpush1.msra.mxu0 0.0
        %1488 = vmatprep.subr.mxu0 0.0
        %1489 = vmatpush1.msra.mxu0 0.0
        %1490 = vmatprep.subr.mxu0 0.0
        %1491 = vmatpush1.msra.mxu0 0.0
        %1492 = vmatprep.subr.mxu0 0.0
        %1493 = vmatpush1.msra.mxu0 0.0
        %1494 = vmatprep.subr.mxu0 0.0
        %1495 = vmatpush1.msra.mxu0 0.0
        %1496 = vmatprep.subr.mxu0 0.0
        %1497 = vmatpush1.msra.mxu0 0.0
        %1498 = vmatprep.subr.mxu0 0.0
        %1499 = vmatpush1.msra.mxu0 0.0
        %1500 = vmatprep.subr.mxu0 0.0
        %1501 = vmatpush1.msra.mxu0 0.0
        %1502 = vmatprep.subr.mxu0 0.0
        %1503 = vmatpush1.msra.mxu0 0.0
        %1504 = vmatprep.subr.mxu0 0.0
        %1505 = vmatpush1.msra.mxu0 0.0
        %1506 = vmatprep.subr.mxu0 0.0
        %1507 = vmatpush1.msra.mxu0 0.0
        %1508 = vmatprep.subr.mxu0 0.0
        %1509 = vmatpush1.msra.mxu0 0.0
        %1510 = vmatprep.subr.mxu0 0.0
        %1511 = vmatpush1.msra.mxu0 0.0
        %1512 = vmatprep.subr.mxu0 0.0
        %1513 = vmatpush1.msra.mxu0 0.0
        %1514 = vmatprep.subr.mxu0 0.0
        %1515 = vmatpush1.msra.mxu0 0.0
        %1516 = vmatprep.subr.mxu0 0.0
        %1517 = vmatpush1.msra.mxu0 0.0
        %1518 = vmatprep.mubr.f32.mxu0 0.0
        %1519 = vmatmul.mubr.f32.gmra.mrb[0].mxu0 %v473
        %v1520 = vpop.f32.mrb[0].mxu0
        %v1521 = vadd.f32 %v1396, %v1520
        %v1522 = vpop.f32.mrb[0].mxu0
        %1523 = vmatprep.mubr.f32.mxu0 0.0
        %1524 = vmatmul.mubr.f32.gmra.mrb[0].mxu0 %v474
        %v1525 = vpop.f32.mrb[0].mxu0
        %v1526 = vadd.f32 %v1401, %v1525
        %v1527 = vpop.f32.mrb[0].mxu0
        %1528 = vmatprep.mubr.f32.mxu0 0.0
        %1529 = vmatmul.mubr.f32.gmra.mrb[0].mxu0 %v475
        %v1530 = vpop.f32.mrb[0].mxu0
        %v1531 = vadd.f32 %v1406, %v1530
        %v1532 = vpop.f32.mrb[0].mxu0
        %1533 = vmatprep.mubr.f32.mxu0 0.0
        %1534 = vmatmul.mubr.f32.gmra.mrb[0].mxu0 %v476
        %v1535 = vpop.f32.mrb[0].mxu0
        %v1536 = vadd.f32 %v1411, %v1535
        %v1537 = vpop.f32.mrb[0].mxu0
        %1538 = vmatprep.mubr.f32.mxu0 0.0
        %1539 = vmatmul.mubr.f32.gmra.mrb[0].mxu0 %v477
        %v1540 = vpop.f32.mrb[0].mxu0
        %v1541 = vadd.f32 %v1416, %v1540
        %v1542 = vpop.f32.mrb[0].mxu0
        %1543 = vmatprep.mubr.f32.mxu0 0.0
        %1544 = vmatmul.mubr.f32.gmra.mrb[0].mxu0 %v478
        %v1545 = vpop.f32.mrb[0].mxu0
        %v1546 = vadd.f32 %v1421, %v1545
        %v1547 = vpop.f32.mrb[0].mxu0
        %1548 = vmatprep.mubr.f32.mxu0 0.0
        %1549 = vmatmul.mubr.f32.gmra.mrb[0].mxu0 %v479
        %v1550 = vpop.f32.mrb[0].mxu0
        %v1551 = vadd.f32 %v1426, %v1550
        %v1552 = vpop.f32.mrb[0].mxu0
        %1553 = vmatprep.mubr.f32.mxu0 0.0
        %1554 = vmatmul.mubr.f32.gmra.mrb[0].mxu0 %v480
        %v1555 = vpop.f32.mrb[0].mxu0
        %v1556 = vadd.f32 %v1431, %v1555
        %v1557 = vpop.f32.mrb[0].mxu0
        %1558 = vmatprep.mubr.f32.mxu0 0.0
        %1559 = vmatmul.mubr.f32.gmra.mrb[0].mxu0 %v481
        %v1560 = vpop.f32.mrb[0].mxu0
        %v1561 = vadd.f32 %v1436, %v1560
        %v1562 = vpop.f32.mrb[0].mxu0
        %1563 = vmatprep.mubr.f32.mxu0 0.0
        %1564 = vmatmul.mubr.f32.gmra.mrb[0].mxu0 %v482
        %v1565 = vpop.f32.mrb[0].mxu0
        %v1566 = vadd.f32 %v1441, %v1565
        %v1567 = vpop.f32.mrb[0].mxu0
        %1568 = vmatprep.mubr.f32.mxu0 0.0
        %1569 = vmatmul.mubr.f32.gmra.mrb[0].mxu0 %v483
        %v1570 = vpop.f32.mrb[0].mxu0
        %v1571 = vadd.f32 %v1446, %v1570
        %v1572 = vpop.f32.mrb[0].mxu0
        %1573 = vmatprep.mubr.f32.mxu0 0.0
        %1574 = vmatmul.mubr.f32.gmra.mrb[0].mxu0 %v484
        %v1575 = vpop.f32.mrb[0].mxu0
        %v1576 = vadd.f32 %v1451, %v1575
        %v1577 = vpop.f32.mrb[0].mxu0
        %1578 = vdwg.mxu0
        %s1579 = scalar_lea.vmem %s1, 896
        %v1580 = vld [vmem:[%s1579] sm:$0xff]
        %v1581 = vld [vmem:[%s1579 + $0x8] sm:$0xff]
        %v1582 = vld [vmem:[%s1579 + $0x10] sm:$0xff]
        %v1583 = vld [vmem:[%s1579 + $0x18] sm:$0xff]
        %v1584 = vld [vmem:[%s1579 + $0x20] sm:$0xff]
        %v1585 = vld [vmem:[%s1579 + $0x28] sm:$0xff]
        %v1586 = vld [vmem:[%s1579 + $0x30] sm:$0xff]
        %v1587 = vld [vmem:[%s1579 + $0x38] sm:$0xff]
        %v1588 = vld [vmem:[%s1579 + $0x40] sm:$0xff]
        %v1589 = vld [vmem:[%s1579 + $0x48] sm:$0xff]
        %v1590 = vld [vmem:[%s1579 + $0x50] sm:$0xff]
        %v1591 = vld [vmem:[%s1579 + $0x58] sm:$0xff]
        %v1592 = vld [vmem:[%s1579 + $0x60] sm:$0xff]
        %v1593 = vld [vmem:[%s1579 + $0x68] sm:$0xff]
        %v1594 = vld [vmem:[%s1579 + $0x70] sm:$0xff]
        %v1595 = vld [vmem:[%s1579 + $0x78] sm:$0xff]
        %1596 = vmatprep.subr.mxu0 0.0
        %1597 = vmatpush1.msra.mxu0 %v1580
        %1598 = vmatprep.subr.mxu0 0.0
        %1599 = vmatpush1.msra.mxu0 %v1581
        %1600 = vmatprep.subr.mxu0 0.0
        %1601 = vmatpush1.msra.mxu0 %v1582
        %1602 = vmatprep.subr.mxu0 0.0
        %1603 = vmatpush1.msra.mxu0 %v1583
        %1604 = vmatprep.subr.mxu0 0.0
        %1605 = vmatpush1.msra.mxu0 %v1584
        %1606 = vmatprep.subr.mxu0 0.0
        %1607 = vmatpush1.msra.mxu0 %v1585
        %1608 = vmatprep.subr.mxu0 0.0
        %1609 = vmatpush1.msra.mxu0 %v1586
        %1610 = vmatprep.subr.mxu0 0.0
        %1611 = vmatpush1.msra.mxu0 %v1587
        %1612 = vmatprep.subr.mxu0 0.0
        %1613 = vmatpush1.msra.mxu0 %v1588
        %1614 = vmatprep.subr.mxu0 0.0
        %1615 = vmatpush1.msra.mxu0 %v1589
        %1616 = vmatprep.subr.mxu0 0.0
        %1617 = vmatpush1.msra.mxu0 %v1590
        %1618 = vmatprep.subr.mxu0 0.0
        %1619 = vmatpush1.msra.mxu0 %v1591
        %1620 = vmatprep.subr.mxu0 0.0
        %1621 = vmatpush1.msra.mxu0 %v1592
        %1622 = vmatprep.subr.mxu0 0.0
        %1623 = vmatpush1.msra.mxu0 %v1593
        %1624 = vmatprep.subr.mxu0 0.0
        %1625 = vmatpush1.msra.mxu0 %v1594
        %1626 = vmatprep.subr.mxu0 0.0
        %1627 = vmatpush1.msra.mxu0 %v1595
        %1628 = vmatprep.subr.mxu0 0.0
        %1629 = vmatpush1.msra.mxu0 0.0
        %1630 = vmatprep.subr.mxu0 0.0
        %1631 = vmatpush1.msra.mxu0 0.0
        %1632 = vmatprep.subr.mxu0 0.0
        %1633 = vmatpush1.msra.mxu0 0.0
        %1634 = vmatprep.subr.mxu0 0.0
        %1635 = vmatpush1.msra.mxu0 0.0
        %1636 = vmatprep.subr.mxu0 0.0
        %1637 = vmatpush1.msra.mxu0 0.0
        %1638 = vmatprep.subr.mxu0 0.0
        %1639 = vmatpush1.msra.mxu0 0.0
        %1640 = vmatprep.subr.mxu0 0.0
        %1641 = vmatpush1.msra.mxu0 0.0
        %1642 = vmatprep.subr.mxu0 0.0
        %1643 = vmatpush1.msra.mxu0 0.0
        %1644 = vmatprep.subr.mxu0 0.0
        %1645 = vmatpush1.msra.mxu0 0.0
        %1646 = vmatprep.subr.mxu0 0.0
        %1647 = vmatpush1.msra.mxu0 0.0
        %1648 = vmatprep.subr.mxu0 0.0
        %1649 = vmatpush1.msra.mxu0 0.0
        %1650 = vmatprep.subr.mxu0 0.0
        %1651 = vmatpush1.msra.mxu0 0.0
        %1652 = vmatprep.subr.mxu0 0.0
        %1653 = vmatpush1.msra.mxu0 0.0
        %1654 = vmatprep.subr.mxu0 0.0
        %1655 = vmatpush1.msra.mxu0 0.0
        %1656 = vmatprep.subr.mxu0 0.0
        %1657 = vmatpush1.msra.mxu0 0.0
        %1658 = vmatprep.subr.mxu0 0.0
        %1659 = vmatpush1.msra.mxu0 0.0
        %1660 = vmatprep.mubr.f32.mxu0 0.0
        %1661 = vmatmul.mubr.f32.gmra.mrb[0].mxu0 %v499
        %v1662 = vpop.f32.mrb[0].mxu0
        %v1663 = vadd.f32 0.0, %v1662
        %v1664 = vpop.f32.mrb[0].mxu0
        %1665 = vmatprep.mubr.f32.mxu0 0.0
        %1666 = vmatmul.mubr.f32.gmra.mrb[0].mxu0 %v500
        %v1667 = vpop.f32.mrb[0].mxu0
        %v1668 = vadd.f32 0.0, %v1667
        %v1669 = vpop.f32.mrb[0].mxu0
        %1670 = vmatprep.mubr.f32.mxu0 0.0
        %1671 = vmatmul.mubr.f32.gmra.mrb[0].mxu0 %v501
        %v1672 = vpop.f32.mrb[0].mxu0
        %v1673 = vadd.f32 0.0, %v1672
        %v1674 = vpop.f32.mrb[0].mxu0
        %1675 = vmatprep.mubr.f32.mxu0 0.0
        %1676 = vmatmul.mubr.f32.gmra.mrb[0].mxu0 %v502
        %v1677 = vpop.f32.mrb[0].mxu0
        %v1678 = vadd.f32 0.0, %v1677
        %v1679 = vpop.f32.mrb[0].mxu0
        %1680 = vmatprep.mubr.f32.mxu0 0.0
        %1681 = vmatmul.mubr.f32.gmra.mrb[0].mxu0 %v503
        %v1682 = vpop.f32.mrb[0].mxu0
        %v1683 = vadd.f32 0.0, %v1682
        %v1684 = vpop.f32.mrb[0].mxu0
        %1685 = vmatprep.mubr.f32.mxu0 0.0
        %1686 = vmatmul.mubr.f32.gmra.mrb[0].mxu0 %v504
        %v1687 = vpop.f32.mrb[0].mxu0
        %v1688 = vadd.f32 0.0, %v1687
        %v1689 = vpop.f32.mrb[0].mxu0
        %1690 = vmatprep.mubr.f32.mxu0 0.0
        %1691 = vmatmul.mubr.f32.gmra.mrb[0].mxu0 %v505
        %v1692 = vpop.f32.mrb[0].mxu0
        %v1693 = vadd.f32 0.0, %v1692
        %v1694 = vpop.f32.mrb[0].mxu0
        %1695 = vmatprep.mubr.f32.mxu0 0.0
        %1696 = vmatmul.mubr.f32.gmra.mrb[0].mxu0 %v506
        %v1697 = vpop.f32.mrb[0].mxu0
        %v1698 = vadd.f32 0.0, %v1697
        %v1699 = vpop.f32.mrb[0].mxu0
        %1700 = vmatprep.mubr.f32.mxu0 0.0
        %1701 = vmatmul.mubr.f32.gmra.mrb[0].mxu0 %v507
        %v1702 = vpop.f32.mrb[0].mxu0
        %v1703 = vadd.f32 0.0, %v1702
        %v1704 = vpop.f32.mrb[0].mxu0
        %1705 = vmatprep.mubr.f32.mxu0 0.0
        %1706 = vmatmul.mubr.f32.gmra.mrb[0].mxu0 %v508
        %v1707 = vpop.f32.mrb[0].mxu0
        %v1708 = vadd.f32 0.0, %v1707
        %v1709 = vpop.f32.mrb[0].mxu0
        %1710 = vmatprep.mubr.f32.mxu0 0.0
        %1711 = vmatmul.mubr.f32.gmra.mrb[0].mxu0 %v509
        %v1712 = vpop.f32.mrb[0].mxu0
        %v1713 = vadd.f32 0.0, %v1712
        %v1714 = vpop.f32.mrb[0].mxu0
        %1715 = vmatprep.mubr.f32.mxu0 0.0
        %1716 = vmatmul.mubr.f32.gmra.mrb[0].mxu0 %v510
        %v1717 = vpop.f32.mrb[0].mxu0
        %v1718 = vadd.f32 0.0, %v1717
        %v1719 = vpop.f32.mrb[0].mxu0
        %1720 = vdwg.mxu0
        %v1721 = vadd.f32 %v1521, %v1663
        %v1722 = vadd.f32 %v1526, %v1668
        %v1723 = vadd.f32 %v1531, %v1673
        %v1724 = vadd.f32 %v1536, %v1678
        %v1725 = vadd.f32 %v1541, %v1683
        %v1726 = vadd.f32 %v1546, %v1688
        %v1727 = vadd.f32 %v1551, %v1693
        %v1728 = vadd.f32 %v1556, %v1698
        %v1729 = vadd.f32 %v1561, %v1703
        %v1730 = vadd.f32 %v1566, %v1708
        %v1731 = vadd.f32 %v1571, %v1713
        %v1732 = vadd.f32 %v1576, %v1718
        %s1733 = scalar_lea.vmem %s1, 1024
        %v1734 = vld [vmem:[%s1733] sm:$0xff]
        %v1735 = vld [vmem:[%s1733 + $0x8] sm:$0xff]
        %v1736 = vld [vmem:[%s1733 + $0x10] sm:$0xff]
        %v1737 = vld [vmem:[%s1733 + $0x18] sm:$0xff]
        %v1738 = vld [vmem:[%s1733 + $0x20] sm:$0xff]
        %v1739 = vld [vmem:[%s1733 + $0x28] sm:$0xff]
        %v1740 = vld [vmem:[%s1733 + $0x30] sm:$0xff]
        %v1741 = vld [vmem:[%s1733 + $0x38] sm:$0xff]
        %v1742 = vld [vmem:[%s1733 + $0x40] sm:$0xff]
        %v1743 = vld [vmem:[%s1733 + $0x48] sm:$0xff]
        %v1744 = vld [vmem:[%s1733 + $0x50] sm:$0xff]
        %v1745 = vld [vmem:[%s1733 + $0x58] sm:$0xff]
        %v1746 = vld [vmem:[%s1733 + $0x60] sm:$0xff]
        %v1747 = vld [vmem:[%s1733 + $0x68] sm:$0xff]
        %v1748 = vld [vmem:[%s1733 + $0x70] sm:$0xff]
        %v1749 = vld [vmem:[%s1733 + $0x78] sm:$0xff]
        %1750 = vmatprep.subr.mxu0 0.0
        %1751 = vmatpush1.msra.mxu0 %v1734
        %1752 = vmatprep.subr.mxu0 0.0
        %1753 = vmatpush1.msra.mxu0 %v1735
        %1754 = vmatprep.subr.mxu0 0.0
        %1755 = vmatpush1.msra.mxu0 %v1736
        %1756 = vmatprep.subr.mxu0 0.0
        %1757 = vmatpush1.msra.mxu0 %v1737
        %1758 = vmatprep.subr.mxu0 0.0
        %1759 = vmatpush1.msra.mxu0 %v1738
        %1760 = vmatprep.subr.mxu0 0.0
        %1761 = vmatpush1.msra.mxu0 %v1739
        %1762 = vmatprep.subr.mxu0 0.0
        %1763 = vmatpush1.msra.mxu0 %v1740
        %1764 = vmatprep.subr.mxu0 0.0
        %1765 = vmatpush1.msra.mxu0 %v1741
        %1766 = vmatprep.subr.mxu0 0.0
        %1767 = vmatpush1.msra.mxu0 %v1742
        %1768 = vmatprep.subr.mxu0 0.0
        %1769 = vmatpush1.msra.mxu0 %v1743
        %1770 = vmatprep.subr.mxu0 0.0
        %1771 = vmatpush1.msra.mxu0 %v1744
        %1772 = vmatprep.subr.mxu0 0.0
        %1773 = vmatpush1.msra.mxu0 %v1745
        %1774 = vmatprep.subr.mxu0 0.0
        %1775 = vmatpush1.msra.mxu0 %v1746
        %1776 = vmatprep.subr.mxu0 0.0
        %1777 = vmatpush1.msra.mxu0 %v1747
        %1778 = vmatprep.subr.mxu0 0.0
        %1779 = vmatpush1.msra.mxu0 %v1748
        %1780 = vmatprep.subr.mxu0 0.0
        %1781 = vmatpush1.msra.mxu0 %v1749
        %1782 = vmatprep.subr.mxu0 0.0
        %1783 = vmatpush1.msra.mxu0 0.0
        %1784 = vmatprep.subr.mxu0 0.0
        %1785 = vmatpush1.msra.mxu0 0.0
        %1786 = vmatprep.subr.mxu0 0.0
        %1787 = vmatpush1.msra.mxu0 0.0
        %1788 = vmatprep.subr.mxu0 0.0
        %1789 = vmatpush1.msra.mxu0 0.0
        %1790 = vmatprep.subr.mxu0 0.0
        %1791 = vmatpush1.msra.mxu0 0.0
        %1792 = vmatprep.subr.mxu0 0.0
        %1793 = vmatpush1.msra.mxu0 0.0
        %1794 = vmatprep.subr.mxu0 0.0
        %1795 = vmatpush1.msra.mxu0 0.0
        %1796 = vmatprep.subr.mxu0 0.0
        %1797 = vmatpush1.msra.mxu0 0.0
        %1798 = vmatprep.subr.mxu0 0.0
        %1799 = vmatpush1.msra.mxu0 0.0
        %1800 = vmatprep.subr.mxu0 0.0
        %1801 = vmatpush1.msra.mxu0 0.0
        %1802 = vmatprep.subr.mxu0 0.0
        %1803 = vmatpush1.msra.mxu0 0.0
        %1804 = vmatprep.subr.mxu0 0.0
        %1805 = vmatpush1.msra.mxu0 0.0
        %1806 = vmatprep.subr.mxu0 0.0
        %1807 = vmatpush1.msra.mxu0 0.0
        %1808 = vmatprep.subr.mxu0 0.0
        %1809 = vmatpush1.msra.mxu0 0.0
        %1810 = vmatprep.subr.mxu0 0.0
        %1811 = vmatpush1.msra.mxu0 0.0
        %1812 = vmatprep.subr.mxu0 0.0
        %1813 = vmatpush1.msra.mxu0 0.0
        %1814 = vmatprep.mubr.f32.mxu0 0.0
        %1815 = vmatmul.mubr.f32.gmra.mrb[0].mxu0 %v512
        %v1816 = vpop.f32.mrb[0].mxu0
        %v1817 = vadd.f32 0.0, %v1816
        %v1818 = vpop.f32.mrb[0].mxu0
        %1819 = vmatprep.mubr.f32.mxu0 0.0
        %1820 = vmatmul.mubr.f32.gmra.mrb[0].mxu0 %v513
        %v1821 = vpop.f32.mrb[0].mxu0
        %v1822 = vadd.f32 0.0, %v1821
        %v1823 = vpop.f32.mrb[0].mxu0
        %1824 = vmatprep.mubr.f32.mxu0 0.0
        %1825 = vmatmul.mubr.f32.gmra.mrb[0].mxu0 %v514
        %v1826 = vpop.f32.mrb[0].mxu0
        %v1827 = vadd.f32 0.0, %v1826
        %v1828 = vpop.f32.mrb[0].mxu0
        %1829 = vmatprep.mubr.f32.mxu0 0.0
        %1830 = vmatmul.mubr.f32.gmra.mrb[0].mxu0 %v515
        %v1831 = vpop.f32.mrb[0].mxu0
        %v1832 = vadd.f32 0.0, %v1831
        %v1833 = vpop.f32.mrb[0].mxu0
        %1834 = vmatprep.mubr.f32.mxu0 0.0
        %1835 = vmatmul.mubr.f32.gmra.mrb[0].mxu0 %v516
        %v1836 = vpop.f32.mrb[0].mxu0
        %v1837 = vadd.f32 0.0, %v1836
        %v1838 = vpop.f32.mrb[0].mxu0
        %1839 = vmatprep.mubr.f32.mxu0 0.0
        %1840 = vmatmul.mubr.f32.gmra.mrb[0].mxu0 %v517
        %v1841 = vpop.f32.mrb[0].mxu0
        %v1842 = vadd.f32 0.0, %v1841
        %v1843 = vpop.f32.mrb[0].mxu0
        %1844 = vmatprep.mubr.f32.mxu0 0.0
        %1845 = vmatmul.mubr.f32.gmra.mrb[0].mxu0 %v518
        %v1846 = vpop.f32.mrb[0].mxu0
        %v1847 = vadd.f32 0.0, %v1846
        %v1848 = vpop.f32.mrb[0].mxu0
        %1849 = vmatprep.mubr.f32.mxu0 0.0
        %1850 = vmatmul.mubr.f32.gmra.mrb[0].mxu0 %v519
        %v1851 = vpop.f32.mrb[0].mxu0
        %v1852 = vadd.f32 0.0, %v1851
        %v1853 = vpop.f32.mrb[0].mxu0
        %1854 = vmatprep.mubr.f32.mxu0 0.0
        %1855 = vmatmul.mubr.f32.gmra.mrb[0].mxu0 %v520
        %v1856 = vpop.f32.mrb[0].mxu0
        %v1857 = vadd.f32 0.0, %v1856
        %v1858 = vpop.f32.mrb[0].mxu0
        %1859 = vmatprep.mubr.f32.mxu0 0.0
        %1860 = vmatmul.mubr.f32.gmra.mrb[0].mxu0 %v521
        %v1861 = vpop.f32.mrb[0].mxu0
        %v1862 = vadd.f32 0.0, %v1861
        %v1863 = vpop.f32.mrb[0].mxu0
        %1864 = vmatprep.mubr.f32.mxu0 0.0
        %1865 = vmatmul.mubr.f32.gmra.mrb[0].mxu0 %v522
        %v1866 = vpop.f32.mrb[0].mxu0
        %v1867 = vadd.f32 0.0, %v1866
        %v1868 = vpop.f32.mrb[0].mxu0
        %1869 = vmatprep.mubr.f32.mxu0 0.0
        %1870 = vmatmul.mubr.f32.gmra.mrb[0].mxu0 %v523
        %v1871 = vpop.f32.mrb[0].mxu0
        %v1872 = vadd.f32 0.0, %v1871
        %v1873 = vpop.f32.mrb[0].mxu0
        %1874 = vdwg.mxu0
        %v1875 = vadd.f32 %v1721, %v1817
        %v1876 = vadd.f32 %v1722, %v1822
        %v1877 = vadd.f32 %v1723, %v1827
        %v1878 = vadd.f32 %v1724, %v1832
        %v1879 = vadd.f32 %v1725, %v1837
        %v1880 = vadd.f32 %v1726, %v1842
        %v1881 = vadd.f32 %v1727, %v1847
        %v1882 = vadd.f32 %v1728, %v1852
        %v1883 = vadd.f32 %v1729, %v1857
        %v1884 = vadd.f32 %v1730, %v1862
        %v1885 = vadd.f32 %v1731, %v1867
        %v1886 = vadd.f32 %v1732, %v1872
        %s1887 = scalar_lea.vmem %s1, 1152
        %v1888 = vld [vmem:[%s1887] sm:$0xff]
        %v1889 = vld [vmem:[%s1887 + $0x8] sm:$0xff]
        %v1890 = vld [vmem:[%s1887 + $0x10] sm:$0xff]
        %v1891 = vld [vmem:[%s1887 + $0x18] sm:$0xff]
        %v1892 = vld [vmem:[%s1887 + $0x20] sm:$0xff]
        %v1893 = vld [vmem:[%s1887 + $0x28] sm:$0xff]
        %v1894 = vld [vmem:[%s1887 + $0x30] sm:$0xff]
        %v1895 = vld [vmem:[%s1887 + $0x38] sm:$0xff]
        %v1896 = vld [vmem:[%s1887 + $0x40] sm:$0xff]
        %v1897 = vld [vmem:[%s1887 + $0x48] sm:$0xff]
        %v1898 = vld [vmem:[%s1887 + $0x50] sm:$0xff]
        %v1899 = vld [vmem:[%s1887 + $0x58] sm:$0xff]
        %v1900 = vld [vmem:[%s1887 + $0x60] sm:$0xff]
        %v1901 = vld [vmem:[%s1887 + $0x68] sm:$0xff]
        %v1902 = vld [vmem:[%s1887 + $0x70] sm:$0xff]
        %v1903 = vld [vmem:[%s1887 + $0x78] sm:$0xff]
        %1904 = vmatprep.subr.mxu0 0.0
        %1905 = vmatpush1.msra.mxu0 %v1888
        %1906 = vmatprep.subr.mxu0 0.0
        %1907 = vmatpush1.msra.mxu0 %v1889
        %1908 = vmatprep.subr.mxu0 0.0
        %1909 = vmatpush1.msra.mxu0 %v1890
        %1910 = vmatprep.subr.mxu0 0.0
        %1911 = vmatpush1.msra.mxu0 %v1891
        %1912 = vmatprep.subr.mxu0 0.0
        %1913 = vmatpush1.msra.mxu0 %v1892
        %1914 = vmatprep.subr.mxu0 0.0
        %1915 = vmatpush1.msra.mxu0 %v1893
        %1916 = vmatprep.subr.mxu0 0.0
        %1917 = vmatpush1.msra.mxu0 %v1894
        %1918 = vmatprep.subr.mxu0 0.0
        %1919 = vmatpush1.msra.mxu0 %v1895
        %1920 = vmatprep.subr.mxu0 0.0
        %1921 = vmatpush1.msra.mxu0 %v1896
        %1922 = vmatprep.subr.mxu0 0.0
        %1923 = vmatpush1.msra.mxu0 %v1897
        %1924 = vmatprep.subr.mxu0 0.0
        %1925 = vmatpush1.msra.mxu0 %v1898
        %1926 = vmatprep.subr.mxu0 0.0
        %1927 = vmatpush1.msra.mxu0 %v1899
        %1928 = vmatprep.subr.mxu0 0.0
        %1929 = vmatpush1.msra.mxu0 %v1900
        %1930 = vmatprep.subr.mxu0 0.0
        %1931 = vmatpush1.msra.mxu0 %v1901
        %1932 = vmatprep.subr.mxu0 0.0
        %1933 = vmatpush1.msra.mxu0 %v1902
        %1934 = vmatprep.subr.mxu0 0.0
        %1935 = vmatpush1.msra.mxu0 %v1903
        %1936 = vmatprep.subr.mxu0 0.0
        %1937 = vmatpush1.msra.mxu0 0.0
        %1938 = vmatprep.subr.mxu0 0.0
        %1939 = vmatpush1.msra.mxu0 0.0
        %1940 = vmatprep.subr.mxu0 0.0
        %1941 = vmatpush1.msra.mxu0 0.0
        %1942 = vmatprep.subr.mxu0 0.0
        %1943 = vmatpush1.msra.mxu0 0.0
        %1944 = vmatprep.subr.mxu0 0.0
        %1945 = vmatpush1.msra.mxu0 0.0
        %1946 = vmatprep.subr.mxu0 0.0
        %1947 = vmatpush1.msra.mxu0 0.0
        %1948 = vmatprep.subr.mxu0 0.0
        %1949 = vmatpush1.msra.mxu0 0.0
        %1950 = vmatprep.subr.mxu0 0.0
        %1951 = vmatpush1.msra.mxu0 0.0
        %1952 = vmatprep.subr.mxu0 0.0
        %1953 = vmatpush1.msra.mxu0 0.0
        %1954 = vmatprep.subr.mxu0 0.0
        %1955 = vmatpush1.msra.mxu0 0.0
        %1956 = vmatprep.subr.mxu0 0.0
        %1957 = vmatpush1.msra.mxu0 0.0
        %1958 = vmatprep.subr.mxu0 0.0
        %1959 = vmatpush1.msra.mxu0 0.0
        %1960 = vmatprep.subr.mxu0 0.0
        %1961 = vmatpush1.msra.mxu0 0.0
        %1962 = vmatprep.subr.mxu0 0.0
        %1963 = vmatpush1.msra.mxu0 0.0
        %1964 = vmatprep.subr.mxu0 0.0
        %1965 = vmatpush1.msra.mxu0 0.0
        %1966 = vmatprep.subr.mxu0 0.0
        %1967 = vmatpush1.msra.mxu0 0.0
        %1968 = vmatprep.mubr.f32.mxu0 0.0
        %1969 = vmatmul.mubr.f32.gmra.mrb[0].mxu0 %v525
        %v1970 = vpop.f32.mrb[0].mxu0
        %v1971 = vadd.f32 0.0, %v1970
        %v1972 = vpop.f32.mrb[0].mxu0
        %1973 = vmatprep.mubr.f32.mxu0 0.0
        %1974 = vmatmul.mubr.f32.gmra.mrb[0].mxu0 %v526
        %v1975 = vpop.f32.mrb[0].mxu0
        %v1976 = vadd.f32 0.0, %v1975
        %v1977 = vpop.f32.mrb[0].mxu0
        %1978 = vmatprep.mubr.f32.mxu0 0.0
        %1979 = vmatmul.mubr.f32.gmra.mrb[0].mxu0 %v527
        %v1980 = vpop.f32.mrb[0].mxu0
        %v1981 = vadd.f32 0.0, %v1980
        %v1982 = vpop.f32.mrb[0].mxu0
        %1983 = vmatprep.mubr.f32.mxu0 0.0
        %1984 = vmatmul.mubr.f32.gmra.mrb[0].mxu0 %v528
        %v1985 = vpop.f32.mrb[0].mxu0
        %v1986 = vadd.f32 0.0, %v1985
        %v1987 = vpop.f32.mrb[0].mxu0
        %1988 = vmatprep.mubr.f32.mxu0 0.0
        %1989 = vmatmul.mubr.f32.gmra.mrb[0].mxu0 %v529
        %v1990 = vpop.f32.mrb[0].mxu0
        %v1991 = vadd.f32 0.0, %v1990
        %v1992 = vpop.f32.mrb[0].mxu0
        %1993 = vmatprep.mubr.f32.mxu0 0.0
        %1994 = vmatmul.mubr.f32.gmra.mrb[0].mxu0 %v530
        %v1995 = vpop.f32.mrb[0].mxu0
        %v1996 = vadd.f32 0.0, %v1995
        %v1997 = vpop.f32.mrb[0].mxu0
        %1998 = vmatprep.mubr.f32.mxu0 0.0
        %1999 = vmatmul.mubr.f32.gmra.mrb[0].mxu0 %v531
        %v2000 = vpop.f32.mrb[0].mxu0
        %v2001 = vadd.f32 0.0, %v2000
        %v2002 = vpop.f32.mrb[0].mxu0
        %2003 = vmatprep.mubr.f32.mxu0 0.0
        %2004 = vmatmul.mubr.f32.gmra.mrb[0].mxu0 %v532
        %v2005 = vpop.f32.mrb[0].mxu0
        %v2006 = vadd.f32 0.0, %v2005
        %v2007 = vpop.f32.mrb[0].mxu0
        %2008 = vmatprep.mubr.f32.mxu0 0.0
        %2009 = vmatmul.mubr.f32.gmra.mrb[0].mxu0 %v533
        %v2010 = vpop.f32.mrb[0].mxu0
        %v2011 = vadd.f32 0.0, %v2010
        %v2012 = vpop.f32.mrb[0].mxu0
        %2013 = vmatprep.mubr.f32.mxu0 0.0
        %2014 = vmatmul.mubr.f32.gmra.mrb[0].mxu0 %v534
        %v2015 = vpop.f32.mrb[0].mxu0
        %v2016 = vadd.f32 0.0, %v2015
        %v2017 = vpop.f32.mrb[0].mxu0
        %2018 = vmatprep.mubr.f32.mxu0 0.0
        %2019 = vmatmul.mubr.f32.gmra.mrb[0].mxu0 %v535
        %v2020 = vpop.f32.mrb[0].mxu0
        %v2021 = vadd.f32 0.0, %v2020
        %v2022 = vpop.f32.mrb[0].mxu0
        %2023 = vmatprep.mubr.f32.mxu0 0.0
        %2024 = vmatmul.mubr.f32.gmra.mrb[0].mxu0 %v536
        %v2025 = vpop.f32.mrb[0].mxu0
        %v2026 = vadd.f32 0.0, %v2025
        %v2027 = vpop.f32.mrb[0].mxu0
        %2028 = vdwg.mxu0
        %v2029 = vadd.f32 %v1875, %v1971
        %v2030 = vadd.f32 %v1876, %v1976
        %v2031 = vadd.f32 %v1877, %v1981
        %v2032 = vadd.f32 %v1878, %v1986
        %v2033 = vadd.f32 %v1879, %v1991
        %v2034 = vadd.f32 %v1880, %v1996
        %v2035 = vadd.f32 %v1881, %v2001
        %v2036 = vadd.f32 %v1882, %v2006
        %v2037 = vadd.f32 %v1883, %v2011
        %v2038 = vadd.f32 %v1884, %v2016
        %v2039 = vadd.f32 %v1885, %v2021
        %v2040 = vadd.f32 %v1886, %v2026
        %v2041 = vmax.f32 %v1283, %v2029
        %v2042 = vmax.f32 %v1284, %v2030
        %v2043 = vmax.f32 %v1285, %v2031
        %v2044 = vmax.f32 %v1286, %v2032
        %v2045 = vmax.f32 %v1287, %v2033
        %v2046 = vmax.f32 %v1288, %v2034
        %v2047 = vmax.f32 %v1289, %v2035
        %v2048 = vmax.f32 %v1290, %v2036
        %v2049 = vmax.f32 %v1291, %v2037
        %v2050 = vmax.f32 %v1292, %v2038
        %v2051 = vmax.f32 %v1293, %v2039
        %v2052 = vmax.f32 %v1294, %v2040
        %2053 = vmatprep.subr.mxu0 0.0
        %2054 = vmatpush1.msra.mxu0 %v567
        %2055 = vmatprep.subr.mxu0 0.0
        %2056 = vmatpush1.msra.mxu0 %v568
        %2057 = vmatprep.subr.mxu0 0.0
        %2058 = vmatpush1.msra.mxu0 %v569
        %2059 = vmatprep.subr.mxu0 0.0
        %2060 = vmatpush1.msra.mxu0 %v570
        %2061 = vmatprep.subr.mxu0 0.0
        %2062 = vmatpush1.msra.mxu0 %v571
        %2063 = vmatprep.subr.mxu0 0.0
        %2064 = vmatpush1.msra.mxu0 %v572
        %2065 = vmatprep.subr.mxu0 0.0
        %2066 = vmatpush1.msra.mxu0 %v573
        %2067 = vmatprep.subr.mxu0 0.0
        %2068 = vmatpush1.msra.mxu0 %v574
        %2069 = vmatprep.subr.mxu0 0.0
        %2070 = vmatpush1.msra.mxu0 %v575
        %2071 = vmatprep.subr.mxu0 0.0
        %2072 = vmatpush1.msra.mxu0 %v576
        %2073 = vmatprep.subr.mxu0 0.0
        %2074 = vmatpush1.msra.mxu0 %v577
        %2075 = vmatprep.subr.mxu0 0.0
        %2076 = vmatpush1.msra.mxu0 %v578
        %2077 = vmatprep.subr.mxu0 0.0
        %2078 = vmatpush1.msra.mxu0 %v579
        %2079 = vmatprep.subr.mxu0 0.0
        %2080 = vmatpush1.msra.mxu0 %v580
        %2081 = vmatprep.subr.mxu0 0.0
        %2082 = vmatpush1.msra.mxu0 %v581
        %2083 = vmatprep.subr.mxu0 0.0
        %2084 = vmatpush1.msra.mxu0 %v582
        %2085 = vmatprep.subr.mxu0 0.0
        %2086 = vmatpush1.msra.mxu0 0.0
        %2087 = vmatprep.subr.mxu0 0.0
        %2088 = vmatpush1.msra.mxu0 0.0
        %2089 = vmatprep.subr.mxu0 0.0
        %2090 = vmatpush1.msra.mxu0 0.0
        %2091 = vmatprep.subr.mxu0 0.0
        %2092 = vmatpush1.msra.mxu0 0.0
        %2093 = vmatprep.subr.mxu0 0.0
        %2094 = vmatpush1.msra.mxu0 0.0
        %2095 = vmatprep.subr.mxu0 0.0
        %2096 = vmatpush1.msra.mxu0 0.0
        %2097 = vmatprep.subr.mxu0 0.0
        %2098 = vmatpush1.msra.mxu0 0.0
        %2099 = vmatprep.subr.mxu0 0.0
        %2100 = vmatpush1.msra.mxu0 0.0
        %2101 = vmatprep.subr.mxu0 0.0
        %2102 = vmatpush1.msra.mxu0 0.0
        %2103 = vmatprep.subr.mxu0 0.0
        %2104 = vmatpush1.msra.mxu0 0.0
        %2105 = vmatprep.subr.mxu0 0.0
        %2106 = vmatpush1.msra.mxu0 0.0
        %2107 = vmatprep.subr.mxu0 0.0
        %2108 = vmatpush1.msra.mxu0 0.0
        %2109 = vmatprep.subr.mxu0 0.0
        %2110 = vmatpush1.msra.mxu0 0.0
        %2111 = vmatprep.subr.mxu0 0.0
        %2112 = vmatpush1.msra.mxu0 0.0
        %2113 = vmatprep.subr.mxu0 0.0
        %2114 = vmatpush1.msra.mxu0 0.0
        %2115 = vmatprep.subr.mxu0 0.0
        %2116 = vmatpush1.msra.mxu0 0.0
        %2117 = vmatprep.mubr.f32.mxu0 0.0
        %2118 = vmatmul.mubr.f32.gmra.mrb[0].mxu0 %v499
        %v2119 = vpop.f32.mrb[0].mxu0
        %v2120 = vadd.f32 0.0, %v2119
        %v2121 = vpop.f32.mrb[0].mxu0
        %2122 = vmatprep.mubr.f32.mxu0 0.0
        %2123 = vmatmul.mubr.f32.gmra.mrb[0].mxu0 %v500
        %v2124 = vpop.f32.mrb[0].mxu0
        %v2125 = vadd.f32 0.0, %v2124
        %v2126 = vpop.f32.mrb[0].mxu0
        %2127 = vmatprep.mubr.f32.mxu0 0.0
        %2128 = vmatmul.mubr.f32.gmra.mrb[0].mxu0 %v501
        %v2129 = vpop.f32.mrb[0].mxu0
        %v2130 = vadd.f32 0.0, %v2129
        %v2131 = vpop.f32.mrb[0].mxu0
        %2132 = vmatprep.mubr.f32.mxu0 0.0
        %2133 = vmatmul.mubr.f32.gmra.mrb[0].mxu0 %v502
        %v2134 = vpop.f32.mrb[0].mxu0
        %v2135 = vadd.f32 0.0, %v2134
        %v2136 = vpop.f32.mrb[0].mxu0
        %2137 = vmatprep.mubr.f32.mxu0 0.0
        %2138 = vmatmul.mubr.f32.gmra.mrb[0].mxu0 %v503
        %v2139 = vpop.f32.mrb[0].mxu0
        %v2140 = vadd.f32 0.0, %v2139
        %v2141 = vpop.f32.mrb[0].mxu0
        %2142 = vmatprep.mubr.f32.mxu0 0.0
        %2143 = vmatmul.mubr.f32.gmra.mrb[0].mxu0 %v504
        %v2144 = vpop.f32.mrb[0].mxu0
        %v2145 = vadd.f32 0.0, %v2144
        %v2146 = vpop.f32.mrb[0].mxu0
        %2147 = vmatprep.mubr.f32.mxu0 0.0
        %2148 = vmatmul.mubr.f32.gmra.mrb[0].mxu0 %v505
        %v2149 = vpop.f32.mrb[0].mxu0
        %v2150 = vadd.f32 0.0, %v2149
        %v2151 = vpop.f32.mrb[0].mxu0
        %2152 = vmatprep.mubr.f32.mxu0 0.0
        %2153 = vmatmul.mubr.f32.gmra.mrb[0].mxu0 %v506
        %v2154 = vpop.f32.mrb[0].mxu0
        %v2155 = vadd.f32 0.0, %v2154
        %v2156 = vpop.f32.mrb[0].mxu0
        %2157 = vmatprep.mubr.f32.mxu0 0.0
        %2158 = vmatmul.mubr.f32.gmra.mrb[0].mxu0 %v507
        %v2159 = vpop.f32.mrb[0].mxu0
        %v2160 = vadd.f32 0.0, %v2159
        %v2161 = vpop.f32.mrb[0].mxu0
        %2162 = vmatprep.mubr.f32.mxu0 0.0
        %2163 = vmatmul.mubr.f32.gmra.mrb[0].mxu0 %v508
        %v2164 = vpop.f32.mrb[0].mxu0
        %v2165 = vadd.f32 0.0, %v2164
        %v2166 = vpop.f32.mrb[0].mxu0
        %2167 = vmatprep.mubr.f32.mxu0 0.0
        %2168 = vmatmul.mubr.f32.gmra.mrb[0].mxu0 %v509
        %v2169 = vpop.f32.mrb[0].mxu0
        %v2170 = vadd.f32 0.0, %v2169
        %v2171 = vpop.f32.mrb[0].mxu0
        %2172 = vmatprep.mubr.f32.mxu0 0.0
        %2173 = vmatmul.mubr.f32.gmra.mrb[0].mxu0 %v510
        %v2174 = vpop.f32.mrb[0].mxu0
        %v2175 = vadd.f32 0.0, %v2174
        %v2176 = vpop.f32.mrb[0].mxu0
        %2177 = vdwg.mxu0
        %2178 = vmatprep.subr.mxu0 0.0
        %2179 = vmatpush1.msra.mxu0 %v550
        %2180 = vmatprep.subr.mxu0 0.0
        %2181 = vmatpush1.msra.mxu0 %v551
        %2182 = vmatprep.subr.mxu0 0.0
        %2183 = vmatpush1.msra.mxu0 %v552
        %2184 = vmatprep.subr.mxu0 0.0
        %2185 = vmatpush1.msra.mxu0 %v553
        %2186 = vmatprep.subr.mxu0 0.0
        %2187 = vmatpush1.msra.mxu0 %v554
        %2188 = vmatprep.subr.mxu0 0.0
        %2189 = vmatpush1.msra.mxu0 %v555
        %2190 = vmatprep.subr.mxu0 0.0
        %2191 = vmatpush1.msra.mxu0 %v556
        %2192 = vmatprep.subr.mxu0 0.0
        %2193 = vmatpush1.msra.mxu0 %v557
        %2194 = vmatprep.subr.mxu0 0.0
        %2195 = vmatpush1.msra.mxu0 %v558
        %2196 = vmatprep.subr.mxu0 0.0
        %2197 = vmatpush1.msra.mxu0 %v559
        %2198 = vmatprep.subr.mxu0 0.0
        %2199 = vmatpush1.msra.mxu0 %v560
        %2200 = vmatprep.subr.mxu0 0.0
        %2201 = vmatpush1.msra.mxu0 %v561
        %2202 = vmatprep.subr.mxu0 0.0
        %2203 = vmatpush1.msra.mxu0 %v562
        %2204 = vmatprep.subr.mxu0 0.0
        %2205 = vmatpush1.msra.mxu0 %v563
        %2206 = vmatprep.subr.mxu0 0.0
        %2207 = vmatpush1.msra.mxu0 %v564
        %2208 = vmatprep.subr.mxu0 0.0
        %2209 = vmatpush1.msra.mxu0 %v565
        %2210 = vmatprep.subr.mxu0 0.0
        %2211 = vmatpush1.msra.mxu0 0.0
        %2212 = vmatprep.subr.mxu0 0.0
        %2213 = vmatpush1.msra.mxu0 0.0
        %2214 = vmatprep.subr.mxu0 0.0
        %2215 = vmatpush1.msra.mxu0 0.0
        %2216 = vmatprep.subr.mxu0 0.0
        %2217 = vmatpush1.msra.mxu0 0.0
        %2218 = vmatprep.subr.mxu0 0.0
        %2219 = vmatpush1.msra.mxu0 0.0
        %2220 = vmatprep.subr.mxu0 0.0
        %2221 = vmatpush1.msra.mxu0 0.0
        %2222 = vmatprep.subr.mxu0 0.0
        %2223 = vmatpush1.msra.mxu0 0.0
        %2224 = vmatprep.subr.mxu0 0.0
        %2225 = vmatpush1.msra.mxu0 0.0
        %2226 = vmatprep.subr.mxu0 0.0
        %2227 = vmatpush1.msra.mxu0 0.0
        %2228 = vmatprep.subr.mxu0 0.0
        %2229 = vmatpush1.msra.mxu0 0.0
        %2230 = vmatprep.subr.mxu0 0.0
        %2231 = vmatpush1.msra.mxu0 0.0
        %2232 = vmatprep.subr.mxu0 0.0
        %2233 = vmatpush1.msra.mxu0 0.0
        %2234 = vmatprep.subr.mxu0 0.0
        %2235 = vmatpush1.msra.mxu0 0.0
        %2236 = vmatprep.subr.mxu0 0.0
        %2237 = vmatpush1.msra.mxu0 0.0
        %2238 = vmatprep.subr.mxu0 0.0
        %2239 = vmatpush1.msra.mxu0 0.0
        %2240 = vmatprep.subr.mxu0 0.0
        %2241 = vmatpush1.msra.mxu0 0.0
        %2242 = vmatprep.mubr.f32.mxu0 0.0
        %2243 = vmatmul.mubr.f32.gmra.mrb[0].mxu0 %v486
        %v2244 = vpop.f32.mrb[0].mxu0
        %v2245 = vadd.f32 %v2120, %v2244
        %v2246 = vpop.f32.mrb[0].mxu0
        %2247 = vmatprep.mubr.f32.mxu0 0.0
        %2248 = vmatmul.mubr.f32.gmra.mrb[0].mxu0 %v487
        %v2249 = vpop.f32.mrb[0].mxu0
        %v2250 = vadd.f32 %v2125, %v2249
        %v2251 = vpop.f32.mrb[0].mxu0
        %2252 = vmatprep.mubr.f32.mxu0 0.0
        %2253 = vmatmul.mubr.f32.gmra.mrb[0].mxu0 %v488
        %v2254 = vpop.f32.mrb[0].mxu0
        %v2255 = vadd.f32 %v2130, %v2254
        %v2256 = vpop.f32.mrb[0].mxu0
        %2257 = vmatprep.mubr.f32.mxu0 0.0
        %2258 = vmatmul.mubr.f32.gmra.mrb[0].mxu0 %v489
        %v2259 = vpop.f32.mrb[0].mxu0
        %v2260 = vadd.f32 %v2135, %v2259
        %v2261 = vpop.f32.mrb[0].mxu0
        %2262 = vmatprep.mubr.f32.mxu0 0.0
        %2263 = vmatmul.mubr.f32.gmra.mrb[0].mxu0 %v490
        %v2264 = vpop.f32.mrb[0].mxu0
        %v2265 = vadd.f32 %v2140, %v2264
        %v2266 = vpop.f32.mrb[0].mxu0
        %2267 = vmatprep.mubr.f32.mxu0 0.0
        %2268 = vmatmul.mubr.f32.gmra.mrb[0].mxu0 %v491
        %v2269 = vpop.f32.mrb[0].mxu0
        %v2270 = vadd.f32 %v2145, %v2269
        %v2271 = vpop.f32.mrb[0].mxu0
        %2272 = vmatprep.mubr.f32.mxu0 0.0
        %2273 = vmatmul.mubr.f32.gmra.mrb[0].mxu0 %v492
        %v2274 = vpop.f32.mrb[0].mxu0
        %v2275 = vadd.f32 %v2150, %v2274
        %v2276 = vpop.f32.mrb[0].mxu0
        %2277 = vmatprep.mubr.f32.mxu0 0.0
        %2278 = vmatmul.mubr.f32.gmra.mrb[0].mxu0 %v493
        %v2279 = vpop.f32.mrb[0].mxu0
        %v2280 = vadd.f32 %v2155, %v2279
        %v2281 = vpop.f32.mrb[0].mxu0
        %2282 = vmatprep.mubr.f32.mxu0 0.0
        %2283 = vmatmul.mubr.f32.gmra.mrb[0].mxu0 %v494
        %v2284 = vpop.f32.mrb[0].mxu0
        %v2285 = vadd.f32 %v2160, %v2284
        %v2286 = vpop.f32.mrb[0].mxu0
        %2287 = vmatprep.mubr.f32.mxu0 0.0
        %2288 = vmatmul.mubr.f32.gmra.mrb[0].mxu0 %v495
        %v2289 = vpop.f32.mrb[0].mxu0
        %v2290 = vadd.f32 %v2165, %v2289
        %v2291 = vpop.f32.mrb[0].mxu0
        %2292 = vmatprep.mubr.f32.mxu0 0.0
        %2293 = vmatmul.mubr.f32.gmra.mrb[0].mxu0 %v496
        %v2294 = vpop.f32.mrb[0].mxu0
        %v2295 = vadd.f32 %v2170, %v2294
        %v2296 = vpop.f32.mrb[0].mxu0
        %2297 = vmatprep.mubr.f32.mxu0 0.0
        %2298 = vmatmul.mubr.f32.gmra.mrb[0].mxu0 %v497
        %v2299 = vpop.f32.mrb[0].mxu0
        %v2300 = vadd.f32 %v2175, %v2299
        %v2301 = vpop.f32.mrb[0].mxu0
        %2302 = vdwg.mxu0
        %2303 = vmatprep.subr.mxu0 0.0
        %2304 = vmatpush1.msra.mxu0 %v834
        %2305 = vmatprep.subr.mxu0 0.0
        %2306 = vmatpush1.msra.mxu0 %v835
        %2307 = vmatprep.subr.mxu0 0.0
        %2308 = vmatpush1.msra.mxu0 %v836
        %2309 = vmatprep.subr.mxu0 0.0
        %2310 = vmatpush1.msra.mxu0 %v837
        %2311 = vmatprep.subr.mxu0 0.0
        %2312 = vmatpush1.msra.mxu0 %v838
        %2313 = vmatprep.subr.mxu0 0.0
        %2314 = vmatpush1.msra.mxu0 %v839
        %2315 = vmatprep.subr.mxu0 0.0
        %2316 = vmatpush1.msra.mxu0 %v840
        %2317 = vmatprep.subr.mxu0 0.0
        %2318 = vmatpush1.msra.mxu0 %v841
        %2319 = vmatprep.subr.mxu0 0.0
        %2320 = vmatpush1.msra.mxu0 %v842
        %2321 = vmatprep.subr.mxu0 0.0
        %2322 = vmatpush1.msra.mxu0 %v843
        %2323 = vmatprep.subr.mxu0 0.0
        %2324 = vmatpush1.msra.mxu0 %v844
        %2325 = vmatprep.subr.mxu0 0.0
        %2326 = vmatpush1.msra.mxu0 %v845
        %2327 = vmatprep.subr.mxu0 0.0
        %2328 = vmatpush1.msra.mxu0 %v846
        %2329 = vmatprep.subr.mxu0 0.0
        %2330 = vmatpush1.msra.mxu0 %v847
        %2331 = vmatprep.subr.mxu0 0.0
        %2332 = vmatpush1.msra.mxu0 %v848
        %2333 = vmatprep.subr.mxu0 0.0
        %2334 = vmatpush1.msra.mxu0 %v849
        %2335 = vmatprep.subr.mxu0 0.0
        %2336 = vmatpush1.msra.mxu0 0.0
        %2337 = vmatprep.subr.mxu0 0.0
        %2338 = vmatpush1.msra.mxu0 0.0
        %2339 = vmatprep.subr.mxu0 0.0
        %2340 = vmatpush1.msra.mxu0 0.0
        %2341 = vmatprep.subr.mxu0 0.0
        %2342 = vmatpush1.msra.mxu0 0.0
        %2343 = vmatprep.subr.mxu0 0.0
        %2344 = vmatpush1.msra.mxu0 0.0
        %2345 = vmatprep.subr.mxu0 0.0
        %2346 = vmatpush1.msra.mxu0 0.0
        %2347 = vmatprep.subr.mxu0 0.0
        %2348 = vmatpush1.msra.mxu0 0.0
        %2349 = vmatprep.subr.mxu0 0.0
        %2350 = vmatpush1.msra.mxu0 0.0
        %2351 = vmatprep.subr.mxu0 0.0
        %2352 = vmatpush1.msra.mxu0 0.0
        %2353 = vmatprep.subr.mxu0 0.0
        %2354 = vmatpush1.msra.mxu0 0.0
        %2355 = vmatprep.subr.mxu0 0.0
        %2356 = vmatpush1.msra.mxu0 0.0
        %2357 = vmatprep.subr.mxu0 0.0
        %2358 = vmatpush1.msra.mxu0 0.0
        %2359 = vmatprep.subr.mxu0 0.0
        %2360 = vmatpush1.msra.mxu0 0.0
        %2361 = vmatprep.subr.mxu0 0.0
        %2362 = vmatpush1.msra.mxu0 0.0
        %2363 = vmatprep.subr.mxu0 0.0
        %2364 = vmatpush1.msra.mxu0 0.0
        %2365 = vmatprep.subr.mxu0 0.0
        %2366 = vmatpush1.msra.mxu0 0.0
        %2367 = vmatprep.mubr.f32.mxu0 0.0
        %2368 = vmatmul.mubr.f32.gmra.mrb[0].mxu0 %v512
        %v2369 = vpop.f32.mrb[0].mxu0
        %v2370 = vadd.f32 0.0, %v2369
        %v2371 = vpop.f32.mrb[0].mxu0
        %2372 = vmatprep.mubr.f32.mxu0 0.0
        %2373 = vmatmul.mubr.f32.gmra.mrb[0].mxu0 %v513
        %v2374 = vpop.f32.mrb[0].mxu0
        %v2375 = vadd.f32 0.0, %v2374
        %v2376 = vpop.f32.mrb[0].mxu0
        %2377 = vmatprep.mubr.f32.mxu0 0.0
        %2378 = vmatmul.mubr.f32.gmra.mrb[0].mxu0 %v514
        %v2379 = vpop.f32.mrb[0].mxu0
        %v2380 = vadd.f32 0.0, %v2379
        %v2381 = vpop.f32.mrb[0].mxu0
        %2382 = vmatprep.mubr.f32.mxu0 0.0
        %2383 = vmatmul.mubr.f32.gmra.mrb[0].mxu0 %v515
        %v2384 = vpop.f32.mrb[0].mxu0
        %v2385 = vadd.f32 0.0, %v2384
        %v2386 = vpop.f32.mrb[0].mxu0
        %2387 = vmatprep.mubr.f32.mxu0 0.0
        %2388 = vmatmul.mubr.f32.gmra.mrb[0].mxu0 %v516
        %v2389 = vpop.f32.mrb[0].mxu0
        %v2390 = vadd.f32 0.0, %v2389
        %v2391 = vpop.f32.mrb[0].mxu0
        %2392 = vmatprep.mubr.f32.mxu0 0.0
        %2393 = vmatmul.mubr.f32.gmra.mrb[0].mxu0 %v517
        %v2394 = vpop.f32.mrb[0].mxu0
        %v2395 = vadd.f32 0.0, %v2394
        %v2396 = vpop.f32.mrb[0].mxu0
        %2397 = vmatprep.mubr.f32.mxu0 0.0
        %2398 = vmatmul.mubr.f32.gmra.mrb[0].mxu0 %v518
        %v2399 = vpop.f32.mrb[0].mxu0
        %v2400 = vadd.f32 0.0, %v2399
        %v2401 = vpop.f32.mrb[0].mxu0
        %2402 = vmatprep.mubr.f32.mxu0 0.0
        %2403 = vmatmul.mubr.f32.gmra.mrb[0].mxu0 %v519
        %v2404 = vpop.f32.mrb[0].mxu0
        %v2405 = vadd.f32 0.0, %v2404
        %v2406 = vpop.f32.mrb[0].mxu0
        %2407 = vmatprep.mubr.f32.mxu0 0.0
        %2408 = vmatmul.mubr.f32.gmra.mrb[0].mxu0 %v520
        %v2409 = vpop.f32.mrb[0].mxu0
        %v2410 = vadd.f32 0.0, %v2409
        %v2411 = vpop.f32.mrb[0].mxu0
        %2412 = vmatprep.mubr.f32.mxu0 0.0
        %2413 = vmatmul.mubr.f32.gmra.mrb[0].mxu0 %v521
        %v2414 = vpop.f32.mrb[0].mxu0
        %v2415 = vadd.f32 0.0, %v2414
        %v2416 = vpop.f32.mrb[0].mxu0
        %2417 = vmatprep.mubr.f32.mxu0 0.0
        %2418 = vmatmul.mubr.f32.gmra.mrb[0].mxu0 %v522
        %v2419 = vpop.f32.mrb[0].mxu0
        %v2420 = vadd.f32 0.0, %v2419
        %v2421 = vpop.f32.mrb[0].mxu0
        %2422 = vmatprep.mubr.f32.mxu0 0.0
        %2423 = vmatmul.mubr.f32.gmra.mrb[0].mxu0 %v523
        %v2424 = vpop.f32.mrb[0].mxu0
        %v2425 = vadd.f32 0.0, %v2424
        %v2426 = vpop.f32.mrb[0].mxu0
        %2427 = vdwg.mxu0
        %v2428 = vadd.f32 %v2245, %v2370
        %v2429 = vadd.f32 %v2250, %v2375
        %v2430 = vadd.f32 %v2255, %v2380
        %v2431 = vadd.f32 %v2260, %v2385
        %v2432 = vadd.f32 %v2265, %v2390
        %v2433 = vadd.f32 %v2270, %v2395
        %v2434 = vadd.f32 %v2275, %v2400
        %v2435 = vadd.f32 %v2280, %v2405
        %v2436 = vadd.f32 %v2285, %v2410
        %v2437 = vadd.f32 %v2290, %v2415
        %v2438 = vadd.f32 %v2295, %v2420
        %v2439 = vadd.f32 %v2300, %v2425
        %2440 = vmatprep.subr.mxu0 0.0
        %2441 = vmatpush1.msra.mxu0 %v988
        %2442 = vmatprep.subr.mxu0 0.0
        %2443 = vmatpush1.msra.mxu0 %v989
        %2444 = vmatprep.subr.mxu0 0.0
        %2445 = vmatpush1.msra.mxu0 %v990
        %2446 = vmatprep.subr.mxu0 0.0
        %2447 = vmatpush1.msra.mxu0 %v991
        %2448 = vmatprep.subr.mxu0 0.0
        %2449 = vmatpush1.msra.mxu0 %v992
        %2450 = vmatprep.subr.mxu0 0.0
        %2451 = vmatpush1.msra.mxu0 %v993
        %2452 = vmatprep.subr.mxu0 0.0
        %2453 = vmatpush1.msra.mxu0 %v994
        %2454 = vmatprep.subr.mxu0 0.0
        %2455 = vmatpush1.msra.mxu0 %v995
        %2456 = vmatprep.subr.mxu0 0.0
        %2457 = vmatpush1.msra.mxu0 %v996
        %2458 = vmatprep.subr.mxu0 0.0
        %2459 = vmatpush1.msra.mxu0 %v997
        %2460 = vmatprep.subr.mxu0 0.0
        %2461 = vmatpush1.msra.mxu0 %v998
        %2462 = vmatprep.subr.mxu0 0.0
        %2463 = vmatpush1.msra.mxu0 %v999
        %2464 = vmatprep.subr.mxu0 0.0
        %2465 = vmatpush1.msra.mxu0 %v1000
        %2466 = vmatprep.subr.mxu0 0.0
        %2467 = vmatpush1.msra.mxu0 %v1001
        %2468 = vmatprep.subr.mxu0 0.0
        %2469 = vmatpush1.msra.mxu0 %v1002
        %2470 = vmatprep.subr.mxu0 0.0
        %2471 = vmatpush1.msra.mxu0 %v1003
        %2472 = vmatprep.subr.mxu0 0.0
        %2473 = vmatpush1.msra.mxu0 0.0
        %2474 = vmatprep.subr.mxu0 0.0
        %2475 = vmatpush1.msra.mxu0 0.0
        %2476 = vmatprep.subr.mxu0 0.0
        %2477 = vmatpush1.msra.mxu0 0.0
        %2478 = vmatprep.subr.mxu0 0.0
        %2479 = vmatpush1.msra.mxu0 0.0
        %2480 = vmatprep.subr.mxu0 0.0
        %2481 = vmatpush1.msra.mxu0 0.0
        %2482 = vmatprep.subr.mxu0 0.0
        %2483 = vmatpush1.msra.mxu0 0.0
        %2484 = vmatprep.subr.mxu0 0.0
        %2485 = vmatpush1.msra.mxu0 0.0
        %2486 = vmatprep.subr.mxu0 0.0
        %2487 = vmatpush1.msra.mxu0 0.0
        %2488 = vmatprep.subr.mxu0 0.0
        %2489 = vmatpush1.msra.mxu0 0.0
        %2490 = vmatprep.subr.mxu0 0.0
        %2491 = vmatpush1.msra.mxu0 0.0
        %2492 = vmatprep.subr.mxu0 0.0
        %2493 = vmatpush1.msra.mxu0 0.0
        %2494 = vmatprep.subr.mxu0 0.0
        %2495 = vmatpush1.msra.mxu0 0.0
        %2496 = vmatprep.subr.mxu0 0.0
        %2497 = vmatpush1.msra.mxu0 0.0
        %2498 = vmatprep.subr.mxu0 0.0
        %2499 = vmatpush1.msra.mxu0 0.0
        %2500 = vmatprep.subr.mxu0 0.0
        %2501 = vmatpush1.msra.mxu0 0.0
        %2502 = vmatprep.subr.mxu0 0.0
        %2503 = vmatpush1.msra.mxu0 0.0
        %2504 = vmatprep.mubr.f32.mxu0 0.0
        %2505 = vmatmul.mubr.f32.gmra.mrb[0].mxu0 %v525
        %v2506 = vpop.f32.mrb[0].mxu0
        %v2507 = vadd.f32 0.0, %v2506
        %v2508 = vpop.f32.mrb[0].mxu0
        %2509 = vmatprep.mubr.f32.mxu0 0.0
        %2510 = vmatmul.mubr.f32.gmra.mrb[0].mxu0 %v526
        %v2511 = vpop.f32.mrb[0].mxu0
        %v2512 = vadd.f32 0.0, %v2511
        %v2513 = vpop.f32.mrb[0].mxu0
        %2514 = vmatprep.mubr.f32.mxu0 0.0
        %2515 = vmatmul.mubr.f32.gmra.mrb[0].mxu0 %v527
        %v2516 = vpop.f32.mrb[0].mxu0
        %v2517 = vadd.f32 0.0, %v2516
        %v2518 = vpop.f32.mrb[0].mxu0
        %2519 = vmatprep.mubr.f32.mxu0 0.0
        %2520 = vmatmul.mubr.f32.gmra.mrb[0].mxu0 %v528
        %v2521 = vpop.f32.mrb[0].mxu0
        %v2522 = vadd.f32 0.0, %v2521
        %v2523 = vpop.f32.mrb[0].mxu0
        %2524 = vmatprep.mubr.f32.mxu0 0.0
        %2525 = vmatmul.mubr.f32.gmra.mrb[0].mxu0 %v529
        %v2526 = vpop.f32.mrb[0].mxu0
        %v2527 = vadd.f32 0.0, %v2526
        %v2528 = vpop.f32.mrb[0].mxu0
        %2529 = vmatprep.mubr.f32.mxu0 0.0
        %2530 = vmatmul.mubr.f32.gmra.mrb[0].mxu0 %v530
        %v2531 = vpop.f32.mrb[0].mxu0
        %v2532 = vadd.f32 0.0, %v2531
        %v2533 = vpop.f32.mrb[0].mxu0
        %2534 = vmatprep.mubr.f32.mxu0 0.0
        %2535 = vmatmul.mubr.f32.gmra.mrb[0].mxu0 %v531
        %v2536 = vpop.f32.mrb[0].mxu0
        %v2537 = vadd.f32 0.0, %v2536
        %v2538 = vpop.f32.mrb[0].mxu0
        %2539 = vmatprep.mubr.f32.mxu0 0.0
        %2540 = vmatmul.mubr.f32.gmra.mrb[0].mxu0 %v532
        %v2541 = vpop.f32.mrb[0].mxu0
        %v2542 = vadd.f32 0.0, %v2541
        %v2543 = vpop.f32.mrb[0].mxu0
        %2544 = vmatprep.mubr.f32.mxu0 0.0
        %2545 = vmatmul.mubr.f32.gmra.mrb[0].mxu0 %v533
        %v2546 = vpop.f32.mrb[0].mxu0
        %v2547 = vadd.f32 0.0, %v2546
        %v2548 = vpop.f32.mrb[0].mxu0
        %2549 = vmatprep.mubr.f32.mxu0 0.0
        %2550 = vmatmul.mubr.f32.gmra.mrb[0].mxu0 %v534
        %v2551 = vpop.f32.mrb[0].mxu0
        %v2552 = vadd.f32 0.0, %v2551
        %v2553 = vpop.f32.mrb[0].mxu0
        %2554 = vmatprep.mubr.f32.mxu0 0.0
        %2555 = vmatmul.mubr.f32.gmra.mrb[0].mxu0 %v535
        %v2556 = vpop.f32.mrb[0].mxu0
        %v2557 = vadd.f32 0.0, %v2556
        %v2558 = vpop.f32.mrb[0].mxu0
        %2559 = vmatprep.mubr.f32.mxu0 0.0
        %2560 = vmatmul.mubr.f32.gmra.mrb[0].mxu0 %v536
        %v2561 = vpop.f32.mrb[0].mxu0
        %v2562 = vadd.f32 0.0, %v2561
        %v2563 = vpop.f32.mrb[0].mxu0
        %2564 = vdwg.mxu0
        %v2565 = vadd.f32 %v2428, %v2507
        %v2566 = vadd.f32 %v2429, %v2512
        %v2567 = vadd.f32 %v2430, %v2517
        %v2568 = vadd.f32 %v2431, %v2522
        %v2569 = vadd.f32 %v2432, %v2527
        %v2570 = vadd.f32 %v2433, %v2532
        %v2571 = vadd.f32 %v2434, %v2537
        %v2572 = vadd.f32 %v2435, %v2542
        %v2573 = vadd.f32 %v2436, %v2547
        %v2574 = vadd.f32 %v2437, %v2552
        %v2575 = vadd.f32 %v2438, %v2557
        %v2576 = vadd.f32 %v2439, %v2562
        %2577 = vmatprep.subr.mxu0 0.0
        %2578 = vmatpush1.msra.mxu0 %v1142
        %2579 = vmatprep.subr.mxu0 0.0
        %2580 = vmatpush1.msra.mxu0 %v1143
        %2581 = vmatprep.subr.mxu0 0.0
        %2582 = vmatpush1.msra.mxu0 %v1144
        %2583 = vmatprep.subr.mxu0 0.0
        %2584 = vmatpush1.msra.mxu0 %v1145
        %2585 = vmatprep.subr.mxu0 0.0
        %2586 = vmatpush1.msra.mxu0 %v1146
        %2587 = vmatprep.subr.mxu0 0.0
        %2588 = vmatpush1.msra.mxu0 %v1147
        %2589 = vmatprep.subr.mxu0 0.0
        %2590 = vmatpush1.msra.mxu0 %v1148
        %2591 = vmatprep.subr.mxu0 0.0
        %2592 = vmatpush1.msra.mxu0 %v1149
        %2593 = vmatprep.subr.mxu0 0.0
        %2594 = vmatpush1.msra.mxu0 %v1150
        %2595 = vmatprep.subr.mxu0 0.0
        %2596 = vmatpush1.msra.mxu0 %v1151
        %2597 = vmatprep.subr.mxu0 0.0
        %2598 = vmatpush1.msra.mxu0 %v1152
        %2599 = vmatprep.subr.mxu0 0.0
        %2600 = vmatpush1.msra.mxu0 %v1153
        %2601 = vmatprep.subr.mxu0 0.0
        %2602 = vmatpush1.msra.mxu0 %v1154
        %2603 = vmatprep.subr.mxu0 0.0
        %2604 = vmatpush1.msra.mxu0 %v1155
        %2605 = vmatprep.subr.mxu0 0.0
        %2606 = vmatpush1.msra.mxu0 %v1156
        %2607 = vmatprep.subr.mxu0 0.0
        %2608 = vmatpush1.msra.mxu0 %v1157
        %2609 = vmatprep.subr.mxu0 0.0
        %2610 = vmatpush1.msra.mxu0 0.0
        %2611 = vmatprep.subr.mxu0 0.0
        %2612 = vmatpush1.msra.mxu0 0.0
        %2613 = vmatprep.subr.mxu0 0.0
        %2614 = vmatpush1.msra.mxu0 0.0
        %2615 = vmatprep.subr.mxu0 0.0
        %2616 = vmatpush1.msra.mxu0 0.0
        %2617 = vmatprep.subr.mxu0 0.0
        %2618 = vmatpush1.msra.mxu0 0.0
        %2619 = vmatprep.subr.mxu0 0.0
        %2620 = vmatpush1.msra.mxu0 0.0
        %2621 = vmatprep.subr.mxu0 0.0
        %2622 = vmatpush1.msra.mxu0 0.0
        %2623 = vmatprep.subr.mxu0 0.0
        %2624 = vmatpush1.msra.mxu0 0.0
        %2625 = vmatprep.subr.mxu0 0.0
        %2626 = vmatpush1.msra.mxu0 0.0
        %2627 = vmatprep.subr.mxu0 0.0
        %2628 = vmatpush1.msra.mxu0 0.0
        %2629 = vmatprep.subr.mxu0 0.0
        %2630 = vmatpush1.msra.mxu0 0.0
        %2631 = vmatprep.subr.mxu0 0.0
        %2632 = vmatpush1.msra.mxu0 0.0
        %2633 = vmatprep.subr.mxu0 0.0
        %2634 = vmatpush1.msra.mxu0 0.0
        %2635 = vmatprep.subr.mxu0 0.0
        %2636 = vmatpush1.msra.mxu0 0.0
        %2637 = vmatprep.subr.mxu0 0.0
        %2638 = vmatpush1.msra.mxu0 0.0
        %2639 = vmatprep.subr.mxu0 0.0
        %2640 = vmatpush1.msra.mxu0 0.0
        %2641 = vmatprep.mubr.f32.mxu0 0.0
        %2642 = vmatmul.mubr.f32.gmra.mrb[0].mxu0 %v538
        %v2643 = vpop.f32.mrb[0].mxu0
        %v2644 = vadd.f32 0.0, %v2643
        %v2645 = vpop.f32.mrb[0].mxu0
        %2646 = vmatprep.mubr.f32.mxu0 0.0
        %2647 = vmatmul.mubr.f32.gmra.mrb[0].mxu0 %v539
        %v2648 = vpop.f32.mrb[0].mxu0
        %v2649 = vadd.f32 0.0, %v2648
        %v2650 = vpop.f32.mrb[0].mxu0
        %2651 = vmatprep.mubr.f32.mxu0 0.0
        %2652 = vmatmul.mubr.f32.gmra.mrb[0].mxu0 %v540
        %v2653 = vpop.f32.mrb[0].mxu0
        %v2654 = vadd.f32 0.0, %v2653
        %v2655 = vpop.f32.mrb[0].mxu0
        %2656 = vmatprep.mubr.f32.mxu0 0.0
        %2657 = vmatmul.mubr.f32.gmra.mrb[0].mxu0 %v541
        %v2658 = vpop.f32.mrb[0].mxu0
        %v2659 = vadd.f32 0.0, %v2658
        %v2660 = vpop.f32.mrb[0].mxu0
        %2661 = vmatprep.mubr.f32.mxu0 0.0
        %2662 = vmatmul.mubr.f32.gmra.mrb[0].mxu0 %v542
        %v2663 = vpop.f32.mrb[0].mxu0
        %v2664 = vadd.f32 0.0, %v2663
        %v2665 = vpop.f32.mrb[0].mxu0
        %2666 = vmatprep.mubr.f32.mxu0 0.0
        %2667 = vmatmul.mubr.f32.gmra.mrb[0].mxu0 %v543
        %v2668 = vpop.f32.mrb[0].mxu0
        %v2669 = vadd.f32 0.0, %v2668
        %v2670 = vpop.f32.mrb[0].mxu0
        %2671 = vmatprep.mubr.f32.mxu0 0.0
        %2672 = vmatmul.mubr.f32.gmra.mrb[0].mxu0 %v544
        %v2673 = vpop.f32.mrb[0].mxu0
        %v2674 = vadd.f32 0.0, %v2673
        %v2675 = vpop.f32.mrb[0].mxu0
        %2676 = vmatprep.mubr.f32.mxu0 0.0
        %2677 = vmatmul.mubr.f32.gmra.mrb[0].mxu0 %v545
        %v2678 = vpop.f32.mrb[0].mxu0
        %v2679 = vadd.f32 0.0, %v2678
        %v2680 = vpop.f32.mrb[0].mxu0
        %2681 = vmatprep.mubr.f32.mxu0 0.0
        %2682 = vmatmul.mubr.f32.gmra.mrb[0].mxu0 %v546
        %v2683 = vpop.f32.mrb[0].mxu0
        %v2684 = vadd.f32 0.0, %v2683
        %v2685 = vpop.f32.mrb[0].mxu0
        %2686 = vmatprep.mubr.f32.mxu0 0.0
        %2687 = vmatmul.mubr.f32.gmra.mrb[0].mxu0 %v547
        %v2688 = vpop.f32.mrb[0].mxu0
        %v2689 = vadd.f32 0.0, %v2688
        %v2690 = vpop.f32.mrb[0].mxu0
        %2691 = vmatprep.mubr.f32.mxu0 0.0
        %2692 = vmatmul.mubr.f32.gmra.mrb[0].mxu0 %v548
        %v2693 = vpop.f32.mrb[0].mxu0
        %v2694 = vadd.f32 0.0, %v2693
        %v2695 = vpop.f32.mrb[0].mxu0
        %2696 = vmatprep.mubr.f32.mxu0 0.0
        %2697 = vmatmul.mubr.f32.gmra.mrb[0].mxu0 %v549
        %v2698 = vpop.f32.mrb[0].mxu0
        %v2699 = vadd.f32 0.0, %v2698
        %v2700 = vpop.f32.mrb[0].mxu0
        %2701 = vdwg.mxu0
        %v2702 = vadd.f32 %v2565, %v2644
        %v2703 = vadd.f32 %v2566, %v2649
        %v2704 = vadd.f32 %v2567, %v2654
        %v2705 = vadd.f32 %v2568, %v2659
        %v2706 = vadd.f32 %v2569, %v2664
        %v2707 = vadd.f32 %v2570, %v2669
        %v2708 = vadd.f32 %v2571, %v2674
        %v2709 = vadd.f32 %v2572, %v2679
        %v2710 = vadd.f32 %v2573, %v2684
        %v2711 = vadd.f32 %v2574, %v2689
        %v2712 = vadd.f32 %v2575, %v2694
        %v2713 = vadd.f32 %v2576, %v2699
        %v2714 = vmax.f32 %v2041, %v2702
        %v2715 = vmax.f32 %v2042, %v2703
        %v2716 = vmax.f32 %v2043, %v2704
        %v2717 = vmax.f32 %v2044, %v2705
        %v2718 = vmax.f32 %v2045, %v2706
        %v2719 = vmax.f32 %v2046, %v2707
        %v2720 = vmax.f32 %v2047, %v2708
        %v2721 = vmax.f32 %v2048, %v2709
        %v2722 = vmax.f32 %v2049, %v2710
        %v2723 = vmax.f32 %v2050, %v2711
        %v2724 = vmax.f32 %v2051, %v2712
        %v2725 = vmax.f32 %v2052, %v2713
        %2726 = vmatprep.subr.mxu0 0.0
        %2727 = vmatpush1.msra.mxu0 %v1313
        %2728 = vmatprep.subr.mxu0 0.0
        %2729 = vmatpush1.msra.mxu0 %v1314
        %2730 = vmatprep.subr.mxu0 0.0
        %2731 = vmatpush1.msra.mxu0 %v1315
        %2732 = vmatprep.subr.mxu0 0.0
        %2733 = vmatpush1.msra.mxu0 %v1316
        %2734 = vmatprep.subr.mxu0 0.0
        %2735 = vmatpush1.msra.mxu0 %v1317
        %2736 = vmatprep.subr.mxu0 0.0
        %2737 = vmatpush1.msra.mxu0 %v1318
        %2738 = vmatprep.subr.mxu0 0.0
        %2739 = vmatpush1.msra.mxu0 %v1319
        %2740 = vmatprep.subr.mxu0 0.0
        %2741 = vmatpush1.msra.mxu0 %v1320
        %2742 = vmatprep.subr.mxu0 0.0
        %2743 = vmatpush1.msra.mxu0 %v1321
        %2744 = vmatprep.subr.mxu0 0.0
        %2745 = vmatpush1.msra.mxu0 %v1322
        %2746 = vmatprep.subr.mxu0 0.0
        %2747 = vmatpush1.msra.mxu0 %v1323
        %2748 = vmatprep.subr.mxu0 0.0
        %2749 = vmatpush1.msra.mxu0 %v1324
        %2750 = vmatprep.subr.mxu0 0.0
        %2751 = vmatpush1.msra.mxu0 %v1325
        %2752 = vmatprep.subr.mxu0 0.0
        %2753 = vmatpush1.msra.mxu0 %v1326
        %2754 = vmatprep.subr.mxu0 0.0
        %2755 = vmatpush1.msra.mxu0 %v1327
        %2756 = vmatprep.subr.mxu0 0.0
        %2757 = vmatpush1.msra.mxu0 %v1328
        %2758 = vmatprep.subr.mxu0 0.0
        %2759 = vmatpush1.msra.mxu0 0.0
        %2760 = vmatprep.subr.mxu0 0.0
        %2761 = vmatpush1.msra.mxu0 0.0
        %2762 = vmatprep.subr.mxu0 0.0
        %2763 = vmatpush1.msra.mxu0 0.0
        %2764 = vmatprep.subr.mxu0 0.0
        %2765 = vmatpush1.msra.mxu0 0.0
        %2766 = vmatprep.subr.mxu0 0.0
        %2767 = vmatpush1.msra.mxu0 0.0
        %2768 = vmatprep.subr.mxu0 0.0
        %2769 = vmatpush1.msra.mxu0 0.0
        %2770 = vmatprep.subr.mxu0 0.0
        %2771 = vmatpush1.msra.mxu0 0.0
        %2772 = vmatprep.subr.mxu0 0.0
        %2773 = vmatpush1.msra.mxu0 0.0
        %2774 = vmatprep.subr.mxu0 0.0
        %2775 = vmatpush1.msra.mxu0 0.0
        %2776 = vmatprep.subr.mxu0 0.0
        %2777 = vmatpush1.msra.mxu0 0.0
        %2778 = vmatprep.subr.mxu0 0.0
        %2779 = vmatpush1.msra.mxu0 0.0
        %2780 = vmatprep.subr.mxu0 0.0
        %2781 = vmatpush1.msra.mxu0 0.0
        %2782 = vmatprep.subr.mxu0 0.0
        %2783 = vmatpush1.msra.mxu0 0.0
        %2784 = vmatprep.subr.mxu0 0.0
        %2785 = vmatpush1.msra.mxu0 0.0
        %2786 = vmatprep.subr.mxu0 0.0
        %2787 = vmatpush1.msra.mxu0 0.0
        %2788 = vmatprep.subr.mxu0 0.0
        %2789 = vmatpush1.msra.mxu0 0.0
        %2790 = vmatprep.mubr.f32.mxu0 0.0
        %2791 = vmatmul.mubr.f32.gmra.mrb[0].mxu0 %v499
        %v2792 = vpop.f32.mrb[0].mxu0
        %v2793 = vadd.f32 0.0, %v2792
        %v2794 = vpop.f32.mrb[0].mxu0
        %2795 = vmatprep.mubr.f32.mxu0 0.0
        %2796 = vmatmul.mubr.f32.gmra.mrb[0].mxu0 %v500
        %v2797 = vpop.f32.mrb[0].mxu0
        %v2798 = vadd.f32 0.0, %v2797
        %v2799 = vpop.f32.mrb[0].mxu0
        %2800 = vmatprep.mubr.f32.mxu0 0.0
        %2801 = vmatmul.mubr.f32.gmra.mrb[0].mxu0 %v501
        %v2802 = vpop.f32.mrb[0].mxu0
        %v2803 = vadd.f32 0.0, %v2802
        %v2804 = vpop.f32.mrb[0].mxu0
        %2805 = vmatprep.mubr.f32.mxu0 0.0
        %2806 = vmatmul.mubr.f32.gmra.mrb[0].mxu0 %v502
        %v2807 = vpop.f32.mrb[0].mxu0
        %v2808 = vadd.f32 0.0, %v2807
        %v2809 = vpop.f32.mrb[0].mxu0
        %2810 = vmatprep.mubr.f32.mxu0 0.0
        %2811 = vmatmul.mubr.f32.gmra.mrb[0].mxu0 %v503
        %v2812 = vpop.f32.mrb[0].mxu0
        %v2813 = vadd.f32 0.0, %v2812
        %v2814 = vpop.f32.mrb[0].mxu0
        %2815 = vmatprep.mubr.f32.mxu0 0.0
        %2816 = vmatmul.mubr.f32.gmra.mrb[0].mxu0 %v504
        %v2817 = vpop.f32.mrb[0].mxu0
        %v2818 = vadd.f32 0.0, %v2817
        %v2819 = vpop.f32.mrb[0].mxu0
        %2820 = vmatprep.mubr.f32.mxu0 0.0
        %2821 = vmatmul.mubr.f32.gmra.mrb[0].mxu0 %v505
        %v2822 = vpop.f32.mrb[0].mxu0
        %v2823 = vadd.f32 0.0, %v2822
        %v2824 = vpop.f32.mrb[0].mxu0
        %2825 = vmatprep.mubr.f32.mxu0 0.0
        %2826 = vmatmul.mubr.f32.gmra.mrb[0].mxu0 %v506
        %v2827 = vpop.f32.mrb[0].mxu0
        %v2828 = vadd.f32 0.0, %v2827
        %v2829 = vpop.f32.mrb[0].mxu0
        %2830 = vmatprep.mubr.f32.mxu0 0.0
        %2831 = vmatmul.mubr.f32.gmra.mrb[0].mxu0 %v507
        %v2832 = vpop.f32.mrb[0].mxu0
        %v2833 = vadd.f32 0.0, %v2832
        %v2834 = vpop.f32.mrb[0].mxu0
        %2835 = vmatprep.mubr.f32.mxu0 0.0
        %2836 = vmatmul.mubr.f32.gmra.mrb[0].mxu0 %v508
        %v2837 = vpop.f32.mrb[0].mxu0
        %v2838 = vadd.f32 0.0, %v2837
        %v2839 = vpop.f32.mrb[0].mxu0
        %2840 = vmatprep.mubr.f32.mxu0 0.0
        %2841 = vmatmul.mubr.f32.gmra.mrb[0].mxu0 %v509
        %v2842 = vpop.f32.mrb[0].mxu0
        %v2843 = vadd.f32 0.0, %v2842
        %v2844 = vpop.f32.mrb[0].mxu0
        %2845 = vmatprep.mubr.f32.mxu0 0.0
        %2846 = vmatmul.mubr.f32.gmra.mrb[0].mxu0 %v510
        %v2847 = vpop.f32.mrb[0].mxu0
        %v2848 = vadd.f32 0.0, %v2847
        %v2849 = vpop.f32.mrb[0].mxu0
        %2850 = vdwg.mxu0
        %2851 = vmatprep.subr.mxu0 0.0
        %2852 = vmatpush1.msra.mxu0 %v1296
        %2853 = vmatprep.subr.mxu0 0.0
        %2854 = vmatpush1.msra.mxu0 %v1297
        %2855 = vmatprep.subr.mxu0 0.0
        %2856 = vmatpush1.msra.mxu0 %v1298
        %2857 = vmatprep.subr.mxu0 0.0
        %2858 = vmatpush1.msra.mxu0 %v1299
        %2859 = vmatprep.subr.mxu0 0.0
        %2860 = vmatpush1.msra.mxu0 %v1300
        %2861 = vmatprep.subr.mxu0 0.0
        %2862 = vmatpush1.msra.mxu0 %v1301
        %2863 = vmatprep.subr.mxu0 0.0
        %2864 = vmatpush1.msra.mxu0 %v1302
        %2865 = vmatprep.subr.mxu0 0.0
        %2866 = vmatpush1.msra.mxu0 %v1303
        %2867 = vmatprep.subr.mxu0 0.0
        %2868 = vmatpush1.msra.mxu0 %v1304
        %2869 = vmatprep.subr.mxu0 0.0
        %2870 = vmatpush1.msra.mxu0 %v1305
        %2871 = vmatprep.subr.mxu0 0.0
        %2872 = vmatpush1.msra.mxu0 %v1306
        %2873 = vmatprep.subr.mxu0 0.0
        %2874 = vmatpush1.msra.mxu0 %v1307
        %2875 = vmatprep.subr.mxu0 0.0
        %2876 = vmatpush1.msra.mxu0 %v1308
        %2877 = vmatprep.subr.mxu0 0.0
        %2878 = vmatpush1.msra.mxu0 %v1309
        %2879 = vmatprep.subr.mxu0 0.0
        %2880 = vmatpush1.msra.mxu0 %v1310
        %2881 = vmatprep.subr.mxu0 0.0
        %2882 = vmatpush1.msra.mxu0 %v1311
        %2883 = vmatprep.subr.mxu0 0.0
        %2884 = vmatpush1.msra.mxu0 0.0
        %2885 = vmatprep.subr.mxu0 0.0
        %2886 = vmatpush1.msra.mxu0 0.0
        %2887 = vmatprep.subr.mxu0 0.0
        %2888 = vmatpush1.msra.mxu0 0.0
        %2889 = vmatprep.subr.mxu0 0.0
        %2890 = vmatpush1.msra.mxu0 0.0
        %2891 = vmatprep.subr.mxu0 0.0
        %2892 = vmatpush1.msra.mxu0 0.0
        %2893 = vmatprep.subr.mxu0 0.0
        %2894 = vmatpush1.msra.mxu0 0.0
        %2895 = vmatprep.subr.mxu0 0.0
        %2896 = vmatpush1.msra.mxu0 0.0
        %2897 = vmatprep.subr.mxu0 0.0
        %2898 = vmatpush1.msra.mxu0 0.0
        %2899 = vmatprep.subr.mxu0 0.0
        %2900 = vmatpush1.msra.mxu0 0.0
        %2901 = vmatprep.subr.mxu0 0.0
        %2902 = vmatpush1.msra.mxu0 0.0
        %2903 = vmatprep.subr.mxu0 0.0
        %2904 = vmatpush1.msra.mxu0 0.0
        %2905 = vmatprep.subr.mxu0 0.0
        %2906 = vmatpush1.msra.mxu0 0.0
        %2907 = vmatprep.subr.mxu0 0.0
        %2908 = vmatpush1.msra.mxu0 0.0
        %2909 = vmatprep.subr.mxu0 0.0
        %2910 = vmatpush1.msra.mxu0 0.0
        %2911 = vmatprep.subr.mxu0 0.0
        %2912 = vmatpush1.msra.mxu0 0.0
        %2913 = vmatprep.subr.mxu0 0.0
        %2914 = vmatpush1.msra.mxu0 0.0
        %2915 = vmatprep.mubr.f32.mxu0 0.0
        %2916 = vmatmul.mubr.f32.gmra.mrb[0].mxu0 %v486
        %v2917 = vpop.f32.mrb[0].mxu0
        %v2918 = vadd.f32 %v2793, %v2917
        %v2919 = vpop.f32.mrb[0].mxu0
        %2920 = vmatprep.mubr.f32.mxu0 0.0
        %2921 = vmatmul.mubr.f32.gmra.mrb[0].mxu0 %v487
        %v2922 = vpop.f32.mrb[0].mxu0
        %v2923 = vadd.f32 %v2798, %v2922
        %v2924 = vpop.f32.mrb[0].mxu0
        %2925 = vmatprep.mubr.f32.mxu0 0.0
        %2926 = vmatmul.mubr.f32.gmra.mrb[0].mxu0 %v488
        %v2927 = vpop.f32.mrb[0].mxu0
        %v2928 = vadd.f32 %v2803, %v2927
        %v2929 = vpop.f32.mrb[0].mxu0
        %2930 = vmatprep.mubr.f32.mxu0 0.0
        %2931 = vmatmul.mubr.f32.gmra.mrb[0].mxu0 %v489
        %v2932 = vpop.f32.mrb[0].mxu0
        %v2933 = vadd.f32 %v2808, %v2932
        %v2934 = vpop.f32.mrb[0].mxu0
        %2935 = vmatprep.mubr.f32.mxu0 0.0
        %2936 = vmatmul.mubr.f32.gmra.mrb[0].mxu0 %v490
        %v2937 = vpop.f32.mrb[0].mxu0
        %v2938 = vadd.f32 %v2813, %v2937
        %v2939 = vpop.f32.mrb[0].mxu0
        %2940 = vmatprep.mubr.f32.mxu0 0.0
        %2941 = vmatmul.mubr.f32.gmra.mrb[0].mxu0 %v491
        %v2942 = vpop.f32.mrb[0].mxu0
        %v2943 = vadd.f32 %v2818, %v2942
        %v2944 = vpop.f32.mrb[0].mxu0
        %2945 = vmatprep.mubr.f32.mxu0 0.0
        %2946 = vmatmul.mubr.f32.gmra.mrb[0].mxu0 %v492
        %v2947 = vpop.f32.mrb[0].mxu0
        %v2948 = vadd.f32 %v2823, %v2947
        %v2949 = vpop.f32.mrb[0].mxu0
        %2950 = vmatprep.mubr.f32.mxu0 0.0
        %2951 = vmatmul.mubr.f32.gmra.mrb[0].mxu0 %v493
        %v2952 = vpop.f32.mrb[0].mxu0
        %v2953 = vadd.f32 %v2828, %v2952
        %v2954 = vpop.f32.mrb[0].mxu0
        %2955 = vmatprep.mubr.f32.mxu0 0.0
        %2956 = vmatmul.mubr.f32.gmra.mrb[0].mxu0 %v494
        %v2957 = vpop.f32.mrb[0].mxu0
        %v2958 = vadd.f32 %v2833, %v2957
        %v2959 = vpop.f32.mrb[0].mxu0
        %2960 = vmatprep.mubr.f32.mxu0 0.0
        %2961 = vmatmul.mubr.f32.gmra.mrb[0].mxu0 %v495
        %v2962 = vpop.f32.mrb[0].mxu0
        %v2963 = vadd.f32 %v2838, %v2962
        %v2964 = vpop.f32.mrb[0].mxu0
        %2965 = vmatprep.mubr.f32.mxu0 0.0
        %2966 = vmatmul.mubr.f32.gmra.mrb[0].mxu0 %v496
        %v2967 = vpop.f32.mrb[0].mxu0
        %v2968 = vadd.f32 %v2843, %v2967
        %v2969 = vpop.f32.mrb[0].mxu0
        %2970 = vmatprep.mubr.f32.mxu0 0.0
        %2971 = vmatmul.mubr.f32.gmra.mrb[0].mxu0 %v497
        %v2972 = vpop.f32.mrb[0].mxu0
        %v2973 = vadd.f32 %v2848, %v2972
        %v2974 = vpop.f32.mrb[0].mxu0
        %2975 = vdwg.mxu0
        %2976 = vmatprep.subr.mxu0 0.0
        %2977 = vmatpush1.msra.mxu0 %v1580
        %2978 = vmatprep.subr.mxu0 0.0
        %2979 = vmatpush1.msra.mxu0 %v1581
        %2980 = vmatprep.subr.mxu0 0.0
        %2981 = vmatpush1.msra.mxu0 %v1582
        %2982 = vmatprep.subr.mxu0 0.0
        %2983 = vmatpush1.msra.mxu0 %v1583
        %2984 = vmatprep.subr.mxu0 0.0
        %2985 = vmatpush1.msra.mxu0 %v1584
        %2986 = vmatprep.subr.mxu0 0.0
        %2987 = vmatpush1.msra.mxu0 %v1585
        %2988 = vmatprep.subr.mxu0 0.0
        %2989 = vmatpush1.msra.mxu0 %v1586
        %2990 = vmatprep.subr.mxu0 0.0
        %2991 = vmatpush1.msra.mxu0 %v1587
        %2992 = vmatprep.subr.mxu0 0.0
        %2993 = vmatpush1.msra.mxu0 %v1588
        %2994 = vmatprep.subr.mxu0 0.0
        %2995 = vmatpush1.msra.mxu0 %v1589
        %2996 = vmatprep.subr.mxu0 0.0
        %2997 = vmatpush1.msra.mxu0 %v1590
        %2998 = vmatprep.subr.mxu0 0.0
        %2999 = vmatpush1.msra.mxu0 %v1591
        %3000 = vmatprep.subr.mxu0 0.0
        %3001 = vmatpush1.msra.mxu0 %v1592
        %3002 = vmatprep.subr.mxu0 0.0
        %3003 = vmatpush1.msra.mxu0 %v1593
        %3004 = vmatprep.subr.mxu0 0.0
        %3005 = vmatpush1.msra.mxu0 %v1594
        %3006 = vmatprep.subr.mxu0 0.0
        %3007 = vmatpush1.msra.mxu0 %v1595
        %3008 = vmatprep.subr.mxu0 0.0
        %3009 = vmatpush1.msra.mxu0 0.0
        %3010 = vmatprep.subr.mxu0 0.0
        %3011 = vmatpush1.msra.mxu0 0.0
        %3012 = vmatprep.subr.mxu0 0.0
        %3013 = vmatpush1.msra.mxu0 0.0
        %3014 = vmatprep.subr.mxu0 0.0
        %3015 = vmatpush1.msra.mxu0 0.0
        %3016 = vmatprep.subr.mxu0 0.0
        %3017 = vmatpush1.msra.mxu0 0.0
        %3018 = vmatprep.subr.mxu0 0.0
        %3019 = vmatpush1.msra.mxu0 0.0
        %3020 = vmatprep.subr.mxu0 0.0
        %3021 = vmatpush1.msra.mxu0 0.0
        %3022 = vmatprep.subr.mxu0 0.0
        %3023 = vmatpush1.msra.mxu0 0.0
        %3024 = vmatprep.subr.mxu0 0.0
        %3025 = vmatpush1.msra.mxu0 0.0
        %3026 = vmatprep.subr.mxu0 0.0
        %3027 = vmatpush1.msra.mxu0 0.0
        %3028 = vmatprep.subr.mxu0 0.0
        %3029 = vmatpush1.msra.mxu0 0.0
        %3030 = vmatprep.subr.mxu0 0.0
        %3031 = vmatpush1.msra.mxu0 0.0
        %3032 = vmatprep.subr.mxu0 0.0
        %3033 = vmatpush1.msra.mxu0 0.0
        %3034 = vmatprep.subr.mxu0 0.0
        %3035 = vmatpush1.msra.mxu0 0.0
        %3036 = vmatprep.subr.mxu0 0.0
        %3037 = vmatpush1.msra.mxu0 0.0
        %3038 = vmatprep.subr.mxu0 0.0
        %3039 = vmatpush1.msra.mxu0 0.0
        %3040 = vmatprep.mubr.f32.mxu0 0.0
        %3041 = vmatmul.mubr.f32.gmra.mrb[0].mxu0 %v512
        %v3042 = vpop.f32.mrb[0].mxu0
        %v3043 = vadd.f32 0.0, %v3042
        %v3044 = vpop.f32.mrb[0].mxu0
        %3045 = vmatprep.mubr.f32.mxu0 0.0
        %3046 = vmatmul.mubr.f32.gmra.mrb[0].mxu0 %v513
        %v3047 = vpop.f32.mrb[0].mxu0
        %v3048 = vadd.f32 0.0, %v3047
        %v3049 = vpop.f32.mrb[0].mxu0
        %3050 = vmatprep.mubr.f32.mxu0 0.0
        %3051 = vmatmul.mubr.f32.gmra.mrb[0].mxu0 %v514
        %v3052 = vpop.f32.mrb[0].mxu0
        %v3053 = vadd.f32 0.0, %v3052
        %v3054 = vpop.f32.mrb[0].mxu0
        %3055 = vmatprep.mubr.f32.mxu0 0.0
        %3056 = vmatmul.mubr.f32.gmra.mrb[0].mxu0 %v515
        %v3057 = vpop.f32.mrb[0].mxu0
        %v3058 = vadd.f32 0.0, %v3057
        %v3059 = vpop.f32.mrb[0].mxu0
        %3060 = vmatprep.mubr.f32.mxu0 0.0
        %3061 = vmatmul.mubr.f32.gmra.mrb[0].mxu0 %v516
        %v3062 = vpop.f32.mrb[0].mxu0
        %v3063 = vadd.f32 0.0, %v3062
        %v3064 = vpop.f32.mrb[0].mxu0
        %3065 = vmatprep.mubr.f32.mxu0 0.0
        %3066 = vmatmul.mubr.f32.gmra.mrb[0].mxu0 %v517
        %v3067 = vpop.f32.mrb[0].mxu0
        %v3068 = vadd.f32 0.0, %v3067
        %v3069 = vpop.f32.mrb[0].mxu0
        %3070 = vmatprep.mubr.f32.mxu0 0.0
        %3071 = vmatmul.mubr.f32.gmra.mrb[0].mxu0 %v518
        %v3072 = vpop.f32.mrb[0].mxu0
        %v3073 = vadd.f32 0.0, %v3072
        %v3074 = vpop.f32.mrb[0].mxu0
        %3075 = vmatprep.mubr.f32.mxu0 0.0
        %3076 = vmatmul.mubr.f32.gmra.mrb[0].mxu0 %v519
        %v3077 = vpop.f32.mrb[0].mxu0
        %v3078 = vadd.f32 0.0, %v3077
        %v3079 = vpop.f32.mrb[0].mxu0
        %3080 = vmatprep.mubr.f32.mxu0 0.0
        %3081 = vmatmul.mubr.f32.gmra.mrb[0].mxu0 %v520
        %v3082 = vpop.f32.mrb[0].mxu0
        %v3083 = vadd.f32 0.0, %v3082
        %v3084 = vpop.f32.mrb[0].mxu0
        %3085 = vmatprep.mubr.f32.mxu0 0.0
        %3086 = vmatmul.mubr.f32.gmra.mrb[0].mxu0 %v521
        %v3087 = vpop.f32.mrb[0].mxu0
        %v3088 = vadd.f32 0.0, %v3087
        %v3089 = vpop.f32.mrb[0].mxu0
        %3090 = vmatprep.mubr.f32.mxu0 0.0
        %3091 = vmatmul.mubr.f32.gmra.mrb[0].mxu0 %v522
        %v3092 = vpop.f32.mrb[0].mxu0
        %v3093 = vadd.f32 0.0, %v3092
        %v3094 = vpop.f32.mrb[0].mxu0
        %3095 = vmatprep.mubr.f32.mxu0 0.0
        %3096 = vmatmul.mubr.f32.gmra.mrb[0].mxu0 %v523
        %v3097 = vpop.f32.mrb[0].mxu0
        %v3098 = vadd.f32 0.0, %v3097
        %v3099 = vpop.f32.mrb[0].mxu0
        %3100 = vdwg.mxu0
        %v3101 = vadd.f32 %v2918, %v3043
        %v3102 = vadd.f32 %v2923, %v3048
        %v3103 = vadd.f32 %v2928, %v3053
        %v3104 = vadd.f32 %v2933, %v3058
        %v3105 = vadd.f32 %v2938, %v3063
        %v3106 = vadd.f32 %v2943, %v3068
        %v3107 = vadd.f32 %v2948, %v3073
        %v3108 = vadd.f32 %v2953, %v3078
        %v3109 = vadd.f32 %v2958, %v3083
        %v3110 = vadd.f32 %v2963, %v3088
        %v3111 = vadd.f32 %v2968, %v3093
        %v3112 = vadd.f32 %v2973, %v3098
        %3113 = vmatprep.subr.mxu0 0.0
        %3114 = vmatpush1.msra.mxu0 %v1734
        %3115 = vmatprep.subr.mxu0 0.0
        %3116 = vmatpush1.msra.mxu0 %v1735
        %3117 = vmatprep.subr.mxu0 0.0
        %3118 = vmatpush1.msra.mxu0 %v1736
        %3119 = vmatprep.subr.mxu0 0.0
        %3120 = vmatpush1.msra.mxu0 %v1737
        %3121 = vmatprep.subr.mxu0 0.0
        %3122 = vmatpush1.msra.mxu0 %v1738
        %3123 = vmatprep.subr.mxu0 0.0
        %3124 = vmatpush1.msra.mxu0 %v1739
        %3125 = vmatprep.subr.mxu0 0.0
        %3126 = vmatpush1.msra.mxu0 %v1740
        %3127 = vmatprep.subr.mxu0 0.0
        %3128 = vmatpush1.msra.mxu0 %v1741
        %3129 = vmatprep.subr.mxu0 0.0
        %3130 = vmatpush1.msra.mxu0 %v1742
        %3131 = vmatprep.subr.mxu0 0.0
        %3132 = vmatpush1.msra.mxu0 %v1743
        %3133 = vmatprep.subr.mxu0 0.0
        %3134 = vmatpush1.msra.mxu0 %v1744
        %3135 = vmatprep.subr.mxu0 0.0
        %3136 = vmatpush1.msra.mxu0 %v1745
        %3137 = vmatprep.subr.mxu0 0.0
        %3138 = vmatpush1.msra.mxu0 %v1746
        %3139 = vmatprep.subr.mxu0 0.0
        %3140 = vmatpush1.msra.mxu0 %v1747
        %3141 = vmatprep.subr.mxu0 0.0
        %3142 = vmatpush1.msra.mxu0 %v1748
        %3143 = vmatprep.subr.mxu0 0.0
        %3144 = vmatpush1.msra.mxu0 %v1749
        %3145 = vmatprep.subr.mxu0 0.0
        %3146 = vmatpush1.msra.mxu0 0.0
        %3147 = vmatprep.subr.mxu0 0.0
        %3148 = vmatpush1.msra.mxu0 0.0
        %3149 = vmatprep.subr.mxu0 0.0
        %3150 = vmatpush1.msra.mxu0 0.0
        %3151 = vmatprep.subr.mxu0 0.0
        %3152 = vmatpush1.msra.mxu0 0.0
        %3153 = vmatprep.subr.mxu0 0.0
        %3154 = vmatpush1.msra.mxu0 0.0
        %3155 = vmatprep.subr.mxu0 0.0
        %3156 = vmatpush1.msra.mxu0 0.0
        %3157 = vmatprep.subr.mxu0 0.0
        %3158 = vmatpush1.msra.mxu0 0.0
        %3159 = vmatprep.subr.mxu0 0.0
        %3160 = vmatpush1.msra.mxu0 0.0
        %3161 = vmatprep.subr.mxu0 0.0
        %3162 = vmatpush1.msra.mxu0 0.0
        %3163 = vmatprep.subr.mxu0 0.0
        %3164 = vmatpush1.msra.mxu0 0.0
        %3165 = vmatprep.subr.mxu0 0.0
        %3166 = vmatpush1.msra.mxu0 0.0
        %3167 = vmatprep.subr.mxu0 0.0
        %3168 = vmatpush1.msra.mxu0 0.0
        %3169 = vmatprep.subr.mxu0 0.0
        %3170 = vmatpush1.msra.mxu0 0.0
        %3171 = vmatprep.subr.mxu0 0.0
        %3172 = vmatpush1.msra.mxu0 0.0
        %3173 = vmatprep.subr.mxu0 0.0
        %3174 = vmatpush1.msra.mxu0 0.0
        %3175 = vmatprep.subr.mxu0 0.0
        %3176 = vmatpush1.msra.mxu0 0.0
        %3177 = vmatprep.mubr.f32.mxu0 0.0
        %3178 = vmatmul.mubr.f32.gmra.mrb[0].mxu0 %v525
        %v3179 = vpop.f32.mrb[0].mxu0
        %v3180 = vadd.f32 0.0, %v3179
        %v3181 = vpop.f32.mrb[0].mxu0
        %3182 = vmatprep.mubr.f32.mxu0 0.0
        %3183 = vmatmul.mubr.f32.gmra.mrb[0].mxu0 %v526
        %v3184 = vpop.f32.mrb[0].mxu0
        %v3185 = vadd.f32 0.0, %v3184
        %v3186 = vpop.f32.mrb[0].mxu0
        %3187 = vmatprep.mubr.f32.mxu0 0.0
        %3188 = vmatmul.mubr.f32.gmra.mrb[0].mxu0 %v527
        %v3189 = vpop.f32.mrb[0].mxu0
        %v3190 = vadd.f32 0.0, %v3189
        %v3191 = vpop.f32.mrb[0].mxu0
        %3192 = vmatprep.mubr.f32.mxu0 0.0
        %3193 = vmatmul.mubr.f32.gmra.mrb[0].mxu0 %v528
        %v3194 = vpop.f32.mrb[0].mxu0
        %v3195 = vadd.f32 0.0, %v3194
        %v3196 = vpop.f32.mrb[0].mxu0
        %3197 = vmatprep.mubr.f32.mxu0 0.0
        %3198 = vmatmul.mubr.f32.gmra.mrb[0].mxu0 %v529
        %v3199 = vpop.f32.mrb[0].mxu0
        %v3200 = vadd.f32 0.0, %v3199
        %v3201 = vpop.f32.mrb[0].mxu0
        %3202 = vmatprep.mubr.f32.mxu0 0.0
        %3203 = vmatmul.mubr.f32.gmra.mrb[0].mxu0 %v530
        %v3204 = vpop.f32.mrb[0].mxu0
        %v3205 = vadd.f32 0.0, %v3204
        %v3206 = vpop.f32.mrb[0].mxu0
        %3207 = vmatprep.mubr.f32.mxu0 0.0
        %3208 = vmatmul.mubr.f32.gmra.mrb[0].mxu0 %v531
        %v3209 = vpop.f32.mrb[0].mxu0
        %v3210 = vadd.f32 0.0, %v3209
        %v3211 = vpop.f32.mrb[0].mxu0
        %3212 = vmatprep.mubr.f32.mxu0 0.0
        %3213 = vmatmul.mubr.f32.gmra.mrb[0].mxu0 %v532
        %v3214 = vpop.f32.mrb[0].mxu0
        %v3215 = vadd.f32 0.0, %v3214
        %v3216 = vpop.f32.mrb[0].mxu0
        %3217 = vmatprep.mubr.f32.mxu0 0.0
        %3218 = vmatmul.mubr.f32.gmra.mrb[0].mxu0 %v533
        %v3219 = vpop.f32.mrb[0].mxu0
        %v3220 = vadd.f32 0.0, %v3219
        %v3221 = vpop.f32.mrb[0].mxu0
        %3222 = vmatprep.mubr.f32.mxu0 0.0
        %3223 = vmatmul.mubr.f32.gmra.mrb[0].mxu0 %v534
        %v3224 = vpop.f32.mrb[0].mxu0
        %v3225 = vadd.f32 0.0, %v3224
        %v3226 = vpop.f32.mrb[0].mxu0
        %3227 = vmatprep.mubr.f32.mxu0 0.0
        %3228 = vmatmul.mubr.f32.gmra.mrb[0].mxu0 %v535
        %v3229 = vpop.f32.mrb[0].mxu0
        %v3230 = vadd.f32 0.0, %v3229
        %v3231 = vpop.f32.mrb[0].mxu0
        %3232 = vmatprep.mubr.f32.mxu0 0.0
        %3233 = vmatmul.mubr.f32.gmra.mrb[0].mxu0 %v536
        %v3234 = vpop.f32.mrb[0].mxu0
        %v3235 = vadd.f32 0.0, %v3234
        %v3236 = vpop.f32.mrb[0].mxu0
        %3237 = vdwg.mxu0
        %v3238 = vadd.f32 %v3101, %v3180
        %v3239 = vadd.f32 %v3102, %v3185
        %v3240 = vadd.f32 %v3103, %v3190
        %v3241 = vadd.f32 %v3104, %v3195
        %v3242 = vadd.f32 %v3105, %v3200
        %v3243 = vadd.f32 %v3106, %v3205
        %v3244 = vadd.f32 %v3107, %v3210
        %v3245 = vadd.f32 %v3108, %v3215
        %v3246 = vadd.f32 %v3109, %v3220
        %v3247 = vadd.f32 %v3110, %v3225
        %v3248 = vadd.f32 %v3111, %v3230
        %v3249 = vadd.f32 %v3112, %v3235
        %3250 = vmatprep.subr.mxu0 0.0
        %3251 = vmatpush1.msra.mxu0 %v1888
        %3252 = vmatprep.subr.mxu0 0.0
        %3253 = vmatpush1.msra.mxu0 %v1889
        %3254 = vmatprep.subr.mxu0 0.0
        %3255 = vmatpush1.msra.mxu0 %v1890
        %3256 = vmatprep.subr.mxu0 0.0
        %3257 = vmatpush1.msra.mxu0 %v1891
        %3258 = vmatprep.subr.mxu0 0.0
        %3259 = vmatpush1.msra.mxu0 %v1892
        %3260 = vmatprep.subr.mxu0 0.0
        %3261 = vmatpush1.msra.mxu0 %v1893
        %3262 = vmatprep.subr.mxu0 0.0
        %3263 = vmatpush1.msra.mxu0 %v1894
        %3264 = vmatprep.subr.mxu0 0.0
        %3265 = vmatpush1.msra.mxu0 %v1895
        %3266 = vmatprep.subr.mxu0 0.0
        %3267 = vmatpush1.msra.mxu0 %v1896
        %3268 = vmatprep.subr.mxu0 0.0
        %3269 = vmatpush1.msra.mxu0 %v1897
        %3270 = vmatprep.subr.mxu0 0.0
        %3271 = vmatpush1.msra.mxu0 %v1898
        %3272 = vmatprep.subr.mxu0 0.0
        %3273 = vmatpush1.msra.mxu0 %v1899
        %3274 = vmatprep.subr.mxu0 0.0
        %3275 = vmatpush1.msra.mxu0 %v1900
        %3276 = vmatprep.subr.mxu0 0.0
        %3277 = vmatpush1.msra.mxu0 %v1901
        %3278 = vmatprep.subr.mxu0 0.0
        %3279 = vmatpush1.msra.mxu0 %v1902
        %3280 = vmatprep.subr.mxu0 0.0
        %3281 = vmatpush1.msra.mxu0 %v1903
        %3282 = vmatprep.subr.mxu0 0.0
        %3283 = vmatpush1.msra.mxu0 0.0
        %3284 = vmatprep.subr.mxu0 0.0
        %3285 = vmatpush1.msra.mxu0 0.0
        %3286 = vmatprep.subr.mxu0 0.0
        %3287 = vmatpush1.msra.mxu0 0.0
        %3288 = vmatprep.subr.mxu0 0.0
        %3289 = vmatpush1.msra.mxu0 0.0
        %3290 = vmatprep.subr.mxu0 0.0
        %3291 = vmatpush1.msra.mxu0 0.0
        %3292 = vmatprep.subr.mxu0 0.0
        %3293 = vmatpush1.msra.mxu0 0.0
        %3294 = vmatprep.subr.mxu0 0.0
        %3295 = vmatpush1.msra.mxu0 0.0
        %3296 = vmatprep.subr.mxu0 0.0
        %3297 = vmatpush1.msra.mxu0 0.0
        %3298 = vmatprep.subr.mxu0 0.0
        %3299 = vmatpush1.msra.mxu0 0.0
        %3300 = vmatprep.subr.mxu0 0.0
        %3301 = vmatpush1.msra.mxu0 0.0
        %3302 = vmatprep.subr.mxu0 0.0
        %3303 = vmatpush1.msra.mxu0 0.0
        %3304 = vmatprep.subr.mxu0 0.0
        %3305 = vmatpush1.msra.mxu0 0.0
        %3306 = vmatprep.subr.mxu0 0.0
        %3307 = vmatpush1.msra.mxu0 0.0
        %3308 = vmatprep.subr.mxu0 0.0
        %3309 = vmatpush1.msra.mxu0 0.0
        %3310 = vmatprep.subr.mxu0 0.0
        %3311 = vmatpush1.msra.mxu0 0.0
        %3312 = vmatprep.subr.mxu0 0.0
        %3313 = vmatpush1.msra.mxu0 0.0
        %3314 = vmatprep.mubr.f32.mxu0 0.0
        %3315 = vmatmul.mubr.f32.gmra.mrb[0].mxu0 %v538
        %v3316 = vpop.f32.mrb[0].mxu0
        %v3317 = vadd.f32 0.0, %v3316
        %v3318 = vpop.f32.mrb[0].mxu0
        %3319 = vmatprep.mubr.f32.mxu0 0.0
        %3320 = vmatmul.mubr.f32.gmra.mrb[0].mxu0 %v539
        %v3321 = vpop.f32.mrb[0].mxu0
        %v3322 = vadd.f32 0.0, %v3321
        %v3323 = vpop.f32.mrb[0].mxu0
        %3324 = vmatprep.mubr.f32.mxu0 0.0
        %3325 = vmatmul.mubr.f32.gmra.mrb[0].mxu0 %v540
        %v3326 = vpop.f32.mrb[0].mxu0
        %v3327 = vadd.f32 0.0, %v3326
        %v3328 = vpop.f32.mrb[0].mxu0
        %3329 = vmatprep.mubr.f32.mxu0 0.0
        %3330 = vmatmul.mubr.f32.gmra.mrb[0].mxu0 %v541
        %v3331 = vpop.f32.mrb[0].mxu0
        %v3332 = vadd.f32 0.0, %v3331
        %v3333 = vpop.f32.mrb[0].mxu0
        %3334 = vmatprep.mubr.f32.mxu0 0.0
        %3335 = vmatmul.mubr.f32.gmra.mrb[0].mxu0 %v542
        %v3336 = vpop.f32.mrb[0].mxu0
        %v3337 = vadd.f32 0.0, %v3336
        %v3338 = vpop.f32.mrb[0].mxu0
        %3339 = vmatprep.mubr.f32.mxu0 0.0
        %3340 = vmatmul.mubr.f32.gmra.mrb[0].mxu0 %v543
        %v3341 = vpop.f32.mrb[0].mxu0
        %v3342 = vadd.f32 0.0, %v3341
        %v3343 = vpop.f32.mrb[0].mxu0
        %3344 = vmatprep.mubr.f32.mxu0 0.0
        %3345 = vmatmul.mubr.f32.gmra.mrb[0].mxu0 %v544
        %v3346 = vpop.f32.mrb[0].mxu0
        %v3347 = vadd.f32 0.0, %v3346
        %v3348 = vpop.f32.mrb[0].mxu0
        %3349 = vmatprep.mubr.f32.mxu0 0.0
        %3350 = vmatmul.mubr.f32.gmra.mrb[0].mxu0 %v545
        %v3351 = vpop.f32.mrb[0].mxu0
        %v3352 = vadd.f32 0.0, %v3351
        %v3353 = vpop.f32.mrb[0].mxu0
        %3354 = vmatprep.mubr.f32.mxu0 0.0
        %3355 = vmatmul.mubr.f32.gmra.mrb[0].mxu0 %v546
        %v3356 = vpop.f32.mrb[0].mxu0
        %v3357 = vadd.f32 0.0, %v3356
        %v3358 = vpop.f32.mrb[0].mxu0
        %3359 = vmatprep.mubr.f32.mxu0 0.0
        %3360 = vmatmul.mubr.f32.gmra.mrb[0].mxu0 %v547
        %v3361 = vpop.f32.mrb[0].mxu0
        %v3362 = vadd.f32 0.0, %v3361
        %v3363 = vpop.f32.mrb[0].mxu0
        %3364 = vmatprep.mubr.f32.mxu0 0.0
        %3365 = vmatmul.mubr.f32.gmra.mrb[0].mxu0 %v548
        %v3366 = vpop.f32.mrb[0].mxu0
        %v3367 = vadd.f32 0.0, %v3366
        %v3368 = vpop.f32.mrb[0].mxu0
        %3369 = vmatprep.mubr.f32.mxu0 0.0
        %3370 = vmatmul.mubr.f32.gmra.mrb[0].mxu0 %v549
        %v3371 = vpop.f32.mrb[0].mxu0
        %v3372 = vadd.f32 0.0, %v3371
        %v3373 = vpop.f32.mrb[0].mxu0
        %3374 = vdwg.mxu0
        %v3375 = vadd.f32 %v3238, %v3317
        %v3376 = vadd.f32 %v3239, %v3322
        %v3377 = vadd.f32 %v3240, %v3327
        %v3378 = vadd.f32 %v3241, %v3332
        %v3379 = vadd.f32 %v3242, %v3337
        %v3380 = vadd.f32 %v3243, %v3342
        %v3381 = vadd.f32 %v3244, %v3347
        %v3382 = vadd.f32 %v3245, %v3352
        %v3383 = vadd.f32 %v3246, %v3357
        %v3384 = vadd.f32 %v3247, %v3362
        %v3385 = vadd.f32 %v3248, %v3367
        %v3386 = vadd.f32 %v3249, %v3372
        %v3387 = vmax.f32 %v2714, %v3375
        %v3388 = vmax.f32 %v2715, %v3376
        %v3389 = vmax.f32 %v2716, %v3377
        %v3390 = vmax.f32 %v2717, %v3378
        %v3391 = vmax.f32 %v2718, %v3379
        %v3392 = vmax.f32 %v2719, %v3380
        %v3393 = vmax.f32 %v2720, %v3381
        %v3394 = vmax.f32 %v2721, %v3382
        %v3395 = vmax.f32 %v2722, %v3383
        %v3396 = vmax.f32 %v2723, %v3384
        %v3397 = vmax.f32 %v2724, %v3385
        %v3398 = vmax.f32 %v2725, %v3386
        %v3399 = vld [vmem:[%s2] sm:$0x1]
        %v3401 = vlaneseq
        %v3402 = vshrl.u32 %v3401, 7
        %v3403 = vsub.s32 0, %v3402
        %v3404 = vrot.slane %v3399, %v3403
        %v3406 = vadd.f32 %v3387, %v3404
        %v3407 = vadd.f32 %v3388, %v3404
        %v3408 = vadd.f32 %v3389, %v3404
        %v3409 = vadd.f32 %v3390, %v3404
        %v3410 = vadd.f32 %v3391, %v3404
        %v3411 = vadd.f32 %v3392, %v3404
        %v3412 = vadd.f32 %v3393, %v3404
        %v3413 = vadd.f32 %v3394, %v3404
        %v3414 = vadd.f32 %v3395, %v3404
        %v3415 = vadd.f32 %v3396, %v3404
        %v3416 = vadd.f32 %v3397, %v3404
        %v3417 = vadd.f32 %v3398, %v3404
        %v3418 = vmax.f32 %v3406, 0.0
        %v3419 = vmax.f32 %v3407, 0.0
        %v3420 = vmax.f32 %v3408, 0.0
        %v3421 = vmax.f32 %v3409, 0.0
        %v3422 = vmax.f32 %v3410, 0.0
        %v3423 = vmax.f32 %v3411, 0.0
        %v3424 = vmax.f32 %v3412, 0.0
        %v3425 = vmax.f32 %v3413, 0.0
        %v3426 = vmax.f32 %v3414, 0.0
        %v3427 = vmax.f32 %v3415, 0.0
        %v3428 = vmax.f32 %v3416, 0.0
        %v3429 = vmax.f32 %v3417, 0.0
        %3430 = vst [vmem:[#allocation2] sm:$0xff] %v3418
        %s3431 = scalar_lea.vmem [#allocation2], 48
        %3432 = vst [vmem:[%s3431] sm:$0xff] %v3419
        %3433 = vst [vmem:[#allocation2 + $0x8] sm:$0xff] %v3420
        %3434 = vst [vmem:[%s3431 + $0x8] sm:$0xff] %v3421
        %3435 = vst [vmem:[#allocation2 + $0x10] sm:$0xff] %v3422
        %3436 = vst [vmem:[%s3431 + $0x10] sm:$0xff] %v3423
        %3437 = vst [vmem:[#allocation2 + $0x18] sm:$0xff] %v3424
        %3438 = vst [vmem:[%s3431 + $0x18] sm:$0xff] %v3425
        %3439 = vst [vmem:[#allocation2 + $0x20] sm:$0xff] %v3426
        %3440 = vst [vmem:[%s3431 + $0x20] sm:$0xff] %v3427
        %3441 = vst [vmem:[#allocation2 + $0x28] sm:$0xff] %v3428
        %3442 = vst [vmem:[%s3431 + $0x28] sm:$0xff] %v3429
        %v3443 = vld [vmem:[#allocation2] sm:$0xff]
        %v3444 = vld [vmem:[#allocation2 + $0x8] sm:$0xff]
        %v3445 = vld [vmem:[#allocation2 + $0x10] sm:$0xff]
        %v3446 = vld [vmem:[#allocation2 + $0x18] sm:$0xff]
        %v3447 = vld [vmem:[%s3] sm:$0xff]
        %v3448 = vld [vmem:[%s3 + $0x8] sm:$0xff]
        %v3449 = vld [vmem:[%s3 + $0x10] sm:$0xff]
        %v3450 = vld [vmem:[%s3 + $0x18] sm:$0xff]
        %v3451 = vld [vmem:[%s3 + $0x20] sm:$0xff]
        %v3452 = vld [vmem:[%s3 + $0x28] sm:$0xff]
        %v3453 = vld [vmem:[%s3 + $0x30] sm:$0xff]
        %v3454 = vld [vmem:[%s3 + $0x38] sm:$0xff]
        %v3455 = vld [vmem:[%s3 + $0x40] sm:$0xff]
        %v3456 = vld [vmem:[%s3 + $0x48] sm:$0xff]
        %v3457 = vld [vmem:[%s3 + $0x50] sm:$0xff]
        %v3458 = vld [vmem:[%s3 + $0x58] sm:$0xff]
        %v3459 = vld [vmem:[%s3 + $0x60] sm:$0xff]
        %v3460 = vld [vmem:[%s3 + $0x68] sm:$0xff]
        %v3461 = vld [vmem:[%s3 + $0x70] sm:$0xff]
        %v3462 = vld [vmem:[%s3 + $0x78] sm:$0xff]
        %v3463 = vld [vmem:[%s3431] sm:$0xff]
        %v3464 = vld [vmem:[%s3431 + $0x8] sm:$0xff]
        %v3465 = vld [vmem:[%s3431 + $0x10] sm:$0xff]
        %v3466 = vld [vmem:[%s3431 + $0x18] sm:$0xff]
        %s3467 = scalar_lea.vmem %s3, 128
        %v3468 = vld [vmem:[%s3467] sm:$0xff]
        %v3469 = vld [vmem:[%s3467 + $0x8] sm:$0xff]
        %v3470 = vld [vmem:[%s3467 + $0x10] sm:$0xff]
        %v3471 = vld [vmem:[%s3467 + $0x18] sm:$0xff]
        %v3472 = vld [vmem:[%s3467 + $0x20] sm:$0xff]
        %v3473 = vld [vmem:[%s3467 + $0x28] sm:$0xff]
        %v3474 = vld [vmem:[%s3467 + $0x30] sm:$0xff]
        %v3475 = vld [vmem:[%s3467 + $0x38] sm:$0xff]
        %v3476 = vld [vmem:[%s3467 + $0x40] sm:$0xff]
        %v3477 = vld [vmem:[%s3467 + $0x48] sm:$0xff]
        %v3478 = vld [vmem:[%s3467 + $0x50] sm:$0xff]
        %v3479 = vld [vmem:[%s3467 + $0x58] sm:$0xff]
        %v3480 = vld [vmem:[%s3467 + $0x60] sm:$0xff]
        %v3481 = vld [vmem:[%s3467 + $0x68] sm:$0xff]
        %v3482 = vld [vmem:[%s3467 + $0x70] sm:$0xff]
        %v3483 = vld [vmem:[%s3467 + $0x78] sm:$0xff]
        %3484 = vmatprep.subr.mxu0 0.0
        %3485 = vmatpush1.msra.mxu0 %v3468
        %3486 = vmatprep.subr.mxu0 0.0
        %3487 = vmatpush1.msra.mxu0 %v3469
        %3488 = vmatprep.subr.mxu0 0.0
        %3489 = vmatpush1.msra.mxu0 %v3470
        %3490 = vmatprep.subr.mxu0 0.0
        %3491 = vmatpush1.msra.mxu0 %v3471
        %3492 = vmatprep.subr.mxu0 0.0
        %3493 = vmatpush1.msra.mxu0 %v3472
        %3494 = vmatprep.subr.mxu0 0.0
        %3495 = vmatpush1.msra.mxu0 %v3473
        %3496 = vmatprep.subr.mxu0 0.0
        %3497 = vmatpush1.msra.mxu0 %v3474
        %3498 = vmatprep.subr.mxu0 0.0
        %3499 = vmatpush1.msra.mxu0 %v3475
        %3500 = vmatprep.subr.mxu0 0.0
        %3501 = vmatpush1.msra.mxu0 %v3476
        %3502 = vmatprep.subr.mxu0 0.0
        %3503 = vmatpush1.msra.mxu0 %v3477
        %3504 = vmatprep.subr.mxu0 0.0
        %3505 = vmatpush1.msra.mxu0 %v3478
        %3506 = vmatprep.subr.mxu0 0.0
        %3507 = vmatpush1.msra.mxu0 %v3479
        %3508 = vmatprep.subr.mxu0 0.0
        %3509 = vmatpush1.msra.mxu0 %v3480
        %3510 = vmatprep.subr.mxu0 0.0
        %3511 = vmatpush1.msra.mxu0 %v3481
        %3512 = vmatprep.subr.mxu0 0.0
        %3513 = vmatpush1.msra.mxu0 %v3482
        %3514 = vmatprep.subr.mxu0 0.0
        %3515 = vmatpush1.msra.mxu0 %v3483
        %3516 = vmatprep.subr.mxu0 0.0
        %3517 = vmatpush1.msra.mxu0 0.0
        %3518 = vmatprep.subr.mxu0 0.0
        %3519 = vmatpush1.msra.mxu0 0.0
        %3520 = vmatprep.subr.mxu0 0.0
        %3521 = vmatpush1.msra.mxu0 0.0
        %3522 = vmatprep.subr.mxu0 0.0
        %3523 = vmatpush1.msra.mxu0 0.0
        %3524 = vmatprep.subr.mxu0 0.0
        %3525 = vmatpush1.msra.mxu0 0.0
        %3526 = vmatprep.subr.mxu0 0.0
        %3527 = vmatpush1.msra.mxu0 0.0
        %3528 = vmatprep.subr.mxu0 0.0
        %3529 = vmatpush1.msra.mxu0 0.0
        %3530 = vmatprep.subr.mxu0 0.0
        %3531 = vmatpush1.msra.mxu0 0.0
        %3532 = vmatprep.subr.mxu0 0.0
        %3533 = vmatpush1.msra.mxu0 0.0
        %3534 = vmatprep.subr.mxu0 0.0
        %3535 = vmatpush1.msra.mxu0 0.0
        %3536 = vmatprep.subr.mxu0 0.0
        %3537 = vmatpush1.msra.mxu0 0.0
        %3538 = vmatprep.subr.mxu0 0.0
        %3539 = vmatpush1.msra.mxu0 0.0
        %3540 = vmatprep.subr.mxu0 0.0
        %3541 = vmatpush1.msra.mxu0 0.0
        %3542 = vmatprep.subr.mxu0 0.0
        %3543 = vmatpush1.msra.mxu0 0.0
        %3544 = vmatprep.subr.mxu0 0.0
        %3545 = vmatpush1.msra.mxu0 0.0
        %3546 = vmatprep.subr.mxu0 0.0
        %3547 = vmatpush1.msra.mxu0 0.0
        %3548 = vmatprep.mubr.f32.mxu0 0.0
        %3549 = vmatmul.mubr.f32.gmra.mrb[0].mxu0 %v3463
        %v3550 = vpop.f32.mrb[0].mxu0
        %v3551 = vadd.f32 0.0, %v3550
        %v3552 = vpop.f32.mrb[0].mxu0
        %3553 = vmatprep.mubr.f32.mxu0 0.0
        %3554 = vmatmul.mubr.f32.gmra.mrb[0].mxu0 %v3464
        %v3555 = vpop.f32.mrb[0].mxu0
        %v3556 = vadd.f32 0.0, %v3555
        %v3557 = vpop.f32.mrb[0].mxu0
        %3558 = vmatprep.mubr.f32.mxu0 0.0
        %3559 = vmatmul.mubr.f32.gmra.mrb[0].mxu0 %v3465
        %v3560 = vpop.f32.mrb[0].mxu0
        %v3561 = vadd.f32 0.0, %v3560
        %v3562 = vpop.f32.mrb[0].mxu0
        %3563 = vmatprep.mubr.f32.mxu0 0.0
        %3564 = vmatmul.mubr.f32.gmra.mrb[0].mxu0 %v3466
        %v3565 = vpop.f32.mrb[0].mxu0
        %v3566 = vadd.f32 0.0, %v3565
        %v3567 = vpop.f32.mrb[0].mxu0
        %3568 = vdwg.mxu0
        %3569 = vmatprep.subr.mxu0 0.0
        %3570 = vmatpush1.msra.mxu0 %v3447
        %3571 = vmatprep.subr.mxu0 0.0
        %3572 = vmatpush1.msra.mxu0 %v3448
        %3573 = vmatprep.subr.mxu0 0.0
        %3574 = vmatpush1.msra.mxu0 %v3449
        %3575 = vmatprep.subr.mxu0 0.0
        %3576 = vmatpush1.msra.mxu0 %v3450
        %3577 = vmatprep.subr.mxu0 0.0
        %3578 = vmatpush1.msra.mxu0 %v3451
        %3579 = vmatprep.subr.mxu0 0.0
        %3580 = vmatpush1.msra.mxu0 %v3452
        %3581 = vmatprep.subr.mxu0 0.0
        %3582 = vmatpush1.msra.mxu0 %v3453
        %3583 = vmatprep.subr.mxu0 0.0
        %3584 = vmatpush1.msra.mxu0 %v3454
        %3585 = vmatprep.subr.mxu0 0.0
        %3586 = vmatpush1.msra.mxu0 %v3455
        %3587 = vmatprep.subr.mxu0 0.0
        %3588 = vmatpush1.msra.mxu0 %v3456
        %3589 = vmatprep.subr.mxu0 0.0
        %3590 = vmatpush1.msra.mxu0 %v3457
        %3591 = vmatprep.subr.mxu0 0.0
        %3592 = vmatpush1.msra.mxu0 %v3458
        %3593 = vmatprep.subr.mxu0 0.0
        %3594 = vmatpush1.msra.mxu0 %v3459
        %3595 = vmatprep.subr.mxu0 0.0
        %3596 = vmatpush1.msra.mxu0 %v3460
        %3597 = vmatprep.subr.mxu0 0.0
        %3598 = vmatpush1.msra.mxu0 %v3461
        %3599 = vmatprep.subr.mxu0 0.0
        %3600 = vmatpush1.msra.mxu0 %v3462
        %3601 = vmatprep.subr.mxu0 0.0
        %3602 = vmatpush1.msra.mxu0 0.0
        %3603 = vmatprep.subr.mxu0 0.0
        %3604 = vmatpush1.msra.mxu0 0.0
        %3605 = vmatprep.subr.mxu0 0.0
        %3606 = vmatpush1.msra.mxu0 0.0
        %3607 = vmatprep.subr.mxu0 0.0
        %3608 = vmatpush1.msra.mxu0 0.0
        %3609 = vmatprep.subr.mxu0 0.0
        %3610 = vmatpush1.msra.mxu0 0.0
        %3611 = vmatprep.subr.mxu0 0.0
        %3612 = vmatpush1.msra.mxu0 0.0
        %3613 = vmatprep.subr.mxu0 0.0
        %3614 = vmatpush1.msra.mxu0 0.0
        %3615 = vmatprep.subr.mxu0 0.0
        %3616 = vmatpush1.msra.mxu0 0.0
        %3617 = vmatprep.subr.mxu0 0.0
        %3618 = vmatpush1.msra.mxu0 0.0
        %3619 = vmatprep.subr.mxu0 0.0
        %3620 = vmatpush1.msra.mxu0 0.0
        %3621 = vmatprep.subr.mxu0 0.0
        %3622 = vmatpush1.msra.mxu0 0.0
        %3623 = vmatprep.subr.mxu0 0.0
        %3624 = vmatpush1.msra.mxu0 0.0
        %3625 = vmatprep.subr.mxu0 0.0
        %3626 = vmatpush1.msra.mxu0 0.0
        %3627 = vmatprep.subr.mxu0 0.0
        %3628 = vmatpush1.msra.mxu0 0.0
        %3629 = vmatprep.subr.mxu0 0.0
        %3630 = vmatpush1.msra.mxu0 0.0
        %3631 = vmatprep.subr.mxu0 0.0
        %3632 = vmatpush1.msra.mxu0 0.0
        %3633 = vmatprep.mubr.f32.mxu0 0.0
        %3634 = vmatmul.mubr.f32.gmra.mrb[0].mxu0 %v3443
        %v3635 = vpop.f32.mrb[0].mxu0
        %v3636 = vadd.f32 %v3551, %v3635
        %v3637 = vpop.f32.mrb[0].mxu0
        %3638 = vmatprep.mubr.f32.mxu0 0.0
        %3639 = vmatmul.mubr.f32.gmra.mrb[0].mxu0 %v3444
        %v3640 = vpop.f32.mrb[0].mxu0
        %v3641 = vadd.f32 %v3556, %v3640
        %v3642 = vpop.f32.mrb[0].mxu0
        %3643 = vmatprep.mubr.f32.mxu0 0.0
        %3644 = vmatmul.mubr.f32.gmra.mrb[0].mxu0 %v3445
        %v3645 = vpop.f32.mrb[0].mxu0
        %v3646 = vadd.f32 %v3561, %v3645
        %v3647 = vpop.f32.mrb[0].mxu0
        %3648 = vmatprep.mubr.f32.mxu0 0.0
        %3649 = vmatmul.mubr.f32.gmra.mrb[0].mxu0 %v3446
        %v3650 = vpop.f32.mrb[0].mxu0
        %v3651 = vadd.f32 %v3566, %v3650
        %v3652 = vpop.f32.mrb[0].mxu0
        %3653 = vdwg.mxu0
        %v3654 = vld [vmem:[#allocation2 + $0x8] sm:$0xff]
        %v3655 = vld [vmem:[#allocation2 + $0x10] sm:$0xff]
        %v3656 = vld [vmem:[#allocation2 + $0x18] sm:$0xff]
        %v3657 = vld [vmem:[#allocation2 + $0x20] sm:$0xff]
        %s3658 = scalar_lea.vmem %s3, 256
        %v3659 = vld [vmem:[%s3658] sm:$0xff]
        %v3660 = vld [vmem:[%s3658 + $0x8] sm:$0xff]
        %v3661 = vld [vmem:[%s3658 + $0x10] sm:$0xff]
        %v3662 = vld [vmem:[%s3658 + $0x18] sm:$0xff]
        %v3663 = vld [vmem:[%s3658 + $0x20] sm:$0xff]
        %v3664 = vld [vmem:[%s3658 + $0x28] sm:$0xff]
        %v3665 = vld [vmem:[%s3658 + $0x30] sm:$0xff]
        %v3666 = vld [vmem:[%s3658 + $0x38] sm:$0xff]
        %v3667 = vld [vmem:[%s3658 + $0x40] sm:$0xff]
        %v3668 = vld [vmem:[%s3658 + $0x48] sm:$0xff]
        %v3669 = vld [vmem:[%s3658 + $0x50] sm:$0xff]
        %v3670 = vld [vmem:[%s3658 + $0x58] sm:$0xff]
        %v3671 = vld [vmem:[%s3658 + $0x60] sm:$0xff]
        %v3672 = vld [vmem:[%s3658 + $0x68] sm:$0xff]
        %v3673 = vld [vmem:[%s3658 + $0x70] sm:$0xff]
        %v3674 = vld [vmem:[%s3658 + $0x78] sm:$0xff]
        %3675 = vmatprep.subr.mxu0 0.0
        %3676 = vmatpush1.msra.mxu0 %v3659
        %3677 = vmatprep.subr.mxu0 0.0
        %3678 = vmatpush1.msra.mxu0 %v3660
        %3679 = vmatprep.subr.mxu0 0.0
        %3680 = vmatpush1.msra.mxu0 %v3661
        %3681 = vmatprep.subr.mxu0 0.0
        %3682 = vmatpush1.msra.mxu0 %v3662
        %3683 = vmatprep.subr.mxu0 0.0
        %3684 = vmatpush1.msra.mxu0 %v3663
        %3685 = vmatprep.subr.mxu0 0.0
        %3686 = vmatpush1.msra.mxu0 %v3664
        %3687 = vmatprep.subr.mxu0 0.0
        %3688 = vmatpush1.msra.mxu0 %v3665
        %3689 = vmatprep.subr.mxu0 0.0
        %3690 = vmatpush1.msra.mxu0 %v3666
        %3691 = vmatprep.subr.mxu0 0.0
        %3692 = vmatpush1.msra.mxu0 %v3667
        %3693 = vmatprep.subr.mxu0 0.0
        %3694 = vmatpush1.msra.mxu0 %v3668
        %3695 = vmatprep.subr.mxu0 0.0
        %3696 = vmatpush1.msra.mxu0 %v3669
        %3697 = vmatprep.subr.mxu0 0.0
        %3698 = vmatpush1.msra.mxu0 %v3670
        %3699 = vmatprep.subr.mxu0 0.0
        %3700 = vmatpush1.msra.mxu0 %v3671
        %3701 = vmatprep.subr.mxu0 0.0
        %3702 = vmatpush1.msra.mxu0 %v3672
        %3703 = vmatprep.subr.mxu0 0.0
        %3704 = vmatpush1.msra.mxu0 %v3673
        %3705 = vmatprep.subr.mxu0 0.0
        %3706 = vmatpush1.msra.mxu0 %v3674
        %3707 = vmatprep.subr.mxu0 0.0
        %3708 = vmatpush1.msra.mxu0 0.0
        %3709 = vmatprep.subr.mxu0 0.0
        %3710 = vmatpush1.msra.mxu0 0.0
        %3711 = vmatprep.subr.mxu0 0.0
        %3712 = vmatpush1.msra.mxu0 0.0
        %3713 = vmatprep.subr.mxu0 0.0
        %3714 = vmatpush1.msra.mxu0 0.0
        %3715 = vmatprep.subr.mxu0 0.0
        %3716 = vmatpush1.msra.mxu0 0.0
        %3717 = vmatprep.subr.mxu0 0.0
        %3718 = vmatpush1.msra.mxu0 0.0
        %3719 = vmatprep.subr.mxu0 0.0
        %3720 = vmatpush1.msra.mxu0 0.0
        %3721 = vmatprep.subr.mxu0 0.0
        %3722 = vmatpush1.msra.mxu0 0.0
        %3723 = vmatprep.subr.mxu0 0.0
        %3724 = vmatpush1.msra.mxu0 0.0
        %3725 = vmatprep.subr.mxu0 0.0
        %3726 = vmatpush1.msra.mxu0 0.0
        %3727 = vmatprep.subr.mxu0 0.0
        %3728 = vmatpush1.msra.mxu0 0.0
        %3729 = vmatprep.subr.mxu0 0.0
        %3730 = vmatpush1.msra.mxu0 0.0
        %3731 = vmatprep.subr.mxu0 0.0
        %3732 = vmatpush1.msra.mxu0 0.0
        %3733 = vmatprep.subr.mxu0 0.0
        %3734 = vmatpush1.msra.mxu0 0.0
        %3735 = vmatprep.subr.mxu0 0.0
        %3736 = vmatpush1.msra.mxu0 0.0
        %3737 = vmatprep.subr.mxu0 0.0
        %3738 = vmatpush1.msra.mxu0 0.0
        %3739 = vmatprep.mubr.f32.mxu0 0.0
        %3740 = vmatmul.mubr.f32.gmra.mrb[0].mxu0 %v3654
        %v3741 = vpop.f32.mrb[0].mxu0
        %v3742 = vadd.f32 0.0, %v3741
        %v3743 = vpop.f32.mrb[0].mxu0
        %3744 = vmatprep.mubr.f32.mxu0 0.0
        %3745 = vmatmul.mubr.f32.gmra.mrb[0].mxu0 %v3655
        %v3746 = vpop.f32.mrb[0].mxu0
        %v3747 = vadd.f32 0.0, %v3746
        %v3748 = vpop.f32.mrb[0].mxu0
        %3749 = vmatprep.mubr.f32.mxu0 0.0
        %3750 = vmatmul.mubr.f32.gmra.mrb[0].mxu0 %v3656
        %v3751 = vpop.f32.mrb[0].mxu0
        %v3752 = vadd.f32 0.0, %v3751
        %v3753 = vpop.f32.mrb[0].mxu0
        %3754 = vmatprep.mubr.f32.mxu0 0.0
        %3755 = vmatmul.mubr.f32.gmra.mrb[0].mxu0 %v3657
        %v3756 = vpop.f32.mrb[0].mxu0
        %v3757 = vadd.f32 0.0, %v3756
        %v3758 = vpop.f32.mrb[0].mxu0
        %3759 = vdwg.mxu0
        %v3760 = vadd.f32 %v3636, %v3742
        %v3761 = vadd.f32 %v3641, %v3747
        %v3762 = vadd.f32 %v3646, %v3752
        %v3763 = vadd.f32 %v3651, %v3757
        %v3764 = vld [vmem:[%s3431 + $0x8] sm:$0xff]
        %v3765 = vld [vmem:[%s3431 + $0x10] sm:$0xff]
        %v3766 = vld [vmem:[%s3431 + $0x18] sm:$0xff]
        %v3767 = vld [vmem:[%s3431 + $0x20] sm:$0xff]
        %s3768 = scalar_lea.vmem %s3, 384
        %v3769 = vld [vmem:[%s3768] sm:$0xff]
        %v3770 = vld [vmem:[%s3768 + $0x8] sm:$0xff]
        %v3771 = vld [vmem:[%s3768 + $0x10] sm:$0xff]
        %v3772 = vld [vmem:[%s3768 + $0x18] sm:$0xff]
        %v3773 = vld [vmem:[%s3768 + $0x20] sm:$0xff]
        %v3774 = vld [vmem:[%s3768 + $0x28] sm:$0xff]
        %v3775 = vld [vmem:[%s3768 + $0x30] sm:$0xff]
        %v3776 = vld [vmem:[%s3768 + $0x38] sm:$0xff]
        %v3777 = vld [vmem:[%s3768 + $0x40] sm:$0xff]
        %v3778 = vld [vmem:[%s3768 + $0x48] sm:$0xff]
        %v3779 = vld [vmem:[%s3768 + $0x50] sm:$0xff]
        %v3780 = vld [vmem:[%s3768 + $0x58] sm:$0xff]
        %v3781 = vld [vmem:[%s3768 + $0x60] sm:$0xff]
        %v3782 = vld [vmem:[%s3768 + $0x68] sm:$0xff]
        %v3783 = vld [vmem:[%s3768 + $0x70] sm:$0xff]
        %v3784 = vld [vmem:[%s3768 + $0x78] sm:$0xff]
        %3785 = vmatprep.subr.mxu0 0.0
        %3786 = vmatpush1.msra.mxu0 %v3769
        %3787 = vmatprep.subr.mxu0 0.0
        %3788 = vmatpush1.msra.mxu0 %v3770
        %3789 = vmatprep.subr.mxu0 0.0
        %3790 = vmatpush1.msra.mxu0 %v3771
        %3791 = vmatprep.subr.mxu0 0.0
        %3792 = vmatpush1.msra.mxu0 %v3772
        %3793 = vmatprep.subr.mxu0 0.0
        %3794 = vmatpush1.msra.mxu0 %v3773
        %3795 = vmatprep.subr.mxu0 0.0
        %3796 = vmatpush1.msra.mxu0 %v3774
        %3797 = vmatprep.subr.mxu0 0.0
        %3798 = vmatpush1.msra.mxu0 %v3775
        %3799 = vmatprep.subr.mxu0 0.0
        %3800 = vmatpush1.msra.mxu0 %v3776
        %3801 = vmatprep.subr.mxu0 0.0
        %3802 = vmatpush1.msra.mxu0 %v3777
        %3803 = vmatprep.subr.mxu0 0.0
        %3804 = vmatpush1.msra.mxu0 %v3778
        %3805 = vmatprep.subr.mxu0 0.0
        %3806 = vmatpush1.msra.mxu0 %v3779
        %3807 = vmatprep.subr.mxu0 0.0
        %3808 = vmatpush1.msra.mxu0 %v3780
        %3809 = vmatprep.subr.mxu0 0.0
        %3810 = vmatpush1.msra.mxu0 %v3781
        %3811 = vmatprep.subr.mxu0 0.0
        %3812 = vmatpush1.msra.mxu0 %v3782
        %3813 = vmatprep.subr.mxu0 0.0
        %3814 = vmatpush1.msra.mxu0 %v3783
        %3815 = vmatprep.subr.mxu0 0.0
        %3816 = vmatpush1.msra.mxu0 %v3784
        %3817 = vmatprep.subr.mxu0 0.0
        %3818 = vmatpush1.msra.mxu0 0.0
        %3819 = vmatprep.subr.mxu0 0.0
        %3820 = vmatpush1.msra.mxu0 0.0
        %3821 = vmatprep.subr.mxu0 0.0
        %3822 = vmatpush1.msra.mxu0 0.0
        %3823 = vmatprep.subr.mxu0 0.0
        %3824 = vmatpush1.msra.mxu0 0.0
        %3825 = vmatprep.subr.mxu0 0.0
        %3826 = vmatpush1.msra.mxu0 0.0
        %3827 = vmatprep.subr.mxu0 0.0
        %3828 = vmatpush1.msra.mxu0 0.0
        %3829 = vmatprep.subr.mxu0 0.0
        %3830 = vmatpush1.msra.mxu0 0.0
        %3831 = vmatprep.subr.mxu0 0.0
        %3832 = vmatpush1.msra.mxu0 0.0
        %3833 = vmatprep.subr.mxu0 0.0
        %3834 = vmatpush1.msra.mxu0 0.0
        %3835 = vmatprep.subr.mxu0 0.0
        %3836 = vmatpush1.msra.mxu0 0.0
        %3837 = vmatprep.subr.mxu0 0.0
        %3838 = vmatpush1.msra.mxu0 0.0
        %3839 = vmatprep.subr.mxu0 0.0
        %3840 = vmatpush1.msra.mxu0 0.0
        %3841 = vmatprep.subr.mxu0 0.0
        %3842 = vmatpush1.msra.mxu0 0.0
        %3843 = vmatprep.subr.mxu0 0.0
        %3844 = vmatpush1.msra.mxu0 0.0
        %3845 = vmatprep.subr.mxu0 0.0
        %3846 = vmatpush1.msra.mxu0 0.0
        %3847 = vmatprep.subr.mxu0 0.0
        %3848 = vmatpush1.msra.mxu0 0.0
        %3849 = vmatprep.mubr.f32.mxu0 0.0
        %3850 = vmatmul.mubr.f32.gmra.mrb[0].mxu0 %v3764
        %v3851 = vpop.f32.mrb[0].mxu0
        %v3852 = vadd.f32 0.0, %v3851
        %v3853 = vpop.f32.mrb[0].mxu0
        %3854 = vmatprep.mubr.f32.mxu0 0.0
        %3855 = vmatmul.mubr.f32.gmra.mrb[0].mxu0 %v3765
        %v3856 = vpop.f32.mrb[0].mxu0
        %v3857 = vadd.f32 0.0, %v3856
        %v3858 = vpop.f32.mrb[0].mxu0
        %3859 = vmatprep.mubr.f32.mxu0 0.0
        %3860 = vmatmul.mubr.f32.gmra.mrb[0].mxu0 %v3766
        %v3861 = vpop.f32.mrb[0].mxu0
        %v3862 = vadd.f32 0.0, %v3861
        %v3863 = vpop.f32.mrb[0].mxu0
        %3864 = vmatprep.mubr.f32.mxu0 0.0
        %3865 = vmatmul.mubr.f32.gmra.mrb[0].mxu0 %v3767
        %v3866 = vpop.f32.mrb[0].mxu0
        %v3867 = vadd.f32 0.0, %v3866
        %v3868 = vpop.f32.mrb[0].mxu0
        %3869 = vdwg.mxu0
        %v3870 = vadd.f32 %v3760, %v3852
        %v3871 = vadd.f32 %v3761, %v3857
        %v3872 = vadd.f32 %v3762, %v3862
        %v3873 = vadd.f32 %v3763, %v3867
        %v3874 = vld [vmem:[#allocation2 + $0x10] sm:$0xff]
        %v3875 = vld [vmem:[#allocation2 + $0x18] sm:$0xff]
        %v3876 = vld [vmem:[#allocation2 + $0x20] sm:$0xff]
        %v3877 = vld [vmem:[#allocation2 + $0x28] sm:$0xff]
        %s3878 = scalar_lea.vmem %s3, 512
        %v3879 = vld [vmem:[%s3878] sm:$0xff]
        %v3880 = vld [vmem:[%s3878 + $0x8] sm:$0xff]
        %v3881 = vld [vmem:[%s3878 + $0x10] sm:$0xff]
        %v3882 = vld [vmem:[%s3878 + $0x18] sm:$0xff]
        %v3883 = vld [vmem:[%s3878 + $0x20] sm:$0xff]
        %v3884 = vld [vmem:[%s3878 + $0x28] sm:$0xff]
        %v3885 = vld [vmem:[%s3878 + $0x30] sm:$0xff]
        %v3886 = vld [vmem:[%s3878 + $0x38] sm:$0xff]
        %v3887 = vld [vmem:[%s3878 + $0x40] sm:$0xff]
        %v3888 = vld [vmem:[%s3878 + $0x48] sm:$0xff]
        %v3889 = vld [vmem:[%s3878 + $0x50] sm:$0xff]
        %v3890 = vld [vmem:[%s3878 + $0x58] sm:$0xff]
        %v3891 = vld [vmem:[%s3878 + $0x60] sm:$0xff]
        %v3892 = vld [vmem:[%s3878 + $0x68] sm:$0xff]
        %v3893 = vld [vmem:[%s3878 + $0x70] sm:$0xff]
        %v3894 = vld [vmem:[%s3878 + $0x78] sm:$0xff]
        %3895 = vmatprep.subr.mxu0 0.0
        %3896 = vmatpush1.msra.mxu0 %v3879
        %3897 = vmatprep.subr.mxu0 0.0
        %3898 = vmatpush1.msra.mxu0 %v3880
        %3899 = vmatprep.subr.mxu0 0.0
        %3900 = vmatpush1.msra.mxu0 %v3881
        %3901 = vmatprep.subr.mxu0 0.0
        %3902 = vmatpush1.msra.mxu0 %v3882
        %3903 = vmatprep.subr.mxu0 0.0
        %3904 = vmatpush1.msra.mxu0 %v3883
        %3905 = vmatprep.subr.mxu0 0.0
        %3906 = vmatpush1.msra.mxu0 %v3884
        %3907 = vmatprep.subr.mxu0 0.0
        %3908 = vmatpush1.msra.mxu0 %v3885
        %3909 = vmatprep.subr.mxu0 0.0
        %3910 = vmatpush1.msra.mxu0 %v3886
        %3911 = vmatprep.subr.mxu0 0.0
        %3912 = vmatpush1.msra.mxu0 %v3887
        %3913 = vmatprep.subr.mxu0 0.0
        %3914 = vmatpush1.msra.mxu0 %v3888
        %3915 = vmatprep.subr.mxu0 0.0
        %3916 = vmatpush1.msra.mxu0 %v3889
        %3917 = vmatprep.subr.mxu0 0.0
        %3918 = vmatpush1.msra.mxu0 %v3890
        %3919 = vmatprep.subr.mxu0 0.0
        %3920 = vmatpush1.msra.mxu0 %v3891
        %3921 = vmatprep.subr.mxu0 0.0
        %3922 = vmatpush1.msra.mxu0 %v3892
        %3923 = vmatprep.subr.mxu0 0.0
        %3924 = vmatpush1.msra.mxu0 %v3893
        %3925 = vmatprep.subr.mxu0 0.0
        %3926 = vmatpush1.msra.mxu0 %v3894
        %3927 = vmatprep.subr.mxu0 0.0
        %3928 = vmatpush1.msra.mxu0 0.0
        %3929 = vmatprep.subr.mxu0 0.0
        %3930 = vmatpush1.msra.mxu0 0.0
        %3931 = vmatprep.subr.mxu0 0.0
        %3932 = vmatpush1.msra.mxu0 0.0
        %3933 = vmatprep.subr.mxu0 0.0
        %3934 = vmatpush1.msra.mxu0 0.0
        %3935 = vmatprep.subr.mxu0 0.0
        %3936 = vmatpush1.msra.mxu0 0.0
        %3937 = vmatprep.subr.mxu0 0.0
        %3938 = vmatpush1.msra.mxu0 0.0
        %3939 = vmatprep.subr.mxu0 0.0
        %3940 = vmatpush1.msra.mxu0 0.0
        %3941 = vmatprep.subr.mxu0 0.0
        %3942 = vmatpush1.msra.mxu0 0.0
        %3943 = vmatprep.subr.mxu0 0.0
        %3944 = vmatpush1.msra.mxu0 0.0
        %3945 = vmatprep.subr.mxu0 0.0
        %3946 = vmatpush1.msra.mxu0 0.0
        %3947 = vmatprep.subr.mxu0 0.0
        %3948 = vmatpush1.msra.mxu0 0.0
        %3949 = vmatprep.subr.mxu0 0.0
        %3950 = vmatpush1.msra.mxu0 0.0
        %3951 = vmatprep.subr.mxu0 0.0
        %3952 = vmatpush1.msra.mxu0 0.0
        %3953 = vmatprep.subr.mxu0 0.0
        %3954 = vmatpush1.msra.mxu0 0.0
        %3955 = vmatprep.subr.mxu0 0.0
        %3956 = vmatpush1.msra.mxu0 0.0
        %3957 = vmatprep.subr.mxu0 0.0
        %3958 = vmatpush1.msra.mxu0 0.0
        %3959 = vmatprep.mubr.f32.mxu0 0.0
        %3960 = vmatmul.mubr.f32.gmra.mrb[0].mxu0 %v3874
        %v3961 = vpop.f32.mrb[0].mxu0
        %v3962 = vadd.f32 0.0, %v3961
        %v3963 = vpop.f32.mrb[0].mxu0
        %3964 = vmatprep.mubr.f32.mxu0 0.0
        %3965 = vmatmul.mubr.f32.gmra.mrb[0].mxu0 %v3875
        %v3966 = vpop.f32.mrb[0].mxu0
        %v3967 = vadd.f32 0.0, %v3966
        %v3968 = vpop.f32.mrb[0].mxu0
        %3969 = vmatprep.mubr.f32.mxu0 0.0
        %3970 = vmatmul.mubr.f32.gmra.mrb[0].mxu0 %v3876
        %v3971 = vpop.f32.mrb[0].mxu0
        %v3972 = vadd.f32 0.0, %v3971
        %v3973 = vpop.f32.mrb[0].mxu0
        %3974 = vmatprep.mubr.f32.mxu0 0.0
        %3975 = vmatmul.mubr.f32.gmra.mrb[0].mxu0 %v3877
        %v3976 = vpop.f32.mrb[0].mxu0
        %v3977 = vadd.f32 0.0, %v3976
        %v3978 = vpop.f32.mrb[0].mxu0
        %3979 = vdwg.mxu0
        %v3980 = vadd.f32 %v3870, %v3962
        %v3981 = vadd.f32 %v3871, %v3967
        %v3982 = vadd.f32 %v3872, %v3972
        %v3983 = vadd.f32 %v3873, %v3977
        %s3984 = scalar_lea.vmem %s3, 640
        %v3985 = vld [vmem:[%s3984] sm:$0xff]
        %v3986 = vld [vmem:[%s3984 + $0x8] sm:$0xff]
        %v3987 = vld [vmem:[%s3984 + $0x10] sm:$0xff]
        %v3988 = vld [vmem:[%s3984 + $0x18] sm:$0xff]
        %v3989 = vld [vmem:[%s3984 + $0x20] sm:$0xff]
        %v3990 = vld [vmem:[%s3984 + $0x28] sm:$0xff]
        %v3991 = vld [vmem:[%s3984 + $0x30] sm:$0xff]
        %v3992 = vld [vmem:[%s3984 + $0x38] sm:$0xff]
        %v3993 = vld [vmem:[%s3984 + $0x40] sm:$0xff]
        %v3994 = vld [vmem:[%s3984 + $0x48] sm:$0xff]
        %v3995 = vld [vmem:[%s3984 + $0x50] sm:$0xff]
        %v3996 = vld [vmem:[%s3984 + $0x58] sm:$0xff]
        %v3997 = vld [vmem:[%s3984 + $0x60] sm:$0xff]
        %v3998 = vld [vmem:[%s3984 + $0x68] sm:$0xff]
        %v3999 = vld [vmem:[%s3984 + $0x70] sm:$0xff]
        %v4000 = vld [vmem:[%s3984 + $0x78] sm:$0xff]
        %s4001 = scalar_lea.vmem %s3, 768
        %v4002 = vld [vmem:[%s4001] sm:$0xff]
        %v4003 = vld [vmem:[%s4001 + $0x8] sm:$0xff]
        %v4004 = vld [vmem:[%s4001 + $0x10] sm:$0xff]
        %v4005 = vld [vmem:[%s4001 + $0x18] sm:$0xff]
        %v4006 = vld [vmem:[%s4001 + $0x20] sm:$0xff]
        %v4007 = vld [vmem:[%s4001 + $0x28] sm:$0xff]
        %v4008 = vld [vmem:[%s4001 + $0x30] sm:$0xff]
        %v4009 = vld [vmem:[%s4001 + $0x38] sm:$0xff]
        %v4010 = vld [vmem:[%s4001 + $0x40] sm:$0xff]
        %v4011 = vld [vmem:[%s4001 + $0x48] sm:$0xff]
        %v4012 = vld [vmem:[%s4001 + $0x50] sm:$0xff]
        %v4013 = vld [vmem:[%s4001 + $0x58] sm:$0xff]
        %v4014 = vld [vmem:[%s4001 + $0x60] sm:$0xff]
        %v4015 = vld [vmem:[%s4001 + $0x68] sm:$0xff]
        %v4016 = vld [vmem:[%s4001 + $0x70] sm:$0xff]
        %v4017 = vld [vmem:[%s4001 + $0x78] sm:$0xff]
        %4018 = vmatprep.subr.mxu0 0.0
        %4019 = vmatpush1.msra.mxu0 %v4002
        %4020 = vmatprep.subr.mxu0 0.0
        %4021 = vmatpush1.msra.mxu0 %v4003
        %4022 = vmatprep.subr.mxu0 0.0
        %4023 = vmatpush1.msra.mxu0 %v4004
        %4024 = vmatprep.subr.mxu0 0.0
        %4025 = vmatpush1.msra.mxu0 %v4005
        %4026 = vmatprep.subr.mxu0 0.0
        %4027 = vmatpush1.msra.mxu0 %v4006
        %4028 = vmatprep.subr.mxu0 0.0
        %4029 = vmatpush1.msra.mxu0 %v4007
        %4030 = vmatprep.subr.mxu0 0.0
        %4031 = vmatpush1.msra.mxu0 %v4008
        %4032 = vmatprep.subr.mxu0 0.0
        %4033 = vmatpush1.msra.mxu0 %v4009
        %4034 = vmatprep.subr.mxu0 0.0
        %4035 = vmatpush1.msra.mxu0 %v4010
        %4036 = vmatprep.subr.mxu0 0.0
        %4037 = vmatpush1.msra.mxu0 %v4011
        %4038 = vmatprep.subr.mxu0 0.0
        %4039 = vmatpush1.msra.mxu0 %v4012
        %4040 = vmatprep.subr.mxu0 0.0
        %4041 = vmatpush1.msra.mxu0 %v4013
        %4042 = vmatprep.subr.mxu0 0.0
        %4043 = vmatpush1.msra.mxu0 %v4014
        %4044 = vmatprep.subr.mxu0 0.0
        %4045 = vmatpush1.msra.mxu0 %v4015
        %4046 = vmatprep.subr.mxu0 0.0
        %4047 = vmatpush1.msra.mxu0 %v4016
        %4048 = vmatprep.subr.mxu0 0.0
        %4049 = vmatpush1.msra.mxu0 %v4017
        %4050 = vmatprep.subr.mxu0 0.0
        %4051 = vmatpush1.msra.mxu0 0.0
        %4052 = vmatprep.subr.mxu0 0.0
        %4053 = vmatpush1.msra.mxu0 0.0
        %4054 = vmatprep.subr.mxu0 0.0
        %4055 = vmatpush1.msra.mxu0 0.0
        %4056 = vmatprep.subr.mxu0 0.0
        %4057 = vmatpush1.msra.mxu0 0.0
        %4058 = vmatprep.subr.mxu0 0.0
        %4059 = vmatpush1.msra.mxu0 0.0
        %4060 = vmatprep.subr.mxu0 0.0
        %4061 = vmatpush1.msra.mxu0 0.0
        %4062 = vmatprep.subr.mxu0 0.0
        %4063 = vmatpush1.msra.mxu0 0.0
        %4064 = vmatprep.subr.mxu0 0.0
        %4065 = vmatpush1.msra.mxu0 0.0
        %4066 = vmatprep.subr.mxu0 0.0
        %4067 = vmatpush1.msra.mxu0 0.0
        %4068 = vmatprep.subr.mxu0 0.0
        %4069 = vmatpush1.msra.mxu0 0.0
        %4070 = vmatprep.subr.mxu0 0.0
        %4071 = vmatpush1.msra.mxu0 0.0
        %4072 = vmatprep.subr.mxu0 0.0
        %4073 = vmatpush1.msra.mxu0 0.0
        %4074 = vmatprep.subr.mxu0 0.0
        %4075 = vmatpush1.msra.mxu0 0.0
        %4076 = vmatprep.subr.mxu0 0.0
        %4077 = vmatpush1.msra.mxu0 0.0
        %4078 = vmatprep.subr.mxu0 0.0
        %4079 = vmatpush1.msra.mxu0 0.0
        %4080 = vmatprep.subr.mxu0 0.0
        %4081 = vmatpush1.msra.mxu0 0.0
        %4082 = vmatprep.mubr.f32.mxu0 0.0
        %4083 = vmatmul.mubr.f32.gmra.mrb[0].mxu0 %v3463
        %v4084 = vpop.f32.mrb[0].mxu0
        %v4085 = vadd.f32 0.0, %v4084
        %v4086 = vpop.f32.mrb[0].mxu0
        %4087 = vmatprep.mubr.f32.mxu0 0.0
        %4088 = vmatmul.mubr.f32.gmra.mrb[0].mxu0 %v3464
        %v4089 = vpop.f32.mrb[0].mxu0
        %v4090 = vadd.f32 0.0, %v4089
        %v4091 = vpop.f32.mrb[0].mxu0
        %4092 = vmatprep.mubr.f32.mxu0 0.0
        %4093 = vmatmul.mubr.f32.gmra.mrb[0].mxu0 %v3465
        %v4094 = vpop.f32.mrb[0].mxu0
        %v4095 = vadd.f32 0.0, %v4094
        %v4096 = vpop.f32.mrb[0].mxu0
        %4097 = vmatprep.mubr.f32.mxu0 0.0
        %4098 = vmatmul.mubr.f32.gmra.mrb[0].mxu0 %v3466
        %v4099 = vpop.f32.mrb[0].mxu0
        %v4100 = vadd.f32 0.0, %v4099
        %v4101 = vpop.f32.mrb[0].mxu0
        %4102 = vdwg.mxu0
        %4103 = vmatprep.subr.mxu0 0.0
        %4104 = vmatpush1.msra.mxu0 %v3985
        %4105 = vmatprep.subr.mxu0 0.0
        %4106 = vmatpush1.msra.mxu0 %v3986
        %4107 = vmatprep.subr.mxu0 0.0
        %4108 = vmatpush1.msra.mxu0 %v3987
        %4109 = vmatprep.subr.mxu0 0.0
        %4110 = vmatpush1.msra.mxu0 %v3988
        %4111 = vmatprep.subr.mxu0 0.0
        %4112 = vmatpush1.msra.mxu0 %v3989
        %4113 = vmatprep.subr.mxu0 0.0
        %4114 = vmatpush1.msra.mxu0 %v3990
        %4115 = vmatprep.subr.mxu0 0.0
        %4116 = vmatpush1.msra.mxu0 %v3991
        %4117 = vmatprep.subr.mxu0 0.0
        %4118 = vmatpush1.msra.mxu0 %v3992
        %4119 = vmatprep.subr.mxu0 0.0
        %4120 = vmatpush1.msra.mxu0 %v3993
        %4121 = vmatprep.subr.mxu0 0.0
        %4122 = vmatpush1.msra.mxu0 %v3994
        %4123 = vmatprep.subr.mxu0 0.0
        %4124 = vmatpush1.msra.mxu0 %v3995
        %4125 = vmatprep.subr.mxu0 0.0
        %4126 = vmatpush1.msra.mxu0 %v3996
        %4127 = vmatprep.subr.mxu0 0.0
        %4128 = vmatpush1.msra.mxu0 %v3997
        %4129 = vmatprep.subr.mxu0 0.0
        %4130 = vmatpush1.msra.mxu0 %v3998
        %4131 = vmatprep.subr.mxu0 0.0
        %4132 = vmatpush1.msra.mxu0 %v3999
        %4133 = vmatprep.subr.mxu0 0.0
        %4134 = vmatpush1.msra.mxu0 %v4000
        %4135 = vmatprep.subr.mxu0 0.0
        %4136 = vmatpush1.msra.mxu0 0.0
        %4137 = vmatprep.subr.mxu0 0.0
        %4138 = vmatpush1.msra.mxu0 0.0
        %4139 = vmatprep.subr.mxu0 0.0
        %4140 = vmatpush1.msra.mxu0 0.0
        %4141 = vmatprep.subr.mxu0 0.0
        %4142 = vmatpush1.msra.mxu0 0.0
        %4143 = vmatprep.subr.mxu0 0.0
        %4144 = vmatpush1.msra.mxu0 0.0
        %4145 = vmatprep.subr.mxu0 0.0
        %4146 = vmatpush1.msra.mxu0 0.0
        %4147 = vmatprep.subr.mxu0 0.0
        %4148 = vmatpush1.msra.mxu0 0.0
        %4149 = vmatprep.subr.mxu0 0.0
        %4150 = vmatpush1.msra.mxu0 0.0
        %4151 = vmatprep.subr.mxu0 0.0
        %4152 = vmatpush1.msra.mxu0 0.0
        %4153 = vmatprep.subr.mxu0 0.0
        %4154 = vmatpush1.msra.mxu0 0.0
        %4155 = vmatprep.subr.mxu0 0.0
        %4156 = vmatpush1.msra.mxu0 0.0
        %4157 = vmatprep.subr.mxu0 0.0
        %4158 = vmatpush1.msra.mxu0 0.0
        %4159 = vmatprep.subr.mxu0 0.0
        %4160 = vmatpush1.msra.mxu0 0.0
        %4161 = vmatprep.subr.mxu0 0.0
        %4162 = vmatpush1.msra.mxu0 0.0
        %4163 = vmatprep.subr.mxu0 0.0
        %4164 = vmatpush1.msra.mxu0 0.0
        %4165 = vmatprep.subr.mxu0 0.0
        %4166 = vmatpush1.msra.mxu0 0.0
        %4167 = vmatprep.mubr.f32.mxu0 0.0
        %4168 = vmatmul.mubr.f32.gmra.mrb[0].mxu0 %v3443
        %v4169 = vpop.f32.mrb[0].mxu0
        %v4170 = vadd.f32 %v4085, %v4169
        %v4171 = vpop.f32.mrb[0].mxu0
        %4172 = vmatprep.mubr.f32.mxu0 0.0
        %4173 = vmatmul.mubr.f32.gmra.mrb[0].mxu0 %v3444
        %v4174 = vpop.f32.mrb[0].mxu0
        %v4175 = vadd.f32 %v4090, %v4174
        %v4176 = vpop.f32.mrb[0].mxu0
        %4177 = vmatprep.mubr.f32.mxu0 0.0
        %4178 = vmatmul.mubr.f32.gmra.mrb[0].mxu0 %v3445
        %v4179 = vpop.f32.mrb[0].mxu0
        %v4180 = vadd.f32 %v4095, %v4179
        %v4181 = vpop.f32.mrb[0].mxu0
        %4182 = vmatprep.mubr.f32.mxu0 0.0
        %4183 = vmatmul.mubr.f32.gmra.mrb[0].mxu0 %v3446
        %v4184 = vpop.f32.mrb[0].mxu0
        %v4185 = vadd.f32 %v4100, %v4184
        %v4186 = vpop.f32.mrb[0].mxu0
        %4187 = vdwg.mxu0
        %s4188 = scalar_lea.vmem %s3, 896
        %v4189 = vld [vmem:[%s4188] sm:$0xff]
        %v4190 = vld [vmem:[%s4188 + $0x8] sm:$0xff]
        %v4191 = vld [vmem:[%s4188 + $0x10] sm:$0xff]
        %v4192 = vld [vmem:[%s4188 + $0x18] sm:$0xff]
        %v4193 = vld [vmem:[%s4188 + $0x20] sm:$0xff]
        %v4194 = vld [vmem:[%s4188 + $0x28] sm:$0xff]
        %v4195 = vld [vmem:[%s4188 + $0x30] sm:$0xff]
        %v4196 = vld [vmem:[%s4188 + $0x38] sm:$0xff]
        %v4197 = vld [vmem:[%s4188 + $0x40] sm:$0xff]
        %v4198 = vld [vmem:[%s4188 + $0x48] sm:$0xff]
        %v4199 = vld [vmem:[%s4188 + $0x50] sm:$0xff]
        %v4200 = vld [vmem:[%s4188 + $0x58] sm:$0xff]
        %v4201 = vld [vmem:[%s4188 + $0x60] sm:$0xff]
        %v4202 = vld [vmem:[%s4188 + $0x68] sm:$0xff]
        %v4203 = vld [vmem:[%s4188 + $0x70] sm:$0xff]
        %v4204 = vld [vmem:[%s4188 + $0x78] sm:$0xff]
        %4205 = vmatprep.subr.mxu0 0.0
        %4206 = vmatpush1.msra.mxu0 %v4189
        %4207 = vmatprep.subr.mxu0 0.0
        %4208 = vmatpush1.msra.mxu0 %v4190
        %4209 = vmatprep.subr.mxu0 0.0
        %4210 = vmatpush1.msra.mxu0 %v4191
        %4211 = vmatprep.subr.mxu0 0.0
        %4212 = vmatpush1.msra.mxu0 %v4192
        %4213 = vmatprep.subr.mxu0 0.0
        %4214 = vmatpush1.msra.mxu0 %v4193
        %4215 = vmatprep.subr.mxu0 0.0
        %4216 = vmatpush1.msra.mxu0 %v4194
        %4217 = vmatprep.subr.mxu0 0.0
        %4218 = vmatpush1.msra.mxu0 %v4195
        %4219 = vmatprep.subr.mxu0 0.0
        %4220 = vmatpush1.msra.mxu0 %v4196
        %4221 = vmatprep.subr.mxu0 0.0
        %4222 = vmatpush1.msra.mxu0 %v4197
        %4223 = vmatprep.subr.mxu0 0.0
        %4224 = vmatpush1.msra.mxu0 %v4198
        %4225 = vmatprep.subr.mxu0 0.0
        %4226 = vmatpush1.msra.mxu0 %v4199
        %4227 = vmatprep.subr.mxu0 0.0
        %4228 = vmatpush1.msra.mxu0 %v4200
        %4229 = vmatprep.subr.mxu0 0.0
        %4230 = vmatpush1.msra.mxu0 %v4201
        %4231 = vmatprep.subr.mxu0 0.0
        %4232 = vmatpush1.msra.mxu0 %v4202
        %4233 = vmatprep.subr.mxu0 0.0
        %4234 = vmatpush1.msra.mxu0 %v4203
        %4235 = vmatprep.subr.mxu0 0.0
        %4236 = vmatpush1.msra.mxu0 %v4204
        %4237 = vmatprep.subr.mxu0 0.0
        %4238 = vmatpush1.msra.mxu0 0.0
        %4239 = vmatprep.subr.mxu0 0.0
        %4240 = vmatpush1.msra.mxu0 0.0
        %4241 = vmatprep.subr.mxu0 0.0
        %4242 = vmatpush1.msra.mxu0 0.0
        %4243 = vmatprep.subr.mxu0 0.0
        %4244 = vmatpush1.msra.mxu0 0.0
        %4245 = vmatprep.subr.mxu0 0.0
        %4246 = vmatpush1.msra.mxu0 0.0
        %4247 = vmatprep.subr.mxu0 0.0
        %4248 = vmatpush1.msra.mxu0 0.0
        %4249 = vmatprep.subr.mxu0 0.0
        %4250 = vmatpush1.msra.mxu0 0.0
        %4251 = vmatprep.subr.mxu0 0.0
        %4252 = vmatpush1.msra.mxu0 0.0
        %4253 = vmatprep.subr.mxu0 0.0
        %4254 = vmatpush1.msra.mxu0 0.0
        %4255 = vmatprep.subr.mxu0 0.0
        %4256 = vmatpush1.msra.mxu0 0.0
        %4257 = vmatprep.subr.mxu0 0.0
        %4258 = vmatpush1.msra.mxu0 0.0
        %4259 = vmatprep.subr.mxu0 0.0
        %4260 = vmatpush1.msra.mxu0 0.0
        %4261 = vmatprep.subr.mxu0 0.0
        %4262 = vmatpush1.msra.mxu0 0.0
        %4263 = vmatprep.subr.mxu0 0.0
        %4264 = vmatpush1.msra.mxu0 0.0
        %4265 = vmatprep.subr.mxu0 0.0
        %4266 = vmatpush1.msra.mxu0 0.0
        %4267 = vmatprep.subr.mxu0 0.0
        %4268 = vmatpush1.msra.mxu0 0.0
        %4269 = vmatprep.mubr.f32.mxu0 0.0
        %4270 = vmatmul.mubr.f32.gmra.mrb[0].mxu0 %v3654
        %v4271 = vpop.f32.mrb[0].mxu0
        %v4272 = vadd.f32 0.0, %v4271
        %v4273 = vpop.f32.mrb[0].mxu0
        %4274 = vmatprep.mubr.f32.mxu0 0.0
        %4275 = vmatmul.mubr.f32.gmra.mrb[0].mxu0 %v3655
        %v4276 = vpop.f32.mrb[0].mxu0
        %v4277 = vadd.f32 0.0, %v4276
        %v4278 = vpop.f32.mrb[0].mxu0
        %4279 = vmatprep.mubr.f32.mxu0 0.0
        %4280 = vmatmul.mubr.f32.gmra.mrb[0].mxu0 %v3656
        %v4281 = vpop.f32.mrb[0].mxu0
        %v4282 = vadd.f32 0.0, %v4281
        %v4283 = vpop.f32.mrb[0].mxu0
        %4284 = vmatprep.mubr.f32.mxu0 0.0
        %4285 = vmatmul.mubr.f32.gmra.mrb[0].mxu0 %v3657
        %v4286 = vpop.f32.mrb[0].mxu0
        %v4287 = vadd.f32 0.0, %v4286
        %v4288 = vpop.f32.mrb[0].mxu0
        %4289 = vdwg.mxu0
        %v4290 = vadd.f32 %v4170, %v4272
        %v4291 = vadd.f32 %v4175, %v4277
        %v4292 = vadd.f32 %v4180, %v4282
        %v4293 = vadd.f32 %v4185, %v4287
        %s4294 = scalar_lea.vmem %s3, 1024
        %v4295 = vld [vmem:[%s4294] sm:$0xff]
        %v4296 = vld [vmem:[%s4294 + $0x8] sm:$0xff]
        %v4297 = vld [vmem:[%s4294 + $0x10] sm:$0xff]
        %v4298 = vld [vmem:[%s4294 + $0x18] sm:$0xff]
        %v4299 = vld [vmem:[%s4294 + $0x20] sm:$0xff]
        %v4300 = vld [vmem:[%s4294 + $0x28] sm:$0xff]
        %v4301 = vld [vmem:[%s4294 + $0x30] sm:$0xff]
        %v4302 = vld [vmem:[%s4294 + $0x38] sm:$0xff]
        %v4303 = vld [vmem:[%s4294 + $0x40] sm:$0xff]
        %v4304 = vld [vmem:[%s4294 + $0x48] sm:$0xff]
        %v4305 = vld [vmem:[%s4294 + $0x50] sm:$0xff]
        %v4306 = vld [vmem:[%s4294 + $0x58] sm:$0xff]
        %v4307 = vld [vmem:[%s4294 + $0x60] sm:$0xff]
        %v4308 = vld [vmem:[%s4294 + $0x68] sm:$0xff]
        %v4309 = vld [vmem:[%s4294 + $0x70] sm:$0xff]
        %v4310 = vld [vmem:[%s4294 + $0x78] sm:$0xff]
        %4311 = vmatprep.subr.mxu0 0.0
        %4312 = vmatpush1.msra.mxu0 %v4295
        %4313 = vmatprep.subr.mxu0 0.0
        %4314 = vmatpush1.msra.mxu0 %v4296
        %4315 = vmatprep.subr.mxu0 0.0
        %4316 = vmatpush1.msra.mxu0 %v4297
        %4317 = vmatprep.subr.mxu0 0.0
        %4318 = vmatpush1.msra.mxu0 %v4298
        %4319 = vmatprep.subr.mxu0 0.0
        %4320 = vmatpush1.msra.mxu0 %v4299
        %4321 = vmatprep.subr.mxu0 0.0
        %4322 = vmatpush1.msra.mxu0 %v4300
        %4323 = vmatprep.subr.mxu0 0.0
        %4324 = vmatpush1.msra.mxu0 %v4301
        %4325 = vmatprep.subr.mxu0 0.0
        %4326 = vmatpush1.msra.mxu0 %v4302
        %4327 = vmatprep.subr.mxu0 0.0
        %4328 = vmatpush1.msra.mxu0 %v4303
        %4329 = vmatprep.subr.mxu0 0.0
        %4330 = vmatpush1.msra.mxu0 %v4304
        %4331 = vmatprep.subr.mxu0 0.0
        %4332 = vmatpush1.msra.mxu0 %v4305
        %4333 = vmatprep.subr.mxu0 0.0
        %4334 = vmatpush1.msra.mxu0 %v4306
        %4335 = vmatprep.subr.mxu0 0.0
        %4336 = vmatpush1.msra.mxu0 %v4307
        %4337 = vmatprep.subr.mxu0 0.0
        %4338 = vmatpush1.msra.mxu0 %v4308
        %4339 = vmatprep.subr.mxu0 0.0
        %4340 = vmatpush1.msra.mxu0 %v4309
        %4341 = vmatprep.subr.mxu0 0.0
        %4342 = vmatpush1.msra.mxu0 %v4310
        %4343 = vmatprep.subr.mxu0 0.0
        %4344 = vmatpush1.msra.mxu0 0.0
        %4345 = vmatprep.subr.mxu0 0.0
        %4346 = vmatpush1.msra.mxu0 0.0
        %4347 = vmatprep.subr.mxu0 0.0
        %4348 = vmatpush1.msra.mxu0 0.0
        %4349 = vmatprep.subr.mxu0 0.0
        %4350 = vmatpush1.msra.mxu0 0.0
        %4351 = vmatprep.subr.mxu0 0.0
        %4352 = vmatpush1.msra.mxu0 0.0
        %4353 = vmatprep.subr.mxu0 0.0
        %4354 = vmatpush1.msra.mxu0 0.0
        %4355 = vmatprep.subr.mxu0 0.0
        %4356 = vmatpush1.msra.mxu0 0.0
        %4357 = vmatprep.subr.mxu0 0.0
        %4358 = vmatpush1.msra.mxu0 0.0
        %4359 = vmatprep.subr.mxu0 0.0
        %4360 = vmatpush1.msra.mxu0 0.0
        %4361 = vmatprep.subr.mxu0 0.0
        %4362 = vmatpush1.msra.mxu0 0.0
        %4363 = vmatprep.subr.mxu0 0.0
        %4364 = vmatpush1.msra.mxu0 0.0
        %4365 = vmatprep.subr.mxu0 0.0
        %4366 = vmatpush1.msra.mxu0 0.0
        %4367 = vmatprep.subr.mxu0 0.0
        %4368 = vmatpush1.msra.mxu0 0.0
        %4369 = vmatprep.subr.mxu0 0.0
        %4370 = vmatpush1.msra.mxu0 0.0
        %4371 = vmatprep.subr.mxu0 0.0
        %4372 = vmatpush1.msra.mxu0 0.0
        %4373 = vmatprep.subr.mxu0 0.0
        %4374 = vmatpush1.msra.mxu0 0.0
        %4375 = vmatprep.mubr.f32.mxu0 0.0
        %4376 = vmatmul.mubr.f32.gmra.mrb[0].mxu0 %v3764
        %v4377 = vpop.f32.mrb[0].mxu0
        %v4378 = vadd.f32 0.0, %v4377
        %v4379 = vpop.f32.mrb[0].mxu0
        %4380 = vmatprep.mubr.f32.mxu0 0.0
        %4381 = vmatmul.mubr.f32.gmra.mrb[0].mxu0 %v3765
        %v4382 = vpop.f32.mrb[0].mxu0
        %v4383 = vadd.f32 0.0, %v4382
        %v4384 = vpop.f32.mrb[0].mxu0
        %4385 = vmatprep.mubr.f32.mxu0 0.0
        %4386 = vmatmul.mubr.f32.gmra.mrb[0].mxu0 %v3766
        %v4387 = vpop.f32.mrb[0].mxu0
        %v4388 = vadd.f32 0.0, %v4387
        %v4389 = vpop.f32.mrb[0].mxu0
        %4390 = vmatprep.mubr.f32.mxu0 0.0
        %4391 = vmatmul.mubr.f32.gmra.mrb[0].mxu0 %v3767
        %v4392 = vpop.f32.mrb[0].mxu0
        %v4393 = vadd.f32 0.0, %v4392
        %v4394 = vpop.f32.mrb[0].mxu0
        %4395 = vdwg.mxu0
        %v4396 = vadd.f32 %v4290, %v4378
        %v4397 = vadd.f32 %v4291, %v4383
        %v4398 = vadd.f32 %v4292, %v4388
        %v4399 = vadd.f32 %v4293, %v4393
        %s4400 = scalar_lea.vmem %s3, 1152
        %v4401 = vld [vmem:[%s4400] sm:$0xff]
        %v4402 = vld [vmem:[%s4400 + $0x8] sm:$0xff]
        %v4403 = vld [vmem:[%s4400 + $0x10] sm:$0xff]
        %v4404 = vld [vmem:[%s4400 + $0x18] sm:$0xff]
        %v4405 = vld [vmem:[%s4400 + $0x20] sm:$0xff]
        %v4406 = vld [vmem:[%s4400 + $0x28] sm:$0xff]
        %v4407 = vld [vmem:[%s4400 + $0x30] sm:$0xff]
        %v4408 = vld [vmem:[%s4400 + $0x38] sm:$0xff]
        %v4409 = vld [vmem:[%s4400 + $0x40] sm:$0xff]
        %v4410 = vld [vmem:[%s4400 + $0x48] sm:$0xff]
        %v4411 = vld [vmem:[%s4400 + $0x50] sm:$0xff]
        %v4412 = vld [vmem:[%s4400 + $0x58] sm:$0xff]
        %v4413 = vld [vmem:[%s4400 + $0x60] sm:$0xff]
        %v4414 = vld [vmem:[%s4400 + $0x68] sm:$0xff]
        %v4415 = vld [vmem:[%s4400 + $0x70] sm:$0xff]
        %v4416 = vld [vmem:[%s4400 + $0x78] sm:$0xff]
        %4417 = vmatprep.subr.mxu0 0.0
        %4418 = vmatpush1.msra.mxu0 %v4401
        %4419 = vmatprep.subr.mxu0 0.0
        %4420 = vmatpush1.msra.mxu0 %v4402
        %4421 = vmatprep.subr.mxu0 0.0
        %4422 = vmatpush1.msra.mxu0 %v4403
        %4423 = vmatprep.subr.mxu0 0.0
        %4424 = vmatpush1.msra.mxu0 %v4404
        %4425 = vmatprep.subr.mxu0 0.0
        %4426 = vmatpush1.msra.mxu0 %v4405
        %4427 = vmatprep.subr.mxu0 0.0
        %4428 = vmatpush1.msra.mxu0 %v4406
        %4429 = vmatprep.subr.mxu0 0.0
        %4430 = vmatpush1.msra.mxu0 %v4407
        %4431 = vmatprep.subr.mxu0 0.0
        %4432 = vmatpush1.msra.mxu0 %v4408
        %4433 = vmatprep.subr.mxu0 0.0
        %4434 = vmatpush1.msra.mxu0 %v4409
        %4435 = vmatprep.subr.mxu0 0.0
        %4436 = vmatpush1.msra.mxu0 %v4410
        %4437 = vmatprep.subr.mxu0 0.0
        %4438 = vmatpush1.msra.mxu0 %v4411
        %4439 = vmatprep.subr.mxu0 0.0
        %4440 = vmatpush1.msra.mxu0 %v4412
        %4441 = vmatprep.subr.mxu0 0.0
        %4442 = vmatpush1.msra.mxu0 %v4413
        %4443 = vmatprep.subr.mxu0 0.0
        %4444 = vmatpush1.msra.mxu0 %v4414
        %4445 = vmatprep.subr.mxu0 0.0
        %4446 = vmatpush1.msra.mxu0 %v4415
        %4447 = vmatprep.subr.mxu0 0.0
        %4448 = vmatpush1.msra.mxu0 %v4416
        %4449 = vmatprep.subr.mxu0 0.0
        %4450 = vmatpush1.msra.mxu0 0.0
        %4451 = vmatprep.subr.mxu0 0.0
        %4452 = vmatpush1.msra.mxu0 0.0
        %4453 = vmatprep.subr.mxu0 0.0
        %4454 = vmatpush1.msra.mxu0 0.0
        %4455 = vmatprep.subr.mxu0 0.0
        %4456 = vmatpush1.msra.mxu0 0.0
        %4457 = vmatprep.subr.mxu0 0.0
        %4458 = vmatpush1.msra.mxu0 0.0
        %4459 = vmatprep.subr.mxu0 0.0
        %4460 = vmatpush1.msra.mxu0 0.0
        %4461 = vmatprep.subr.mxu0 0.0
        %4462 = vmatpush1.msra.mxu0 0.0
        %4463 = vmatprep.subr.mxu0 0.0
        %4464 = vmatpush1.msra.mxu0 0.0
        %4465 = vmatprep.subr.mxu0 0.0
        %4466 = vmatpush1.msra.mxu0 0.0
        %4467 = vmatprep.subr.mxu0 0.0
        %4468 = vmatpush1.msra.mxu0 0.0
        %4469 = vmatprep.subr.mxu0 0.0
        %4470 = vmatpush1.msra.mxu0 0.0
        %4471 = vmatprep.subr.mxu0 0.0
        %4472 = vmatpush1.msra.mxu0 0.0
        %4473 = vmatprep.subr.mxu0 0.0
        %4474 = vmatpush1.msra.mxu0 0.0
        %4475 = vmatprep.subr.mxu0 0.0
        %4476 = vmatpush1.msra.mxu0 0.0
        %4477 = vmatprep.subr.mxu0 0.0
        %4478 = vmatpush1.msra.mxu0 0.0
        %4479 = vmatprep.subr.mxu0 0.0
        %4480 = vmatpush1.msra.mxu0 0.0
        %4481 = vmatprep.mubr.f32.mxu0 0.0
        %4482 = vmatmul.mubr.f32.gmra.mrb[0].mxu0 %v3874
        %v4483 = vpop.f32.mrb[0].mxu0
        %v4484 = vadd.f32 0.0, %v4483
        %v4485 = vpop.f32.mrb[0].mxu0
        %4486 = vmatprep.mubr.f32.mxu0 0.0
        %4487 = vmatmul.mubr.f32.gmra.mrb[0].mxu0 %v3875
        %v4488 = vpop.f32.mrb[0].mxu0
        %v4489 = vadd.f32 0.0, %v4488
        %v4490 = vpop.f32.mrb[0].mxu0
        %4491 = vmatprep.mubr.f32.mxu0 0.0
        %4492 = vmatmul.mubr.f32.gmra.mrb[0].mxu0 %v3876
        %v4493 = vpop.f32.mrb[0].mxu0
        %v4494 = vadd.f32 0.0, %v4493
        %v4495 = vpop.f32.mrb[0].mxu0
        %4496 = vmatprep.mubr.f32.mxu0 0.0
        %4497 = vmatmul.mubr.f32.gmra.mrb[0].mxu0 %v3877
        %v4498 = vpop.f32.mrb[0].mxu0
        %v4499 = vadd.f32 0.0, %v4498
        %v4500 = vpop.f32.mrb[0].mxu0
        %4501 = vdwg.mxu0
        %v4502 = vadd.f32 %v4396, %v4484
        %v4503 = vadd.f32 %v4397, %v4489
        %v4504 = vadd.f32 %v4398, %v4494
        %v4505 = vadd.f32 %v4399, %v4499
        %v4506 = vmax.f32 %v3980, %v4502
        %v4507 = vmax.f32 %v3981, %v4503
        %v4508 = vmax.f32 %v3982, %v4504
        %v4509 = vmax.f32 %v3983, %v4505
        %4510 = vmatprep.subr.mxu0 0.0
        %4511 = vmatpush1.msra.mxu0 %v3468
        %4512 = vmatprep.subr.mxu0 0.0
        %4513 = vmatpush1.msra.mxu0 %v3469
        %4514 = vmatprep.subr.mxu0 0.0
        %4515 = vmatpush1.msra.mxu0 %v3470
        %4516 = vmatprep.subr.mxu0 0.0
        %4517 = vmatpush1.msra.mxu0 %v3471
        %4518 = vmatprep.subr.mxu0 0.0
        %4519 = vmatpush1.msra.mxu0 %v3472
        %4520 = vmatprep.subr.mxu0 0.0
        %4521 = vmatpush1.msra.mxu0 %v3473
        %4522 = vmatprep.subr.mxu0 0.0
        %4523 = vmatpush1.msra.mxu0 %v3474
        %4524 = vmatprep.subr.mxu0 0.0
        %4525 = vmatpush1.msra.mxu0 %v3475
        %4526 = vmatprep.subr.mxu0 0.0
        %4527 = vmatpush1.msra.mxu0 %v3476
        %4528 = vmatprep.subr.mxu0 0.0
        %4529 = vmatpush1.msra.mxu0 %v3477
        %4530 = vmatprep.subr.mxu0 0.0
        %4531 = vmatpush1.msra.mxu0 %v3478
        %4532 = vmatprep.subr.mxu0 0.0
        %4533 = vmatpush1.msra.mxu0 %v3479
        %4534 = vmatprep.subr.mxu0 0.0
        %4535 = vmatpush1.msra.mxu0 %v3480
        %4536 = vmatprep.subr.mxu0 0.0
        %4537 = vmatpush1.msra.mxu0 %v3481
        %4538 = vmatprep.subr.mxu0 0.0
        %4539 = vmatpush1.msra.mxu0 %v3482
        %4540 = vmatprep.subr.mxu0 0.0
        %4541 = vmatpush1.msra.mxu0 %v3483
        %4542 = vmatprep.subr.mxu0 0.0
        %4543 = vmatpush1.msra.mxu0 0.0
        %4544 = vmatprep.subr.mxu0 0.0
        %4545 = vmatpush1.msra.mxu0 0.0
        %4546 = vmatprep.subr.mxu0 0.0
        %4547 = vmatpush1.msra.mxu0 0.0
        %4548 = vmatprep.subr.mxu0 0.0
        %4549 = vmatpush1.msra.mxu0 0.0
        %4550 = vmatprep.subr.mxu0 0.0
        %4551 = vmatpush1.msra.mxu0 0.0
        %4552 = vmatprep.subr.mxu0 0.0
        %4553 = vmatpush1.msra.mxu0 0.0
        %4554 = vmatprep.subr.mxu0 0.0
        %4555 = vmatpush1.msra.mxu0 0.0
        %4556 = vmatprep.subr.mxu0 0.0
        %4557 = vmatpush1.msra.mxu0 0.0
        %4558 = vmatprep.subr.mxu0 0.0
        %4559 = vmatpush1.msra.mxu0 0.0
        %4560 = vmatprep.subr.mxu0 0.0
        %4561 = vmatpush1.msra.mxu0 0.0
        %4562 = vmatprep.subr.mxu0 0.0
        %4563 = vmatpush1.msra.mxu0 0.0
        %4564 = vmatprep.subr.mxu0 0.0
        %4565 = vmatpush1.msra.mxu0 0.0
        %4566 = vmatprep.subr.mxu0 0.0
        %4567 = vmatpush1.msra.mxu0 0.0
        %4568 = vmatprep.subr.mxu0 0.0
        %4569 = vmatpush1.msra.mxu0 0.0
        %4570 = vmatprep.subr.mxu0 0.0
        %4571 = vmatpush1.msra.mxu0 0.0
        %4572 = vmatprep.subr.mxu0 0.0
        %4573 = vmatpush1.msra.mxu0 0.0
        %4574 = vmatprep.mubr.f32.mxu0 0.0
        %4575 = vmatmul.mubr.f32.gmra.mrb[0].mxu0 %v3654
        %v4576 = vpop.f32.mrb[0].mxu0
        %v4577 = vadd.f32 0.0, %v4576
        %v4578 = vpop.f32.mrb[0].mxu0
        %4579 = vmatprep.mubr.f32.mxu0 0.0
        %4580 = vmatmul.mubr.f32.gmra.mrb[0].mxu0 %v3655
        %v4581 = vpop.f32.mrb[0].mxu0
        %v4582 = vadd.f32 0.0, %v4581
        %v4583 = vpop.f32.mrb[0].mxu0
        %4584 = vmatprep.mubr.f32.mxu0 0.0
        %4585 = vmatmul.mubr.f32.gmra.mrb[0].mxu0 %v3656
        %v4586 = vpop.f32.mrb[0].mxu0
        %v4587 = vadd.f32 0.0, %v4586
        %v4588 = vpop.f32.mrb[0].mxu0
        %4589 = vmatprep.mubr.f32.mxu0 0.0
        %4590 = vmatmul.mubr.f32.gmra.mrb[0].mxu0 %v3657
        %v4591 = vpop.f32.mrb[0].mxu0
        %v4592 = vadd.f32 0.0, %v4591
        %v4593 = vpop.f32.mrb[0].mxu0
        %4594 = vdwg.mxu0
        %4595 = vmatprep.subr.mxu0 0.0
        %4596 = vmatpush1.msra.mxu0 %v3447
        %4597 = vmatprep.subr.mxu0 0.0
        %4598 = vmatpush1.msra.mxu0 %v3448
        %4599 = vmatprep.subr.mxu0 0.0
        %4600 = vmatpush1.msra.mxu0 %v3449
        %4601 = vmatprep.subr.mxu0 0.0
        %4602 = vmatpush1.msra.mxu0 %v3450
        %4603 = vmatprep.subr.mxu0 0.0
        %4604 = vmatpush1.msra.mxu0 %v3451
        %4605 = vmatprep.subr.mxu0 0.0
        %4606 = vmatpush1.msra.mxu0 %v3452
        %4607 = vmatprep.subr.mxu0 0.0
        %4608 = vmatpush1.msra.mxu0 %v3453
        %4609 = vmatprep.subr.mxu0 0.0
        %4610 = vmatpush1.msra.mxu0 %v3454
        %4611 = vmatprep.subr.mxu0 0.0
        %4612 = vmatpush1.msra.mxu0 %v3455
        %4613 = vmatprep.subr.mxu0 0.0
        %4614 = vmatpush1.msra.mxu0 %v3456
        %4615 = vmatprep.subr.mxu0 0.0
        %4616 = vmatpush1.msra.mxu0 %v3457
        %4617 = vmatprep.subr.mxu0 0.0
        %4618 = vmatpush1.msra.mxu0 %v3458
        %4619 = vmatprep.subr.mxu0 0.0
        %4620 = vmatpush1.msra.mxu0 %v3459
        %4621 = vmatprep.subr.mxu0 0.0
        %4622 = vmatpush1.msra.mxu0 %v3460
        %4623 = vmatprep.subr.mxu0 0.0
        %4624 = vmatpush1.msra.mxu0 %v3461
        %4625 = vmatprep.subr.mxu0 0.0
        %4626 = vmatpush1.msra.mxu0 %v3462
        %4627 = vmatprep.subr.mxu0 0.0
        %4628 = vmatpush1.msra.mxu0 0.0
        %4629 = vmatprep.subr.mxu0 0.0
        %4630 = vmatpush1.msra.mxu0 0.0
        %4631 = vmatprep.subr.mxu0 0.0
        %4632 = vmatpush1.msra.mxu0 0.0
        %4633 = vmatprep.subr.mxu0 0.0
        %4634 = vmatpush1.msra.mxu0 0.0
        %4635 = vmatprep.subr.mxu0 0.0
        %4636 = vmatpush1.msra.mxu0 0.0
        %4637 = vmatprep.subr.mxu0 0.0
        %4638 = vmatpush1.msra.mxu0 0.0
        %4639 = vmatprep.subr.mxu0 0.0
        %4640 = vmatpush1.msra.mxu0 0.0
        %4641 = vmatprep.subr.mxu0 0.0
        %4642 = vmatpush1.msra.mxu0 0.0
        %4643 = vmatprep.subr.mxu0 0.0
        %4644 = vmatpush1.msra.mxu0 0.0
        %4645 = vmatprep.subr.mxu0 0.0
        %4646 = vmatpush1.msra.mxu0 0.0
        %4647 = vmatprep.subr.mxu0 0.0
        %4648 = vmatpush1.msra.mxu0 0.0
        %4649 = vmatprep.subr.mxu0 0.0
        %4650 = vmatpush1.msra.mxu0 0.0
        %4651 = vmatprep.subr.mxu0 0.0
        %4652 = vmatpush1.msra.mxu0 0.0
        %4653 = vmatprep.subr.mxu0 0.0
        %4654 = vmatpush1.msra.mxu0 0.0
        %4655 = vmatprep.subr.mxu0 0.0
        %4656 = vmatpush1.msra.mxu0 0.0
        %4657 = vmatprep.subr.mxu0 0.0
        %4658 = vmatpush1.msra.mxu0 0.0
        %4659 = vmatprep.mubr.f32.mxu0 0.0
        %4660 = vmatmul.mubr.f32.gmra.mrb[0].mxu0 %v3463
        %v4661 = vpop.f32.mrb[0].mxu0
        %v4662 = vadd.f32 %v4577, %v4661
        %v4663 = vpop.f32.mrb[0].mxu0
        %4664 = vmatprep.mubr.f32.mxu0 0.0
        %4665 = vmatmul.mubr.f32.gmra.mrb[0].mxu0 %v3464
        %v4666 = vpop.f32.mrb[0].mxu0
        %v4667 = vadd.f32 %v4582, %v4666
        %v4668 = vpop.f32.mrb[0].mxu0
        %4669 = vmatprep.mubr.f32.mxu0 0.0
        %4670 = vmatmul.mubr.f32.gmra.mrb[0].mxu0 %v3465
        %v4671 = vpop.f32.mrb[0].mxu0
        %v4672 = vadd.f32 %v4587, %v4671
        %v4673 = vpop.f32.mrb[0].mxu0
        %4674 = vmatprep.mubr.f32.mxu0 0.0
        %4675 = vmatmul.mubr.f32.gmra.mrb[0].mxu0 %v3466
        %v4676 = vpop.f32.mrb[0].mxu0
        %v4677 = vadd.f32 %v4592, %v4676
        %v4678 = vpop.f32.mrb[0].mxu0
        %4679 = vdwg.mxu0
        %4680 = vmatprep.subr.mxu0 0.0
        %4681 = vmatpush1.msra.mxu0 %v3659
        %4682 = vmatprep.subr.mxu0 0.0
        %4683 = vmatpush1.msra.mxu0 %v3660
        %4684 = vmatprep.subr.mxu0 0.0
        %4685 = vmatpush1.msra.mxu0 %v3661
        %4686 = vmatprep.subr.mxu0 0.0
        %4687 = vmatpush1.msra.mxu0 %v3662
        %4688 = vmatprep.subr.mxu0 0.0
        %4689 = vmatpush1.msra.mxu0 %v3663
        %4690 = vmatprep.subr.mxu0 0.0
        %4691 = vmatpush1.msra.mxu0 %v3664
        %4692 = vmatprep.subr.mxu0 0.0
        %4693 = vmatpush1.msra.mxu0 %v3665
        %4694 = vmatprep.subr.mxu0 0.0
        %4695 = vmatpush1.msra.mxu0 %v3666
        %4696 = vmatprep.subr.mxu0 0.0
        %4697 = vmatpush1.msra.mxu0 %v3667
        %4698 = vmatprep.subr.mxu0 0.0
        %4699 = vmatpush1.msra.mxu0 %v3668
        %4700 = vmatprep.subr.mxu0 0.0
        %4701 = vmatpush1.msra.mxu0 %v3669
        %4702 = vmatprep.subr.mxu0 0.0
        %4703 = vmatpush1.msra.mxu0 %v3670
        %4704 = vmatprep.subr.mxu0 0.0
        %4705 = vmatpush1.msra.mxu0 %v3671
        %4706 = vmatprep.subr.mxu0 0.0
        %4707 = vmatpush1.msra.mxu0 %v3672
        %4708 = vmatprep.subr.mxu0 0.0
        %4709 = vmatpush1.msra.mxu0 %v3673
        %4710 = vmatprep.subr.mxu0 0.0
        %4711 = vmatpush1.msra.mxu0 %v3674
        %4712 = vmatprep.subr.mxu0 0.0
        %4713 = vmatpush1.msra.mxu0 0.0
        %4714 = vmatprep.subr.mxu0 0.0
        %4715 = vmatpush1.msra.mxu0 0.0
        %4716 = vmatprep.subr.mxu0 0.0
        %4717 = vmatpush1.msra.mxu0 0.0
        %4718 = vmatprep.subr.mxu0 0.0
        %4719 = vmatpush1.msra.mxu0 0.0
        %4720 = vmatprep.subr.mxu0 0.0
        %4721 = vmatpush1.msra.mxu0 0.0
        %4722 = vmatprep.subr.mxu0 0.0
        %4723 = vmatpush1.msra.mxu0 0.0
        %4724 = vmatprep.subr.mxu0 0.0
        %4725 = vmatpush1.msra.mxu0 0.0
        %4726 = vmatprep.subr.mxu0 0.0
        %4727 = vmatpush1.msra.mxu0 0.0
        %4728 = vmatprep.subr.mxu0 0.0
        %4729 = vmatpush1.msra.mxu0 0.0
        %4730 = vmatprep.subr.mxu0 0.0
        %4731 = vmatpush1.msra.mxu0 0.0
        %4732 = vmatprep.subr.mxu0 0.0
        %4733 = vmatpush1.msra.mxu0 0.0
        %4734 = vmatprep.subr.mxu0 0.0
        %4735 = vmatpush1.msra.mxu0 0.0
        %4736 = vmatprep.subr.mxu0 0.0
        %4737 = vmatpush1.msra.mxu0 0.0
        %4738 = vmatprep.subr.mxu0 0.0
        %4739 = vmatpush1.msra.mxu0 0.0
        %4740 = vmatprep.subr.mxu0 0.0
        %4741 = vmatpush1.msra.mxu0 0.0
        %4742 = vmatprep.subr.mxu0 0.0
        %4743 = vmatpush1.msra.mxu0 0.0
        %4744 = vmatprep.mubr.f32.mxu0 0.0
        %4745 = vmatmul.mubr.f32.gmra.mrb[0].mxu0 %v3764
        %v4746 = vpop.f32.mrb[0].mxu0
        %v4747 = vadd.f32 0.0, %v4746
        %v4748 = vpop.f32.mrb[0].mxu0
        %4749 = vmatprep.mubr.f32.mxu0 0.0
        %4750 = vmatmul.mubr.f32.gmra.mrb[0].mxu0 %v3765
        %v4751 = vpop.f32.mrb[0].mxu0
        %v4752 = vadd.f32 0.0, %v4751
        %v4753 = vpop.f32.mrb[0].mxu0
        %4754 = vmatprep.mubr.f32.mxu0 0.0
        %4755 = vmatmul.mubr.f32.gmra.mrb[0].mxu0 %v3766
        %v4756 = vpop.f32.mrb[0].mxu0
        %v4757 = vadd.f32 0.0, %v4756
        %v4758 = vpop.f32.mrb[0].mxu0
        %4759 = vmatprep.mubr.f32.mxu0 0.0
        %4760 = vmatmul.mubr.f32.gmra.mrb[0].mxu0 %v3767
        %v4761 = vpop.f32.mrb[0].mxu0
        %v4762 = vadd.f32 0.0, %v4761
        %v4763 = vpop.f32.mrb[0].mxu0
        %4764 = vdwg.mxu0
        %v4765 = vadd.f32 %v4662, %v4747
        %v4766 = vadd.f32 %v4667, %v4752
        %v4767 = vadd.f32 %v4672, %v4757
        %v4768 = vadd.f32 %v4677, %v4762
        %4769 = vmatprep.subr.mxu0 0.0
        %4770 = vmatpush1.msra.mxu0 %v3769
        %4771 = vmatprep.subr.mxu0 0.0
        %4772 = vmatpush1.msra.mxu0 %v3770
        %4773 = vmatprep.subr.mxu0 0.0
        %4774 = vmatpush1.msra.mxu0 %v3771
        %4775 = vmatprep.subr.mxu0 0.0
        %4776 = vmatpush1.msra.mxu0 %v3772
        %4777 = vmatprep.subr.mxu0 0.0
        %4778 = vmatpush1.msra.mxu0 %v3773
        %4779 = vmatprep.subr.mxu0 0.0
        %4780 = vmatpush1.msra.mxu0 %v3774
        %4781 = vmatprep.subr.mxu0 0.0
        %4782 = vmatpush1.msra.mxu0 %v3775
        %4783 = vmatprep.subr.mxu0 0.0
        %4784 = vmatpush1.msra.mxu0 %v3776
        %4785 = vmatprep.subr.mxu0 0.0
        %4786 = vmatpush1.msra.mxu0 %v3777
        %4787 = vmatprep.subr.mxu0 0.0
        %4788 = vmatpush1.msra.mxu0 %v3778
        %4789 = vmatprep.subr.mxu0 0.0
        %4790 = vmatpush1.msra.mxu0 %v3779
        %4791 = vmatprep.subr.mxu0 0.0
        %4792 = vmatpush1.msra.mxu0 %v3780
        %4793 = vmatprep.subr.mxu0 0.0
        %4794 = vmatpush1.msra.mxu0 %v3781
        %4795 = vmatprep.subr.mxu0 0.0
        %4796 = vmatpush1.msra.mxu0 %v3782
        %4797 = vmatprep.subr.mxu0 0.0
        %4798 = vmatpush1.msra.mxu0 %v3783
        %4799 = vmatprep.subr.mxu0 0.0
        %4800 = vmatpush1.msra.mxu0 %v3784
        %4801 = vmatprep.subr.mxu0 0.0
        %4802 = vmatpush1.msra.mxu0 0.0
        %4803 = vmatprep.subr.mxu0 0.0
        %4804 = vmatpush1.msra.mxu0 0.0
        %4805 = vmatprep.subr.mxu0 0.0
        %4806 = vmatpush1.msra.mxu0 0.0
        %4807 = vmatprep.subr.mxu0 0.0
        %4808 = vmatpush1.msra.mxu0 0.0
        %4809 = vmatprep.subr.mxu0 0.0
        %4810 = vmatpush1.msra.mxu0 0.0
        %4811 = vmatprep.subr.mxu0 0.0
        %4812 = vmatpush1.msra.mxu0 0.0
        %4813 = vmatprep.subr.mxu0 0.0
        %4814 = vmatpush1.msra.mxu0 0.0
        %4815 = vmatprep.subr.mxu0 0.0
        %4816 = vmatpush1.msra.mxu0 0.0
        %4817 = vmatprep.subr.mxu0 0.0
        %4818 = vmatpush1.msra.mxu0 0.0
        %4819 = vmatprep.subr.mxu0 0.0
        %4820 = vmatpush1.msra.mxu0 0.0
        %4821 = vmatprep.subr.mxu0 0.0
        %4822 = vmatpush1.msra.mxu0 0.0
        %4823 = vmatprep.subr.mxu0 0.0
        %4824 = vmatpush1.msra.mxu0 0.0
        %4825 = vmatprep.subr.mxu0 0.0
        %4826 = vmatpush1.msra.mxu0 0.0
        %4827 = vmatprep.subr.mxu0 0.0
        %4828 = vmatpush1.msra.mxu0 0.0
        %4829 = vmatprep.subr.mxu0 0.0
        %4830 = vmatpush1.msra.mxu0 0.0
        %4831 = vmatprep.subr.mxu0 0.0
        %4832 = vmatpush1.msra.mxu0 0.0
        %4833 = vmatprep.mubr.f32.mxu0 0.0
        %4834 = vmatmul.mubr.f32.gmra.mrb[0].mxu0 %v3874
        %v4835 = vpop.f32.mrb[0].mxu0
        %v4836 = vadd.f32 0.0, %v4835
        %v4837 = vpop.f32.mrb[0].mxu0
        %4838 = vmatprep.mubr.f32.mxu0 0.0
        %4839 = vmatmul.mubr.f32.gmra.mrb[0].mxu0 %v3875
        %v4840 = vpop.f32.mrb[0].mxu0
        %v4841 = vadd.f32 0.0, %v4840
        %v4842 = vpop.f32.mrb[0].mxu0
        %4843 = vmatprep.mubr.f32.mxu0 0.0
        %4844 = vmatmul.mubr.f32.gmra.mrb[0].mxu0 %v3876
        %v4845 = vpop.f32.mrb[0].mxu0
        %v4846 = vadd.f32 0.0, %v4845
        %v4847 = vpop.f32.mrb[0].mxu0
        %4848 = vmatprep.mubr.f32.mxu0 0.0
        %4849 = vmatmul.mubr.f32.gmra.mrb[0].mxu0 %v3877
        %v4850 = vpop.f32.mrb[0].mxu0
        %v4851 = vadd.f32 0.0, %v4850
        %v4852 = vpop.f32.mrb[0].mxu0
        %4853 = vdwg.mxu0
        %v4854 = vadd.f32 %v4765, %v4836
        %v4855 = vadd.f32 %v4766, %v4841
        %v4856 = vadd.f32 %v4767, %v4846
        %v4857 = vadd.f32 %v4768, %v4851
        %v4858 = vld [vmem:[%s3431 + $0x10] sm:$0xff]
        %v4859 = vld [vmem:[%s3431 + $0x18] sm:$0xff]
        %v4860 = vld [vmem:[%s3431 + $0x20] sm:$0xff]
        %v4861 = vld [vmem:[%s3431 + $0x28] sm:$0xff]
        %4862 = vmatprep.subr.mxu0 0.0
        %4863 = vmatpush1.msra.mxu0 %v3879
        %4864 = vmatprep.subr.mxu0 0.0
        %4865 = vmatpush1.msra.mxu0 %v3880
        %4866 = vmatprep.subr.mxu0 0.0
        %4867 = vmatpush1.msra.mxu0 %v3881
        %4868 = vmatprep.subr.mxu0 0.0
        %4869 = vmatpush1.msra.mxu0 %v3882
        %4870 = vmatprep.subr.mxu0 0.0
        %4871 = vmatpush1.msra.mxu0 %v3883
        %4872 = vmatprep.subr.mxu0 0.0
        %4873 = vmatpush1.msra.mxu0 %v3884
        %4874 = vmatprep.subr.mxu0 0.0
        %4875 = vmatpush1.msra.mxu0 %v3885
        %4876 = vmatprep.subr.mxu0 0.0
        %4877 = vmatpush1.msra.mxu0 %v3886
        %4878 = vmatprep.subr.mxu0 0.0
        %4879 = vmatpush1.msra.mxu0 %v3887
        %4880 = vmatprep.subr.mxu0 0.0
        %4881 = vmatpush1.msra.mxu0 %v3888
        %4882 = vmatprep.subr.mxu0 0.0
        %4883 = vmatpush1.msra.mxu0 %v3889
        %4884 = vmatprep.subr.mxu0 0.0
        %4885 = vmatpush1.msra.mxu0 %v3890
        %4886 = vmatprep.subr.mxu0 0.0
        %4887 = vmatpush1.msra.mxu0 %v3891
        %4888 = vmatprep.subr.mxu0 0.0
        %4889 = vmatpush1.msra.mxu0 %v3892
        %4890 = vmatprep.subr.mxu0 0.0
        %4891 = vmatpush1.msra.mxu0 %v3893
        %4892 = vmatprep.subr.mxu0 0.0
        %4893 = vmatpush1.msra.mxu0 %v3894
        %4894 = vmatprep.subr.mxu0 0.0
        %4895 = vmatpush1.msra.mxu0 0.0
        %4896 = vmatprep.subr.mxu0 0.0
        %4897 = vmatpush1.msra.mxu0 0.0
        %4898 = vmatprep.subr.mxu0 0.0
        %4899 = vmatpush1.msra.mxu0 0.0
        %4900 = vmatprep.subr.mxu0 0.0
        %4901 = vmatpush1.msra.mxu0 0.0
        %4902 = vmatprep.subr.mxu0 0.0
        %4903 = vmatpush1.msra.mxu0 0.0
        %4904 = vmatprep.subr.mxu0 0.0
        %4905 = vmatpush1.msra.mxu0 0.0
        %4906 = vmatprep.subr.mxu0 0.0
        %4907 = vmatpush1.msra.mxu0 0.0
        %4908 = vmatprep.subr.mxu0 0.0
        %4909 = vmatpush1.msra.mxu0 0.0
        %4910 = vmatprep.subr.mxu0 0.0
        %4911 = vmatpush1.msra.mxu0 0.0
        %4912 = vmatprep.subr.mxu0 0.0
        %4913 = vmatpush1.msra.mxu0 0.0
        %4914 = vmatprep.subr.mxu0 0.0
        %4915 = vmatpush1.msra.mxu0 0.0
        %4916 = vmatprep.subr.mxu0 0.0
        %4917 = vmatpush1.msra.mxu0 0.0
        %4918 = vmatprep.subr.mxu0 0.0
        %4919 = vmatpush1.msra.mxu0 0.0
        %4920 = vmatprep.subr.mxu0 0.0
        %4921 = vmatpush1.msra.mxu0 0.0
        %4922 = vmatprep.subr.mxu0 0.0
        %4923 = vmatpush1.msra.mxu0 0.0
        %4924 = vmatprep.subr.mxu0 0.0
        %4925 = vmatpush1.msra.mxu0 0.0
        %4926 = vmatprep.mubr.f32.mxu0 0.0
        %4927 = vmatmul.mubr.f32.gmra.mrb[0].mxu0 %v4858
        %v4928 = vpop.f32.mrb[0].mxu0
        %v4929 = vadd.f32 0.0, %v4928
        %v4930 = vpop.f32.mrb[0].mxu0
        %4931 = vmatprep.mubr.f32.mxu0 0.0
        %4932 = vmatmul.mubr.f32.gmra.mrb[0].mxu0 %v4859
        %v4933 = vpop.f32.mrb[0].mxu0
        %v4934 = vadd.f32 0.0, %v4933
        %v4935 = vpop.f32.mrb[0].mxu0
        %4936 = vmatprep.mubr.f32.mxu0 0.0
        %4937 = vmatmul.mubr.f32.gmra.mrb[0].mxu0 %v4860
        %v4938 = vpop.f32.mrb[0].mxu0
        %v4939 = vadd.f32 0.0, %v4938
        %v4940 = vpop.f32.mrb[0].mxu0
        %4941 = vmatprep.mubr.f32.mxu0 0.0
        %4942 = vmatmul.mubr.f32.gmra.mrb[0].mxu0 %v4861
        %v4943 = vpop.f32.mrb[0].mxu0
        %v4944 = vadd.f32 0.0, %v4943
        %v4945 = vpop.f32.mrb[0].mxu0
        %4946 = vdwg.mxu0
        %v4947 = vadd.f32 %v4854, %v4929
        %v4948 = vadd.f32 %v4855, %v4934
        %v4949 = vadd.f32 %v4856, %v4939
        %v4950 = vadd.f32 %v4857, %v4944
        %v4951 = vmax.f32 %v4506, %v4947
        %v4952 = vmax.f32 %v4507, %v4948
        %v4953 = vmax.f32 %v4508, %v4949
        %v4954 = vmax.f32 %v4509, %v4950
        %4955 = vmatprep.subr.mxu0 0.0
        %4956 = vmatpush1.msra.mxu0 %v4002
        %4957 = vmatprep.subr.mxu0 0.0
        %4958 = vmatpush1.msra.mxu0 %v4003
        %4959 = vmatprep.subr.mxu0 0.0
        %4960 = vmatpush1.msra.mxu0 %v4004
        %4961 = vmatprep.subr.mxu0 0.0
        %4962 = vmatpush1.msra.mxu0 %v4005
        %4963 = vmatprep.subr.mxu0 0.0
        %4964 = vmatpush1.msra.mxu0 %v4006
        %4965 = vmatprep.subr.mxu0 0.0
        %4966 = vmatpush1.msra.mxu0 %v4007
        %4967 = vmatprep.subr.mxu0 0.0
        %4968 = vmatpush1.msra.mxu0 %v4008
        %4969 = vmatprep.subr.mxu0 0.0
        %4970 = vmatpush1.msra.mxu0 %v4009
        %4971 = vmatprep.subr.mxu0 0.0
        %4972 = vmatpush1.msra.mxu0 %v4010
        %4973 = vmatprep.subr.mxu0 0.0
        %4974 = vmatpush1.msra.mxu0 %v4011
        %4975 = vmatprep.subr.mxu0 0.0
        %4976 = vmatpush1.msra.mxu0 %v4012
        %4977 = vmatprep.subr.mxu0 0.0
        %4978 = vmatpush1.msra.mxu0 %v4013
        %4979 = vmatprep.subr.mxu0 0.0
        %4980 = vmatpush1.msra.mxu0 %v4014
        %4981 = vmatprep.subr.mxu0 0.0
        %4982 = vmatpush1.msra.mxu0 %v4015
        %4983 = vmatprep.subr.mxu0 0.0
        %4984 = vmatpush1.msra.mxu0 %v4016
        %4985 = vmatprep.subr.mxu0 0.0
        %4986 = vmatpush1.msra.mxu0 %v4017
        %4987 = vmatprep.subr.mxu0 0.0
        %4988 = vmatpush1.msra.mxu0 0.0
        %4989 = vmatprep.subr.mxu0 0.0
        %4990 = vmatpush1.msra.mxu0 0.0
        %4991 = vmatprep.subr.mxu0 0.0
        %4992 = vmatpush1.msra.mxu0 0.0
        %4993 = vmatprep.subr.mxu0 0.0
        %4994 = vmatpush1.msra.mxu0 0.0
        %4995 = vmatprep.subr.mxu0 0.0
        %4996 = vmatpush1.msra.mxu0 0.0
        %4997 = vmatprep.subr.mxu0 0.0
        %4998 = vmatpush1.msra.mxu0 0.0
        %4999 = vmatprep.subr.mxu0 0.0
        %5000 = vmatpush1.msra.mxu0 0.0
        %5001 = vmatprep.subr.mxu0 0.0
        %5002 = vmatpush1.msra.mxu0 0.0
        %5003 = vmatprep.subr.mxu0 0.0
        %5004 = vmatpush1.msra.mxu0 0.0
        %5005 = vmatprep.subr.mxu0 0.0
        %5006 = vmatpush1.msra.mxu0 0.0
        %5007 = vmatprep.subr.mxu0 0.0
        %5008 = vmatpush1.msra.mxu0 0.0
        %5009 = vmatprep.subr.mxu0 0.0
        %5010 = vmatpush1.msra.mxu0 0.0
        %5011 = vmatprep.subr.mxu0 0.0
        %5012 = vmatpush1.msra.mxu0 0.0
        %5013 = vmatprep.subr.mxu0 0.0
        %5014 = vmatpush1.msra.mxu0 0.0
        %5015 = vmatprep.subr.mxu0 0.0
        %5016 = vmatpush1.msra.mxu0 0.0
        %5017 = vmatprep.subr.mxu0 0.0
        %5018 = vmatpush1.msra.mxu0 0.0
        %5019 = vmatprep.mubr.f32.mxu0 0.0
        %5020 = vmatmul.mubr.f32.gmra.mrb[0].mxu0 %v3654
        %v5021 = vpop.f32.mrb[0].mxu0
        %v5022 = vadd.f32 0.0, %v5021
        %v5023 = vpop.f32.mrb[0].mxu0
        %5024 = vmatprep.mubr.f32.mxu0 0.0
        %5025 = vmatmul.mubr.f32.gmra.mrb[0].mxu0 %v3655
        %v5026 = vpop.f32.mrb[0].mxu0
        %v5027 = vadd.f32 0.0, %v5026
        %v5028 = vpop.f32.mrb[0].mxu0
        %5029 = vmatprep.mubr.f32.mxu0 0.0
        %5030 = vmatmul.mubr.f32.gmra.mrb[0].mxu0 %v3656
        %v5031 = vpop.f32.mrb[0].mxu0
        %v5032 = vadd.f32 0.0, %v5031
        %v5033 = vpop.f32.mrb[0].mxu0
        %5034 = vmatprep.mubr.f32.mxu0 0.0
        %5035 = vmatmul.mubr.f32.gmra.mrb[0].mxu0 %v3657
        %v5036 = vpop.f32.mrb[0].mxu0
        %v5037 = vadd.f32 0.0, %v5036
        %v5038 = vpop.f32.mrb[0].mxu0
        %5039 = vdwg.mxu0
        %5040 = vmatprep.subr.mxu0 0.0
        %5041 = vmatpush1.msra.mxu0 %v3985
        %5042 = vmatprep.subr.mxu0 0.0
        %5043 = vmatpush1.msra.mxu0 %v3986
        %5044 = vmatprep.subr.mxu0 0.0
        %5045 = vmatpush1.msra.mxu0 %v3987
        %5046 = vmatprep.subr.mxu0 0.0
        %5047 = vmatpush1.msra.mxu0 %v3988
        %5048 = vmatprep.subr.mxu0 0.0
        %5049 = vmatpush1.msra.mxu0 %v3989
        %5050 = vmatprep.subr.mxu0 0.0
        %5051 = vmatpush1.msra.mxu0 %v3990
        %5052 = vmatprep.subr.mxu0 0.0
        %5053 = vmatpush1.msra.mxu0 %v3991
        %5054 = vmatprep.subr.mxu0 0.0
        %5055 = vmatpush1.msra.mxu0 %v3992
        %5056 = vmatprep.subr.mxu0 0.0
        %5057 = vmatpush1.msra.mxu0 %v3993
        %5058 = vmatprep.subr.mxu0 0.0
        %5059 = vmatpush1.msra.mxu0 %v3994
        %5060 = vmatprep.subr.mxu0 0.0
        %5061 = vmatpush1.msra.mxu0 %v3995
        %5062 = vmatprep.subr.mxu0 0.0
        %5063 = vmatpush1.msra.mxu0 %v3996
        %5064 = vmatprep.subr.mxu0 0.0
        %5065 = vmatpush1.msra.mxu0 %v3997
        %5066 = vmatprep.subr.mxu0 0.0
        %5067 = vmatpush1.msra.mxu0 %v3998
        %5068 = vmatprep.subr.mxu0 0.0
        %5069 = vmatpush1.msra.mxu0 %v3999
        %5070 = vmatprep.subr.mxu0 0.0
        %5071 = vmatpush1.msra.mxu0 %v4000
        %5072 = vmatprep.subr.mxu0 0.0
        %5073 = vmatpush1.msra.mxu0 0.0
        %5074 = vmatprep.subr.mxu0 0.0
        %5075 = vmatpush1.msra.mxu0 0.0
        %5076 = vmatprep.subr.mxu0 0.0
        %5077 = vmatpush1.msra.mxu0 0.0
        %5078 = vmatprep.subr.mxu0 0.0
        %5079 = vmatpush1.msra.mxu0 0.0
        %5080 = vmatprep.subr.mxu0 0.0
        %5081 = vmatpush1.msra.mxu0 0.0
        %5082 = vmatprep.subr.mxu0 0.0
        %5083 = vmatpush1.msra.mxu0 0.0
        %5084 = vmatprep.subr.mxu0 0.0
        %5085 = vmatpush1.msra.mxu0 0.0
        %5086 = vmatprep.subr.mxu0 0.0
        %5087 = vmatpush1.msra.mxu0 0.0
        %5088 = vmatprep.subr.mxu0 0.0
        %5089 = vmatpush1.msra.mxu0 0.0
        %5090 = vmatprep.subr.mxu0 0.0
        %5091 = vmatpush1.msra.mxu0 0.0
        %5092 = vmatprep.subr.mxu0 0.0
        %5093 = vmatpush1.msra.mxu0 0.0
        %5094 = vmatprep.subr.mxu0 0.0
        %5095 = vmatpush1.msra.mxu0 0.0
        %5096 = vmatprep.subr.mxu0 0.0
        %5097 = vmatpush1.msra.mxu0 0.0
        %5098 = vmatprep.subr.mxu0 0.0
        %5099 = vmatpush1.msra.mxu0 0.0
        %5100 = vmatprep.subr.mxu0 0.0
        %5101 = vmatpush1.msra.mxu0 0.0
        %5102 = vmatprep.subr.mxu0 0.0
        %5103 = vmatpush1.msra.mxu0 0.0
        %5104 = vmatprep.mubr.f32.mxu0 0.0
        %5105 = vmatmul.mubr.f32.gmra.mrb[0].mxu0 %v3463
        %v5106 = vpop.f32.mrb[0].mxu0
        %v5107 = vadd.f32 %v5022, %v5106
        %v5108 = vpop.f32.mrb[0].mxu0
        %5109 = vmatprep.mubr.f32.mxu0 0.0
        %5110 = vmatmul.mubr.f32.gmra.mrb[0].mxu0 %v3464
        %v5111 = vpop.f32.mrb[0].mxu0
        %v5112 = vadd.f32 %v5027, %v5111
        %v5113 = vpop.f32.mrb[0].mxu0
        %5114 = vmatprep.mubr.f32.mxu0 0.0
        %5115 = vmatmul.mubr.f32.gmra.mrb[0].mxu0 %v3465
        %v5116 = vpop.f32.mrb[0].mxu0
        %v5117 = vadd.f32 %v5032, %v5116
        %v5118 = vpop.f32.mrb[0].mxu0
        %5119 = vmatprep.mubr.f32.mxu0 0.0
        %5120 = vmatmul.mubr.f32.gmra.mrb[0].mxu0 %v3466
        %v5121 = vpop.f32.mrb[0].mxu0
        %v5122 = vadd.f32 %v5037, %v5121
        %v5123 = vpop.f32.mrb[0].mxu0
        %5124 = vdwg.mxu0
        %5125 = vmatprep.subr.mxu0 0.0
        %5126 = vmatpush1.msra.mxu0 %v4189
        %5127 = vmatprep.subr.mxu0 0.0
        %5128 = vmatpush1.msra.mxu0 %v4190
        %5129 = vmatprep.subr.mxu0 0.0
        %5130 = vmatpush1.msra.mxu0 %v4191
        %5131 = vmatprep.subr.mxu0 0.0
        %5132 = vmatpush1.msra.mxu0 %v4192
        %5133 = vmatprep.subr.mxu0 0.0
        %5134 = vmatpush1.msra.mxu0 %v4193
        %5135 = vmatprep.subr.mxu0 0.0
        %5136 = vmatpush1.msra.mxu0 %v4194
        %5137 = vmatprep.subr.mxu0 0.0
        %5138 = vmatpush1.msra.mxu0 %v4195
        %5139 = vmatprep.subr.mxu0 0.0
        %5140 = vmatpush1.msra.mxu0 %v4196
        %5141 = vmatprep.subr.mxu0 0.0
        %5142 = vmatpush1.msra.mxu0 %v4197
        %5143 = vmatprep.subr.mxu0 0.0
        %5144 = vmatpush1.msra.mxu0 %v4198
        %5145 = vmatprep.subr.mxu0 0.0
        %5146 = vmatpush1.msra.mxu0 %v4199
        %5147 = vmatprep.subr.mxu0 0.0
        %5148 = vmatpush1.msra.mxu0 %v4200
        %5149 = vmatprep.subr.mxu0 0.0
        %5150 = vmatpush1.msra.mxu0 %v4201
        %5151 = vmatprep.subr.mxu0 0.0
        %5152 = vmatpush1.msra.mxu0 %v4202
        %5153 = vmatprep.subr.mxu0 0.0
        %5154 = vmatpush1.msra.mxu0 %v4203
        %5155 = vmatprep.subr.mxu0 0.0
        %5156 = vmatpush1.msra.mxu0 %v4204
        %5157 = vmatprep.subr.mxu0 0.0
        %5158 = vmatpush1.msra.mxu0 0.0
        %5159 = vmatprep.subr.mxu0 0.0
        %5160 = vmatpush1.msra.mxu0 0.0
        %5161 = vmatprep.subr.mxu0 0.0
        %5162 = vmatpush1.msra.mxu0 0.0
        %5163 = vmatprep.subr.mxu0 0.0
        %5164 = vmatpush1.msra.mxu0 0.0
        %5165 = vmatprep.subr.mxu0 0.0
        %5166 = vmatpush1.msra.mxu0 0.0
        %5167 = vmatprep.subr.mxu0 0.0
        %5168 = vmatpush1.msra.mxu0 0.0
        %5169 = vmatprep.subr.mxu0 0.0
        %5170 = vmatpush1.msra.mxu0 0.0
        %5171 = vmatprep.subr.mxu0 0.0
        %5172 = vmatpush1.msra.mxu0 0.0
        %5173 = vmatprep.subr.mxu0 0.0
        %5174 = vmatpush1.msra.mxu0 0.0
        %5175 = vmatprep.subr.mxu0 0.0
        %5176 = vmatpush1.msra.mxu0 0.0
        %5177 = vmatprep.subr.mxu0 0.0
        %5178 = vmatpush1.msra.mxu0 0.0
        %5179 = vmatprep.subr.mxu0 0.0
        %5180 = vmatpush1.msra.mxu0 0.0
        %5181 = vmatprep.subr.mxu0 0.0
        %5182 = vmatpush1.msra.mxu0 0.0
        %5183 = vmatprep.subr.mxu0 0.0
        %5184 = vmatpush1.msra.mxu0 0.0
        %5185 = vmatprep.subr.mxu0 0.0
        %5186 = vmatpush1.msra.mxu0 0.0
        %5187 = vmatprep.subr.mxu0 0.0
        %5188 = vmatpush1.msra.mxu0 0.0
        %5189 = vmatprep.mubr.f32.mxu0 0.0
        %5190 = vmatmul.mubr.f32.gmra.mrb[0].mxu0 %v3764
        %v5191 = vpop.f32.mrb[0].mxu0
        %v5192 = vadd.f32 0.0, %v5191
        %v5193 = vpop.f32.mrb[0].mxu0
        %5194 = vmatprep.mubr.f32.mxu0 0.0
        %5195 = vmatmul.mubr.f32.gmra.mrb[0].mxu0 %v3765
        %v5196 = vpop.f32.mrb[0].mxu0
        %v5197 = vadd.f32 0.0, %v5196
        %v5198 = vpop.f32.mrb[0].mxu0
        %5199 = vmatprep.mubr.f32.mxu0 0.0
        %5200 = vmatmul.mubr.f32.gmra.mrb[0].mxu0 %v3766
        %v5201 = vpop.f32.mrb[0].mxu0
        %v5202 = vadd.f32 0.0, %v5201
        %v5203 = vpop.f32.mrb[0].mxu0
        %5204 = vmatprep.mubr.f32.mxu0 0.0
        %5205 = vmatmul.mubr.f32.gmra.mrb[0].mxu0 %v3767
        %v5206 = vpop.f32.mrb[0].mxu0
        %v5207 = vadd.f32 0.0, %v5206
        %v5208 = vpop.f32.mrb[0].mxu0
        %5209 = vdwg.mxu0
        %v5210 = vadd.f32 %v5107, %v5192
        %v5211 = vadd.f32 %v5112, %v5197
        %v5212 = vadd.f32 %v5117, %v5202
        %v5213 = vadd.f32 %v5122, %v5207
        %5214 = vmatprep.subr.mxu0 0.0
        %5215 = vmatpush1.msra.mxu0 %v4295
        %5216 = vmatprep.subr.mxu0 0.0
        %5217 = vmatpush1.msra.mxu0 %v4296
        %5218 = vmatprep.subr.mxu0 0.0
        %5219 = vmatpush1.msra.mxu0 %v4297
        %5220 = vmatprep.subr.mxu0 0.0
        %5221 = vmatpush1.msra.mxu0 %v4298
        %5222 = vmatprep.subr.mxu0 0.0
        %5223 = vmatpush1.msra.mxu0 %v4299
        %5224 = vmatprep.subr.mxu0 0.0
        %5225 = vmatpush1.msra.mxu0 %v4300
        %5226 = vmatprep.subr.mxu0 0.0
        %5227 = vmatpush1.msra.mxu0 %v4301
        %5228 = vmatprep.subr.mxu0 0.0
        %5229 = vmatpush1.msra.mxu0 %v4302
        %5230 = vmatprep.subr.mxu0 0.0
        %5231 = vmatpush1.msra.mxu0 %v4303
        %5232 = vmatprep.subr.mxu0 0.0
        %5233 = vmatpush1.msra.mxu0 %v4304
        %5234 = vmatprep.subr.mxu0 0.0
        %5235 = vmatpush1.msra.mxu0 %v4305
        %5236 = vmatprep.subr.mxu0 0.0
        %5237 = vmatpush1.msra.mxu0 %v4306
        %5238 = vmatprep.subr.mxu0 0.0
        %5239 = vmatpush1.msra.mxu0 %v4307
        %5240 = vmatprep.subr.mxu0 0.0
        %5241 = vmatpush1.msra.mxu0 %v4308
        %5242 = vmatprep.subr.mxu0 0.0
        %5243 = vmatpush1.msra.mxu0 %v4309
        %5244 = vmatprep.subr.mxu0 0.0
        %5245 = vmatpush1.msra.mxu0 %v4310
        %5246 = vmatprep.subr.mxu0 0.0
        %5247 = vmatpush1.msra.mxu0 0.0
        %5248 = vmatprep.subr.mxu0 0.0
        %5249 = vmatpush1.msra.mxu0 0.0
        %5250 = vmatprep.subr.mxu0 0.0
        %5251 = vmatpush1.msra.mxu0 0.0
        %5252 = vmatprep.subr.mxu0 0.0
        %5253 = vmatpush1.msra.mxu0 0.0
        %5254 = vmatprep.subr.mxu0 0.0
        %5255 = vmatpush1.msra.mxu0 0.0
        %5256 = vmatprep.subr.mxu0 0.0
        %5257 = vmatpush1.msra.mxu0 0.0
        %5258 = vmatprep.subr.mxu0 0.0
        %5259 = vmatpush1.msra.mxu0 0.0
        %5260 = vmatprep.subr.mxu0 0.0
        %5261 = vmatpush1.msra.mxu0 0.0
        %5262 = vmatprep.subr.mxu0 0.0
        %5263 = vmatpush1.msra.mxu0 0.0
        %5264 = vmatprep.subr.mxu0 0.0
        %5265 = vmatpush1.msra.mxu0 0.0
        %5266 = vmatprep.subr.mxu0 0.0
        %5267 = vmatpush1.msra.mxu0 0.0
        %5268 = vmatprep.subr.mxu0 0.0
        %5269 = vmatpush1.msra.mxu0 0.0
        %5270 = vmatprep.subr.mxu0 0.0
        %5271 = vmatpush1.msra.mxu0 0.0
        %5272 = vmatprep.subr.mxu0 0.0
        %5273 = vmatpush1.msra.mxu0 0.0
        %5274 = vmatprep.subr.mxu0 0.0
        %5275 = vmatpush1.msra.mxu0 0.0
        %5276 = vmatprep.subr.mxu0 0.0
        %5277 = vmatpush1.msra.mxu0 0.0
        %5278 = vmatprep.mubr.f32.mxu0 0.0
        %5279 = vmatmul.mubr.f32.gmra.mrb[0].mxu0 %v3874
        %v5280 = vpop.f32.mrb[0].mxu0
        %v5281 = vadd.f32 0.0, %v5280
        %v5282 = vpop.f32.mrb[0].mxu0
        %5283 = vmatprep.mubr.f32.mxu0 0.0
        %5284 = vmatmul.mubr.f32.gmra.mrb[0].mxu0 %v3875
        %v5285 = vpop.f32.mrb[0].mxu0
        %v5286 = vadd.f32 0.0, %v5285
        %v5287 = vpop.f32.mrb[0].mxu0
        %5288 = vmatprep.mubr.f32.mxu0 0.0
        %5289 = vmatmul.mubr.f32.gmra.mrb[0].mxu0 %v3876
        %v5290 = vpop.f32.mrb[0].mxu0
        %v5291 = vadd.f32 0.0, %v5290
        %v5292 = vpop.f32.mrb[0].mxu0
        %5293 = vmatprep.mubr.f32.mxu0 0.0
        %5294 = vmatmul.mubr.f32.gmra.mrb[0].mxu0 %v3877
        %v5295 = vpop.f32.mrb[0].mxu0
        %v5296 = vadd.f32 0.0, %v5295
        %v5297 = vpop.f32.mrb[0].mxu0
        %5298 = vdwg.mxu0
        %v5299 = vadd.f32 %v5210, %v5281
        %v5300 = vadd.f32 %v5211, %v5286
        %v5301 = vadd.f32 %v5212, %v5291
        %v5302 = vadd.f32 %v5213, %v5296
        %5303 = vmatprep.subr.mxu0 0.0
        %5304 = vmatpush1.msra.mxu0 %v4401
        %5305 = vmatprep.subr.mxu0 0.0
        %5306 = vmatpush1.msra.mxu0 %v4402
        %5307 = vmatprep.subr.mxu0 0.0
        %5308 = vmatpush1.msra.mxu0 %v4403
        %5309 = vmatprep.subr.mxu0 0.0
        %5310 = vmatpush1.msra.mxu0 %v4404
        %5311 = vmatprep.subr.mxu0 0.0
        %5312 = vmatpush1.msra.mxu0 %v4405
        %5313 = vmatprep.subr.mxu0 0.0
        %5314 = vmatpush1.msra.mxu0 %v4406
        %5315 = vmatprep.subr.mxu0 0.0
        %5316 = vmatpush1.msra.mxu0 %v4407
        %5317 = vmatprep.subr.mxu0 0.0
        %5318 = vmatpush1.msra.mxu0 %v4408
        %5319 = vmatprep.subr.mxu0 0.0
        %5320 = vmatpush1.msra.mxu0 %v4409
        %5321 = vmatprep.subr.mxu0 0.0
        %5322 = vmatpush1.msra.mxu0 %v4410
        %5323 = vmatprep.subr.mxu0 0.0
        %5324 = vmatpush1.msra.mxu0 %v4411
        %5325 = vmatprep.subr.mxu0 0.0
        %5326 = vmatpush1.msra.mxu0 %v4412
        %5327 = vmatprep.subr.mxu0 0.0
        %5328 = vmatpush1.msra.mxu0 %v4413
        %5329 = vmatprep.subr.mxu0 0.0
        %5330 = vmatpush1.msra.mxu0 %v4414
        %5331 = vmatprep.subr.mxu0 0.0
        %5332 = vmatpush1.msra.mxu0 %v4415
        %5333 = vmatprep.subr.mxu0 0.0
        %5334 = vmatpush1.msra.mxu0 %v4416
        %5335 = vmatprep.subr.mxu0 0.0
        %5336 = vmatpush1.msra.mxu0 0.0
        %5337 = vmatprep.subr.mxu0 0.0
        %5338 = vmatpush1.msra.mxu0 0.0
        %5339 = vmatprep.subr.mxu0 0.0
        %5340 = vmatpush1.msra.mxu0 0.0
        %5341 = vmatprep.subr.mxu0 0.0
        %5342 = vmatpush1.msra.mxu0 0.0
        %5343 = vmatprep.subr.mxu0 0.0
        %5344 = vmatpush1.msra.mxu0 0.0
        %5345 = vmatprep.subr.mxu0 0.0
        %5346 = vmatpush1.msra.mxu0 0.0
        %5347 = vmatprep.subr.mxu0 0.0
        %5348 = vmatpush1.msra.mxu0 0.0
        %5349 = vmatprep.subr.mxu0 0.0
        %5350 = vmatpush1.msra.mxu0 0.0
        %5351 = vmatprep.subr.mxu0 0.0
        %5352 = vmatpush1.msra.mxu0 0.0
        %5353 = vmatprep.subr.mxu0 0.0
        %5354 = vmatpush1.msra.mxu0 0.0
        %5355 = vmatprep.subr.mxu0 0.0
        %5356 = vmatpush1.msra.mxu0 0.0
        %5357 = vmatprep.subr.mxu0 0.0
        %5358 = vmatpush1.msra.mxu0 0.0
        %5359 = vmatprep.subr.mxu0 0.0
        %5360 = vmatpush1.msra.mxu0 0.0
        %5361 = vmatprep.subr.mxu0 0.0
        %5362 = vmatpush1.msra.mxu0 0.0
        %5363 = vmatprep.subr.mxu0 0.0
        %5364 = vmatpush1.msra.mxu0 0.0
        %5365 = vmatprep.subr.mxu0 0.0
        %5366 = vmatpush1.msra.mxu0 0.0
        %5367 = vmatprep.mubr.f32.mxu0 0.0
        %5368 = vmatmul.mubr.f32.gmra.mrb[0].mxu0 %v4858
        %v5369 = vpop.f32.mrb[0].mxu0
        %v5370 = vadd.f32 0.0, %v5369
        %v5371 = vpop.f32.mrb[0].mxu0
        %5372 = vmatprep.mubr.f32.mxu0 0.0
        %5373 = vmatmul.mubr.f32.gmra.mrb[0].mxu0 %v4859
        %v5374 = vpop.f32.mrb[0].mxu0
        %v5375 = vadd.f32 0.0, %v5374
        %v5376 = vpop.f32.mrb[0].mxu0
        %5377 = vmatprep.mubr.f32.mxu0 0.0
        %5378 = vmatmul.mubr.f32.gmra.mrb[0].mxu0 %v4860
        %v5379 = vpop.f32.mrb[0].mxu0
        %v5380 = vadd.f32 0.0, %v5379
        %v5381 = vpop.f32.mrb[0].mxu0
        %5382 = vmatprep.mubr.f32.mxu0 0.0
        %5383 = vmatmul.mubr.f32.gmra.mrb[0].mxu0 %v4861
        %v5384 = vpop.f32.mrb[0].mxu0
        %v5385 = vadd.f32 0.0, %v5384
        %v5386 = vpop.f32.mrb[0].mxu0
        %5387 = vdwg.mxu0
        %v5388 = vadd.f32 %v5299, %v5370
        %v5389 = vadd.f32 %v5300, %v5375
        %v5390 = vadd.f32 %v5301, %v5380
        %v5391 = vadd.f32 %v5302, %v5385
        %v5392 = vmax.f32 %v4951, %v5388
        %v5393 = vmax.f32 %v4952, %v5389
        %v5394 = vmax.f32 %v4953, %v5390
        %v5395 = vmax.f32 %v4954, %v5391
        %v5396 = vld [vmem:[%s4] sm:$0x1]
        %v5398 = vlaneseq
        %v5399 = vshrl.u32 %v5398, 7
        %v5400 = vsub.s32 0, %v5399
        %v5401 = vrot.slane %v5396, %v5400
        %v5403 = vadd.f32 %v5392, %v5401
        %v5404 = vadd.f32 %v5393, %v5401
        %v5405 = vadd.f32 %v5394, %v5401
        %v5406 = vadd.f32 %v5395, %v5401
        %v5407 = vmax.f32 %v5403, 0.0
        %v5408 = vmax.f32 %v5404, 0.0
        %v5409 = vmax.f32 %v5405, 0.0
        %v5410 = vmax.f32 %v5406, 0.0
        %v5411 = vld [vmem:[%s5] sm:$0xff]
        %v5412 = vld [vmem:[%s5 + $0x8] sm:$0xff]
        %v5413 = vld [vmem:[%s5 + $0x10] sm:$0xff]
        %v5414 = vld [vmem:[%s5 + $0x18] sm:$0xff]
        %v5415 = vld [vmem:[%s5 + $0x20] sm:$0xff]
        %v5416 = vld [vmem:[%s5 + $0x28] sm:$0xff]
        %v5417 = vld [vmem:[%s5 + $0x30] sm:$0xff]
        %v5418 = vld [vmem:[%s5 + $0x38] sm:$0xff]
        %v5419 = vld [vmem:[%s5 + $0x40] sm:$0xff]
        %v5420 = vld [vmem:[%s5 + $0x48] sm:$0xff]
        %v5421 = vld [vmem:[%s5 + $0x50] sm:$0xff]
        %v5422 = vld [vmem:[%s5 + $0x58] sm:$0xff]
        %v5423 = vld [vmem:[%s5 + $0x60] sm:$0xff]
        %v5424 = vld [vmem:[%s5 + $0x68] sm:$0xff]
        %v5425 = vld [vmem:[%s5 + $0x70] sm:$0xff]
        %v5426 = vld [vmem:[%s5 + $0x78] sm:$0xff]
        %s5427 = scalar_lea.vmem %s5, 128
        %v5428 = vld [vmem:[%s5427] sm:$0xff]
        %v5429 = vld [vmem:[%s5427 + $0x8] sm:$0xff]
        %v5430 = vld [vmem:[%s5427 + $0x10] sm:$0xff]
        %v5431 = vld [vmem:[%s5427 + $0x18] sm:$0xff]
        %v5432 = vld [vmem:[%s5427 + $0x20] sm:$0xff]
        %v5433 = vld [vmem:[%s5427 + $0x28] sm:$0xff]
        %v5434 = vld [vmem:[%s5427 + $0x30] sm:$0xff]
        %v5435 = vld [vmem:[%s5427 + $0x38] sm:$0xff]
        %v5436 = vld [vmem:[%s5427 + $0x40] sm:$0xff]
        %v5437 = vld [vmem:[%s5427 + $0x48] sm:$0xff]
        %v5438 = vld [vmem:[%s5427 + $0x50] sm:$0xff]
        %v5439 = vld [vmem:[%s5427 + $0x58] sm:$0xff]
        %v5440 = vld [vmem:[%s5427 + $0x60] sm:$0xff]
        %v5441 = vld [vmem:[%s5427 + $0x68] sm:$0xff]
        %v5442 = vld [vmem:[%s5427 + $0x70] sm:$0xff]
        %v5443 = vld [vmem:[%s5427 + $0x78] sm:$0xff]
        %5444 = vmatprep.subr.mxu0 0.0
        %5445 = vmatpush1.msra.mxu0 %v5428
        %5446 = vmatprep.subr.mxu0 0.0
        %5447 = vmatpush1.msra.mxu0 %v5429
        %5448 = vmatprep.subr.mxu0 0.0
        %5449 = vmatpush1.msra.mxu0 %v5430
        %5450 = vmatprep.subr.mxu0 0.0
        %5451 = vmatpush1.msra.mxu0 %v5431
        %5452 = vmatprep.subr.mxu0 0.0
        %5453 = vmatpush1.msra.mxu0 %v5432
        %5454 = vmatprep.subr.mxu0 0.0
        %5455 = vmatpush1.msra.mxu0 %v5433
        %5456 = vmatprep.subr.mxu0 0.0
        %5457 = vmatpush1.msra.mxu0 %v5434
        %5458 = vmatprep.subr.mxu0 0.0
        %5459 = vmatpush1.msra.mxu0 %v5435
        %5460 = vmatprep.subr.mxu0 0.0
        %5461 = vmatpush1.msra.mxu0 %v5436
        %5462 = vmatprep.subr.mxu0 0.0
        %5463 = vmatpush1.msra.mxu0 %v5437
        %5464 = vmatprep.subr.mxu0 0.0
        %5465 = vmatpush1.msra.mxu0 %v5438
        %5466 = vmatprep.subr.mxu0 0.0
        %5467 = vmatpush1.msra.mxu0 %v5439
        %5468 = vmatprep.subr.mxu0 0.0
        %5469 = vmatpush1.msra.mxu0 %v5440
        %5470 = vmatprep.subr.mxu0 0.0
        %5471 = vmatpush1.msra.mxu0 %v5441
        %5472 = vmatprep.subr.mxu0 0.0
        %5473 = vmatpush1.msra.mxu0 %v5442
        %5474 = vmatprep.subr.mxu0 0.0
        %5475 = vmatpush1.msra.mxu0 %v5443
        %5476 = vmatprep.subr.mxu0 0.0
        %5477 = vmatpush1.msra.mxu0 0.0
        %5478 = vmatprep.subr.mxu0 0.0
        %5479 = vmatpush1.msra.mxu0 0.0
        %5480 = vmatprep.subr.mxu0 0.0
        %5481 = vmatpush1.msra.mxu0 0.0
        %5482 = vmatprep.subr.mxu0 0.0
        %5483 = vmatpush1.msra.mxu0 0.0
        %5484 = vmatprep.subr.mxu0 0.0
        %5485 = vmatpush1.msra.mxu0 0.0
        %5486 = vmatprep.subr.mxu0 0.0
        %5487 = vmatpush1.msra.mxu0 0.0
        %5488 = vmatprep.subr.mxu0 0.0
        %5489 = vmatpush1.msra.mxu0 0.0
        %5490 = vmatprep.subr.mxu0 0.0
        %5491 = vmatpush1.msra.mxu0 0.0
        %5492 = vmatprep.subr.mxu0 0.0
        %5493 = vmatpush1.msra.mxu0 0.0
        %5494 = vmatprep.subr.mxu0 0.0
        %5495 = vmatpush1.msra.mxu0 0.0
        %5496 = vmatprep.subr.mxu0 0.0
        %5497 = vmatpush1.msra.mxu0 0.0
        %5498 = vmatprep.subr.mxu0 0.0
        %5499 = vmatpush1.msra.mxu0 0.0
        %5500 = vmatprep.subr.mxu0 0.0
        %5501 = vmatpush1.msra.mxu0 0.0
        %5502 = vmatprep.subr.mxu0 0.0
        %5503 = vmatpush1.msra.mxu0 0.0
        %5504 = vmatprep.subr.mxu0 0.0
        %5505 = vmatpush1.msra.mxu0 0.0
        %5506 = vmatprep.subr.mxu0 0.0
        %5507 = vmatpush1.msra.mxu0 0.0
        %5508 = vmatprep.mubr.f32.mxu0 0.0
        %5509 = vmatmul.mubr.f32.gmra.mrb[0].mxu0 %v5408
        %v5510 = vpop.f32.mrb[0].mxu0
        %v5511 = vadd.f32 0.0, %v5510
        %v5512 = vpop.f32.mrb[0].mxu0
        %5513 = vdwg.mxu0
        %5514 = vmatprep.subr.mxu0 0.0
        %5515 = vmatpush1.msra.mxu0 %v5411
        %5516 = vmatprep.subr.mxu0 0.0
        %5517 = vmatpush1.msra.mxu0 %v5412
        %5518 = vmatprep.subr.mxu0 0.0
        %5519 = vmatpush1.msra.mxu0 %v5413
        %5520 = vmatprep.subr.mxu0 0.0
        %5521 = vmatpush1.msra.mxu0 %v5414
        %5522 = vmatprep.subr.mxu0 0.0
        %5523 = vmatpush1.msra.mxu0 %v5415
        %5524 = vmatprep.subr.mxu0 0.0
        %5525 = vmatpush1.msra.mxu0 %v5416
        %5526 = vmatprep.subr.mxu0 0.0
        %5527 = vmatpush1.msra.mxu0 %v5417
        %5528 = vmatprep.subr.mxu0 0.0
        %5529 = vmatpush1.msra.mxu0 %v5418
        %5530 = vmatprep.subr.mxu0 0.0
        %5531 = vmatpush1.msra.mxu0 %v5419
        %5532 = vmatprep.subr.mxu0 0.0
        %5533 = vmatpush1.msra.mxu0 %v5420
        %5534 = vmatprep.subr.mxu0 0.0
        %5535 = vmatpush1.msra.mxu0 %v5421
        %5536 = vmatprep.subr.mxu0 0.0
        %5537 = vmatpush1.msra.mxu0 %v5422
        %5538 = vmatprep.subr.mxu0 0.0
        %5539 = vmatpush1.msra.mxu0 %v5423
        %5540 = vmatprep.subr.mxu0 0.0
        %5541 = vmatpush1.msra.mxu0 %v5424
        %5542 = vmatprep.subr.mxu0 0.0
        %5543 = vmatpush1.msra.mxu0 %v5425
        %5544 = vmatprep.subr.mxu0 0.0
        %5545 = vmatpush1.msra.mxu0 %v5426
        %5546 = vmatprep.subr.mxu0 0.0
        %5547 = vmatpush1.msra.mxu0 0.0
        %5548 = vmatprep.subr.mxu0 0.0
        %5549 = vmatpush1.msra.mxu0 0.0
        %5550 = vmatprep.subr.mxu0 0.0
        %5551 = vmatpush1.msra.mxu0 0.0
        %5552 = vmatprep.subr.mxu0 0.0
        %5553 = vmatpush1.msra.mxu0 0.0
        %5554 = vmatprep.subr.mxu0 0.0
        %5555 = vmatpush1.msra.mxu0 0.0
        %5556 = vmatprep.subr.mxu0 0.0
        %5557 = vmatpush1.msra.mxu0 0.0
        %5558 = vmatprep.subr.mxu0 0.0
        %5559 = vmatpush1.msra.mxu0 0.0
        %5560 = vmatprep.subr.mxu0 0.0
        %5561 = vmatpush1.msra.mxu0 0.0
        %5562 = vmatprep.subr.mxu0 0.0
        %5563 = vmatpush1.msra.mxu0 0.0
        %5564 = vmatprep.subr.mxu0 0.0
        %5565 = vmatpush1.msra.mxu0 0.0
        %5566 = vmatprep.subr.mxu0 0.0
        %5567 = vmatpush1.msra.mxu0 0.0
        %5568 = vmatprep.subr.mxu0 0.0
        %5569 = vmatpush1.msra.mxu0 0.0
        %5570 = vmatprep.subr.mxu0 0.0
        %5571 = vmatpush1.msra.mxu0 0.0
        %5572 = vmatprep.subr.mxu0 0.0
        %5573 = vmatpush1.msra.mxu0 0.0
        %5574 = vmatprep.subr.mxu0 0.0
        %5575 = vmatpush1.msra.mxu0 0.0
        %5576 = vmatprep.subr.mxu0 0.0
        %5577 = vmatpush1.msra.mxu0 0.0
        %5578 = vmatprep.mubr.f32.mxu0 0.0
        %5579 = vmatmul.mubr.f32.gmra.mrb[0].mxu0 %v5407
        %v5580 = vpop.f32.mrb[0].mxu0
        %v5581 = vadd.f32 %v5511, %v5580
        %v5582 = vpop.f32.mrb[0].mxu0
        %5583 = vdwg.mxu0
        %s5584 = scalar_lea.vmem %s5, 256
        %v5585 = vld [vmem:[%s5584] sm:$0xff]
        %v5586 = vld [vmem:[%s5584 + $0x8] sm:$0xff]
        %v5587 = vld [vmem:[%s5584 + $0x10] sm:$0xff]
        %v5588 = vld [vmem:[%s5584 + $0x18] sm:$0xff]
        %v5589 = vld [vmem:[%s5584 + $0x20] sm:$0xff]
        %v5590 = vld [vmem:[%s5584 + $0x28] sm:$0xff]
        %v5591 = vld [vmem:[%s5584 + $0x30] sm:$0xff]
        %v5592 = vld [vmem:[%s5584 + $0x38] sm:$0xff]
        %v5593 = vld [vmem:[%s5584 + $0x40] sm:$0xff]
        %v5594 = vld [vmem:[%s5584 + $0x48] sm:$0xff]
        %v5595 = vld [vmem:[%s5584 + $0x50] sm:$0xff]
        %v5596 = vld [vmem:[%s5584 + $0x58] sm:$0xff]
        %v5597 = vld [vmem:[%s5584 + $0x60] sm:$0xff]
        %v5598 = vld [vmem:[%s5584 + $0x68] sm:$0xff]
        %v5599 = vld [vmem:[%s5584 + $0x70] sm:$0xff]
        %v5600 = vld [vmem:[%s5584 + $0x78] sm:$0xff]
        %5601 = vmatprep.subr.mxu0 0.0
        %5602 = vmatpush1.msra.mxu0 %v5585
        %5603 = vmatprep.subr.mxu0 0.0
        %5604 = vmatpush1.msra.mxu0 %v5586
        %5605 = vmatprep.subr.mxu0 0.0
        %5606 = vmatpush1.msra.mxu0 %v5587
        %5607 = vmatprep.subr.mxu0 0.0
        %5608 = vmatpush1.msra.mxu0 %v5588
        %5609 = vmatprep.subr.mxu0 0.0
        %5610 = vmatpush1.msra.mxu0 %v5589
        %5611 = vmatprep.subr.mxu0 0.0
        %5612 = vmatpush1.msra.mxu0 %v5590
        %5613 = vmatprep.subr.mxu0 0.0
        %5614 = vmatpush1.msra.mxu0 %v5591
        %5615 = vmatprep.subr.mxu0 0.0
        %5616 = vmatpush1.msra.mxu0 %v5592
        %5617 = vmatprep.subr.mxu0 0.0
        %5618 = vmatpush1.msra.mxu0 %v5593
        %5619 = vmatprep.subr.mxu0 0.0
        %5620 = vmatpush1.msra.mxu0 %v5594
        %5621 = vmatprep.subr.mxu0 0.0
        %5622 = vmatpush1.msra.mxu0 %v5595
        %5623 = vmatprep.subr.mxu0 0.0
        %5624 = vmatpush1.msra.mxu0 %v5596
        %5625 = vmatprep.subr.mxu0 0.0
        %5626 = vmatpush1.msra.mxu0 %v5597
        %5627 = vmatprep.subr.mxu0 0.0
        %5628 = vmatpush1.msra.mxu0 %v5598
        %5629 = vmatprep.subr.mxu0 0.0
        %5630 = vmatpush1.msra.mxu0 %v5599
        %5631 = vmatprep.subr.mxu0 0.0
        %5632 = vmatpush1.msra.mxu0 %v5600
        %5633 = vmatprep.subr.mxu0 0.0
        %5634 = vmatpush1.msra.mxu0 0.0
        %5635 = vmatprep.subr.mxu0 0.0
        %5636 = vmatpush1.msra.mxu0 0.0
        %5637 = vmatprep.subr.mxu0 0.0
        %5638 = vmatpush1.msra.mxu0 0.0
        %5639 = vmatprep.subr.mxu0 0.0
        %5640 = vmatpush1.msra.mxu0 0.0
        %5641 = vmatprep.subr.mxu0 0.0
        %5642 = vmatpush1.msra.mxu0 0.0
        %5643 = vmatprep.subr.mxu0 0.0
        %5644 = vmatpush1.msra.mxu0 0.0
        %5645 = vmatprep.subr.mxu0 0.0
        %5646 = vmatpush1.msra.mxu0 0.0
        %5647 = vmatprep.subr.mxu0 0.0
        %5648 = vmatpush1.msra.mxu0 0.0
        %5649 = vmatprep.subr.mxu0 0.0
        %5650 = vmatpush1.msra.mxu0 0.0
        %5651 = vmatprep.subr.mxu0 0.0
        %5652 = vmatpush1.msra.mxu0 0.0
        %5653 = vmatprep.subr.mxu0 0.0
        %5654 = vmatpush1.msra.mxu0 0.0
        %5655 = vmatprep.subr.mxu0 0.0
        %5656 = vmatpush1.msra.mxu0 0.0
        %5657 = vmatprep.subr.mxu0 0.0
        %5658 = vmatpush1.msra.mxu0 0.0
        %5659 = vmatprep.subr.mxu0 0.0
        %5660 = vmatpush1.msra.mxu0 0.0
        %5661 = vmatprep.subr.mxu0 0.0
        %5662 = vmatpush1.msra.mxu0 0.0
        %5663 = vmatprep.subr.mxu0 0.0
        %5664 = vmatpush1.msra.mxu0 0.0
        %5665 = vmatprep.mubr.f32.mxu0 0.0
        %5666 = vmatmul.mubr.f32.gmra.mrb[0].mxu0 %v5409
        %v5667 = vpop.f32.mrb[0].mxu0
        %v5668 = vadd.f32 0.0, %v5667
        %v5669 = vpop.f32.mrb[0].mxu0
        %5670 = vdwg.mxu0
        %v5671 = vadd.f32 %v5581, %v5668
        %s5672 = scalar_lea.vmem %s5, 384
        %v5673 = vld [vmem:[%s5672] sm:$0xff]
        %v5674 = vld [vmem:[%s5672 + $0x8] sm:$0xff]
        %v5675 = vld [vmem:[%s5672 + $0x10] sm:$0xff]
        %v5676 = vld [vmem:[%s5672 + $0x18] sm:$0xff]
        %v5677 = vld [vmem:[%s5672 + $0x20] sm:$0xff]
        %v5678 = vld [vmem:[%s5672 + $0x28] sm:$0xff]
        %v5679 = vld [vmem:[%s5672 + $0x30] sm:$0xff]
        %v5680 = vld [vmem:[%s5672 + $0x38] sm:$0xff]
        %v5681 = vld [vmem:[%s5672 + $0x40] sm:$0xff]
        %v5682 = vld [vmem:[%s5672 + $0x48] sm:$0xff]
        %v5683 = vld [vmem:[%s5672 + $0x50] sm:$0xff]
        %v5684 = vld [vmem:[%s5672 + $0x58] sm:$0xff]
        %v5685 = vld [vmem:[%s5672 + $0x60] sm:$0xff]
        %v5686 = vld [vmem:[%s5672 + $0x68] sm:$0xff]
        %v5687 = vld [vmem:[%s5672 + $0x70] sm:$0xff]
        %v5688 = vld [vmem:[%s5672 + $0x78] sm:$0xff]
        %5689 = vmatprep.subr.mxu0 0.0
        %5690 = vmatpush1.msra.mxu0 %v5673
        %5691 = vmatprep.subr.mxu0 0.0
        %5692 = vmatpush1.msra.mxu0 %v5674
        %5693 = vmatprep.subr.mxu0 0.0
        %5694 = vmatpush1.msra.mxu0 %v5675
        %5695 = vmatprep.subr.mxu0 0.0
        %5696 = vmatpush1.msra.mxu0 %v5676
        %5697 = vmatprep.subr.mxu0 0.0
        %5698 = vmatpush1.msra.mxu0 %v5677
        %5699 = vmatprep.subr.mxu0 0.0
        %5700 = vmatpush1.msra.mxu0 %v5678
        %5701 = vmatprep.subr.mxu0 0.0
        %5702 = vmatpush1.msra.mxu0 %v5679
        %5703 = vmatprep.subr.mxu0 0.0
        %5704 = vmatpush1.msra.mxu0 %v5680
        %5705 = vmatprep.subr.mxu0 0.0
        %5706 = vmatpush1.msra.mxu0 %v5681
        %5707 = vmatprep.subr.mxu0 0.0
        %5708 = vmatpush1.msra.mxu0 %v5682
        %5709 = vmatprep.subr.mxu0 0.0
        %5710 = vmatpush1.msra.mxu0 %v5683
        %5711 = vmatprep.subr.mxu0 0.0
        %5712 = vmatpush1.msra.mxu0 %v5684
        %5713 = vmatprep.subr.mxu0 0.0
        %5714 = vmatpush1.msra.mxu0 %v5685
        %5715 = vmatprep.subr.mxu0 0.0
        %5716 = vmatpush1.msra.mxu0 %v5686
        %5717 = vmatprep.subr.mxu0 0.0
        %5718 = vmatpush1.msra.mxu0 %v5687
        %5719 = vmatprep.subr.mxu0 0.0
        %5720 = vmatpush1.msra.mxu0 %v5688
        %5721 = vmatprep.subr.mxu0 0.0
        %5722 = vmatpush1.msra.mxu0 0.0
        %5723 = vmatprep.subr.mxu0 0.0
        %5724 = vmatpush1.msra.mxu0 0.0
        %5725 = vmatprep.subr.mxu0 0.0
        %5726 = vmatpush1.msra.mxu0 0.0
        %5727 = vmatprep.subr.mxu0 0.0
        %5728 = vmatpush1.msra.mxu0 0.0
        %5729 = vmatprep.subr.mxu0 0.0
        %5730 = vmatpush1.msra.mxu0 0.0
        %5731 = vmatprep.subr.mxu0 0.0
        %5732 = vmatpush1.msra.mxu0 0.0
        %5733 = vmatprep.subr.mxu0 0.0
        %5734 = vmatpush1.msra.mxu0 0.0
        %5735 = vmatprep.subr.mxu0 0.0
        %5736 = vmatpush1.msra.mxu0 0.0
        %5737 = vmatprep.subr.mxu0 0.0
        %5738 = vmatpush1.msra.mxu0 0.0
        %5739 = vmatprep.subr.mxu0 0.0
        %5740 = vmatpush1.msra.mxu0 0.0
        %5741 = vmatprep.subr.mxu0 0.0
        %5742 = vmatpush1.msra.mxu0 0.0
        %5743 = vmatprep.subr.mxu0 0.0
        %5744 = vmatpush1.msra.mxu0 0.0
        %5745 = vmatprep.subr.mxu0 0.0
        %5746 = vmatpush1.msra.mxu0 0.0
        %5747 = vmatprep.subr.mxu0 0.0
        %5748 = vmatpush1.msra.mxu0 0.0
        %5749 = vmatprep.subr.mxu0 0.0
        %5750 = vmatpush1.msra.mxu0 0.0
        %5751 = vmatprep.subr.mxu0 0.0
        %5752 = vmatpush1.msra.mxu0 0.0
        %5753 = vmatprep.mubr.f32.mxu0 0.0
        %5754 = vmatmul.mubr.f32.gmra.mrb[0].mxu0 %v5410
        %v5755 = vpop.f32.mrb[0].mxu0
        %v5756 = vadd.f32 0.0, %v5755
        %v5757 = vpop.f32.mrb[0].mxu0
        %5758 = vdwg.mxu0
        %v5759 = vadd.f32 %v5671, %v5756
        %v5760 = vld [vmem:[%s6] sm:$0x1]
        %v5762 = vlaneseq
        %v5763 = vshrl.u32 %v5762, 7
        %v5764 = vsub.s32 0, %v5763
        %v5765 = vrot.slane %v5760, %v5764
        %v5767 = vadd.f32 %v5759, %v5765
        %v5768 = vmax.f32 %v5767, 0.0
        %v5769 = vld [vmem:[%s7] sm:$0xff]
        %v5770 = vld [vmem:[%s7 + $0x8] sm:$0xff]
        %v5771 = vld [vmem:[%s7 + $0x10] sm:$0xff]
        %v5772 = vld [vmem:[%s7 + $0x18] sm:$0xff]
        %v5773 = vld [vmem:[%s7 + $0x20] sm:$0xff]
        %v5774 = vld [vmem:[%s7 + $0x28] sm:$0xff]
        %v5775 = vld [vmem:[%s7 + $0x30] sm:$0xff]
        %v5776 = vld [vmem:[%s7 + $0x38] sm:$0xff]
        %v5777 = vld [vmem:[%s7 + $0x40] sm:$0xff]
        %v5778 = vld [vmem:[%s7 + $0x48] sm:$0xff]
        %v5779 = vld [vmem:[%s7 + $0x50] sm:$0xff]
        %v5780 = vld [vmem:[%s7 + $0x58] sm:$0xff]
        %v5781 = vld [vmem:[%s7 + $0x60] sm:$0xff]
        %v5782 = vld [vmem:[%s7 + $0x68] sm:$0xff]
        %v5783 = vld [vmem:[%s7 + $0x70] sm:$0xff]
        %v5784 = vld [vmem:[%s7 + $0x78] sm:$0xff]
        %v5785 = vld [vmem:[%s8] sm:$0x1]
        %v5787 = vlaneseq
        %v5788 = vshrl.u32 %v5787, 7
        %v5789 = vsub.s32 0, %v5788
        %v5790 = vrot.slane %v5785, %v5789
        %5792 = vmatprep.subr.mxu0 0.0
        %5793 = vmatpush1.msra.mxu0 %v5769
        %5794 = vmatprep.subr.mxu0 0.0
        %5795 = vmatpush1.msra.mxu0 %v5770
        %5796 = vmatprep.subr.mxu0 0.0
        %5797 = vmatpush1.msra.mxu0 %v5771
        %5798 = vmatprep.subr.mxu0 0.0
        %5799 = vmatpush1.msra.mxu0 %v5772
        %5800 = vmatprep.subr.mxu0 0.0
        %5801 = vmatpush1.msra.mxu0 %v5773
        %5802 = vmatprep.subr.mxu0 0.0
        %5803 = vmatpush1.msra.mxu0 %v5774
        %5804 = vmatprep.subr.mxu0 0.0
        %5805 = vmatpush1.msra.mxu0 %v5775
        %5806 = vmatprep.subr.mxu0 0.0
        %5807 = vmatpush1.msra.mxu0 %v5776
        %5808 = vmatprep.subr.mxu0 0.0
        %5809 = vmatpush1.msra.mxu0 %v5777
        %5810 = vmatprep.subr.mxu0 0.0
        %5811 = vmatpush1.msra.mxu0 %v5778
        %5812 = vmatprep.subr.mxu0 0.0
        %5813 = vmatpush1.msra.mxu0 %v5779
        %5814 = vmatprep.subr.mxu0 0.0
        %5815 = vmatpush1.msra.mxu0 %v5780
        %5816 = vmatprep.subr.mxu0 0.0
        %5817 = vmatpush1.msra.mxu0 %v5781
        %5818 = vmatprep.subr.mxu0 0.0
        %5819 = vmatpush1.msra.mxu0 %v5782
        %5820 = vmatprep.subr.mxu0 0.0
        %5821 = vmatpush1.msra.mxu0 %v5783
        %5822 = vmatprep.subr.mxu0 0.0
        %5823 = vmatpush1.msra.mxu0 %v5784
        %5824 = vmatprep.subr.mxu0 0.0
        %5825 = vmatpush1.msra.mxu0 0.0
        %5826 = vmatprep.subr.mxu0 0.0
        %5827 = vmatpush1.msra.mxu0 0.0
        %5828 = vmatprep.subr.mxu0 0.0
        %5829 = vmatpush1.msra.mxu0 0.0
        %5830 = vmatprep.subr.mxu0 0.0
        %5831 = vmatpush1.msra.mxu0 0.0
        %5832 = vmatprep.subr.mxu0 0.0
        %5833 = vmatpush1.msra.mxu0 0.0
        %5834 = vmatprep.subr.mxu0 0.0
        %5835 = vmatpush1.msra.mxu0 0.0
        %5836 = vmatprep.subr.mxu0 0.0
        %5837 = vmatpush1.msra.mxu0 0.0
        %5838 = vmatprep.subr.mxu0 0.0
        %5839 = vmatpush1.msra.mxu0 0.0
        %5840 = vmatprep.subr.mxu0 0.0
        %5841 = vmatpush1.msra.mxu0 0.0
        %5842 = vmatprep.subr.mxu0 0.0
        %5843 = vmatpush1.msra.mxu0 0.0
        %5844 = vmatprep.subr.mxu0 0.0
        %5845 = vmatpush1.msra.mxu0 0.0
        %5846 = vmatprep.subr.mxu0 0.0
        %5847 = vmatpush1.msra.mxu0 0.0
        %5848 = vmatprep.subr.mxu0 0.0
        %5849 = vmatpush1.msra.mxu0 0.0
        %5850 = vmatprep.subr.mxu0 0.0
        %5851 = vmatpush1.msra.mxu0 0.0
        %5852 = vmatprep.subr.mxu0 0.0
        %5853 = vmatpush1.msra.mxu0 0.0
        %5854 = vmatprep.subr.mxu0 0.0
        %5855 = vmatpush1.msra.mxu0 0.0
        %5856 = vmatprep.mubr.f32.mxu0 0.0
        %5857 = vmatmul.mubr.f32.gmra.mrb[0].mxu0 %v5768
        %v5858 = vpop.f32.mrb[0].mxu0
        %v5859 = vadd.f32 %v5790, %v5858
        %v5860 = vpop.f32.mrb[0].mxu0
        %5861 = vdwg.mxu0
        %v5862 = vlaneseq
        %v5863 = vand.u32 %v5862, 127
        %vm5864 = vcmp.lt.s32.totalorder %v5863, 10
        %v5865 = vsel %vm5864, %v5859, -1e+30
        %5866 = vmax.xlane.f32.xlu0 %v5865
        %v5867 = vpop.xlane.xlu0 %5866
        %v5868 = vsub.f32 %v5865, %v5867
        %v5869 = vmul.f32 %v5868, 1.442695
        %v5870 = vpow.pop %v5869
        %v5871 = vsel %vm5864, %v5870, 0.0
        %5872 = vadd.xlane.f32.xlu0 %v5871
        %v5873 = vpop.xlane.xlu0 %5872
        %v5874 = vlog2.pop %v5873
        %v5875 = vmul.f32 %v5874, 0.6931472
        %v5876 = vsub.f32 %v5868, %v5875
        %v5877 = vsel %vm5864, %v5876, 0.0
        %5878 = vst [vmem:[%s472] sm:$0xff] %v5877
        %p5879 = scmp.lt.s32.totalorder %s20, 2
        %s5880 = scalar_select %p5879, %s20, 2
        %s5881 = smul.addr %s5880, 8
        %s5882 = scalar_lea.vmem %s9, %s5881
        // Predicated region
        $region95: #{net_forward.1} parent=89 // pred_check
          %p5883 = pneg %p232
        $region96: #{net_forward.1} parent=89 // pred_check_branch
          %5885 = sbr.rel (%p5883) target = $region98
        $region97: #{net_forward.1} parent=89 // pred_region
          _
        $region98: #{net_forward.1} parent=89 // pred_fallthru
          _
      $region90: #{net_forward.1} parent=5 // pred_fallthru
        _
      %p5886 = scmp.le.s32.totalorder 2, %s15
      // Predicated region
      $region99: #{net_forward.1} parent=5 // pred_check
        %p5887 = pneg %p5886
      $region100: #{net_forward.1} parent=5 // pred_check_branch
        %5889 = sbr.rel (%p5887) target = $region102
      $region101: #{net_forward.1} parent=5 // pred_region
        %s5890 = ssub.s32 %s15, 2
        // Predicated region
        $region103: #{net_forward.1} parent=101 // pred_check
          %p5891 = pneg %p238
        $region104: #{net_forward.1} parent=101 // pred_check_branch
          %5893 = sbr.rel (%p5891) target = $region106
        $region105: #{net_forward.1} parent=101 // pred_region
          %p5894 = scmp.lt.s32.totalorder %s21, 2
          %s5895 = scalar_select %p5894, %s21, 2
          %s5896 = smul.addr %s5895, 8
          %s5897 = scalar_lea.vmem %s9, %s5896
        $region106: #{net_forward.1} parent=101 // pred_fallthru
          _
      $region102: #{net_forward.1} parent=5 // pred_fallthru
        _
    $region6: #{net_forward.1} parent=1 // loop_footer
      %s19 = sadd.s32 1, %s15
    $region7: #{net_forward.1} parent=1 // loop_footer_branch
      %14 = sbr.rel target = $region3
    $region8: #{net_forward.1} parent=1 // loop_exit
      _

</llo_original>
